<compile_context>
chip_gen: v6e
topology: v6e:2x2x1
jax: 0.10.0
libtpu: 0.0.40
codegen_flags: <defaults>
</compile_context>

<pallas_src>
import functools

import jax
import jax.numpy as jnp
from jax.experimental import pallas as pl
from jax.experimental.pallas import tpu as pltpu


def _stable_sigmoid(t):
    # Numerically-stable sigmoid (no exp overflow for large |t|).
    e = jnp.exp(-jnp.abs(t))
    r = 1.0 / (1.0 + e)
    return jnp.where(t >= 0.0, r, e * r)


def _conv_cbam_kernel(H, W, HW, HWp, use_vpu_conv,
                      x_ref, wc_ref, bias_ref, w1_ref, w2_ref,
                      rv_ref, cv_ref, wtap_ref, o_ref):
    # Layout: channels on sublanes, flattened (padded) spatial HWp on lanes.
    #
    # x_ref:    (1, C1, HWp) f32
    # wc_ref:   (C2, C1)     bf16 (MXU path) or f32 (VPU path); BN scale folded
    # bias_ref: (C2, 1)      f32  folded BN bias
    # w1_ref:   (CR, C2)     f32  channel-attention fc1
    # w2_ref:   (C2, CR)     f32  channel-attention fc2
    # rv_ref:   (7, HWp)     f32  row (di) zero-pad validity
    # cv_ref:   (7, HWp)     f32  col (dj) zero-pad validity
    # wtap_ref: (2, 49)      f32  7x7 SA tap weights (row 0: avg map, 1: max)
    # o_ref:    (1, C2, HWp) f32
    C1 = x_ref.shape[1]

    # --- 1x1 conv (BN scale pre-folded) + bias + Hardswish -------------------
    if use_vpu_conv:
        # Small C1: VPU sum-of-outer-products, f32 exact (avoids MXU K pad-out).
        x2 = x_ref[0]                                          # (C1, HWp)
        wcs = wc_ref[...]                                      # (C2, C1)
        y = wcs[:, 0:1] * x2[0:1, :]
        for k in range(1, C1):
            y = y + wcs[:, k:k + 1] * x2[k:k + 1, :]
        y = y + bias_ref[...]
    else:
        xb = x_ref[0].astype(jnp.bfloat16)                     # (C1, HWp)
        y = jnp.dot(wc_ref[...], xb,
                    preferred_element_type=jnp.float32)        # (C2, HWp)
        y = y + bias_ref[...]
    y = y * jnp.clip(y + 3.0, 0.0, 6.0) * (1.0 / 6.0)          # hardswish

    # --- Channel attention (global avg/max over real lanes + tiny MLP) -------
    if HW == HWp:
        avg_c = jnp.mean(y, axis=1, keepdims=True)             # (C2, 1)
        max_c = jnp.max(y, axis=1, keepdims=True)              # (C2, 1)
    else:
        lane = jax.lax.broadcasted_iota(jnp.int32, (1, HWp), 1)
        maskf = (lane < HW).astype(jnp.float32)                # (1, HWp)
        avg_c = jnp.sum(y * maskf, axis=1, keepdims=True) * (1.0 / HW)
        max_c = jnp.max(y - (1.0 - maskf) * 1e30, axis=1, keepdims=True)

    stats = jnp.concatenate([avg_c, max_c], axis=1)            # (C2, 2) batched MLP
    h = jnp.maximum(
        jnp.dot(w1_ref[...], stats, preferred_element_type=jnp.float32), 0.0)
    z = jnp.dot(w2_ref[...], h, preferred_element_type=jnp.float32)  # (C2, 2)
    ca = _stable_sigmoid(z[:, 0:1] + z[:, 1:2])                # (C2, 1)
    y = y * ca

    # --- Spatial attention: 7x7 conv over packed [avg; max] (2, HWp) slab ----
    avg_s = jnp.mean(y, axis=0, keepdims=True)                 # (1, HWp)
    max_s = jnp.max(y, axis=0, keepdims=True)                  # (1, HWp)
    sam = jnp.concatenate([avg_s, max_s], axis=0)              # (2, HWp)

    parts = []
    for di in range(-3, 4):
        rv = rv_ref[pl.ds(di + 3, 1), :]                       # (1, HWp)
        part = None
        for dj in range(-3, 4):
            t = (di + 3) * 7 + (dj + 3)
            s = (-(di * W + dj)) % HWp                         # static shift
            r = pltpu.roll(sam, shift=s, axis=1) if s else sam  # one roll/tap
            v = rv * cv_ref[pl.ds(dj + 3, 1), :]               # (1, HWp) validity
            term = (wtap_ref[:, pl.ds(t, 1)] * r) * v          # (2, HWp)
            part = term if part is None else part + term
        parts.append(part)
    while len(parts) > 1:                                      # tree-sum 7 partials
        nxt = [parts[i] + parts[i + 1] for i in range(0, len(parts) - 1, 2)]
        if len(parts) % 2:
            nxt.append(parts[-1])
        parts = nxt
    sa_pre = jnp.sum(parts[0], axis=0, keepdims=True)          # (1, HWp) sublane-sum
    sa = _stable_sigmoid(sa_pre)

    o_ref[0] = y * sa                                          # lane-dense store


def conv_cbam_pallas(x, wc, gamma, beta, rmean, rvar, w1, w2, wsa, eps=1e-5):
    N, C1, H, W = x.shape
    C2 = wc.shape[0]
    CR = w1.shape[0]
    HW = H * W
    HWp = ((HW + 127) // 128) * 128          # lane-dense padding of flat HW axis

    use_vpu_conv = C1 <= 16                  # VPU path for tiny-C1 layers

    # ---- fold BN (inference) into the 1x1 conv ------------------------------
    scale = gamma / jnp.sqrt(rvar + eps)
    wcs = wc * scale[:, None]                                   # (C2, C1)
    wc_in = wcs.astype(jnp.float32) if use_vpu_conv else wcs.astype(jnp.bfloat16)
    bias = (beta - rmean * scale).reshape(C2, 1).astype(jnp.float32)
    w1k = w1.astype(jnp.float32)                                # (CR, C2)
    w2k = w2.astype(jnp.float32)                                # (C2, CR)

    # ---- separable zero-pad validity (7+7 rows) + packed tap weights --------
    p = jnp.arange(HWp)
    hh = p // W
    ww = p % W
    d = jnp.arange(7) - 3
    rv = ((hh[None, :] + d[:, None] >= 0)
          & (hh[None, :] + d[:, None] < H)).astype(jnp.float32)  # (7, HWp)
    cv = ((ww[None, :] + d[:, None] >= 0)
          & (ww[None, :] + d[:, None] < W)).astype(jnp.float32)  # (7, HWp)
    wtap = jnp.stack([wsa[0, 0].reshape(49),
                      wsa[0, 1].reshape(49)], axis=0).astype(jnp.float32)  # (2, 49)

    x3 = x.reshape(N, C1, HW)                # free reshape, NCHW layout kept
    if HWp != HW:
        x3 = jnp.pad(x3, ((0, 0), (0, 0), (0, HWp - HW)))

    # ---- generation-aware VMEM budget ---------------------------------------
    wc_bytes = C2 * C1 * (4 if use_vpu_conv else 2)
    const_bytes = (wc_bytes + C2 * 4 + 2 * CR * C2 * 4
                   + 14 * HWp * 4 + 2 * 49 * 4)
    block_bytes = (C1 + C2) * HWp * 4
    need = 2 * block_bytes + 2 * const_bytes + (4 << 20)        # double-buffer + margin
    try:
        cap = int(pltpu.get_tpu_info().vmem_capacity_bytes)
    except Exception:
        cap = 64 << 20                                          # conservative (v7x)
    vmem_limit = int(min(max(need, 32 << 20), max(cap - (8 << 20), 16 << 20)))

    kernel = functools.partial(_conv_cbam_kernel, H, W, HW, HWp, use_vpu_conv)

    def build_and_run(single_buffer_consts):
        def const_spec(shape):
            rank = len(shape)
            idx = lambda n: (0,) * rank
            if single_buffer_consts:
                # grid-invariant inputs: no point double-buffering them
                return pl.BlockSpec(shape, idx, pipeline_mode=pl.Buffered(1))
            return pl.BlockSpec(shape, idx)

        return pl.pallas_call(
            kernel,
            out_shape=jax.ShapeDtypeStruct((N, C2, HWp), jnp.float32),
            grid=(N,),
            in_specs=[
                pl.BlockSpec((1, C1, HWp), lambda n: (n, 0, 0)),
                const_spec((C2, C1)),
                const_spec((C2, 1)),
                const_spec((CR, C2)),
                const_spec((C2, CR)),
                const_spec((7, HWp)),
                const_spec((7, HWp)),
                const_spec((2, 49)),
            ],
            out_specs=pl.BlockSpec((1, C2, HWp), lambda n: (n, 0, 0)),
            compiler_params=pltpu.CompilerParams(
                dimension_semantics=("parallel",),
                vmem_limit_bytes=vmem_limit),
        )(x3, wc_in, bias, w1k, w2k, rv, cv, wtap)

    try:
        out = build_and_run(True)            # single-buffer constant operands
    except Exception:
        out = build_and_run(False)           # fallback if Buffered(1) unsupported

    if HWp != HW:
        out = out[:, :, :HW]
    return out.reshape(N, C2, H, W)          # free reshape back to NCHW


def conv_cbam_reference(x, wc, gamma, beta, rmean, rvar, w1, w2, wsa,
                        eps=1e-5, bf16_conv=False):
    """Pure-JAX NCHW reference mirroring the PyTorch forward.

    When bf16_conv=True the 1x1-conv operands are rounded to bf16 (f32
    accumulation) to mirror the kernel's MXU fast path; otherwise fully f32
    (mirrors the small-C1 VPU path).
    """
    hi = jax.lax.Precision.HIGHEST
    scale = gamma / jnp.sqrt(rvar + eps)
    bias = beta - rmean * scale
    wcs = wc * scale[:, None]
    xr = x
    if bf16_conv:
        wcs = wcs.astype(jnp.bfloat16).astype(jnp.float32)
        xr = x.astype(jnp.bfloat16).astype(jnp.float32)
    y = jnp.einsum('oc,nchw->nohw', wcs, xr, precision=hi)
    y = y + bias[None, :, None, None]
    y = y * jnp.clip(y + 3.0, 0.0, 6.0) * (1.0 / 6.0)
    avg = jnp.mean(y, axis=(2, 3))
    mx = jnp.max(y, axis=(2, 3))

    def mlp(v):
        h = jnp.maximum(jnp.dot(v, w1.T, precision=hi), 0.0)
        return jnp.dot(h, w2.T, precision=hi)

    ca = jax.nn.sigmoid(mlp(avg) + mlp(mx))
    y = y * ca[:, :, None, None]
    avg_s = jnp.mean(y, axis=1, keepdims=True)
    max_s = jnp.max(y, axis=1, keepdims=True)
    s = jnp.concatenate([avg_s, max_s], axis=1)
    sa = jax.lax.conv_general_dilated(
        s, wsa, (1, 1), [(3, 3), (3, 3)],
        dimension_numbers=('NCHW', 'OIHW', 'NCHW'), precision=hi)
    return y * jax.nn.sigmoid(sa)


if __name__ == "__main__":
    def make_inputs(key, N, C1, C2, H, W):
        CR = max(C2 // 16, 1)
        ks = jax.random.split(key, 9)
        wc = (jax.random.normal(ks[0], (C2, C1)) * 0.2).astype(jnp.float32)
        gamma = (1.0 + 0.1 * jax.random.normal(ks[1], (C2,))).astype(jnp.float32)
        beta = (0.1 * jax.random.normal(ks[2], (C2,))).astype(jnp.float32)
        rmean = (0.1 * jax.random.normal(ks[3], (C2,))).astype(jnp.float32)
        rvar = (jnp.abs(jax.random.normal(ks[4], (C2,))) * 0.5 + 0.5).astype(jnp.float32)
        w1 = (jax.random.normal(ks[5], (CR, C2)) * 0.2).astype(jnp.float32)
        w2 = (jax.random.normal(ks[6], (C2, CR)) * 0.2).astype(jnp.float32)
        wsa = (jax.random.normal(ks[7], (1, 2, 7, 7)) * 0.2).astype(jnp.float32)
        x = jax.random.normal(ks[8], (N, C1, H, W)).astype(jnp.float32)
        return x, wc, gamma, beta, rmean, rvar, w1, w2, wsa

    key = jax.random.PRNGKey(0)
    k1, k2 = jax.random.split(key)

    # Case 1: small C1 (VPU conv path), HW already a multiple of 128.
    args1 = make_inputs(k1, 2, 4, 32, 16, 16)
    out1 = jax.block_until_ready(conv_cbam_pallas(*args1))
    ref1 = jax.block_until_ready(conv_cbam_reference(*args1, bf16_conv=False))
    assert out1.shape == ref1.shape
    err1 = float(jnp.max(jnp.abs(out1 - ref1)))
    if not jnp.allclose(out1, ref1, atol=5e-3, rtol=5e-3):
        raise AssertionError(f"case1 mismatch vs reference, max abs err={err1}")

    # Case 2: larger C1 (bf16 MXU path) + non-128-multiple HW (lane padding).
    args2 = make_inputs(k2, 1, 32, 32, 13, 10)
    out2 = jax.block_until_ready(conv_cbam_pallas(*args2))
    ref2 = jax.block_until_ready(conv_cbam_reference(*args2, bf16_conv=True))
    assert out2.shape == ref2.shape
    err2 = float(jnp.max(jnp.abs(out2 - ref2)))
    if not jnp.allclose(out2, ref2, atol=5e-3, rtol=5e-3):
        raise AssertionError(f"case2 mismatch vs reference, max abs err={err2}")

    print("KERNEL_OK")
</pallas_src>

<mosaic_0001>
module attributes {stable_mosaic.version = 11 : i64} {
  func.func @_conv_cbam_kernel(%arg0: i32, %arg1: memref<1x4x256xf32, #tpu.memory_space<vmem>>, %arg2: memref<32x4xf32, #tpu.memory_space<vmem>>, %arg3: memref<32x1xf32, #tpu.memory_space<vmem>>, %arg4: memref<2x32xf32, #tpu.memory_space<vmem>>, %arg5: memref<32x2xf32, #tpu.memory_space<vmem>>, %arg6: memref<7x256xf32, #tpu.memory_space<vmem>>, %arg7: memref<7x256xf32, #tpu.memory_space<vmem>>, %arg8: memref<2x49xf32, #tpu.memory_space<vmem>>, %arg9: memref<1x32x256xf32, #tpu.memory_space<vmem>>) attributes {dimension_semantics = [#tpu.dimension_semantics<parallel>], iteration_bounds = array<i64: 2>, scalar_prefetch = 0 : i64, scratch_operands = 0 : i64, tpu.core_type = #tpu.core_type<tc>, window_params = [{transform_indices = @transform_0, window_bounds = array<i64: 1, 4, 256>}, {pipeline_mode = #tpu.pipeline_mode<synchronous>, transform_indices = @transform_1, window_bounds = array<i64: 32, 4>}, {pipeline_mode = #tpu.pipeline_mode<synchronous>, transform_indices = @transform_2, window_bounds = array<i64: 32, 1>}, {pipeline_mode = #tpu.pipeline_mode<synchronous>, transform_indices = @transform_3, window_bounds = array<i64: 2, 32>}, {pipeline_mode = #tpu.pipeline_mode<synchronous>, transform_indices = @transform_4, window_bounds = array<i64: 32, 2>}, {pipeline_mode = #tpu.pipeline_mode<synchronous>, transform_indices = @transform_5, window_bounds = array<i64: 7, 256>}, {pipeline_mode = #tpu.pipeline_mode<synchronous>, transform_indices = @transform_6, window_bounds = array<i64: 7, 256>}, {pipeline_mode = #tpu.pipeline_mode<synchronous>, transform_indices = @transform_7, window_bounds = array<i64: 2, 49>}, {transform_indices = @transform_8, window_bounds = array<i64: 1, 32, 256>}]} {
    %c0 = arith.constant 0 : index
    %c0_0 = arith.constant 0 : index
    %c0_1 = arith.constant 0 : index
    %0 = vector.load %arg1[%c0, %c0_0, %c0_1] : memref<1x4x256xf32, #tpu.memory_space<vmem>>, vector<1x4x256xf32>
    %1 = vector.shape_cast %0 : vector<1x4x256xf32> to vector<4x256xf32>
    %c0_2 = arith.constant 0 : index
    %c0_3 = arith.constant 0 : index
    %2 = vector.load %arg2[%c0_2, %c0_3] : memref<32x4xf32, #tpu.memory_space<vmem>>, vector<32x4xf32>
    %3 = vector.extract_strided_slice %2 {offsets = [0, 0], sizes = [32, 1], strides = [1, 1]} : vector<32x4xf32> to vector<32x1xf32>
    %4 = vector.extract_strided_slice %1 {offsets = [0, 0], sizes = [1, 256], strides = [1, 1]} : vector<4x256xf32> to vector<1x256xf32>
    %5 = vector.broadcast %3 : vector<32x1xf32> to vector<32x256xf32>
    %6 = vector.broadcast %4 : vector<1x256xf32> to vector<32x256xf32>
    %7 = arith.mulf %5, %6 : vector<32x256xf32>
    %8 = vector.extract_strided_slice %2 {offsets = [0, 1], sizes = [32, 1], strides = [1, 1]} : vector<32x4xf32> to vector<32x1xf32>
    %9 = vector.extract_strided_slice %1 {offsets = [1, 0], sizes = [1, 256], strides = [1, 1]} : vector<4x256xf32> to vector<1x256xf32>
    %10 = vector.broadcast %8 : vector<32x1xf32> to vector<32x256xf32>
    %11 = vector.broadcast %9 : vector<1x256xf32> to vector<32x256xf32>
    %12 = arith.mulf %10, %11 : vector<32x256xf32>
    %13 = arith.addf %7, %12 : vector<32x256xf32>
    %14 = vector.extract_strided_slice %2 {offsets = [0, 2], sizes = [32, 1], strides = [1, 1]} : vector<32x4xf32> to vector<32x1xf32>
    %15 = vector.extract_strided_slice %1 {offsets = [2, 0], sizes = [1, 256], strides = [1, 1]} : vector<4x256xf32> to vector<1x256xf32>
    %16 = vector.broadcast %14 : vector<32x1xf32> to vector<32x256xf32>
    %17 = vector.broadcast %15 : vector<1x256xf32> to vector<32x256xf32>
    %18 = arith.mulf %16, %17 : vector<32x256xf32>
    %19 = arith.addf %13, %18 : vector<32x256xf32>
    %20 = vector.extract_strided_slice %2 {offsets = [0, 3], sizes = [32, 1], strides = [1, 1]} : vector<32x4xf32> to vector<32x1xf32>
    %21 = vector.extract_strided_slice %1 {offsets = [3, 0], sizes = [1, 256], strides = [1, 1]} : vector<4x256xf32> to vector<1x256xf32>
    %22 = vector.broadcast %20 : vector<32x1xf32> to vector<32x256xf32>
    %23 = vector.broadcast %21 : vector<1x256xf32> to vector<32x256xf32>
    %24 = arith.mulf %22, %23 : vector<32x256xf32>
    %25 = arith.addf %19, %24 : vector<32x256xf32>
    %c0_4 = arith.constant 0 : index
    %c0_5 = arith.constant 0 : index
    %26 = vector.load %arg3[%c0_4, %c0_5] : memref<32x1xf32, #tpu.memory_space<vmem>>, vector<32x1xf32>
    %27 = vector.broadcast %26 : vector<32x1xf32> to vector<32x256xf32>
    %28 = arith.addf %25, %27 : vector<32x256xf32>
    %cst = arith.constant 3.000000e+00 : f32
    %29 = vector.broadcast %cst : f32 to vector<32x256xf32>
    %30 = arith.addf %28, %29 : vector<32x256xf32>
    %cst_6 = arith.constant 0.000000e+00 : f32
    %cst_7 = arith.constant 6.000000e+00 : f32
    %31 = vector.broadcast %cst_6 : f32 to vector<32x256xf32>
    %32 = arith.maximumf %31, %30 : vector<32x256xf32>
    %33 = vector.broadcast %cst_7 : f32 to vector<32x256xf32>
    %34 = arith.minimumf %33, %32 : vector<32x256xf32>
    %35 = arith.mulf %28, %34 : vector<32x256xf32>
    %cst_8 = arith.constant 0.166666672 : f32
    %36 = vector.broadcast %cst_8 : f32 to vector<32x256xf32>
    %37 = arith.mulf %35, %36 : vector<32x256xf32>
    %cst_9 = arith.constant dense<0.000000e+00> : vector<32xf32>
    %38 = vector.multi_reduction <add>, %37, %cst_9 [1] : vector<32x256xf32> to vector<32xf32>
    %39 = vector.shape_cast %38 : vector<32xf32> to vector<32x1xf32>
    %cst_10 = arith.constant 2.560000e+02 : f32
    %40 = vector.broadcast %cst_10 : f32 to vector<32x1xf32>
    %41 = arith.divf %39, %40 : vector<32x1xf32>
    %cst_11 = arith.constant dense<0xFF800000> : vector<32xf32>
    %42 = vector.multi_reduction <maximumf>, %37, %cst_11 [1] : vector<32x256xf32> to vector<32xf32>
    %43 = vector.shape_cast %42 : vector<32xf32> to vector<32x1xf32>
    %44 = tpu.concatenate %41, %43 in 1 : vector<32x1xf32>, vector<32x1xf32> -> vector<32x2xf32>
    %c0_12 = arith.constant 0 : index
    %c0_13 = arith.constant 0 : index
    %45 = vector.load %arg4[%c0_12, %c0_13] : memref<2x32xf32, #tpu.memory_space<vmem>>, vector<2x32xf32>
    %cst_14 = arith.constant dense<0.000000e+00> : vector<2x2xf32>
    %46 = tpu.matmul %45, %44, %cst_14 {dimension_numbers = #tpu.dot_dimension_numbers<[1], [0], [0], [1], [0, 0, 1, 1], [], []>} : vector<2x32xf32>, vector<32x2xf32>, vector<2x2xf32> -> vector<2x2xf32>
    %cst_15 = arith.constant 0.000000e+00 : f32
    %47 = vector.broadcast %cst_15 : f32 to vector<2x2xf32>
    %48 = arith.maximumf %46, %47 : vector<2x2xf32>
    %c0_16 = arith.constant 0 : index
    %c0_17 = arith.constant 0 : index
    %49 = vector.load %arg5[%c0_16, %c0_17] : memref<32x2xf32, #tpu.memory_space<vmem>>, vector<32x2xf32>
    %cst_18 = arith.constant dense<0.000000e+00> : vector<32x2xf32>
    %50 = tpu.matmul %49, %48, %cst_18 {dimension_numbers = #tpu.dot_dimension_numbers<[1], [0], [0], [1], [0, 0, 1, 1], [], []>} : vector<32x2xf32>, vector<2x2xf32>, vector<32x2xf32> -> vector<32x2xf32>
    %51 = vector.extract_strided_slice %50 {offsets = [0, 0], sizes = [32, 1], strides = [1, 1]} : vector<32x2xf32> to vector<32x1xf32>
    %52 = vector.extract_strided_slice %50 {offsets = [0, 1], sizes = [32, 1], strides = [1, 1]} : vector<32x2xf32> to vector<32x1xf32>
    %53 = arith.addf %51, %52 : vector<32x1xf32>
    %54 = math.absf %53 : vector<32x1xf32>
    %cst_19 = arith.constant 0.000000e+00 : f32
    %55 = vector.broadcast %cst_19 : f32 to vector<32x1xf32>
    %56 = arith.subf %55, %54 : vector<32x1xf32>
    %57 = math.exp %56 : vector<32x1xf32>
    %cst_20 = arith.constant 1.000000e+00 : f32
    %58 = vector.broadcast %cst_20 : f32 to vector<32x1xf32>
    %59 = arith.addf %58, %57 : vector<32x1xf32>
    %cst_21 = arith.constant 1.000000e+00 : f32
    %60 = vector.broadcast %cst_21 : f32 to vector<32x1xf32>
    %61 = arith.divf %60, %59 : vector<32x1xf32>
    %cst_22 = arith.constant 0.000000e+00 : f32
    %62 = vector.broadcast %cst_22 : f32 to vector<32x1xf32>
    %63 = arith.cmpf oge, %53, %62 : vector<32x1xf32>
    %64 = arith.mulf %57, %61 : vector<32x1xf32>
    %65 = arith.select %63, %61, %64 : vector<32x1xi1>, vector<32x1xf32>
    %66 = vector.broadcast %65 : vector<32x1xf32> to vector<32x256xf32>
    %67 = arith.mulf %37, %66 : vector<32x256xf32>
    %cst_23 = arith.constant dense<0.000000e+00> : vector<256xf32>
    %68 = vector.multi_reduction <add>, %67, %cst_23 [0] : vector<32x256xf32> to vector<256xf32>
    %69 = vector.shape_cast %68 : vector<256xf32> to vector<1x256xf32>
    %cst_24 = arith.constant 3.200000e+01 : f32
    %70 = vector.broadcast %cst_24 : f32 to vector<1x256xf32>
    %71 = arith.divf %69, %70 : vector<1x256xf32>
    %cst_25 = arith.constant dense<0xFF800000> : vector<256xf32>
    %72 = vector.multi_reduction <maximumf>, %67, %cst_25 [0] : vector<32x256xf32> to vector<256xf32>
    %73 = vector.shape_cast %72 : vector<256xf32> to vector<1x256xf32>
    %74 = tpu.concatenate %71, %73 in 0 : vector<1x256xf32>, vector<1x256xf32> -> vector<2x256xf32>
    %c0_26 = arith.constant 0 : index
    %c0_27 = arith.constant 0 : index
    %75 = vector.load %arg6[%c0_26, %c0_27] : memref<7x256xf32, #tpu.memory_space<vmem>>, vector<1x256xf32>
    %c51_i32 = arith.constant 51 : i32
    %76 = tpu.dynamic_rotate %74 by %c51_i32 dim 1 : vector<2x256xf32>, i32 -> vector<2x256xf32>
    %c0_28 = arith.constant 0 : index
    %c0_29 = arith.constant 0 : index
    %77 = vector.load %arg7[%c0_28, %c0_29] : memref<7x256xf32, #tpu.memory_space<vmem>>, vector<1x256xf32>
    %78 = arith.mulf %75, %77 : vector<1x256xf32>
    %c0_30 = arith.constant 0 : index
    %c0_31 = arith.constant 0 : index
    %79 = vector.load %arg8[%c0_30, %c0_31] : memref<2x49xf32, #tpu.memory_space<vmem>>, vector<2x1xf32>
    %80 = vector.broadcast %79 : vector<2x1xf32> to vector<2x256xf32>
    %81 = arith.mulf %80, %76 : vector<2x256xf32>
    %82 = vector.broadcast %78 : vector<1x256xf32> to vector<2x256xf32>
    %83 = arith.mulf %81, %82 : vector<2x256xf32>
    %c50_i32 = arith.constant 50 : i32
    %84 = tpu.dynamic_rotate %74 by %c50_i32 dim 1 : vector<2x256xf32>, i32 -> vector<2x256xf32>
    %c1 = arith.constant 1 : index
    %c0_32 = arith.constant 0 : index
    %85 = vector.load %arg7[%c1, %c0_32] : memref<7x256xf32, #tpu.memory_space<vmem>>, vector<1x256xf32>
    %86 = arith.mulf %75, %85 : vector<1x256xf32>
    %c0_33 = arith.constant 0 : index
    %c1_34 = arith.constant 1 : index
    %87 = vector.load %arg8[%c0_33, %c1_34] : memref<2x49xf32, #tpu.memory_space<vmem>>, vector<2x1xf32>
    %88 = vector.broadcast %87 : vector<2x1xf32> to vector<2x256xf32>
    %89 = arith.mulf %88, %84 : vector<2x256xf32>
    %90 = vector.broadcast %86 : vector<1x256xf32> to vector<2x256xf32>
    %91 = arith.mulf %89, %90 : vector<2x256xf32>
    %92 = arith.addf %83, %91 : vector<2x256xf32>
    %c49_i32 = arith.constant 49 : i32
    %93 = tpu.dynamic_rotate %74 by %c49_i32 dim 1 : vector<2x256xf32>, i32 -> vector<2x256xf32>
    %c2 = arith.constant 2 : index
    %c0_35 = arith.constant 0 : index
    %94 = vector.load %arg7[%c2, %c0_35] : memref<7x256xf32, #tpu.memory_space<vmem>>, vector<1x256xf32>
    %95 = arith.mulf %75, %94 : vector<1x256xf32>
    %c0_36 = arith.constant 0 : index
    %c2_37 = arith.constant 2 : index
    %96 = vector.load %arg8[%c0_36, %c2_37] : memref<2x49xf32, #tpu.memory_space<vmem>>, vector<2x1xf32>
    %97 = vector.broadcast %96 : vector<2x1xf32> to vector<2x256xf32>
    %98 = arith.mulf %97, %93 : vector<2x256xf32>
    %99 = vector.broadcast %95 : vector<1x256xf32> to vector<2x256xf32>
    %100 = arith.mulf %98, %99 : vector<2x256xf32>
    %101 = arith.addf %92, %100 : vector<2x256xf32>
    %c48_i32 = arith.constant 48 : i32
    %102 = tpu.dynamic_rotate %74 by %c48_i32 dim 1 : vector<2x256xf32>, i32 -> vector<2x256xf32>
    %c3 = arith.constant 3 : index
    %c0_38 = arith.constant 0 : index
    %103 = vector.load %arg7[%c3, %c0_38] : memref<7x256xf32, #tpu.memory_space<vmem>>, vector<1x256xf32>
    %104 = arith.mulf %75, %103 : vector<1x256xf32>
    %c0_39 = arith.constant 0 : index
    %c3_40 = arith.constant 3 : index
    %105 = vector.load %arg8[%c0_39, %c3_40] : memref<2x49xf32, #tpu.memory_space<vmem>>, vector<2x1xf32>
    %106 = vector.broadcast %105 : vector<2x1xf32> to vector<2x256xf32>
    %107 = arith.mulf %106, %102 : vector<2x256xf32>
    %108 = vector.broadcast %104 : vector<1x256xf32> to vector<2x256xf32>
    %109 = arith.mulf %107, %108 : vector<2x256xf32>
    %110 = arith.addf %101, %109 : vector<2x256xf32>
    %c47_i32 = arith.constant 47 : i32
    %111 = tpu.dynamic_rotate %74 by %c47_i32 dim 1 : vector<2x256xf32>, i32 -> vector<2x256xf32>
    %c4 = arith.constant 4 : index
    %c0_41 = arith.constant 0 : index
    %112 = vector.load %arg7[%c4, %c0_41] : memref<7x256xf32, #tpu.memory_space<vmem>>, vector<1x256xf32>
    %113 = arith.mulf %75, %112 : vector<1x256xf32>
    %c0_42 = arith.constant 0 : index
    %c4_43 = arith.constant 4 : index
    %114 = vector.load %arg8[%c0_42, %c4_43] : memref<2x49xf32, #tpu.memory_space<vmem>>, vector<2x1xf32>
    %115 = vector.broadcast %114 : vector<2x1xf32> to vector<2x256xf32>
    %116 = arith.mulf %115, %111 : vector<2x256xf32>
    %117 = vector.broadcast %113 : vector<1x256xf32> to vector<2x256xf32>
    %118 = arith.mulf %116, %117 : vector<2x256xf32>
    %119 = arith.addf %110, %118 : vector<2x256xf32>
    %c46_i32 = arith.constant 46 : i32
    %120 = tpu.dynamic_rotate %74 by %c46_i32 dim 1 : vector<2x256xf32>, i32 -> vector<2x256xf32>
    %c5 = arith.constant 5 : index
    %c0_44 = arith.constant 0 : index
    %121 = vector.load %arg7[%c5, %c0_44] : memref<7x256xf32, #tpu.memory_space<vmem>>, vector<1x256xf32>
    %122 = arith.mulf %75, %121 : vector<1x256xf32>
    %c0_45 = arith.constant 0 : index
    %c5_46 = arith.constant 5 : index
    %123 = vector.load %arg8[%c0_45, %c5_46] : memref<2x49xf32, #tpu.memory_space<vmem>>, vector<2x1xf32>
    %124 = vector.broadcast %123 : vector<2x1xf32> to vector<2x256xf32>
    %125 = arith.mulf %124, %120 : vector<2x256xf32>
    %126 = vector.broadcast %122 : vector<1x256xf32> to vector<2x256xf32>
    %127 = arith.mulf %125, %126 : vector<2x256xf32>
    %128 = arith.addf %119, %127 : vector<2x256xf32>
    %c45_i32 = arith.constant 45 : i32
    %129 = tpu.dynamic_rotate %74 by %c45_i32 dim 1 : vector<2x256xf32>, i32 -> vector<2x256xf32>
    %c6 = arith.constant 6 : index
    %c0_47 = arith.constant 0 : index
    %130 = vector.load %arg7[%c6, %c0_47] : memref<7x256xf32, #tpu.memory_space<vmem>>, vector<1x256xf32>
    %131 = arith.mulf %75, %130 : vector<1x256xf32>
    %c0_48 = arith.constant 0 : index
    %c6_49 = arith.constant 6 : index
    %132 = vector.load %arg8[%c0_48, %c6_49] : memref<2x49xf32, #tpu.memory_space<vmem>>, vector<2x1xf32>
    %133 = vector.broadcast %132 : vector<2x1xf32> to vector<2x256xf32>
    %134 = arith.mulf %133, %129 : vector<2x256xf32>
    %135 = vector.broadcast %131 : vector<1x256xf32> to vector<2x256xf32>
    %136 = arith.mulf %134, %135 : vector<2x256xf32>
    %137 = arith.addf %128, %136 : vector<2x256xf32>
    %c1_50 = arith.constant 1 : index
    %c0_51 = arith.constant 0 : index
    %138 = vector.load %arg6[%c1_50, %c0_51] : memref<7x256xf32, #tpu.memory_space<vmem>>, vector<1x256xf32>
    %c35_i32 = arith.constant 35 : i32
    %139 = tpu.dynamic_rotate %74 by %c35_i32 dim 1 : vector<2x256xf32>, i32 -> vector<2x256xf32>
    %c0_52 = arith.constant 0 : index
    %c0_53 = arith.constant 0 : index
    %140 = vector.load %arg7[%c0_52, %c0_53] : memref<7x256xf32, #tpu.memory_space<vmem>>, vector<1x256xf32>
    %141 = arith.mulf %138, %140 : vector<1x256xf32>
    %c0_54 = arith.constant 0 : index
    %c7 = arith.constant 7 : index
    %142 = vector.load %arg8[%c0_54, %c7] : memref<2x49xf32, #tpu.memory_space<vmem>>, vector<2x1xf32>
    %143 = vector.broadcast %142 : vector<2x1xf32> to vector<2x256xf32>
    %144 = arith.mulf %143, %139 : vector<2x256xf32>
    %145 = vector.broadcast %141 : vector<1x256xf32> to vector<2x256xf32>
    %146 = arith.mulf %144, %145 : vector<2x256xf32>
    %c34_i32 = arith.constant 34 : i32
    %147 = tpu.dynamic_rotate %74 by %c34_i32 dim 1 : vector<2x256xf32>, i32 -> vector<2x256xf32>
    %c1_55 = arith.constant 1 : index
    %c0_56 = arith.constant 0 : index
    %148 = vector.load %arg7[%c1_55, %c0_56] : memref<7x256xf32, #tpu.memory_space<vmem>>, vector<1x256xf32>
    %149 = arith.mulf %138, %148 : vector<1x256xf32>
    %c0_57 = arith.constant 0 : index
    %c8 = arith.constant 8 : index
    %150 = vector.load %arg8[%c0_57, %c8] : memref<2x49xf32, #tpu.memory_space<vmem>>, vector<2x1xf32>
    %151 = vector.broadcast %150 : vector<2x1xf32> to vector<2x256xf32>
    %152 = arith.mulf %151, %147 : vector<2x256xf32>
    %153 = vector.broadcast %149 : vector<1x256xf32> to vector<2x256xf32>
    %154 = arith.mulf %152, %153 : vector<2x256xf32>
    %155 = arith.addf %146, %154 : vector<2x256xf32>
    %c33_i32 = arith.constant 33 : i32
    %156 = tpu.dynamic_rotate %74 by %c33_i32 dim 1 : vector<2x256xf32>, i32 -> vector<2x256xf32>
    %c2_58 = arith.constant 2 : index
    %c0_59 = arith.constant 0 : index
    %157 = vector.load %arg7[%c2_58, %c0_59] : memref<7x256xf32, #tpu.memory_space<vmem>>, vector<1x256xf32>
    %158 = arith.mulf %138, %157 : vector<1x256xf32>
    %c0_60 = arith.constant 0 : index
    %c9 = arith.constant 9 : index
    %159 = vector.load %arg8[%c0_60, %c9] : memref<2x49xf32, #tpu.memory_space<vmem>>, vector<2x1xf32>
    %160 = vector.broadcast %159 : vector<2x1xf32> to vector<2x256xf32>
    %161 = arith.mulf %160, %156 : vector<2x256xf32>
    %162 = vector.broadcast %158 : vector<1x256xf32> to vector<2x256xf32>
    %163 = arith.mulf %161, %162 : vector<2x256xf32>
    %164 = arith.addf %155, %163 : vector<2x256xf32>
    %c32_i32 = arith.constant 32 : i32
    %165 = tpu.dynamic_rotate %74 by %c32_i32 dim 1 : vector<2x256xf32>, i32 -> vector<2x256xf32>
    %c3_61 = arith.constant 3 : index
    %c0_62 = arith.constant 0 : index
    %166 = vector.load %arg7[%c3_61, %c0_62] : memref<7x256xf32, #tpu.memory_space<vmem>>, vector<1x256xf32>
    %167 = arith.mulf %138, %166 : vector<1x256xf32>
    %c0_63 = arith.constant 0 : index
    %c10 = arith.constant 10 : index
    %168 = vector.load %arg8[%c0_63, %c10] : memref<2x49xf32, #tpu.memory_space<vmem>>, vector<2x1xf32>
    %169 = vector.broadcast %168 : vector<2x1xf32> to vector<2x256xf32>
    %170 = arith.mulf %169, %165 : vector<2x256xf32>
    %171 = vector.broadcast %167 : vector<1x256xf32> to vector<2x256xf32>
    %172 = arith.mulf %170, %171 : vector<2x256xf32>
    %173 = arith.addf %164, %172 : vector<2x256xf32>
    %c31_i32 = arith.constant 31 : i32
    %174 = tpu.dynamic_rotate %74 by %c31_i32 dim 1 : vector<2x256xf32>, i32 -> vector<2x256xf32>
    %c4_64 = arith.constant 4 : index
    %c0_65 = arith.constant 0 : index
    %175 = vector.load %arg7[%c4_64, %c0_65] : memref<7x256xf32, #tpu.memory_space<vmem>>, vector<1x256xf32>
    %176 = arith.mulf %138, %175 : vector<1x256xf32>
    %c0_66 = arith.constant 0 : index
    %c11 = arith.constant 11 : index
    %177 = vector.load %arg8[%c0_66, %c11] : memref<2x49xf32, #tpu.memory_space<vmem>>, vector<2x1xf32>
    %178 = vector.broadcast %177 : vector<2x1xf32> to vector<2x256xf32>
    %179 = arith.mulf %178, %174 : vector<2x256xf32>
    %180 = vector.broadcast %176 : vector<1x256xf32> to vector<2x256xf32>
    %181 = arith.mulf %179, %180 : vector<2x256xf32>
    %182 = arith.addf %173, %181 : vector<2x256xf32>
    %c30_i32 = arith.constant 30 : i32
    %183 = tpu.dynamic_rotate %74 by %c30_i32 dim 1 : vector<2x256xf32>, i32 -> vector<2x256xf32>
    %c5_67 = arith.constant 5 : index
    %c0_68 = arith.constant 0 : index
    %184 = vector.load %arg7[%c5_67, %c0_68] : memref<7x256xf32, #tpu.memory_space<vmem>>, vector<1x256xf32>
    %185 = arith.mulf %138, %184 : vector<1x256xf32>
    %c0_69 = arith.constant 0 : index
    %c12 = arith.constant 12 : index
    %186 = vector.load %arg8[%c0_69, %c12] : memref<2x49xf32, #tpu.memory_space<vmem>>, vector<2x1xf32>
    %187 = vector.broadcast %186 : vector<2x1xf32> to vector<2x256xf32>
    %188 = arith.mulf %187, %183 : vector<2x256xf32>
    %189 = vector.broadcast %185 : vector<1x256xf32> to vector<2x256xf32>
    %190 = arith.mulf %188, %189 : vector<2x256xf32>
    %191 = arith.addf %182, %190 : vector<2x256xf32>
    %c29_i32 = arith.constant 29 : i32
    %192 = tpu.dynamic_rotate %74 by %c29_i32 dim 1 : vector<2x256xf32>, i32 -> vector<2x256xf32>
    %c6_70 = arith.constant 6 : index
    %c0_71 = arith.constant 0 : index
    %193 = vector.load %arg7[%c6_70, %c0_71] : memref<7x256xf32, #tpu.memory_space<vmem>>, vector<1x256xf32>
    %194 = arith.mulf %138, %193 : vector<1x256xf32>
    %c0_72 = arith.constant 0 : index
    %c13 = arith.constant 13 : index
    %195 = vector.load %arg8[%c0_72, %c13] : memref<2x49xf32, #tpu.memory_space<vmem>>, vector<2x1xf32>
    %196 = vector.broadcast %195 : vector<2x1xf32> to vector<2x256xf32>
    %197 = arith.mulf %196, %192 : vector<2x256xf32>
    %198 = vector.broadcast %194 : vector<1x256xf32> to vector<2x256xf32>
    %199 = arith.mulf %197, %198 : vector<2x256xf32>
    %200 = arith.addf %191, %199 : vector<2x256xf32>
    %c2_73 = arith.constant 2 : index
    %c0_74 = arith.constant 0 : index
    %201 = vector.load %arg6[%c2_73, %c0_74] : memref<7x256xf32, #tpu.memory_space<vmem>>, vector<1x256xf32>
    %c19_i32 = arith.constant 19 : i32
    %202 = tpu.dynamic_rotate %74 by %c19_i32 dim 1 : vector<2x256xf32>, i32 -> vector<2x256xf32>
    %c0_75 = arith.constant 0 : index
    %c0_76 = arith.constant 0 : index
    %203 = vector.load %arg7[%c0_75, %c0_76] : memref<7x256xf32, #tpu.memory_space<vmem>>, vector<1x256xf32>
    %204 = arith.mulf %201, %203 : vector<1x256xf32>
    %c0_77 = arith.constant 0 : index
    %c14 = arith.constant 14 : index
    %205 = vector.load %arg8[%c0_77, %c14] : memref<2x49xf32, #tpu.memory_space<vmem>>, vector<2x1xf32>
    %206 = vector.broadcast %205 : vector<2x1xf32> to vector<2x256xf32>
    %207 = arith.mulf %206, %202 : vector<2x256xf32>
    %208 = vector.broadcast %204 : vector<1x256xf32> to vector<2x256xf32>
    %209 = arith.mulf %207, %208 : vector<2x256xf32>
    %c18_i32 = arith.constant 18 : i32
    %210 = tpu.dynamic_rotate %74 by %c18_i32 dim 1 : vector<2x256xf32>, i32 -> vector<2x256xf32>
    %c1_78 = arith.constant 1 : index
    %c0_79 = arith.constant 0 : index
    %211 = vector.load %arg7[%c1_78, %c0_79] : memref<7x256xf32, #tpu.memory_space<vmem>>, vector<1x256xf32>
    %212 = arith.mulf %201, %211 : vector<1x256xf32>
    %c0_80 = arith.constant 0 : index
    %c15 = arith.constant 15 : index
    %213 = vector.load %arg8[%c0_80, %c15] : memref<2x49xf32, #tpu.memory_space<vmem>>, vector<2x1xf32>
    %214 = vector.broadcast %213 : vector<2x1xf32> to vector<2x256xf32>
    %215 = arith.mulf %214, %210 : vector<2x256xf32>
    %216 = vector.broadcast %212 : vector<1x256xf32> to vector<2x256xf32>
    %217 = arith.mulf %215, %216 : vector<2x256xf32>
    %218 = arith.addf %209, %217 : vector<2x256xf32>
    %c17_i32 = arith.constant 17 : i32
    %219 = tpu.dynamic_rotate %74 by %c17_i32 dim 1 : vector<2x256xf32>, i32 -> vector<2x256xf32>
    %c2_81 = arith.constant 2 : index
    %c0_82 = arith.constant 0 : index
    %220 = vector.load %arg7[%c2_81, %c0_82] : memref<7x256xf32, #tpu.memory_space<vmem>>, vector<1x256xf32>
    %221 = arith.mulf %201, %220 : vector<1x256xf32>
    %c0_83 = arith.constant 0 : index
    %c16 = arith.constant 16 : index
    %222 = vector.load %arg8[%c0_83, %c16] : memref<2x49xf32, #tpu.memory_space<vmem>>, vector<2x1xf32>
    %223 = vector.broadcast %222 : vector<2x1xf32> to vector<2x256xf32>
    %224 = arith.mulf %223, %219 : vector<2x256xf32>
    %225 = vector.broadcast %221 : vector<1x256xf32> to vector<2x256xf32>
    %226 = arith.mulf %224, %225 : vector<2x256xf32>
    %227 = arith.addf %218, %226 : vector<2x256xf32>
    %c16_i32 = arith.constant 16 : i32
    %228 = tpu.dynamic_rotate %74 by %c16_i32 dim 1 : vector<2x256xf32>, i32 -> vector<2x256xf32>
    %c3_84 = arith.constant 3 : index
    %c0_85 = arith.constant 0 : index
    %229 = vector.load %arg7[%c3_84, %c0_85] : memref<7x256xf32, #tpu.memory_space<vmem>>, vector<1x256xf32>
    %230 = arith.mulf %201, %229 : vector<1x256xf32>
    %c0_86 = arith.constant 0 : index
    %c17 = arith.constant 17 : index
    %231 = vector.load %arg8[%c0_86, %c17] : memref<2x49xf32, #tpu.memory_space<vmem>>, vector<2x1xf32>
    %232 = vector.broadcast %231 : vector<2x1xf32> to vector<2x256xf32>
    %233 = arith.mulf %232, %228 : vector<2x256xf32>
    %234 = vector.broadcast %230 : vector<1x256xf32> to vector<2x256xf32>
    %235 = arith.mulf %233, %234 : vector<2x256xf32>
    %236 = arith.addf %227, %235 : vector<2x256xf32>
    %c15_i32 = arith.constant 15 : i32
    %237 = tpu.dynamic_rotate %74 by %c15_i32 dim 1 : vector<2x256xf32>, i32 -> vector<2x256xf32>
    %c4_87 = arith.constant 4 : index
    %c0_88 = arith.constant 0 : index
    %238 = vector.load %arg7[%c4_87, %c0_88] : memref<7x256xf32, #tpu.memory_space<vmem>>, vector<1x256xf32>
    %239 = arith.mulf %201, %238 : vector<1x256xf32>
    %c0_89 = arith.constant 0 : index
    %c18 = arith.constant 18 : index
    %240 = vector.load %arg8[%c0_89, %c18] : memref<2x49xf32, #tpu.memory_space<vmem>>, vector<2x1xf32>
    %241 = vector.broadcast %240 : vector<2x1xf32> to vector<2x256xf32>
    %242 = arith.mulf %241, %237 : vector<2x256xf32>
    %243 = vector.broadcast %239 : vector<1x256xf32> to vector<2x256xf32>
    %244 = arith.mulf %242, %243 : vector<2x256xf32>
    %245 = arith.addf %236, %244 : vector<2x256xf32>
    %c14_i32 = arith.constant 14 : i32
    %246 = tpu.dynamic_rotate %74 by %c14_i32 dim 1 : vector<2x256xf32>, i32 -> vector<2x256xf32>
    %c5_90 = arith.constant 5 : index
    %c0_91 = arith.constant 0 : index
    %247 = vector.load %arg7[%c5_90, %c0_91] : memref<7x256xf32, #tpu.memory_space<vmem>>, vector<1x256xf32>
    %248 = arith.mulf %201, %247 : vector<1x256xf32>
    %c0_92 = arith.constant 0 : index
    %c19 = arith.constant 19 : index
    %249 = vector.load %arg8[%c0_92, %c19] : memref<2x49xf32, #tpu.memory_space<vmem>>, vector<2x1xf32>
    %250 = vector.broadcast %249 : vector<2x1xf32> to vector<2x256xf32>
    %251 = arith.mulf %250, %246 : vector<2x256xf32>
    %252 = vector.broadcast %248 : vector<1x256xf32> to vector<2x256xf32>
    %253 = arith.mulf %251, %252 : vector<2x256xf32>
    %254 = arith.addf %245, %253 : vector<2x256xf32>
    %c13_i32 = arith.constant 13 : i32
    %255 = tpu.dynamic_rotate %74 by %c13_i32 dim 1 : vector<2x256xf32>, i32 -> vector<2x256xf32>
    %c6_93 = arith.constant 6 : index
    %c0_94 = arith.constant 0 : index
    %256 = vector.load %arg7[%c6_93, %c0_94] : memref<7x256xf32, #tpu.memory_space<vmem>>, vector<1x256xf32>
    %257 = arith.mulf %201, %256 : vector<1x256xf32>
    %c0_95 = arith.constant 0 : index
    %c20 = arith.constant 20 : index
    %258 = vector.load %arg8[%c0_95, %c20] : memref<2x49xf32, #tpu.memory_space<vmem>>, vector<2x1xf32>
    %259 = vector.broadcast %258 : vector<2x1xf32> to vector<2x256xf32>
    %260 = arith.mulf %259, %255 : vector<2x256xf32>
    %261 = vector.broadcast %257 : vector<1x256xf32> to vector<2x256xf32>
    %262 = arith.mulf %260, %261 : vector<2x256xf32>
    %263 = arith.addf %254, %262 : vector<2x256xf32>
    %c3_96 = arith.constant 3 : index
    %c0_97 = arith.constant 0 : index
    %264 = vector.load %arg6[%c3_96, %c0_97] : memref<7x256xf32, #tpu.memory_space<vmem>>, vector<1x256xf32>
    %c3_i32 = arith.constant 3 : i32
    %265 = tpu.dynamic_rotate %74 by %c3_i32 dim 1 : vector<2x256xf32>, i32 -> vector<2x256xf32>
    %c0_98 = arith.constant 0 : index
    %c0_99 = arith.constant 0 : index
    %266 = vector.load %arg7[%c0_98, %c0_99] : memref<7x256xf32, #tpu.memory_space<vmem>>, vector<1x256xf32>
    %267 = arith.mulf %264, %266 : vector<1x256xf32>
    %c0_100 = arith.constant 0 : index
    %c21 = arith.constant 21 : index
    %268 = vector.load %arg8[%c0_100, %c21] : memref<2x49xf32, #tpu.memory_space<vmem>>, vector<2x1xf32>
    %269 = vector.broadcast %268 : vector<2x1xf32> to vector<2x256xf32>
    %270 = arith.mulf %269, %265 : vector<2x256xf32>
    %271 = vector.broadcast %267 : vector<1x256xf32> to vector<2x256xf32>
    %272 = arith.mulf %270, %271 : vector<2x256xf32>
    %c2_i32 = arith.constant 2 : i32
    %273 = tpu.dynamic_rotate %74 by %c2_i32 dim 1 : vector<2x256xf32>, i32 -> vector<2x256xf32>
    %c1_101 = arith.constant 1 : index
    %c0_102 = arith.constant 0 : index
    %274 = vector.load %arg7[%c1_101, %c0_102] : memref<7x256xf32, #tpu.memory_space<vmem>>, vector<1x256xf32>
    %275 = arith.mulf %264, %274 : vector<1x256xf32>
    %c0_103 = arith.constant 0 : index
    %c22 = arith.constant 22 : index
    %276 = vector.load %arg8[%c0_103, %c22] : memref<2x49xf32, #tpu.memory_space<vmem>>, vector<2x1xf32>
    %277 = vector.broadcast %276 : vector<2x1xf32> to vector<2x256xf32>
    %278 = arith.mulf %277, %273 : vector<2x256xf32>
    %279 = vector.broadcast %275 : vector<1x256xf32> to vector<2x256xf32>
    %280 = arith.mulf %278, %279 : vector<2x256xf32>
    %281 = arith.addf %272, %280 : vector<2x256xf32>
    %c1_i32 = arith.constant 1 : i32
    %282 = tpu.dynamic_rotate %74 by %c1_i32 dim 1 : vector<2x256xf32>, i32 -> vector<2x256xf32>
    %c2_104 = arith.constant 2 : index
    %c0_105 = arith.constant 0 : index
    %283 = vector.load %arg7[%c2_104, %c0_105] : memref<7x256xf32, #tpu.memory_space<vmem>>, vector<1x256xf32>
    %284 = arith.mulf %264, %283 : vector<1x256xf32>
    %c0_106 = arith.constant 0 : index
    %c23 = arith.constant 23 : index
    %285 = vector.load %arg8[%c0_106, %c23] : memref<2x49xf32, #tpu.memory_space<vmem>>, vector<2x1xf32>
    %286 = vector.broadcast %285 : vector<2x1xf32> to vector<2x256xf32>
    %287 = arith.mulf %286, %282 : vector<2x256xf32>
    %288 = vector.broadcast %284 : vector<1x256xf32> to vector<2x256xf32>
    %289 = arith.mulf %287, %288 : vector<2x256xf32>
    %290 = arith.addf %281, %289 : vector<2x256xf32>
    %c3_107 = arith.constant 3 : index
    %c0_108 = arith.constant 0 : index
    %291 = vector.load %arg7[%c3_107, %c0_108] : memref<7x256xf32, #tpu.memory_space<vmem>>, vector<1x256xf32>
    %292 = arith.mulf %264, %291 : vector<1x256xf32>
    %c0_109 = arith.constant 0 : index
    %c24 = arith.constant 24 : index
    %293 = vector.load %arg8[%c0_109, %c24] : memref<2x49xf32, #tpu.memory_space<vmem>>, vector<2x1xf32>
    %294 = vector.broadcast %293 : vector<2x1xf32> to vector<2x256xf32>
    %295 = arith.mulf %294, %74 : vector<2x256xf32>
    %296 = vector.broadcast %292 : vector<1x256xf32> to vector<2x256xf32>
    %297 = arith.mulf %295, %296 : vector<2x256xf32>
    %298 = arith.addf %290, %297 : vector<2x256xf32>
    %c255_i32 = arith.constant 255 : i32
    %299 = tpu.dynamic_rotate %74 by %c255_i32 dim 1 : vector<2x256xf32>, i32 -> vector<2x256xf32>
    %c4_110 = arith.constant 4 : index
    %c0_111 = arith.constant 0 : index
    %300 = vector.load %arg7[%c4_110, %c0_111] : memref<7x256xf32, #tpu.memory_space<vmem>>, vector<1x256xf32>
    %301 = arith.mulf %264, %300 : vector<1x256xf32>
    %c0_112 = arith.constant 0 : index
    %c25 = arith.constant 25 : index
    %302 = vector.load %arg8[%c0_112, %c25] : memref<2x49xf32, #tpu.memory_space<vmem>>, vector<2x1xf32>
    %303 = vector.broadcast %302 : vector<2x1xf32> to vector<2x256xf32>
    %304 = arith.mulf %303, %299 : vector<2x256xf32>
    %305 = vector.broadcast %301 : vector<1x256xf32> to vector<2x256xf32>
    %306 = arith.mulf %304, %305 : vector<2x256xf32>
    %307 = arith.addf %298, %306 : vector<2x256xf32>
    %c254_i32 = arith.constant 254 : i32
    %308 = tpu.dynamic_rotate %74 by %c254_i32 dim 1 : vector<2x256xf32>, i32 -> vector<2x256xf32>
    %c5_113 = arith.constant 5 : index
    %c0_114 = arith.constant 0 : index
    %309 = vector.load %arg7[%c5_113, %c0_114] : memref<7x256xf32, #tpu.memory_space<vmem>>, vector<1x256xf32>
    %310 = arith.mulf %264, %309 : vector<1x256xf32>
    %c0_115 = arith.constant 0 : index
    %c26 = arith.constant 26 : index
    %311 = vector.load %arg8[%c0_115, %c26] : memref<2x49xf32, #tpu.memory_space<vmem>>, vector<2x1xf32>
    %312 = vector.broadcast %311 : vector<2x1xf32> to vector<2x256xf32>
    %313 = arith.mulf %312, %308 : vector<2x256xf32>
    %314 = vector.broadcast %310 : vector<1x256xf32> to vector<2x256xf32>
    %315 = arith.mulf %313, %314 : vector<2x256xf32>
    %316 = arith.addf %307, %315 : vector<2x256xf32>
    %c253_i32 = arith.constant 253 : i32
    %317 = tpu.dynamic_rotate %74 by %c253_i32 dim 1 : vector<2x256xf32>, i32 -> vector<2x256xf32>
    %c6_116 = arith.constant 6 : index
    %c0_117 = arith.constant 0 : index
    %318 = vector.load %arg7[%c6_116, %c0_117] : memref<7x256xf32, #tpu.memory_space<vmem>>, vector<1x256xf32>
    %319 = arith.mulf %264, %318 : vector<1x256xf32>
    %c0_118 = arith.constant 0 : index
    %c27 = arith.constant 27 : index
    %320 = vector.load %arg8[%c0_118, %c27] : memref<2x49xf32, #tpu.memory_space<vmem>>, vector<2x1xf32>
    %321 = vector.broadcast %320 : vector<2x1xf32> to vector<2x256xf32>
    %322 = arith.mulf %321, %317 : vector<2x256xf32>
    %323 = vector.broadcast %319 : vector<1x256xf32> to vector<2x256xf32>
    %324 = arith.mulf %322, %323 : vector<2x256xf32>
    %325 = arith.addf %316, %324 : vector<2x256xf32>
    %c4_119 = arith.constant 4 : index
    %c0_120 = arith.constant 0 : index
    %326 = vector.load %arg6[%c4_119, %c0_120] : memref<7x256xf32, #tpu.memory_space<vmem>>, vector<1x256xf32>
    %c243_i32 = arith.constant 243 : i32
    %327 = tpu.dynamic_rotate %74 by %c243_i32 dim 1 : vector<2x256xf32>, i32 -> vector<2x256xf32>
    %c0_121 = arith.constant 0 : index
    %c0_122 = arith.constant 0 : index
    %328 = vector.load %arg7[%c0_121, %c0_122] : memref<7x256xf32, #tpu.memory_space<vmem>>, vector<1x256xf32>
    %329 = arith.mulf %326, %328 : vector<1x256xf32>
    %c0_123 = arith.constant 0 : index
    %c28 = arith.constant 28 : index
    %330 = vector.load %arg8[%c0_123, %c28] : memref<2x49xf32, #tpu.memory_space<vmem>>, vector<2x1xf32>
    %331 = vector.broadcast %330 : vector<2x1xf32> to vector<2x256xf32>
    %332 = arith.mulf %331, %327 : vector<2x256xf32>
    %333 = vector.broadcast %329 : vector<1x256xf32> to vector<2x256xf32>
    %334 = arith.mulf %332, %333 : vector<2x256xf32>
    %c242_i32 = arith.constant 242 : i32
    %335 = tpu.dynamic_rotate %74 by %c242_i32 dim 1 : vector<2x256xf32>, i32 -> vector<2x256xf32>
    %c1_124 = arith.constant 1 : index
    %c0_125 = arith.constant 0 : index
    %336 = vector.load %arg7[%c1_124, %c0_125] : memref<7x256xf32, #tpu.memory_space<vmem>>, vector<1x256xf32>
    %337 = arith.mulf %326, %336 : vector<1x256xf32>
    %c0_126 = arith.constant 0 : index
    %c29 = arith.constant 29 : index
    %338 = vector.load %arg8[%c0_126, %c29] : memref<2x49xf32, #tpu.memory_space<vmem>>, vector<2x1xf32>
    %339 = vector.broadcast %338 : vector<2x1xf32> to vector<2x256xf32>
    %340 = arith.mulf %339, %335 : vector<2x256xf32>
    %341 = vector.broadcast %337 : vector<1x256xf32> to vector<2x256xf32>
    %342 = arith.mulf %340, %341 : vector<2x256xf32>
    %343 = arith.addf %334, %342 : vector<2x256xf32>
    %c241_i32 = arith.constant 241 : i32
    %344 = tpu.dynamic_rotate %74 by %c241_i32 dim 1 : vector<2x256xf32>, i32 -> vector<2x256xf32>
    %c2_127 = arith.constant 2 : index
    %c0_128 = arith.constant 0 : index
    %345 = vector.load %arg7[%c2_127, %c0_128] : memref<7x256xf32, #tpu.memory_space<vmem>>, vector<1x256xf32>
    %346 = arith.mulf %326, %345 : vector<1x256xf32>
    %c0_129 = arith.constant 0 : index
    %c30 = arith.constant 30 : index
    %347 = vector.load %arg8[%c0_129, %c30] : memref<2x49xf32, #tpu.memory_space<vmem>>, vector<2x1xf32>
    %348 = vector.broadcast %347 : vector<2x1xf32> to vector<2x256xf32>
    %349 = arith.mulf %348, %344 : vector<2x256xf32>
    %350 = vector.broadcast %346 : vector<1x256xf32> to vector<2x256xf32>
    %351 = arith.mulf %349, %350 : vector<2x256xf32>
    %352 = arith.addf %343, %351 : vector<2x256xf32>
    %c240_i32 = arith.constant 240 : i32
    %353 = tpu.dynamic_rotate %74 by %c240_i32 dim 1 : vector<2x256xf32>, i32 -> vector<2x256xf32>
    %c3_130 = arith.constant 3 : index
    %c0_131 = arith.constant 0 : index
    %354 = vector.load %arg7[%c3_130, %c0_131] : memref<7x256xf32, #tpu.memory_space<vmem>>, vector<1x256xf32>
    %355 = arith.mulf %326, %354 : vector<1x256xf32>
    %c0_132 = arith.constant 0 : index
    %c31 = arith.constant 31 : index
    %356 = vector.load %arg8[%c0_132, %c31] : memref<2x49xf32, #tpu.memory_space<vmem>>, vector<2x1xf32>
    %357 = vector.broadcast %356 : vector<2x1xf32> to vector<2x256xf32>
    %358 = arith.mulf %357, %353 : vector<2x256xf32>
    %359 = vector.broadcast %355 : vector<1x256xf32> to vector<2x256xf32>
    %360 = arith.mulf %358, %359 : vector<2x256xf32>
    %361 = arith.addf %352, %360 : vector<2x256xf32>
    %c239_i32 = arith.constant 239 : i32
    %362 = tpu.dynamic_rotate %74 by %c239_i32 dim 1 : vector<2x256xf32>, i32 -> vector<2x256xf32>
    %c4_133 = arith.constant 4 : index
    %c0_134 = arith.constant 0 : index
    %363 = vector.load %arg7[%c4_133, %c0_134] : memref<7x256xf32, #tpu.memory_space<vmem>>, vector<1x256xf32>
    %364 = arith.mulf %326, %363 : vector<1x256xf32>
    %c0_135 = arith.constant 0 : index
    %c32 = arith.constant 32 : index
    %365 = vector.load %arg8[%c0_135, %c32] : memref<2x49xf32, #tpu.memory_space<vmem>>, vector<2x1xf32>
    %366 = vector.broadcast %365 : vector<2x1xf32> to vector<2x256xf32>
    %367 = arith.mulf %366, %362 : vector<2x256xf32>
    %368 = vector.broadcast %364 : vector<1x256xf32> to vector<2x256xf32>
    %369 = arith.mulf %367, %368 : vector<2x256xf32>
    %370 = arith.addf %361, %369 : vector<2x256xf32>
    %c238_i32 = arith.constant 238 : i32
    %371 = tpu.dynamic_rotate %74 by %c238_i32 dim 1 : vector<2x256xf32>, i32 -> vector<2x256xf32>
    %c5_136 = arith.constant 5 : index
    %c0_137 = arith.constant 0 : index
    %372 = vector.load %arg7[%c5_136, %c0_137] : memref<7x256xf32, #tpu.memory_space<vmem>>, vector<1x256xf32>
    %373 = arith.mulf %326, %372 : vector<1x256xf32>
    %c0_138 = arith.constant 0 : index
    %c33 = arith.constant 33 : index
    %374 = vector.load %arg8[%c0_138, %c33] : memref<2x49xf32, #tpu.memory_space<vmem>>, vector<2x1xf32>
    %375 = vector.broadcast %374 : vector<2x1xf32> to vector<2x256xf32>
    %376 = arith.mulf %375, %371 : vector<2x256xf32>
    %377 = vector.broadcast %373 : vector<1x256xf32> to vector<2x256xf32>
    %378 = arith.mulf %376, %377 : vector<2x256xf32>
    %379 = arith.addf %370, %378 : vector<2x256xf32>
    %c237_i32 = arith.constant 237 : i32
    %380 = tpu.dynamic_rotate %74 by %c237_i32 dim 1 : vector<2x256xf32>, i32 -> vector<2x256xf32>
    %c6_139 = arith.constant 6 : index
    %c0_140 = arith.constant 0 : index
    %381 = vector.load %arg7[%c6_139, %c0_140] : memref<7x256xf32, #tpu.memory_space<vmem>>, vector<1x256xf32>
    %382 = arith.mulf %326, %381 : vector<1x256xf32>
    %c0_141 = arith.constant 0 : index
    %c34 = arith.constant 34 : index
    %383 = vector.load %arg8[%c0_141, %c34] : memref<2x49xf32, #tpu.memory_space<vmem>>, vector<2x1xf32>
    %384 = vector.broadcast %383 : vector<2x1xf32> to vector<2x256xf32>
    %385 = arith.mulf %384, %380 : vector<2x256xf32>
    %386 = vector.broadcast %382 : vector<1x256xf32> to vector<2x256xf32>
    %387 = arith.mulf %385, %386 : vector<2x256xf32>
    %388 = arith.addf %379, %387 : vector<2x256xf32>
    %c5_142 = arith.constant 5 : index
    %c0_143 = arith.constant 0 : index
    %389 = vector.load %arg6[%c5_142, %c0_143] : memref<7x256xf32, #tpu.memory_space<vmem>>, vector<1x256xf32>
    %c227_i32 = arith.constant 227 : i32
    %390 = tpu.dynamic_rotate %74 by %c227_i32 dim 1 : vector<2x256xf32>, i32 -> vector<2x256xf32>
    %c0_144 = arith.constant 0 : index
    %c0_145 = arith.constant 0 : index
    %391 = vector.load %arg7[%c0_144, %c0_145] : memref<7x256xf32, #tpu.memory_space<vmem>>, vector<1x256xf32>
    %392 = arith.mulf %389, %391 : vector<1x256xf32>
    %c0_146 = arith.constant 0 : index
    %c35 = arith.constant 35 : index
    %393 = vector.load %arg8[%c0_146, %c35] : memref<2x49xf32, #tpu.memory_space<vmem>>, vector<2x1xf32>
    %394 = vector.broadcast %393 : vector<2x1xf32> to vector<2x256xf32>
    %395 = arith.mulf %394, %390 : vector<2x256xf32>
    %396 = vector.broadcast %392 : vector<1x256xf32> to vector<2x256xf32>
    %397 = arith.mulf %395, %396 : vector<2x256xf32>
    %c226_i32 = arith.constant 226 : i32
    %398 = tpu.dynamic_rotate %74 by %c226_i32 dim 1 : vector<2x256xf32>, i32 -> vector<2x256xf32>
    %c1_147 = arith.constant 1 : index
    %c0_148 = arith.constant 0 : index
    %399 = vector.load %arg7[%c1_147, %c0_148] : memref<7x256xf32, #tpu.memory_space<vmem>>, vector<1x256xf32>
    %400 = arith.mulf %389, %399 : vector<1x256xf32>
    %c0_149 = arith.constant 0 : index
    %c36 = arith.constant 36 : index
    %401 = vector.load %arg8[%c0_149, %c36] : memref<2x49xf32, #tpu.memory_space<vmem>>, vector<2x1xf32>
    %402 = vector.broadcast %401 : vector<2x1xf32> to vector<2x256xf32>
    %403 = arith.mulf %402, %398 : vector<2x256xf32>
    %404 = vector.broadcast %400 : vector<1x256xf32> to vector<2x256xf32>
    %405 = arith.mulf %403, %404 : vector<2x256xf32>
    %406 = arith.addf %397, %405 : vector<2x256xf32>
    %c225_i32 = arith.constant 225 : i32
    %407 = tpu.dynamic_rotate %74 by %c225_i32 dim 1 : vector<2x256xf32>, i32 -> vector<2x256xf32>
    %c2_150 = arith.constant 2 : index
    %c0_151 = arith.constant 0 : index
    %408 = vector.load %arg7[%c2_150, %c0_151] : memref<7x256xf32, #tpu.memory_space<vmem>>, vector<1x256xf32>
    %409 = arith.mulf %389, %408 : vector<1x256xf32>
    %c0_152 = arith.constant 0 : index
    %c37 = arith.constant 37 : index
    %410 = vector.load %arg8[%c0_152, %c37] : memref<2x49xf32, #tpu.memory_space<vmem>>, vector<2x1xf32>
    %411 = vector.broadcast %410 : vector<2x1xf32> to vector<2x256xf32>
    %412 = arith.mulf %411, %407 : vector<2x256xf32>
    %413 = vector.broadcast %409 : vector<1x256xf32> to vector<2x256xf32>
    %414 = arith.mulf %412, %413 : vector<2x256xf32>
    %415 = arith.addf %406, %414 : vector<2x256xf32>
    %c224_i32 = arith.constant 224 : i32
    %416 = tpu.dynamic_rotate %74 by %c224_i32 dim 1 : vector<2x256xf32>, i32 -> vector<2x256xf32>
    %c3_153 = arith.constant 3 : index
    %c0_154 = arith.constant 0 : index
    %417 = vector.load %arg7[%c3_153, %c0_154] : memref<7x256xf32, #tpu.memory_space<vmem>>, vector<1x256xf32>
    %418 = arith.mulf %389, %417 : vector<1x256xf32>
    %c0_155 = arith.constant 0 : index
    %c38 = arith.constant 38 : index
    %419 = vector.load %arg8[%c0_155, %c38] : memref<2x49xf32, #tpu.memory_space<vmem>>, vector<2x1xf32>
    %420 = vector.broadcast %419 : vector<2x1xf32> to vector<2x256xf32>
    %421 = arith.mulf %420, %416 : vector<2x256xf32>
    %422 = vector.broadcast %418 : vector<1x256xf32> to vector<2x256xf32>
    %423 = arith.mulf %421, %422 : vector<2x256xf32>
    %424 = arith.addf %415, %423 : vector<2x256xf32>
    %c223_i32 = arith.constant 223 : i32
    %425 = tpu.dynamic_rotate %74 by %c223_i32 dim 1 : vector<2x256xf32>, i32 -> vector<2x256xf32>
    %c4_156 = arith.constant 4 : index
    %c0_157 = arith.constant 0 : index
    %426 = vector.load %arg7[%c4_156, %c0_157] : memref<7x256xf32, #tpu.memory_space<vmem>>, vector<1x256xf32>
    %427 = arith.mulf %389, %426 : vector<1x256xf32>
    %c0_158 = arith.constant 0 : index
    %c39 = arith.constant 39 : index
    %428 = vector.load %arg8[%c0_158, %c39] : memref<2x49xf32, #tpu.memory_space<vmem>>, vector<2x1xf32>
    %429 = vector.broadcast %428 : vector<2x1xf32> to vector<2x256xf32>
    %430 = arith.mulf %429, %425 : vector<2x256xf32>
    %431 = vector.broadcast %427 : vector<1x256xf32> to vector<2x256xf32>
    %432 = arith.mulf %430, %431 : vector<2x256xf32>
    %433 = arith.addf %424, %432 : vector<2x256xf32>
    %c222_i32 = arith.constant 222 : i32
    %434 = tpu.dynamic_rotate %74 by %c222_i32 dim 1 : vector<2x256xf32>, i32 -> vector<2x256xf32>
    %c5_159 = arith.constant 5 : index
    %c0_160 = arith.constant 0 : index
    %435 = vector.load %arg7[%c5_159, %c0_160] : memref<7x256xf32, #tpu.memory_space<vmem>>, vector<1x256xf32>
    %436 = arith.mulf %389, %435 : vector<1x256xf32>
    %c0_161 = arith.constant 0 : index
    %c40 = arith.constant 40 : index
    %437 = vector.load %arg8[%c0_161, %c40] : memref<2x49xf32, #tpu.memory_space<vmem>>, vector<2x1xf32>
    %438 = vector.broadcast %437 : vector<2x1xf32> to vector<2x256xf32>
    %439 = arith.mulf %438, %434 : vector<2x256xf32>
    %440 = vector.broadcast %436 : vector<1x256xf32> to vector<2x256xf32>
    %441 = arith.mulf %439, %440 : vector<2x256xf32>
    %442 = arith.addf %433, %441 : vector<2x256xf32>
    %c221_i32 = arith.constant 221 : i32
    %443 = tpu.dynamic_rotate %74 by %c221_i32 dim 1 : vector<2x256xf32>, i32 -> vector<2x256xf32>
    %c6_162 = arith.constant 6 : index
    %c0_163 = arith.constant 0 : index
    %444 = vector.load %arg7[%c6_162, %c0_163] : memref<7x256xf32, #tpu.memory_space<vmem>>, vector<1x256xf32>
    %445 = arith.mulf %389, %444 : vector<1x256xf32>
    %c0_164 = arith.constant 0 : index
    %c41 = arith.constant 41 : index
    %446 = vector.load %arg8[%c0_164, %c41] : memref<2x49xf32, #tpu.memory_space<vmem>>, vector<2x1xf32>
    %447 = vector.broadcast %446 : vector<2x1xf32> to vector<2x256xf32>
    %448 = arith.mulf %447, %443 : vector<2x256xf32>
    %449 = vector.broadcast %445 : vector<1x256xf32> to vector<2x256xf32>
    %450 = arith.mulf %448, %449 : vector<2x256xf32>
    %451 = arith.addf %442, %450 : vector<2x256xf32>
    %c6_165 = arith.constant 6 : index
    %c0_166 = arith.constant 0 : index
    %452 = vector.load %arg6[%c6_165, %c0_166] : memref<7x256xf32, #tpu.memory_space<vmem>>, vector<1x256xf32>
    %c211_i32 = arith.constant 211 : i32
    %453 = tpu.dynamic_rotate %74 by %c211_i32 dim 1 : vector<2x256xf32>, i32 -> vector<2x256xf32>
    %c0_167 = arith.constant 0 : index
    %c0_168 = arith.constant 0 : index
    %454 = vector.load %arg7[%c0_167, %c0_168] : memref<7x256xf32, #tpu.memory_space<vmem>>, vector<1x256xf32>
    %455 = arith.mulf %452, %454 : vector<1x256xf32>
    %c0_169 = arith.constant 0 : index
    %c42 = arith.constant 42 : index
    %456 = vector.load %arg8[%c0_169, %c42] : memref<2x49xf32, #tpu.memory_space<vmem>>, vector<2x1xf32>
    %457 = vector.broadcast %456 : vector<2x1xf32> to vector<2x256xf32>
    %458 = arith.mulf %457, %453 : vector<2x256xf32>
    %459 = vector.broadcast %455 : vector<1x256xf32> to vector<2x256xf32>
    %460 = arith.mulf %458, %459 : vector<2x256xf32>
    %c210_i32 = arith.constant 210 : i32
    %461 = tpu.dynamic_rotate %74 by %c210_i32 dim 1 : vector<2x256xf32>, i32 -> vector<2x256xf32>
    %c1_170 = arith.constant 1 : index
    %c0_171 = arith.constant 0 : index
    %462 = vector.load %arg7[%c1_170, %c0_171] : memref<7x256xf32, #tpu.memory_space<vmem>>, vector<1x256xf32>
    %463 = arith.mulf %452, %462 : vector<1x256xf32>
    %c0_172 = arith.constant 0 : index
    %c43 = arith.constant 43 : index
    %464 = vector.load %arg8[%c0_172, %c43] : memref<2x49xf32, #tpu.memory_space<vmem>>, vector<2x1xf32>
    %465 = vector.broadcast %464 : vector<2x1xf32> to vector<2x256xf32>
    %466 = arith.mulf %465, %461 : vector<2x256xf32>
    %467 = vector.broadcast %463 : vector<1x256xf32> to vector<2x256xf32>
    %468 = arith.mulf %466, %467 : vector<2x256xf32>
    %469 = arith.addf %460, %468 : vector<2x256xf32>
    %c209_i32 = arith.constant 209 : i32
    %470 = tpu.dynamic_rotate %74 by %c209_i32 dim 1 : vector<2x256xf32>, i32 -> vector<2x256xf32>
    %c2_173 = arith.constant 2 : index
    %c0_174 = arith.constant 0 : index
    %471 = vector.load %arg7[%c2_173, %c0_174] : memref<7x256xf32, #tpu.memory_space<vmem>>, vector<1x256xf32>
    %472 = arith.mulf %452, %471 : vector<1x256xf32>
    %c0_175 = arith.constant 0 : index
    %c44 = arith.constant 44 : index
    %473 = vector.load %arg8[%c0_175, %c44] : memref<2x49xf32, #tpu.memory_space<vmem>>, vector<2x1xf32>
    %474 = vector.broadcast %473 : vector<2x1xf32> to vector<2x256xf32>
    %475 = arith.mulf %474, %470 : vector<2x256xf32>
    %476 = vector.broadcast %472 : vector<1x256xf32> to vector<2x256xf32>
    %477 = arith.mulf %475, %476 : vector<2x256xf32>
    %478 = arith.addf %469, %477 : vector<2x256xf32>
    %c208_i32 = arith.constant 208 : i32
    %479 = tpu.dynamic_rotate %74 by %c208_i32 dim 1 : vector<2x256xf32>, i32 -> vector<2x256xf32>
    %c3_176 = arith.constant 3 : index
    %c0_177 = arith.constant 0 : index
    %480 = vector.load %arg7[%c3_176, %c0_177] : memref<7x256xf32, #tpu.memory_space<vmem>>, vector<1x256xf32>
    %481 = arith.mulf %452, %480 : vector<1x256xf32>
    %c0_178 = arith.constant 0 : index
    %c45 = arith.constant 45 : index
    %482 = vector.load %arg8[%c0_178, %c45] : memref<2x49xf32, #tpu.memory_space<vmem>>, vector<2x1xf32>
    %483 = vector.broadcast %482 : vector<2x1xf32> to vector<2x256xf32>
    %484 = arith.mulf %483, %479 : vector<2x256xf32>
    %485 = vector.broadcast %481 : vector<1x256xf32> to vector<2x256xf32>
    %486 = arith.mulf %484, %485 : vector<2x256xf32>
    %487 = arith.addf %478, %486 : vector<2x256xf32>
    %c207_i32 = arith.constant 207 : i32
    %488 = tpu.dynamic_rotate %74 by %c207_i32 dim 1 : vector<2x256xf32>, i32 -> vector<2x256xf32>
    %c4_179 = arith.constant 4 : index
    %c0_180 = arith.constant 0 : index
    %489 = vector.load %arg7[%c4_179, %c0_180] : memref<7x256xf32, #tpu.memory_space<vmem>>, vector<1x256xf32>
    %490 = arith.mulf %452, %489 : vector<1x256xf32>
    %c0_181 = arith.constant 0 : index
    %c46 = arith.constant 46 : index
    %491 = vector.load %arg8[%c0_181, %c46] : memref<2x49xf32, #tpu.memory_space<vmem>>, vector<2x1xf32>
    %492 = vector.broadcast %491 : vector<2x1xf32> to vector<2x256xf32>
    %493 = arith.mulf %492, %488 : vector<2x256xf32>
    %494 = vector.broadcast %490 : vector<1x256xf32> to vector<2x256xf32>
    %495 = arith.mulf %493, %494 : vector<2x256xf32>
    %496 = arith.addf %487, %495 : vector<2x256xf32>
    %c206_i32 = arith.constant 206 : i32
    %497 = tpu.dynamic_rotate %74 by %c206_i32 dim 1 : vector<2x256xf32>, i32 -> vector<2x256xf32>
    %c5_182 = arith.constant 5 : index
    %c0_183 = arith.constant 0 : index
    %498 = vector.load %arg7[%c5_182, %c0_183] : memref<7x256xf32, #tpu.memory_space<vmem>>, vector<1x256xf32>
    %499 = arith.mulf %452, %498 : vector<1x256xf32>
    %c0_184 = arith.constant 0 : index
    %c47 = arith.constant 47 : index
    %500 = vector.load %arg8[%c0_184, %c47] : memref<2x49xf32, #tpu.memory_space<vmem>>, vector<2x1xf32>
    %501 = vector.broadcast %500 : vector<2x1xf32> to vector<2x256xf32>
    %502 = arith.mulf %501, %497 : vector<2x256xf32>
    %503 = vector.broadcast %499 : vector<1x256xf32> to vector<2x256xf32>
    %504 = arith.mulf %502, %503 : vector<2x256xf32>
    %505 = arith.addf %496, %504 : vector<2x256xf32>
    %c205_i32 = arith.constant 205 : i32
    %506 = tpu.dynamic_rotate %74 by %c205_i32 dim 1 : vector<2x256xf32>, i32 -> vector<2x256xf32>
    %c6_185 = arith.constant 6 : index
    %c0_186 = arith.constant 0 : index
    %507 = vector.load %arg7[%c6_185, %c0_186] : memref<7x256xf32, #tpu.memory_space<vmem>>, vector<1x256xf32>
    %508 = arith.mulf %452, %507 : vector<1x256xf32>
    %c0_187 = arith.constant 0 : index
    %c48 = arith.constant 48 : index
    %509 = vector.load %arg8[%c0_187, %c48] : memref<2x49xf32, #tpu.memory_space<vmem>>, vector<2x1xf32>
    %510 = vector.broadcast %509 : vector<2x1xf32> to vector<2x256xf32>
    %511 = arith.mulf %510, %506 : vector<2x256xf32>
    %512 = vector.broadcast %508 : vector<1x256xf32> to vector<2x256xf32>
    %513 = arith.mulf %511, %512 : vector<2x256xf32>
    %514 = arith.addf %505, %513 : vector<2x256xf32>
    %515 = arith.addf %137, %200 : vector<2x256xf32>
    %516 = arith.addf %263, %325 : vector<2x256xf32>
    %517 = arith.addf %388, %451 : vector<2x256xf32>
    %518 = arith.addf %515, %516 : vector<2x256xf32>
    %519 = arith.addf %517, %514 : vector<2x256xf32>
    %520 = arith.addf %518, %519 : vector<2x256xf32>
    %cst_188 = arith.constant dense<0.000000e+00> : vector<256xf32>
    %521 = vector.multi_reduction <add>, %520, %cst_188 [0] : vector<2x256xf32> to vector<256xf32>
    %522 = vector.shape_cast %521 : vector<256xf32> to vector<1x256xf32>
    %523 = math.absf %522 : vector<1x256xf32>
    %cst_189 = arith.constant 0.000000e+00 : f32
    %524 = vector.broadcast %cst_189 : f32 to vector<1x256xf32>
    %525 = arith.subf %524, %523 : vector<1x256xf32>
    %526 = math.exp %525 : vector<1x256xf32>
    %cst_190 = arith.constant 1.000000e+00 : f32
    %527 = vector.broadcast %cst_190 : f32 to vector<1x256xf32>
    %528 = arith.addf %527, %526 : vector<1x256xf32>
    %cst_191 = arith.constant 1.000000e+00 : f32
    %529 = vector.broadcast %cst_191 : f32 to vector<1x256xf32>
    %530 = arith.divf %529, %528 : vector<1x256xf32>
    %cst_192 = arith.constant 0.000000e+00 : f32
    %531 = vector.broadcast %cst_192 : f32 to vector<1x256xf32>
    %532 = arith.cmpf oge, %522, %531 : vector<1x256xf32>
    %533 = arith.mulf %526, %530 : vector<1x256xf32>
    %534 = arith.select %532, %530, %533 : vector<1x256xi1>, vector<1x256xf32>
    %535 = vector.broadcast %534 : vector<1x256xf32> to vector<32x256xf32>
    %536 = arith.mulf %67, %535 : vector<32x256xf32>
    %c0_193 = arith.constant 0 : index
    %c0_194 = arith.constant 0 : index
    %c0_195 = arith.constant 0 : index
    %537 = vector.load %arg9[%c0_193, %c0_194, %c0_195] : memref<1x32x256xf32, #tpu.memory_space<vmem>>, vector<1x32x256xf32>
    %538 = vector.shape_cast %537 : vector<1x32x256xf32> to vector<32x256xf32>
    %539 = vector.shape_cast %536 : vector<32x256xf32> to vector<1x32x256xf32>
    tpu.vector_store %arg9[%c0_193, %c0_194, %c0_195], %539 {strides = array<i32>} : memref<1x32x256xf32, #tpu.memory_space<vmem>>, vector<1x32x256xf32>,
    return
  }
  func.func @transform_0(%arg0: i32) -> (i32, i32, i32) {
    %c0_i32 = arith.constant 0 : i32
    %c0_i32_0 = arith.constant 0 : i32
    %c0_i32_1 = arith.constant 0 : i32
    return %arg0, %c0_i32, %c0_i32_0 : i32, i32, i32
  }
  func.func @transform_1(%arg0: i32) -> (i32, i32) {
    %c0_i32 = arith.constant 0 : i32
    %c0_i32_0 = arith.constant 0 : i32
    %c0_i32_1 = arith.constant 0 : i32
    return %c0_i32, %c0_i32_0 : i32, i32
  }
  func.func @transform_2(%arg0: i32) -> (i32, i32) {
    %c0_i32 = arith.constant 0 : i32
    %c0_i32_0 = arith.constant 0 : i32
    %c0_i32_1 = arith.constant 0 : i32
    return %c0_i32, %c0_i32_0 : i32, i32
  }
  func.func @transform_3(%arg0: i32) -> (i32, i32) {
    %c0_i32 = arith.constant 0 : i32
    %c0_i32_0 = arith.constant 0 : i32
    %c0_i32_1 = arith.constant 0 : i32
    return %c0_i32, %c0_i32_0 : i32, i32
  }
  func.func @transform_4(%arg0: i32) -> (i32, i32) {
    %c0_i32 = arith.constant 0 : i32
    %c0_i32_0 = arith.constant 0 : i32
    %c0_i32_1 = arith.constant 0 : i32
    return %c0_i32, %c0_i32_0 : i32, i32
  }
  func.func @transform_5(%arg0: i32) -> (i32, i32) {
    %c0_i32 = arith.constant 0 : i32
    %c0_i32_0 = arith.constant 0 : i32
    %c0_i32_1 = arith.constant 0 : i32
    return %c0_i32, %c0_i32_0 : i32, i32
  }
  func.func @transform_6(%arg0: i32) -> (i32, i32) {
    %c0_i32 = arith.constant 0 : i32
    %c0_i32_0 = arith.constant 0 : i32
    %c0_i32_1 = arith.constant 0 : i32
    return %c0_i32, %c0_i32_0 : i32, i32
  }
  func.func @transform_7(%arg0: i32) -> (i32, i32) {
    %c0_i32 = arith.constant 0 : i32
    %c0_i32_0 = arith.constant 0 : i32
    %c0_i32_1 = arith.constant 0 : i32
    return %c0_i32, %c0_i32_0 : i32, i32
  }
  func.func @transform_8(%arg0: i32) -> (i32, i32, i32) {
    %c0_i32 = arith.constant 0 : i32
    %c0_i32_0 = arith.constant 0 : i32
    %c0_i32_1 = arith.constant 0 : i32
    return %arg0, %c0_i32, %c0_i32_0 : i32, i32, i32
  }
}

module attributes {stable_mosaic.version = 11 : i64} {
  func.func @_conv_cbam_kernel(%arg0: i32, %arg1: memref<1x4x256xf32, #tpu.memory_space<vmem>>, %arg2: memref<32x4xf32, #tpu.memory_space<vmem>>, %arg3: memref<32x1xf32, #tpu.memory_space<vmem>>, %arg4: memref<2x32xf32, #tpu.memory_space<vmem>>, %arg5: memref<32x2xf32, #tpu.memory_space<vmem>>, %arg6: memref<7x256xf32, #tpu.memory_space<vmem>>, %arg7: memref<7x256xf32, #tpu.memory_space<vmem>>, %arg8: memref<2x49xf32, #tpu.memory_space<vmem>>, %arg9: memref<1x32x256xf32, #tpu.memory_space<vmem>>) attributes {dimension_semantics = [#tpu.dimension_semantics<parallel>], iteration_bounds = array<i64: 2>, scalar_prefetch = 0 : i64, scratch_operands = 0 : i64, tpu.core_type = #tpu.core_type<tc>, window_params = [{transform_indices = @transform_0, window_bounds = array<i64: 1, 4, 256>}, {pipeline_mode = #tpu.pipeline_mode<synchronous>, transform_indices = @transform_1, window_bounds = array<i64: 32, 4>}, {pipeline_mode = #tpu.pipeline_mode<synchronous>, transform_indices = @transform_2, window_bounds = array<i64: 32, 1>}, {pipeline_mode = #tpu.pipeline_mode<synchronous>, transform_indices = @transform_3, window_bounds = array<i64: 2, 32>}, {pipeline_mode = #tpu.pipeline_mode<synchronous>, transform_indices = @transform_4, window_bounds = array<i64: 32, 2>}, {pipeline_mode = #tpu.pipeline_mode<synchronous>, transform_indices = @transform_5, window_bounds = array<i64: 7, 256>}, {pipeline_mode = #tpu.pipeline_mode<synchronous>, transform_indices = @transform_6, window_bounds = array<i64: 7, 256>}, {pipeline_mode = #tpu.pipeline_mode<synchronous>, transform_indices = @transform_7, window_bounds = array<i64: 2, 49>}, {transform_indices = @transform_8, window_bounds = array<i64: 1, 32, 256>}]} {
    %c0 = arith.constant 0 : index
    %c0_0 = arith.constant 0 : index
    %c0_1 = arith.constant 0 : index
    %0 = vector.load %arg1[%c0, %c0_0, %c0_1] : memref<1x4x256xf32, #tpu.memory_space<vmem>>, vector<1x4x256xf32>
    %1 = vector.shape_cast %0 : vector<1x4x256xf32> to vector<4x256xf32>
    %c0_2 = arith.constant 0 : index
    %c0_3 = arith.constant 0 : index
    %2 = vector.load %arg2[%c0_2, %c0_3] : memref<32x4xf32, #tpu.memory_space<vmem>>, vector<32x4xf32>
    %3 = vector.extract_strided_slice %2 {offsets = [0, 0], sizes = [32, 1], strides = [1, 1]} : vector<32x4xf32> to vector<32x1xf32>
    %4 = vector.extract_strided_slice %1 {offsets = [0, 0], sizes = [1, 256], strides = [1, 1]} : vector<4x256xf32> to vector<1x256xf32>
    %5 = vector.broadcast %3 : vector<32x1xf32> to vector<32x256xf32>
    %6 = vector.broadcast %4 : vector<1x256xf32> to vector<32x256xf32>
    %7 = arith.mulf %5, %6 : vector<32x256xf32>
    %8 = vector.extract_strided_slice %2 {offsets = [0, 1], sizes = [32, 1], strides = [1, 1]} : vector<32x4xf32> to vector<32x1xf32>
    %9 = vector.extract_strided_slice %1 {offsets = [1, 0], sizes = [1, 256], strides = [1, 1]} : vector<4x256xf32> to vector<1x256xf32>
    %10 = vector.broadcast %8 : vector<32x1xf32> to vector<32x256xf32>
    %11 = vector.broadcast %9 : vector<1x256xf32> to vector<32x256xf32>
    %12 = arith.mulf %10, %11 : vector<32x256xf32>
    %13 = arith.addf %7, %12 : vector<32x256xf32>
    %14 = vector.extract_strided_slice %2 {offsets = [0, 2], sizes = [32, 1], strides = [1, 1]} : vector<32x4xf32> to vector<32x1xf32>
    %15 = vector.extract_strided_slice %1 {offsets = [2, 0], sizes = [1, 256], strides = [1, 1]} : vector<4x256xf32> to vector<1x256xf32>
    %16 = vector.broadcast %14 : vector<32x1xf32> to vector<32x256xf32>
    %17 = vector.broadcast %15 : vector<1x256xf32> to vector<32x256xf32>
    %18 = arith.mulf %16, %17 : vector<32x256xf32>
    %19 = arith.addf %13, %18 : vector<32x256xf32>
    %20 = vector.extract_strided_slice %2 {offsets = [0, 3], sizes = [32, 1], strides = [1, 1]} : vector<32x4xf32> to vector<32x1xf32>
    %21 = vector.extract_strided_slice %1 {offsets = [3, 0], sizes = [1, 256], strides = [1, 1]} : vector<4x256xf32> to vector<1x256xf32>
    %22 = vector.broadcast %20 : vector<32x1xf32> to vector<32x256xf32>
    %23 = vector.broadcast %21 : vector<1x256xf32> to vector<32x256xf32>
    %24 = arith.mulf %22, %23 : vector<32x256xf32>
    %25 = arith.addf %19, %24 : vector<32x256xf32>
    %c0_4 = arith.constant 0 : index
    %c0_5 = arith.constant 0 : index
    %26 = vector.load %arg3[%c0_4, %c0_5] : memref<32x1xf32, #tpu.memory_space<vmem>>, vector<32x1xf32>
    %27 = vector.broadcast %26 : vector<32x1xf32> to vector<32x256xf32>
    %28 = arith.addf %25, %27 : vector<32x256xf32>
    %cst = arith.constant 3.000000e+00 : f32
    %29 = vector.broadcast %cst : f32 to vector<32x256xf32>
    %30 = arith.addf %28, %29 : vector<32x256xf32>
    %cst_6 = arith.constant 0.000000e+00 : f32
    %cst_7 = arith.constant 6.000000e+00 : f32
    %31 = vector.broadcast %cst_6 : f32 to vector<32x256xf32>
    %32 = arith.maximumf %31, %30 : vector<32x256xf32>
    %33 = vector.broadcast %cst_7 : f32 to vector<32x256xf32>
    %34 = arith.minimumf %33, %32 : vector<32x256xf32>
    %35 = arith.mulf %28, %34 : vector<32x256xf32>
    %cst_8 = arith.constant 0.166666672 : f32
    %36 = vector.broadcast %cst_8 : f32 to vector<32x256xf32>
    %37 = arith.mulf %35, %36 : vector<32x256xf32>
    %cst_9 = arith.constant dense<0.000000e+00> : vector<32xf32>
    %38 = vector.multi_reduction <add>, %37, %cst_9 [1] : vector<32x256xf32> to vector<32xf32>
    %39 = vector.shape_cast %38 : vector<32xf32> to vector<32x1xf32>
    %cst_10 = arith.constant 2.560000e+02 : f32
    %40 = vector.broadcast %cst_10 : f32 to vector<32x1xf32>
    %41 = arith.divf %39, %40 : vector<32x1xf32>
    %cst_11 = arith.constant dense<0xFF800000> : vector<32xf32>
    %42 = vector.multi_reduction <maximumf>, %37, %cst_11 [1] : vector<32x256xf32> to vector<32xf32>
    %43 = vector.shape_cast %42 : vector<32xf32> to vector<32x1xf32>
    %44 = tpu.concatenate %41, %43 in 1 : vector<32x1xf32>, vector<32x1xf32> -> vector<32x2xf32>
    %c0_12 = arith.constant 0 : index
    %c0_13 = arith.constant 0 : index
    %45 = vector.load %arg4[%c0_12, %c0_13] : memref<2x32xf32, #tpu.memory_space<vmem>>, vector<2x32xf32>
    %cst_14 = arith.constant dense<0.000000e+00> : vector<2x2xf32>
    %46 = tpu.matmul %45, %44, %cst_14 {dimension_numbers = #tpu.dot_dimension_numbers<[1], [0], [0], [1], [0, 0, 1, 1], [], []>} : vector<2x32xf32>, vector<32x2xf32>, vector<2x2xf32> -> vector<2x2xf32>
    %cst_15 = arith.constant 0.000000e+00 : f32
    %47 = vector.broadcast %cst_15 : f32 to vector<2x2xf32>
    %48 = arith.maximumf %46, %47 : vector<2x2xf32>
    %c0_16 = arith.constant 0 : index
    %c0_17 = arith.constant 0 : index
    %49 = vector.load %arg5[%c0_16, %c0_17] : memref<32x2xf32, #tpu.memory_space<vmem>>, vector<32x2xf32>
    %cst_18 = arith.constant dense<0.000000e+00> : vector<32x2xf32>
    %50 = tpu.matmul %49, %48, %cst_18 {dimension_numbers = #tpu.dot_dimension_numbers<[1], [0], [0], [1], [0, 0, 1, 1], [], []>} : vector<32x2xf32>, vector<2x2xf32>, vector<32x2xf32> -> vector<32x2xf32>
    %51 = vector.extract_strided_slice %50 {offsets = [0, 0], sizes = [32, 1], strides = [1, 1]} : vector<32x2xf32> to vector<32x1xf32>
    %52 = vector.extract_strided_slice %50 {offsets = [0, 1], sizes = [32, 1], strides = [1, 1]} : vector<32x2xf32> to vector<32x1xf32>
    %53 = arith.addf %51, %52 : vector<32x1xf32>
    %54 = math.absf %53 : vector<32x1xf32>
    %cst_19 = arith.constant 0.000000e+00 : f32
    %55 = vector.broadcast %cst_19 : f32 to vector<32x1xf32>
    %56 = arith.subf %55, %54 : vector<32x1xf32>
    %57 = math.exp %56 : vector<32x1xf32>
    %cst_20 = arith.constant 1.000000e+00 : f32
    %58 = vector.broadcast %cst_20 : f32 to vector<32x1xf32>
    %59 = arith.addf %58, %57 : vector<32x1xf32>
    %cst_21 = arith.constant 1.000000e+00 : f32
    %60 = vector.broadcast %cst_21 : f32 to vector<32x1xf32>
    %61 = arith.divf %60, %59 : vector<32x1xf32>
    %cst_22 = arith.constant 0.000000e+00 : f32
    %62 = vector.broadcast %cst_22 : f32 to vector<32x1xf32>
    %63 = arith.cmpf oge, %53, %62 : vector<32x1xf32>
    %64 = arith.mulf %57, %61 : vector<32x1xf32>
    %65 = arith.select %63, %61, %64 : vector<32x1xi1>, vector<32x1xf32>
    %66 = vector.broadcast %65 : vector<32x1xf32> to vector<32x256xf32>
    %67 = arith.mulf %37, %66 : vector<32x256xf32>
    %cst_23 = arith.constant dense<0.000000e+00> : vector<256xf32>
    %68 = vector.multi_reduction <add>, %67, %cst_23 [0] : vector<32x256xf32> to vector<256xf32>
    %69 = vector.shape_cast %68 : vector<256xf32> to vector<1x256xf32>
    %cst_24 = arith.constant 3.200000e+01 : f32
    %70 = vector.broadcast %cst_24 : f32 to vector<1x256xf32>
    %71 = arith.divf %69, %70 : vector<1x256xf32>
    %cst_25 = arith.constant dense<0xFF800000> : vector<256xf32>
    %72 = vector.multi_reduction <maximumf>, %67, %cst_25 [0] : vector<32x256xf32> to vector<256xf32>
    %73 = vector.shape_cast %72 : vector<256xf32> to vector<1x256xf32>
    %74 = tpu.concatenate %71, %73 in 0 : vector<1x256xf32>, vector<1x256xf32> -> vector<2x256xf32>
    %c0_26 = arith.constant 0 : index
    %c0_27 = arith.constant 0 : index
    %75 = vector.load %arg6[%c0_26, %c0_27] : memref<7x256xf32, #tpu.memory_space<vmem>>, vector<1x256xf32>
    %c51_i32 = arith.constant 51 : i32
    %76 = tpu.dynamic_rotate %74 by %c51_i32 dim 1 : vector<2x256xf32>, i32 -> vector<2x256xf32>
    %c0_28 = arith.constant 0 : index
    %c0_29 = arith.constant 0 : index
    %77 = vector.load %arg7[%c0_28, %c0_29] : memref<7x256xf32, #tpu.memory_space<vmem>>, vector<1x256xf32>
    %78 = arith.mulf %75, %77 : vector<1x256xf32>
    %c0_30 = arith.constant 0 : index
    %c0_31 = arith.constant 0 : index
    %79 = vector.load %arg8[%c0_30, %c0_31] : memref<2x49xf32, #tpu.memory_space<vmem>>, vector<2x1xf32>
    %80 = vector.broadcast %79 : vector<2x1xf32> to vector<2x256xf32>
    %81 = arith.mulf %80, %76 : vector<2x256xf32>
    %82 = vector.broadcast %78 : vector<1x256xf32> to vector<2x256xf32>
    %83 = arith.mulf %81, %82 : vector<2x256xf32>
    %c50_i32 = arith.constant 50 : i32
    %84 = tpu.dynamic_rotate %74 by %c50_i32 dim 1 : vector<2x256xf32>, i32 -> vector<2x256xf32>
    %c1 = arith.constant 1 : index
    %c0_32 = arith.constant 0 : index
    %85 = vector.load %arg7[%c1, %c0_32] : memref<7x256xf32, #tpu.memory_space<vmem>>, vector<1x256xf32>
    %86 = arith.mulf %75, %85 : vector<1x256xf32>
    %c0_33 = arith.constant 0 : index
    %c1_34 = arith.constant 1 : index
    %87 = vector.load %arg8[%c0_33, %c1_34] : memref<2x49xf32, #tpu.memory_space<vmem>>, vector<2x1xf32>
    %88 = vector.broadcast %87 : vector<2x1xf32> to vector<2x256xf32>
    %89 = arith.mulf %88, %84 : vector<2x256xf32>
    %90 = vector.broadcast %86 : vector<1x256xf32> to vector<2x256xf32>
    %91 = arith.mulf %89, %90 : vector<2x256xf32>
    %92 = arith.addf %83, %91 : vector<2x256xf32>
    %c49_i32 = arith.constant 49 : i32
    %93 = tpu.dynamic_rotate %74 by %c49_i32 dim 1 : vector<2x256xf32>, i32 -> vector<2x256xf32>
    %c2 = arith.constant 2 : index
    %c0_35 = arith.constant 0 : index
    %94 = vector.load %arg7[%c2, %c0_35] : memref<7x256xf32, #tpu.memory_space<vmem>>, vector<1x256xf32>
    %95 = arith.mulf %75, %94 : vector<1x256xf32>
    %c0_36 = arith.constant 0 : index
    %c2_37 = arith.constant 2 : index
    %96 = vector.load %arg8[%c0_36, %c2_37] : memref<2x49xf32, #tpu.memory_space<vmem>>, vector<2x1xf32>
    %97 = vector.broadcast %96 : vector<2x1xf32> to vector<2x256xf32>
    %98 = arith.mulf %97, %93 : vector<2x256xf32>
    %99 = vector.broadcast %95 : vector<1x256xf32> to vector<2x256xf32>
    %100 = arith.mulf %98, %99 : vector<2x256xf32>
    %101 = arith.addf %92, %100 : vector<2x256xf32>
    %c48_i32 = arith.constant 48 : i32
    %102 = tpu.dynamic_rotate %74 by %c48_i32 dim 1 : vector<2x256xf32>, i32 -> vector<2x256xf32>
    %c3 = arith.constant 3 : index
    %c0_38 = arith.constant 0 : index
    %103 = vector.load %arg7[%c3, %c0_38] : memref<7x256xf32, #tpu.memory_space<vmem>>, vector<1x256xf32>
    %104 = arith.mulf %75, %103 : vector<1x256xf32>
    %c0_39 = arith.constant 0 : index
    %c3_40 = arith.constant 3 : index
    %105 = vector.load %arg8[%c0_39, %c3_40] : memref<2x49xf32, #tpu.memory_space<vmem>>, vector<2x1xf32>
    %106 = vector.broadcast %105 : vector<2x1xf32> to vector<2x256xf32>
    %107 = arith.mulf %106, %102 : vector<2x256xf32>
    %108 = vector.broadcast %104 : vector<1x256xf32> to vector<2x256xf32>
    %109 = arith.mulf %107, %108 : vector<2x256xf32>
    %110 = arith.addf %101, %109 : vector<2x256xf32>
    %c47_i32 = arith.constant 47 : i32
    %111 = tpu.dynamic_rotate %74 by %c47_i32 dim 1 : vector<2x256xf32>, i32 -> vector<2x256xf32>
    %c4 = arith.constant 4 : index
    %c0_41 = arith.constant 0 : index
    %112 = vector.load %arg7[%c4, %c0_41] : memref<7x256xf32, #tpu.memory_space<vmem>>, vector<1x256xf32>
    %113 = arith.mulf %75, %112 : vector<1x256xf32>
    %c0_42 = arith.constant 0 : index
    %c4_43 = arith.constant 4 : index
    %114 = vector.load %arg8[%c0_42, %c4_43] : memref<2x49xf32, #tpu.memory_space<vmem>>, vector<2x1xf32>
    %115 = vector.broadcast %114 : vector<2x1xf32> to vector<2x256xf32>
    %116 = arith.mulf %115, %111 : vector<2x256xf32>
    %117 = vector.broadcast %113 : vector<1x256xf32> to vector<2x256xf32>
    %118 = arith.mulf %116, %117 : vector<2x256xf32>
    %119 = arith.addf %110, %118 : vector<2x256xf32>
    %c46_i32 = arith.constant 46 : i32
    %120 = tpu.dynamic_rotate %74 by %c46_i32 dim 1 : vector<2x256xf32>, i32 -> vector<2x256xf32>
    %c5 = arith.constant 5 : index
    %c0_44 = arith.constant 0 : index
    %121 = vector.load %arg7[%c5, %c0_44] : memref<7x256xf32, #tpu.memory_space<vmem>>, vector<1x256xf32>
    %122 = arith.mulf %75, %121 : vector<1x256xf32>
    %c0_45 = arith.constant 0 : index
    %c5_46 = arith.constant 5 : index
    %123 = vector.load %arg8[%c0_45, %c5_46] : memref<2x49xf32, #tpu.memory_space<vmem>>, vector<2x1xf32>
    %124 = vector.broadcast %123 : vector<2x1xf32> to vector<2x256xf32>
    %125 = arith.mulf %124, %120 : vector<2x256xf32>
    %126 = vector.broadcast %122 : vector<1x256xf32> to vector<2x256xf32>
    %127 = arith.mulf %125, %126 : vector<2x256xf32>
    %128 = arith.addf %119, %127 : vector<2x256xf32>
    %c45_i32 = arith.constant 45 : i32
    %129 = tpu.dynamic_rotate %74 by %c45_i32 dim 1 : vector<2x256xf32>, i32 -> vector<2x256xf32>
    %c6 = arith.constant 6 : index
    %c0_47 = arith.constant 0 : index
    %130 = vector.load %arg7[%c6, %c0_47] : memref<7x256xf32, #tpu.memory_space<vmem>>, vector<1x256xf32>
    %131 = arith.mulf %75, %130 : vector<1x256xf32>
    %c0_48 = arith.constant 0 : index
    %c6_49 = arith.constant 6 : index
    %132 = vector.load %arg8[%c0_48, %c6_49] : memref<2x49xf32, #tpu.memory_space<vmem>>, vector<2x1xf32>
    %133 = vector.broadcast %132 : vector<2x1xf32> to vector<2x256xf32>
    %134 = arith.mulf %133, %129 : vector<2x256xf32>
    %135 = vector.broadcast %131 : vector<1x256xf32> to vector<2x256xf32>
    %136 = arith.mulf %134, %135 : vector<2x256xf32>
    %137 = arith.addf %128, %136 : vector<2x256xf32>
    %c1_50 = arith.constant 1 : index
    %c0_51 = arith.constant 0 : index
    %138 = vector.load %arg6[%c1_50, %c0_51] : memref<7x256xf32, #tpu.memory_space<vmem>>, vector<1x256xf32>
    %c35_i32 = arith.constant 35 : i32
    %139 = tpu.dynamic_rotate %74 by %c35_i32 dim 1 : vector<2x256xf32>, i32 -> vector<2x256xf32>
    %c0_52 = arith.constant 0 : index
    %c0_53 = arith.constant 0 : index
    %140 = vector.load %arg7[%c0_52, %c0_53] : memref<7x256xf32, #tpu.memory_space<vmem>>, vector<1x256xf32>
    %141 = arith.mulf %138, %140 : vector<1x256xf32>
    %c0_54 = arith.constant 0 : index
    %c7 = arith.constant 7 : index
    %142 = vector.load %arg8[%c0_54, %c7] : memref<2x49xf32, #tpu.memory_space<vmem>>, vector<2x1xf32>
    %143 = vector.broadcast %142 : vector<2x1xf32> to vector<2x256xf32>
    %144 = arith.mulf %143, %139 : vector<2x256xf32>
    %145 = vector.broadcast %141 : vector<1x256xf32> to vector<2x256xf32>
    %146 = arith.mulf %144, %145 : vector<2x256xf32>
    %c34_i32 = arith.constant 34 : i32
    %147 = tpu.dynamic_rotate %74 by %c34_i32 dim 1 : vector<2x256xf32>, i32 -> vector<2x256xf32>
    %c1_55 = arith.constant 1 : index
    %c0_56 = arith.constant 0 : index
    %148 = vector.load %arg7[%c1_55, %c0_56] : memref<7x256xf32, #tpu.memory_space<vmem>>, vector<1x256xf32>
    %149 = arith.mulf %138, %148 : vector<1x256xf32>
    %c0_57 = arith.constant 0 : index
    %c8 = arith.constant 8 : index
    %150 = vector.load %arg8[%c0_57, %c8] : memref<2x49xf32, #tpu.memory_space<vmem>>, vector<2x1xf32>
    %151 = vector.broadcast %150 : vector<2x1xf32> to vector<2x256xf32>
    %152 = arith.mulf %151, %147 : vector<2x256xf32>
    %153 = vector.broadcast %149 : vector<1x256xf32> to vector<2x256xf32>
    %154 = arith.mulf %152, %153 : vector<2x256xf32>
    %155 = arith.addf %146, %154 : vector<2x256xf32>
    %c33_i32 = arith.constant 33 : i32
    %156 = tpu.dynamic_rotate %74 by %c33_i32 dim 1 : vector<2x256xf32>, i32 -> vector<2x256xf32>
    %c2_58 = arith.constant 2 : index
    %c0_59 = arith.constant 0 : index
    %157 = vector.load %arg7[%c2_58, %c0_59] : memref<7x256xf32, #tpu.memory_space<vmem>>, vector<1x256xf32>
    %158 = arith.mulf %138, %157 : vector<1x256xf32>
    %c0_60 = arith.constant 0 : index
    %c9 = arith.constant 9 : index
    %159 = vector.load %arg8[%c0_60, %c9] : memref<2x49xf32, #tpu.memory_space<vmem>>, vector<2x1xf32>
    %160 = vector.broadcast %159 : vector<2x1xf32> to vector<2x256xf32>
    %161 = arith.mulf %160, %156 : vector<2x256xf32>
    %162 = vector.broadcast %158 : vector<1x256xf32> to vector<2x256xf32>
    %163 = arith.mulf %161, %162 : vector<2x256xf32>
    %164 = arith.addf %155, %163 : vector<2x256xf32>
    %c32_i32 = arith.constant 32 : i32
    %165 = tpu.dynamic_rotate %74 by %c32_i32 dim 1 : vector<2x256xf32>, i32 -> vector<2x256xf32>
    %c3_61 = arith.constant 3 : index
    %c0_62 = arith.constant 0 : index
    %166 = vector.load %arg7[%c3_61, %c0_62] : memref<7x256xf32, #tpu.memory_space<vmem>>, vector<1x256xf32>
    %167 = arith.mulf %138, %166 : vector<1x256xf32>
    %c0_63 = arith.constant 0 : index
    %c10 = arith.constant 10 : index
    %168 = vector.load %arg8[%c0_63, %c10] : memref<2x49xf32, #tpu.memory_space<vmem>>, vector<2x1xf32>
    %169 = vector.broadcast %168 : vector<2x1xf32> to vector<2x256xf32>
    %170 = arith.mulf %169, %165 : vector<2x256xf32>
    %171 = vector.broadcast %167 : vector<1x256xf32> to vector<2x256xf32>
    %172 = arith.mulf %170, %171 : vector<2x256xf32>
    %173 = arith.addf %164, %172 : vector<2x256xf32>
    %c31_i32 = arith.constant 31 : i32
    %174 = tpu.dynamic_rotate %74 by %c31_i32 dim 1 : vector<2x256xf32>, i32 -> vector<2x256xf32>
    %c4_64 = arith.constant 4 : index
    %c0_65 = arith.constant 0 : index
    %175 = vector.load %arg7[%c4_64, %c0_65] : memref<7x256xf32, #tpu.memory_space<vmem>>, vector<1x256xf32>
    %176 = arith.mulf %138, %175 : vector<1x256xf32>
    %c0_66 = arith.constant 0 : index
    %c11 = arith.constant 11 : index
    %177 = vector.load %arg8[%c0_66, %c11] : memref<2x49xf32, #tpu.memory_space<vmem>>, vector<2x1xf32>
    %178 = vector.broadcast %177 : vector<2x1xf32> to vector<2x256xf32>
    %179 = arith.mulf %178, %174 : vector<2x256xf32>
    %180 = vector.broadcast %176 : vector<1x256xf32> to vector<2x256xf32>
    %181 = arith.mulf %179, %180 : vector<2x256xf32>
    %182 = arith.addf %173, %181 : vector<2x256xf32>
    %c30_i32 = arith.constant 30 : i32
    %183 = tpu.dynamic_rotate %74 by %c30_i32 dim 1 : vector<2x256xf32>, i32 -> vector<2x256xf32>
    %c5_67 = arith.constant 5 : index
    %c0_68 = arith.constant 0 : index
    %184 = vector.load %arg7[%c5_67, %c0_68] : memref<7x256xf32, #tpu.memory_space<vmem>>, vector<1x256xf32>
    %185 = arith.mulf %138, %184 : vector<1x256xf32>
    %c0_69 = arith.constant 0 : index
    %c12 = arith.constant 12 : index
    %186 = vector.load %arg8[%c0_69, %c12] : memref<2x49xf32, #tpu.memory_space<vmem>>, vector<2x1xf32>
    %187 = vector.broadcast %186 : vector<2x1xf32> to vector<2x256xf32>
    %188 = arith.mulf %187, %183 : vector<2x256xf32>
    %189 = vector.broadcast %185 : vector<1x256xf32> to vector<2x256xf32>
    %190 = arith.mulf %188, %189 : vector<2x256xf32>
    %191 = arith.addf %182, %190 : vector<2x256xf32>
    %c29_i32 = arith.constant 29 : i32
    %192 = tpu.dynamic_rotate %74 by %c29_i32 dim 1 : vector<2x256xf32>, i32 -> vector<2x256xf32>
    %c6_70 = arith.constant 6 : index
    %c0_71 = arith.constant 0 : index
    %193 = vector.load %arg7[%c6_70, %c0_71] : memref<7x256xf32, #tpu.memory_space<vmem>>, vector<1x256xf32>
    %194 = arith.mulf %138, %193 : vector<1x256xf32>
    %c0_72 = arith.constant 0 : index
    %c13 = arith.constant 13 : index
    %195 = vector.load %arg8[%c0_72, %c13] : memref<2x49xf32, #tpu.memory_space<vmem>>, vector<2x1xf32>
    %196 = vector.broadcast %195 : vector<2x1xf32> to vector<2x256xf32>
    %197 = arith.mulf %196, %192 : vector<2x256xf32>
    %198 = vector.broadcast %194 : vector<1x256xf32> to vector<2x256xf32>
    %199 = arith.mulf %197, %198 : vector<2x256xf32>
    %200 = arith.addf %191, %199 : vector<2x256xf32>
    %c2_73 = arith.constant 2 : index
    %c0_74 = arith.constant 0 : index
    %201 = vector.load %arg6[%c2_73, %c0_74] : memref<7x256xf32, #tpu.memory_space<vmem>>, vector<1x256xf32>
    %c19_i32 = arith.constant 19 : i32
    %202 = tpu.dynamic_rotate %74 by %c19_i32 dim 1 : vector<2x256xf32>, i32 -> vector<2x256xf32>
    %c0_75 = arith.constant 0 : index
    %c0_76 = arith.constant 0 : index
    %203 = vector.load %arg7[%c0_75, %c0_76] : memref<7x256xf32, #tpu.memory_space<vmem>>, vector<1x256xf32>
    %204 = arith.mulf %201, %203 : vector<1x256xf32>
    %c0_77 = arith.constant 0 : index
    %c14 = arith.constant 14 : index
    %205 = vector.load %arg8[%c0_77, %c14] : memref<2x49xf32, #tpu.memory_space<vmem>>, vector<2x1xf32>
    %206 = vector.broadcast %205 : vector<2x1xf32> to vector<2x256xf32>
    %207 = arith.mulf %206, %202 : vector<2x256xf32>
    %208 = vector.broadcast %204 : vector<1x256xf32> to vector<2x256xf32>
    %209 = arith.mulf %207, %208 : vector<2x256xf32>
    %c18_i32 = arith.constant 18 : i32
    %210 = tpu.dynamic_rotate %74 by %c18_i32 dim 1 : vector<2x256xf32>, i32 -> vector<2x256xf32>
    %c1_78 = arith.constant 1 : index
    %c0_79 = arith.constant 0 : index
    %211 = vector.load %arg7[%c1_78, %c0_79] : memref<7x256xf32, #tpu.memory_space<vmem>>, vector<1x256xf32>
    %212 = arith.mulf %201, %211 : vector<1x256xf32>
    %c0_80 = arith.constant 0 : index
    %c15 = arith.constant 15 : index
    %213 = vector.load %arg8[%c0_80, %c15] : memref<2x49xf32, #tpu.memory_space<vmem>>, vector<2x1xf32>
    %214 = vector.broadcast %213 : vector<2x1xf32> to vector<2x256xf32>
    %215 = arith.mulf %214, %210 : vector<2x256xf32>
    %216 = vector.broadcast %212 : vector<1x256xf32> to vector<2x256xf32>
    %217 = arith.mulf %215, %216 : vector<2x256xf32>
    %218 = arith.addf %209, %217 : vector<2x256xf32>
    %c17_i32 = arith.constant 17 : i32
    %219 = tpu.dynamic_rotate %74 by %c17_i32 dim 1 : vector<2x256xf32>, i32 -> vector<2x256xf32>
    %c2_81 = arith.constant 2 : index
    %c0_82 = arith.constant 0 : index
    %220 = vector.load %arg7[%c2_81, %c0_82] : memref<7x256xf32, #tpu.memory_space<vmem>>, vector<1x256xf32>
    %221 = arith.mulf %201, %220 : vector<1x256xf32>
    %c0_83 = arith.constant 0 : index
    %c16 = arith.constant 16 : index
    %222 = vector.load %arg8[%c0_83, %c16] : memref<2x49xf32, #tpu.memory_space<vmem>>, vector<2x1xf32>
    %223 = vector.broadcast %222 : vector<2x1xf32> to vector<2x256xf32>
    %224 = arith.mulf %223, %219 : vector<2x256xf32>
    %225 = vector.broadcast %221 : vector<1x256xf32> to vector<2x256xf32>
    %226 = arith.mulf %224, %225 : vector<2x256xf32>
    %227 = arith.addf %218, %226 : vector<2x256xf32>
    %c16_i32 = arith.constant 16 : i32
    %228 = tpu.dynamic_rotate %74 by %c16_i32 dim 1 : vector<2x256xf32>, i32 -> vector<2x256xf32>
    %c3_84 = arith.constant 3 : index
    %c0_85 = arith.constant 0 : index
    %229 = vector.load %arg7[%c3_84, %c0_85] : memref<7x256xf32, #tpu.memory_space<vmem>>, vector<1x256xf32>
    %230 = arith.mulf %201, %229 : vector<1x256xf32>
    %c0_86 = arith.constant 0 : index
    %c17 = arith.constant 17 : index
    %231 = vector.load %arg8[%c0_86, %c17] : memref<2x49xf32, #tpu.memory_space<vmem>>, vector<2x1xf32>
    %232 = vector.broadcast %231 : vector<2x1xf32> to vector<2x256xf32>
    %233 = arith.mulf %232, %228 : vector<2x256xf32>
    %234 = vector.broadcast %230 : vector<1x256xf32> to vector<2x256xf32>
    %235 = arith.mulf %233, %234 : vector<2x256xf32>
    %236 = arith.addf %227, %235 : vector<2x256xf32>
    %c15_i32 = arith.constant 15 : i32
    %237 = tpu.dynamic_rotate %74 by %c15_i32 dim 1 : vector<2x256xf32>, i32 -> vector<2x256xf32>
    %c4_87 = arith.constant 4 : index
    %c0_88 = arith.constant 0 : index
    %238 = vector.load %arg7[%c4_87, %c0_88] : memref<7x256xf32, #tpu.memory_space<vmem>>, vector<1x256xf32>
    %239 = arith.mulf %201, %238 : vector<1x256xf32>
    %c0_89 = arith.constant 0 : index
    %c18 = arith.constant 18 : index
    %240 = vector.load %arg8[%c0_89, %c18] : memref<2x49xf32, #tpu.memory_space<vmem>>, vector<2x1xf32>
    %241 = vector.broadcast %240 : vector<2x1xf32> to vector<2x256xf32>
    %242 = arith.mulf %241, %237 : vector<2x256xf32>
    %243 = vector.broadcast %239 : vector<1x256xf32> to vector<2x256xf32>
    %244 = arith.mulf %242, %243 : vector<2x256xf32>
    %245 = arith.addf %236, %244 : vector<2x256xf32>
    %c14_i32 = arith.constant 14 : i32
    %246 = tpu.dynamic_rotate %74 by %c14_i32 dim 1 : vector<2x256xf32>, i32 -> vector<2x256xf32>
    %c5_90 = arith.constant 5 : index
    %c0_91 = arith.constant 0 : index
    %247 = vector.load %arg7[%c5_90, %c0_91] : memref<7x256xf32, #tpu.memory_space<vmem>>, vector<1x256xf32>
    %248 = arith.mulf %201, %247 : vector<1x256xf32>
    %c0_92 = arith.constant 0 : index
    %c19 = arith.constant 19 : index
    %249 = vector.load %arg8[%c0_92, %c19] : memref<2x49xf32, #tpu.memory_space<vmem>>, vector<2x1xf32>
    %250 = vector.broadcast %249 : vector<2x1xf32> to vector<2x256xf32>
    %251 = arith.mulf %250, %246 : vector<2x256xf32>
    %252 = vector.broadcast %248 : vector<1x256xf32> to vector<2x256xf32>
    %253 = arith.mulf %251, %252 : vector<2x256xf32>
    %254 = arith.addf %245, %253 : vector<2x256xf32>
    %c13_i32 = arith.constant 13 : i32
    %255 = tpu.dynamic_rotate %74 by %c13_i32 dim 1 : vector<2x256xf32>, i32 -> vector<2x256xf32>
    %c6_93 = arith.constant 6 : index
    %c0_94 = arith.constant 0 : index
    %256 = vector.load %arg7[%c6_93, %c0_94] : memref<7x256xf32, #tpu.memory_space<vmem>>, vector<1x256xf32>
    %257 = arith.mulf %201, %256 : vector<1x256xf32>
    %c0_95 = arith.constant 0 : index
    %c20 = arith.constant 20 : index
    %258 = vector.load %arg8[%c0_95, %c20] : memref<2x49xf32, #tpu.memory_space<vmem>>, vector<2x1xf32>
    %259 = vector.broadcast %258 : vector<2x1xf32> to vector<2x256xf32>
    %260 = arith.mulf %259, %255 : vector<2x256xf32>
    %261 = vector.broadcast %257 : vector<1x256xf32> to vector<2x256xf32>
    %262 = arith.mulf %260, %261 : vector<2x256xf32>
    %263 = arith.addf %254, %262 : vector<2x256xf32>
    %c3_96 = arith.constant 3 : index
    %c0_97 = arith.constant 0 : index
    %264 = vector.load %arg6[%c3_96, %c0_97] : memref<7x256xf32, #tpu.memory_space<vmem>>, vector<1x256xf32>
    %c3_i32 = arith.constant 3 : i32
    %265 = tpu.dynamic_rotate %74 by %c3_i32 dim 1 : vector<2x256xf32>, i32 -> vector<2x256xf32>
    %c0_98 = arith.constant 0 : index
    %c0_99 = arith.constant 0 : index
    %266 = vector.load %arg7[%c0_98, %c0_99] : memref<7x256xf32, #tpu.memory_space<vmem>>, vector<1x256xf32>
    %267 = arith.mulf %264, %266 : vector<1x256xf32>
    %c0_100 = arith.constant 0 : index
    %c21 = arith.constant 21 : index
    %268 = vector.load %arg8[%c0_100, %c21] : memref<2x49xf32, #tpu.memory_space<vmem>>, vector<2x1xf32>
    %269 = vector.broadcast %268 : vector<2x1xf32> to vector<2x256xf32>
    %270 = arith.mulf %269, %265 : vector<2x256xf32>
    %271 = vector.broadcast %267 : vector<1x256xf32> to vector<2x256xf32>
    %272 = arith.mulf %270, %271 : vector<2x256xf32>
    %c2_i32 = arith.constant 2 : i32
    %273 = tpu.dynamic_rotate %74 by %c2_i32 dim 1 : vector<2x256xf32>, i32 -> vector<2x256xf32>
    %c1_101 = arith.constant 1 : index
    %c0_102 = arith.constant 0 : index
    %274 = vector.load %arg7[%c1_101, %c0_102] : memref<7x256xf32, #tpu.memory_space<vmem>>, vector<1x256xf32>
    %275 = arith.mulf %264, %274 : vector<1x256xf32>
    %c0_103 = arith.constant 0 : index
    %c22 = arith.constant 22 : index
    %276 = vector.load %arg8[%c0_103, %c22] : memref<2x49xf32, #tpu.memory_space<vmem>>, vector<2x1xf32>
    %277 = vector.broadcast %276 : vector<2x1xf32> to vector<2x256xf32>
    %278 = arith.mulf %277, %273 : vector<2x256xf32>
    %279 = vector.broadcast %275 : vector<1x256xf32> to vector<2x256xf32>
    %280 = arith.mulf %278, %279 : vector<2x256xf32>
    %281 = arith.addf %272, %280 : vector<2x256xf32>
    %c1_i32 = arith.constant 1 : i32
    %282 = tpu.dynamic_rotate %74 by %c1_i32 dim 1 : vector<2x256xf32>, i32 -> vector<2x256xf32>
    %c2_104 = arith.constant 2 : index
    %c0_105 = arith.constant 0 : index
    %283 = vector.load %arg7[%c2_104, %c0_105] : memref<7x256xf32, #tpu.memory_space<vmem>>, vector<1x256xf32>
    %284 = arith.mulf %264, %283 : vector<1x256xf32>
    %c0_106 = arith.constant 0 : index
    %c23 = arith.constant 23 : index
    %285 = vector.load %arg8[%c0_106, %c23] : memref<2x49xf32, #tpu.memory_space<vmem>>, vector<2x1xf32>
    %286 = vector.broadcast %285 : vector<2x1xf32> to vector<2x256xf32>
    %287 = arith.mulf %286, %282 : vector<2x256xf32>
    %288 = vector.broadcast %284 : vector<1x256xf32> to vector<2x256xf32>
    %289 = arith.mulf %287, %288 : vector<2x256xf32>
    %290 = arith.addf %281, %289 : vector<2x256xf32>
    %c3_107 = arith.constant 3 : index
    %c0_108 = arith.constant 0 : index
    %291 = vector.load %arg7[%c3_107, %c0_108] : memref<7x256xf32, #tpu.memory_space<vmem>>, vector<1x256xf32>
    %292 = arith.mulf %264, %291 : vector<1x256xf32>
    %c0_109 = arith.constant 0 : index
    %c24 = arith.constant 24 : index
    %293 = vector.load %arg8[%c0_109, %c24] : memref<2x49xf32, #tpu.memory_space<vmem>>, vector<2x1xf32>
    %294 = vector.broadcast %293 : vector<2x1xf32> to vector<2x256xf32>
    %295 = arith.mulf %294, %74 : vector<2x256xf32>
    %296 = vector.broadcast %292 : vector<1x256xf32> to vector<2x256xf32>
    %297 = arith.mulf %295, %296 : vector<2x256xf32>
    %298 = arith.addf %290, %297 : vector<2x256xf32>
    %c255_i32 = arith.constant 255 : i32
    %299 = tpu.dynamic_rotate %74 by %c255_i32 dim 1 : vector<2x256xf32>, i32 -> vector<2x256xf32>
    %c4_110 = arith.constant 4 : index
    %c0_111 = arith.constant 0 : index
    %300 = vector.load %arg7[%c4_110, %c0_111] : memref<7x256xf32, #tpu.memory_space<vmem>>, vector<1x256xf32>
    %301 = arith.mulf %264, %300 : vector<1x256xf32>
    %c0_112 = arith.constant 0 : index
    %c25 = arith.constant 25 : index
    %302 = vector.load %arg8[%c0_112, %c25] : memref<2x49xf32, #tpu.memory_space<vmem>>, vector<2x1xf32>
    %303 = vector.broadcast %302 : vector<2x1xf32> to vector<2x256xf32>
    %304 = arith.mulf %303, %299 : vector<2x256xf32>
    %305 = vector.broadcast %301 : vector<1x256xf32> to vector<2x256xf32>
    %306 = arith.mulf %304, %305 : vector<2x256xf32>
    %307 = arith.addf %298, %306 : vector<2x256xf32>
    %c254_i32 = arith.constant 254 : i32
    %308 = tpu.dynamic_rotate %74 by %c254_i32 dim 1 : vector<2x256xf32>, i32 -> vector<2x256xf32>
    %c5_113 = arith.constant 5 : index
    %c0_114 = arith.constant 0 : index
    %309 = vector.load %arg7[%c5_113, %c0_114] : memref<7x256xf32, #tpu.memory_space<vmem>>, vector<1x256xf32>
    %310 = arith.mulf %264, %309 : vector<1x256xf32>
    %c0_115 = arith.constant 0 : index
    %c26 = arith.constant 26 : index
    %311 = vector.load %arg8[%c0_115, %c26] : memref<2x49xf32, #tpu.memory_space<vmem>>, vector<2x1xf32>
    %312 = vector.broadcast %311 : vector<2x1xf32> to vector<2x256xf32>
    %313 = arith.mulf %312, %308 : vector<2x256xf32>
    %314 = vector.broadcast %310 : vector<1x256xf32> to vector<2x256xf32>
    %315 = arith.mulf %313, %314 : vector<2x256xf32>
    %316 = arith.addf %307, %315 : vector<2x256xf32>
    %c253_i32 = arith.constant 253 : i32
    %317 = tpu.dynamic_rotate %74 by %c253_i32 dim 1 : vector<2x256xf32>, i32 -> vector<2x256xf32>
    %c6_116 = arith.constant 6 : index
    %c0_117 = arith.constant 0 : index
    %318 = vector.load %arg7[%c6_116, %c0_117] : memref<7x256xf32, #tpu.memory_space<vmem>>, vector<1x256xf32>
    %319 = arith.mulf %264, %318 : vector<1x256xf32>
    %c0_118 = arith.constant 0 : index
    %c27 = arith.constant 27 : index
    %320 = vector.load %arg8[%c0_118, %c27] : memref<2x49xf32, #tpu.memory_space<vmem>>, vector<2x1xf32>
    %321 = vector.broadcast %320 : vector<2x1xf32> to vector<2x256xf32>
    %322 = arith.mulf %321, %317 : vector<2x256xf32>
    %323 = vector.broadcast %319 : vector<1x256xf32> to vector<2x256xf32>
    %324 = arith.mulf %322, %323 : vector<2x256xf32>
    %325 = arith.addf %316, %324 : vector<2x256xf32>
    %c4_119 = arith.constant 4 : index
    %c0_120 = arith.constant 0 : index
    %326 = vector.load %arg6[%c4_119, %c0_120] : memref<7x256xf32, #tpu.memory_space<vmem>>, vector<1x256xf32>
    %c243_i32 = arith.constant 243 : i32
    %327 = tpu.dynamic_rotate %74 by %c243_i32 dim 1 : vector<2x256xf32>, i32 -> vector<2x256xf32>
    %c0_121 = arith.constant 0 : index
    %c0_122 = arith.constant 0 : index
    %328 = vector.load %arg7[%c0_121, %c0_122] : memref<7x256xf32, #tpu.memory_space<vmem>>, vector<1x256xf32>
    %329 = arith.mulf %326, %328 : vector<1x256xf32>
    %c0_123 = arith.constant 0 : index
    %c28 = arith.constant 28 : index
    %330 = vector.load %arg8[%c0_123, %c28] : memref<2x49xf32, #tpu.memory_space<vmem>>, vector<2x1xf32>
    %331 = vector.broadcast %330 : vector<2x1xf32> to vector<2x256xf32>
    %332 = arith.mulf %331, %327 : vector<2x256xf32>
    %333 = vector.broadcast %329 : vector<1x256xf32> to vector<2x256xf32>
    %334 = arith.mulf %332, %333 : vector<2x256xf32>
    %c242_i32 = arith.constant 242 : i32
    %335 = tpu.dynamic_rotate %74 by %c242_i32 dim 1 : vector<2x256xf32>, i32 -> vector<2x256xf32>
    %c1_124 = arith.constant 1 : index
    %c0_125 = arith.constant 0 : index
    %336 = vector.load %arg7[%c1_124, %c0_125] : memref<7x256xf32, #tpu.memory_space<vmem>>, vector<1x256xf32>
    %337 = arith.mulf %326, %336 : vector<1x256xf32>
    %c0_126 = arith.constant 0 : index
    %c29 = arith.constant 29 : index
    %338 = vector.load %arg8[%c0_126, %c29] : memref<2x49xf32, #tpu.memory_space<vmem>>, vector<2x1xf32>
    %339 = vector.broadcast %338 : vector<2x1xf32> to vector<2x256xf32>
    %340 = arith.mulf %339, %335 : vector<2x256xf32>
    %341 = vector.broadcast %337 : vector<1x256xf32> to vector<2x256xf32>
    %342 = arith.mulf %340, %341 : vector<2x256xf32>
    %343 = arith.addf %334, %342 : vector<2x256xf32>
    %c241_i32 = arith.constant 241 : i32
    %344 = tpu.dynamic_rotate %74 by %c241_i32 dim 1 : vector<2x256xf32>, i32 -> vector<2x256xf32>
    %c2_127 = arith.constant 2 : index
    %c0_128 = arith.constant 0 : index
    %345 = vector.load %arg7[%c2_127, %c0_128] : memref<7x256xf32, #tpu.memory_space<vmem>>, vector<1x256xf32>
    %346 = arith.mulf %326, %345 : vector<1x256xf32>
    %c0_129 = arith.constant 0 : index
    %c30 = arith.constant 30 : index
    %347 = vector.load %arg8[%c0_129, %c30] : memref<2x49xf32, #tpu.memory_space<vmem>>, vector<2x1xf32>
    %348 = vector.broadcast %347 : vector<2x1xf32> to vector<2x256xf32>
    %349 = arith.mulf %348, %344 : vector<2x256xf32>
    %350 = vector.broadcast %346 : vector<1x256xf32> to vector<2x256xf32>
    %351 = arith.mulf %349, %350 : vector<2x256xf32>
    %352 = arith.addf %343, %351 : vector<2x256xf32>
    %c240_i32 = arith.constant 240 : i32
    %353 = tpu.dynamic_rotate %74 by %c240_i32 dim 1 : vector<2x256xf32>, i32 -> vector<2x256xf32>
    %c3_130 = arith.constant 3 : index
    %c0_131 = arith.constant 0 : index
    %354 = vector.load %arg7[%c3_130, %c0_131] : memref<7x256xf32, #tpu.memory_space<vmem>>, vector<1x256xf32>
    %355 = arith.mulf %326, %354 : vector<1x256xf32>
    %c0_132 = arith.constant 0 : index
    %c31 = arith.constant 31 : index
    %356 = vector.load %arg8[%c0_132, %c31] : memref<2x49xf32, #tpu.memory_space<vmem>>, vector<2x1xf32>
    %357 = vector.broadcast %356 : vector<2x1xf32> to vector<2x256xf32>
    %358 = arith.mulf %357, %353 : vector<2x256xf32>
    %359 = vector.broadcast %355 : vector<1x256xf32> to vector<2x256xf32>
    %360 = arith.mulf %358, %359 : vector<2x256xf32>
    %361 = arith.addf %352, %360 : vector<2x256xf32>
    %c239_i32 = arith.constant 239 : i32
    %362 = tpu.dynamic_rotate %74 by %c239_i32 dim 1 : vector<2x256xf32>, i32 -> vector<2x256xf32>
    %c4_133 = arith.constant 4 : index
    %c0_134 = arith.constant 0 : index
    %363 = vector.load %arg7[%c4_133, %c0_134] : memref<7x256xf32, #tpu.memory_space<vmem>>, vector<1x256xf32>
    %364 = arith.mulf %326, %363 : vector<1x256xf32>
    %c0_135 = arith.constant 0 : index
    %c32 = arith.constant 32 : index
    %365 = vector.load %arg8[%c0_135, %c32] : memref<2x49xf32, #tpu.memory_space<vmem>>, vector<2x1xf32>
    %366 = vector.broadcast %365 : vector<2x1xf32> to vector<2x256xf32>
    %367 = arith.mulf %366, %362 : vector<2x256xf32>
    %368 = vector.broadcast %364 : vector<1x256xf32> to vector<2x256xf32>
    %369 = arith.mulf %367, %368 : vector<2x256xf32>
    %370 = arith.addf %361, %369 : vector<2x256xf32>
    %c238_i32 = arith.constant 238 : i32
    %371 = tpu.dynamic_rotate %74 by %c238_i32 dim 1 : vector<2x256xf32>, i32 -> vector<2x256xf32>
    %c5_136 = arith.constant 5 : index
    %c0_137 = arith.constant 0 : index
    %372 = vector.load %arg7[%c5_136, %c0_137] : memref<7x256xf32, #tpu.memory_space<vmem>>, vector<1x256xf32>
    %373 = arith.mulf %326, %372 : vector<1x256xf32>
    %c0_138 = arith.constant 0 : index
    %c33 = arith.constant 33 : index
    %374 = vector.load %arg8[%c0_138, %c33] : memref<2x49xf32, #tpu.memory_space<vmem>>, vector<2x1xf32>
    %375 = vector.broadcast %374 : vector<2x1xf32> to vector<2x256xf32>
    %376 = arith.mulf %375, %371 : vector<2x256xf32>
    %377 = vector.broadcast %373 : vector<1x256xf32> to vector<2x256xf32>
    %378 = arith.mulf %376, %377 : vector<2x256xf32>
    %379 = arith.addf %370, %378 : vector<2x256xf32>
    %c237_i32 = arith.constant 237 : i32
    %380 = tpu.dynamic_rotate %74 by %c237_i32 dim 1 : vector<2x256xf32>, i32 -> vector<2x256xf32>
    %c6_139 = arith.constant 6 : index
    %c0_140 = arith.constant 0 : index
    %381 = vector.load %arg7[%c6_139, %c0_140] : memref<7x256xf32, #tpu.memory_space<vmem>>, vector<1x256xf32>
    %382 = arith.mulf %326, %381 : vector<1x256xf32>
    %c0_141 = arith.constant 0 : index
    %c34 = arith.constant 34 : index
    %383 = vector.load %arg8[%c0_141, %c34] : memref<2x49xf32, #tpu.memory_space<vmem>>, vector<2x1xf32>
    %384 = vector.broadcast %383 : vector<2x1xf32> to vector<2x256xf32>
    %385 = arith.mulf %384, %380 : vector<2x256xf32>
    %386 = vector.broadcast %382 : vector<1x256xf32> to vector<2x256xf32>
    %387 = arith.mulf %385, %386 : vector<2x256xf32>
    %388 = arith.addf %379, %387 : vector<2x256xf32>
    %c5_142 = arith.constant 5 : index
    %c0_143 = arith.constant 0 : index
    %389 = vector.load %arg6[%c5_142, %c0_143] : memref<7x256xf32, #tpu.memory_space<vmem>>, vector<1x256xf32>
    %c227_i32 = arith.constant 227 : i32
    %390 = tpu.dynamic_rotate %74 by %c227_i32 dim 1 : vector<2x256xf32>, i32 -> vector<2x256xf32>
    %c0_144 = arith.constant 0 : index
    %c0_145 = arith.constant 0 : index
    %391 = vector.load %arg7[%c0_144, %c0_145] : memref<7x256xf32, #tpu.memory_space<vmem>>, vector<1x256xf32>
    %392 = arith.mulf %389, %391 : vector<1x256xf32>
    %c0_146 = arith.constant 0 : index
    %c35 = arith.constant 35 : index
    %393 = vector.load %arg8[%c0_146, %c35] : memref<2x49xf32, #tpu.memory_space<vmem>>, vector<2x1xf32>
    %394 = vector.broadcast %393 : vector<2x1xf32> to vector<2x256xf32>
    %395 = arith.mulf %394, %390 : vector<2x256xf32>
    %396 = vector.broadcast %392 : vector<1x256xf32> to vector<2x256xf32>
    %397 = arith.mulf %395, %396 : vector<2x256xf32>
    %c226_i32 = arith.constant 226 : i32
    %398 = tpu.dynamic_rotate %74 by %c226_i32 dim 1 : vector<2x256xf32>, i32 -> vector<2x256xf32>
    %c1_147 = arith.constant 1 : index
    %c0_148 = arith.constant 0 : index
    %399 = vector.load %arg7[%c1_147, %c0_148] : memref<7x256xf32, #tpu.memory_space<vmem>>, vector<1x256xf32>
    %400 = arith.mulf %389, %399 : vector<1x256xf32>
    %c0_149 = arith.constant 0 : index
    %c36 = arith.constant 36 : index
    %401 = vector.load %arg8[%c0_149, %c36] : memref<2x49xf32, #tpu.memory_space<vmem>>, vector<2x1xf32>
    %402 = vector.broadcast %401 : vector<2x1xf32> to vector<2x256xf32>
    %403 = arith.mulf %402, %398 : vector<2x256xf32>
    %404 = vector.broadcast %400 : vector<1x256xf32> to vector<2x256xf32>
    %405 = arith.mulf %403, %404 : vector<2x256xf32>
    %406 = arith.addf %397, %405 : vector<2x256xf32>
    %c225_i32 = arith.constant 225 : i32
    %407 = tpu.dynamic_rotate %74 by %c225_i32 dim 1 : vector<2x256xf32>, i32 -> vector<2x256xf32>
    %c2_150 = arith.constant 2 : index
    %c0_151 = arith.constant 0 : index
    %408 = vector.load %arg7[%c2_150, %c0_151] : memref<7x256xf32, #tpu.memory_space<vmem>>, vector<1x256xf32>
    %409 = arith.mulf %389, %408 : vector<1x256xf32>
    %c0_152 = arith.constant 0 : index
    %c37 = arith.constant 37 : index
    %410 = vector.load %arg8[%c0_152, %c37] : memref<2x49xf32, #tpu.memory_space<vmem>>, vector<2x1xf32>
    %411 = vector.broadcast %410 : vector<2x1xf32> to vector<2x256xf32>
    %412 = arith.mulf %411, %407 : vector<2x256xf32>
    %413 = vector.broadcast %409 : vector<1x256xf32> to vector<2x256xf32>
    %414 = arith.mulf %412, %413 : vector<2x256xf32>
    %415 = arith.addf %406, %414 : vector<2x256xf32>
    %c224_i32 = arith.constant 224 : i32
    %416 = tpu.dynamic_rotate %74 by %c224_i32 dim 1 : vector<2x256xf32>, i32 -> vector<2x256xf32>
    %c3_153 = arith.constant 3 : index
    %c0_154 = arith.constant 0 : index
    %417 = vector.load %arg7[%c3_153, %c0_154] : memref<7x256xf32, #tpu.memory_space<vmem>>, vector<1x256xf32>
    %418 = arith.mulf %389, %417 : vector<1x256xf32>
    %c0_155 = arith.constant 0 : index
    %c38 = arith.constant 38 : index
    %419 = vector.load %arg8[%c0_155, %c38] : memref<2x49xf32, #tpu.memory_space<vmem>>, vector<2x1xf32>
    %420 = vector.broadcast %419 : vector<2x1xf32> to vector<2x256xf32>
    %421 = arith.mulf %420, %416 : vector<2x256xf32>
    %422 = vector.broadcast %418 : vector<1x256xf32> to vector<2x256xf32>
    %423 = arith.mulf %421, %422 : vector<2x256xf32>
    %424 = arith.addf %415, %423 : vector<2x256xf32>
    %c223_i32 = arith.constant 223 : i32
    %425 = tpu.dynamic_rotate %74 by %c223_i32 dim 1 : vector<2x256xf32>, i32 -> vector<2x256xf32>
    %c4_156 = arith.constant 4 : index
    %c0_157 = arith.constant 0 : index
    %426 = vector.load %arg7[%c4_156, %c0_157] : memref<7x256xf32, #tpu.memory_space<vmem>>, vector<1x256xf32>
    %427 = arith.mulf %389, %426 : vector<1x256xf32>
    %c0_158 = arith.constant 0 : index
    %c39 = arith.constant 39 : index
    %428 = vector.load %arg8[%c0_158, %c39] : memref<2x49xf32, #tpu.memory_space<vmem>>, vector<2x1xf32>
    %429 = vector.broadcast %428 : vector<2x1xf32> to vector<2x256xf32>
    %430 = arith.mulf %429, %425 : vector<2x256xf32>
    %431 = vector.broadcast %427 : vector<1x256xf32> to vector<2x256xf32>
    %432 = arith.mulf %430, %431 : vector<2x256xf32>
    %433 = arith.addf %424, %432 : vector<2x256xf32>
    %c222_i32 = arith.constant 222 : i32
    %434 = tpu.dynamic_rotate %74 by %c222_i32 dim 1 : vector<2x256xf32>, i32 -> vector<2x256xf32>
    %c5_159 = arith.constant 5 : index
    %c0_160 = arith.constant 0 : index
    %435 = vector.load %arg7[%c5_159, %c0_160] : memref<7x256xf32, #tpu.memory_space<vmem>>, vector<1x256xf32>
    %436 = arith.mulf %389, %435 : vector<1x256xf32>
    %c0_161 = arith.constant 0 : index
    %c40 = arith.constant 40 : index
    %437 = vector.load %arg8[%c0_161, %c40] : memref<2x49xf32, #tpu.memory_space<vmem>>, vector<2x1xf32>
    %438 = vector.broadcast %437 : vector<2x1xf32> to vector<2x256xf32>
    %439 = arith.mulf %438, %434 : vector<2x256xf32>
    %440 = vector.broadcast %436 : vector<1x256xf32> to vector<2x256xf32>
    %441 = arith.mulf %439, %440 : vector<2x256xf32>
    %442 = arith.addf %433, %441 : vector<2x256xf32>
    %c221_i32 = arith.constant 221 : i32
    %443 = tpu.dynamic_rotate %74 by %c221_i32 dim 1 : vector<2x256xf32>, i32 -> vector<2x256xf32>
    %c6_162 = arith.constant 6 : index
    %c0_163 = arith.constant 0 : index
    %444 = vector.load %arg7[%c6_162, %c0_163] : memref<7x256xf32, #tpu.memory_space<vmem>>, vector<1x256xf32>
    %445 = arith.mulf %389, %444 : vector<1x256xf32>
    %c0_164 = arith.constant 0 : index
    %c41 = arith.constant 41 : index
    %446 = vector.load %arg8[%c0_164, %c41] : memref<2x49xf32, #tpu.memory_space<vmem>>, vector<2x1xf32>
    %447 = vector.broadcast %446 : vector<2x1xf32> to vector<2x256xf32>
    %448 = arith.mulf %447, %443 : vector<2x256xf32>
    %449 = vector.broadcast %445 : vector<1x256xf32> to vector<2x256xf32>
    %450 = arith.mulf %448, %449 : vector<2x256xf32>
    %451 = arith.addf %442, %450 : vector<2x256xf32>
    %c6_165 = arith.constant 6 : index
    %c0_166 = arith.constant 0 : index
    %452 = vector.load %arg6[%c6_165, %c0_166] : memref<7x256xf32, #tpu.memory_space<vmem>>, vector<1x256xf32>
    %c211_i32 = arith.constant 211 : i32
    %453 = tpu.dynamic_rotate %74 by %c211_i32 dim 1 : vector<2x256xf32>, i32 -> vector<2x256xf32>
    %c0_167 = arith.constant 0 : index
    %c0_168 = arith.constant 0 : index
    %454 = vector.load %arg7[%c0_167, %c0_168] : memref<7x256xf32, #tpu.memory_space<vmem>>, vector<1x256xf32>
    %455 = arith.mulf %452, %454 : vector<1x256xf32>
    %c0_169 = arith.constant 0 : index
    %c42 = arith.constant 42 : index
    %456 = vector.load %arg8[%c0_169, %c42] : memref<2x49xf32, #tpu.memory_space<vmem>>, vector<2x1xf32>
    %457 = vector.broadcast %456 : vector<2x1xf32> to vector<2x256xf32>
    %458 = arith.mulf %457, %453 : vector<2x256xf32>
    %459 = vector.broadcast %455 : vector<1x256xf32> to vector<2x256xf32>
    %460 = arith.mulf %458, %459 : vector<2x256xf32>
    %c210_i32 = arith.constant 210 : i32
    %461 = tpu.dynamic_rotate %74 by %c210_i32 dim 1 : vector<2x256xf32>, i32 -> vector<2x256xf32>
    %c1_170 = arith.constant 1 : index
    %c0_171 = arith.constant 0 : index
    %462 = vector.load %arg7[%c1_170, %c0_171] : memref<7x256xf32, #tpu.memory_space<vmem>>, vector<1x256xf32>
    %463 = arith.mulf %452, %462 : vector<1x256xf32>
    %c0_172 = arith.constant 0 : index
    %c43 = arith.constant 43 : index
    %464 = vector.load %arg8[%c0_172, %c43] : memref<2x49xf32, #tpu.memory_space<vmem>>, vector<2x1xf32>
    %465 = vector.broadcast %464 : vector<2x1xf32> to vector<2x256xf32>
    %466 = arith.mulf %465, %461 : vector<2x256xf32>
    %467 = vector.broadcast %463 : vector<1x256xf32> to vector<2x256xf32>
    %468 = arith.mulf %466, %467 : vector<2x256xf32>
    %469 = arith.addf %460, %468 : vector<2x256xf32>
    %c209_i32 = arith.constant 209 : i32
    %470 = tpu.dynamic_rotate %74 by %c209_i32 dim 1 : vector<2x256xf32>, i32 -> vector<2x256xf32>
    %c2_173 = arith.constant 2 : index
    %c0_174 = arith.constant 0 : index
    %471 = vector.load %arg7[%c2_173, %c0_174] : memref<7x256xf32, #tpu.memory_space<vmem>>, vector<1x256xf32>
    %472 = arith.mulf %452, %471 : vector<1x256xf32>
    %c0_175 = arith.constant 0 : index
    %c44 = arith.constant 44 : index
    %473 = vector.load %arg8[%c0_175, %c44] : memref<2x49xf32, #tpu.memory_space<vmem>>, vector<2x1xf32>
    %474 = vector.broadcast %473 : vector<2x1xf32> to vector<2x256xf32>
    %475 = arith.mulf %474, %470 : vector<2x256xf32>
    %476 = vector.broadcast %472 : vector<1x256xf32> to vector<2x256xf32>
    %477 = arith.mulf %475, %476 : vector<2x256xf32>
    %478 = arith.addf %469, %477 : vector<2x256xf32>
    %c208_i32 = arith.constant 208 : i32
    %479 = tpu.dynamic_rotate %74 by %c208_i32 dim 1 : vector<2x256xf32>, i32 -> vector<2x256xf32>
    %c3_176 = arith.constant 3 : index
    %c0_177 = arith.constant 0 : index
    %480 = vector.load %arg7[%c3_176, %c0_177] : memref<7x256xf32, #tpu.memory_space<vmem>>, vector<1x256xf32>
    %481 = arith.mulf %452, %480 : vector<1x256xf32>
    %c0_178 = arith.constant 0 : index
    %c45 = arith.constant 45 : index
    %482 = vector.load %arg8[%c0_178, %c45] : memref<2x49xf32, #tpu.memory_space<vmem>>, vector<2x1xf32>
    %483 = vector.broadcast %482 : vector<2x1xf32> to vector<2x256xf32>
    %484 = arith.mulf %483, %479 : vector<2x256xf32>
    %485 = vector.broadcast %481 : vector<1x256xf32> to vector<2x256xf32>
    %486 = arith.mulf %484, %485 : vector<2x256xf32>
    %487 = arith.addf %478, %486 : vector<2x256xf32>
    %c207_i32 = arith.constant 207 : i32
    %488 = tpu.dynamic_rotate %74 by %c207_i32 dim 1 : vector<2x256xf32>, i32 -> vector<2x256xf32>
    %c4_179 = arith.constant 4 : index
    %c0_180 = arith.constant 0 : index
    %489 = vector.load %arg7[%c4_179, %c0_180] : memref<7x256xf32, #tpu.memory_space<vmem>>, vector<1x256xf32>
    %490 = arith.mulf %452, %489 : vector<1x256xf32>
    %c0_181 = arith.constant 0 : index
    %c46 = arith.constant 46 : index
    %491 = vector.load %arg8[%c0_181, %c46] : memref<2x49xf32, #tpu.memory_space<vmem>>, vector<2x1xf32>
    %492 = vector.broadcast %491 : vector<2x1xf32> to vector<2x256xf32>
    %493 = arith.mulf %492, %488 : vector<2x256xf32>
    %494 = vector.broadcast %490 : vector<1x256xf32> to vector<2x256xf32>
    %495 = arith.mulf %493, %494 : vector<2x256xf32>
    %496 = arith.addf %487, %495 : vector<2x256xf32>
    %c206_i32 = arith.constant 206 : i32
    %497 = tpu.dynamic_rotate %74 by %c206_i32 dim 1 : vector<2x256xf32>, i32 -> vector<2x256xf32>
    %c5_182 = arith.constant 5 : index
    %c0_183 = arith.constant 0 : index
    %498 = vector.load %arg7[%c5_182, %c0_183] : memref<7x256xf32, #tpu.memory_space<vmem>>, vector<1x256xf32>
    %499 = arith.mulf %452, %498 : vector<1x256xf32>
    %c0_184 = arith.constant 0 : index
    %c47 = arith.constant 47 : index
    %500 = vector.load %arg8[%c0_184, %c47] : memref<2x49xf32, #tpu.memory_space<vmem>>, vector<2x1xf32>
    %501 = vector.broadcast %500 : vector<2x1xf32> to vector<2x256xf32>
    %502 = arith.mulf %501, %497 : vector<2x256xf32>
    %503 = vector.broadcast %499 : vector<1x256xf32> to vector<2x256xf32>
    %504 = arith.mulf %502, %503 : vector<2x256xf32>
    %505 = arith.addf %496, %504 : vector<2x256xf32>
    %c205_i32 = arith.constant 205 : i32
    %506 = tpu.dynamic_rotate %74 by %c205_i32 dim 1 : vector<2x256xf32>, i32 -> vector<2x256xf32>
    %c6_185 = arith.constant 6 : index
    %c0_186 = arith.constant 0 : index
    %507 = vector.load %arg7[%c6_185, %c0_186] : memref<7x256xf32, #tpu.memory_space<vmem>>, vector<1x256xf32>
    %508 = arith.mulf %452, %507 : vector<1x256xf32>
    %c0_187 = arith.constant 0 : index
    %c48 = arith.constant 48 : index
    %509 = vector.load %arg8[%c0_187, %c48] : memref<2x49xf32, #tpu.memory_space<vmem>>, vector<2x1xf32>
    %510 = vector.broadcast %509 : vector<2x1xf32> to vector<2x256xf32>
    %511 = arith.mulf %510, %506 : vector<2x256xf32>
    %512 = vector.broadcast %508 : vector<1x256xf32> to vector<2x256xf32>
    %513 = arith.mulf %511, %512 : vector<2x256xf32>
    %514 = arith.addf %505, %513 : vector<2x256xf32>
    %515 = arith.addf %137, %200 : vector<2x256xf32>
    %516 = arith.addf %263, %325 : vector<2x256xf32>
    %517 = arith.addf %388, %451 : vector<2x256xf32>
    %518 = arith.addf %515, %516 : vector<2x256xf32>
    %519 = arith.addf %517, %514 : vector<2x256xf32>
    %520 = arith.addf %518, %519 : vector<2x256xf32>
    %cst_188 = arith.constant dense<0.000000e+00> : vector<256xf32>
    %521 = vector.multi_reduction <add>, %520, %cst_188 [0] : vector<2x256xf32> to vector<256xf32>
    %522 = vector.shape_cast %521 : vector<256xf32> to vector<1x256xf32>
    %523 = math.absf %522 : vector<1x256xf32>
    %cst_189 = arith.constant 0.000000e+00 : f32
    %524 = vector.broadcast %cst_189 : f32 to vector<1x256xf32>
    %525 = arith.subf %524, %523 : vector<1x256xf32>
    %526 = math.exp %525 : vector<1x256xf32>
    %cst_190 = arith.constant 1.000000e+00 : f32
    %527 = vector.broadcast %cst_190 : f32 to vector<1x256xf32>
    %528 = arith.addf %527, %526 : vector<1x256xf32>
    %cst_191 = arith.constant 1.000000e+00 : f32
    %529 = vector.broadcast %cst_191 : f32 to vector<1x256xf32>
    %530 = arith.divf %529, %528 : vector<1x256xf32>
    %cst_192 = arith.constant 0.000000e+00 : f32
    %531 = vector.broadcast %cst_192 : f32 to vector<1x256xf32>
    %532 = arith.cmpf oge, %522, %531 : vector<1x256xf32>
    %533 = arith.mulf %526, %530 : vector<1x256xf32>
    %534 = arith.select %532, %530, %533 : vector<1x256xi1>, vector<1x256xf32>
    %535 = vector.broadcast %534 : vector<1x256xf32> to vector<32x256xf32>
    %536 = arith.mulf %67, %535 : vector<32x256xf32>
    %c0_193 = arith.constant 0 : index
    %c0_194 = arith.constant 0 : index
    %c0_195 = arith.constant 0 : index
    %537 = vector.load %arg9[%c0_193, %c0_194, %c0_195] : memref<1x32x256xf32, #tpu.memory_space<vmem>>, vector<1x32x256xf32>
    %538 = vector.shape_cast %537 : vector<1x32x256xf32> to vector<32x256xf32>
    %539 = vector.shape_cast %536 : vector<32x256xf32> to vector<1x32x256xf32>
    tpu.vector_store %arg9[%c0_193, %c0_194, %c0_195], %539 {strides = array<i32>} : memref<1x32x256xf32, #tpu.memory_space<vmem>>, vector<1x32x256xf32>,
    return
  }
  func.func @transform_0(%arg0: i32) -> (i32, i32, i32) {
    %c0_i32 = arith.constant 0 : i32
    %c0_i32_0 = arith.constant 0 : i32
    %c0_i32_1 = arith.constant 0 : i32
    return %arg0, %c0_i32, %c0_i32_0 : i32, i32, i32
  }
  func.func @transform_1(%arg0: i32) -> (i32, i32) {
    %c0_i32 = arith.constant 0 : i32
    %c0_i32_0 = arith.constant 0 : i32
    %c0_i32_1 = arith.constant 0 : i32
    return %c0_i32, %c0_i32_0 : i32, i32
  }
  func.func @transform_2(%arg0: i32) -> (i32, i32) {
    %c0_i32 = arith.constant 0 : i32
    %c0_i32_0 = arith.constant 0 : i32
    %c0_i32_1 = arith.constant 0 : i32
    return %c0_i32, %c0_i32_0 : i32, i32
  }
  func.func @transform_3(%arg0: i32) -> (i32, i32) {
    %c0_i32 = arith.constant 0 : i32
    %c0_i32_0 = arith.constant 0 : i32
    %c0_i32_1 = arith.constant 0 : i32
    return %c0_i32, %c0_i32_0 : i32, i32
  }
  func.func @transform_4(%arg0: i32) -> (i32, i32) {
    %c0_i32 = arith.constant 0 : i32
    %c0_i32_0 = arith.constant 0 : i32
    %c0_i32_1 = arith.constant 0 : i32
    return %c0_i32, %c0_i32_0 : i32, i32
  }
  func.func @transform_5(%arg0: i32) -> (i32, i32) {
    %c0_i32 = arith.constant 0 : i32
    %c0_i32_0 = arith.constant 0 : i32
    %c0_i32_1 = arith.constant 0 : i32
    return %c0_i32, %c0_i32_0 : i32, i32
  }
  func.func @transform_6(%arg0: i32) -> (i32, i32) {
    %c0_i32 = arith.constant 0 : i32
    %c0_i32_0 = arith.constant 0 : i32
    %c0_i32_1 = arith.constant 0 : i32
    return %c0_i32, %c0_i32_0 : i32, i32
  }
  func.func @transform_7(%arg0: i32) -> (i32, i32) {
    %c0_i32 = arith.constant 0 : i32
    %c0_i32_0 = arith.constant 0 : i32
    %c0_i32_1 = arith.constant 0 : i32
    return %c0_i32, %c0_i32_0 : i32, i32
  }
  func.func @transform_8(%arg0: i32) -> (i32, i32, i32) {
    %c0_i32 = arith.constant 0 : i32
    %c0_i32_0 = arith.constant 0 : i32
    %c0_i32_1 = arith.constant 0 : i32
    return %arg0, %c0_i32, %c0_i32_0 : i32, i32, i32
  }
}

</mosaic_0001>

<llo_original>
// kernel: tpu_custom_call.1
$region0: #{tpu_custom_call.1}
  #allocation0 [shape = 'u32[]', space=smem, size = 0x4, offset = 0x4, fixed_abs, tag = 'smem constant byte address 0x4 - core index']
  #allocation1 [shape = 'u32[144,128]{1,0:T(1,128)}', space=vmem, size = 0x12000, scoped, tag = 'internal scratch']
  %s0 = inlined_call_operand.vmem [shape: f32[2,4,256], index: 0, kind: input, shape index: {}]
  %s1 = inlined_call_operand.vmem [shape: f32[32,4], index: 1, kind: input, shape index: {}]
  %s2 = inlined_call_operand.vmem [shape: f32[32,1], index: 2, kind: input, shape index: {}]
  %s3 = inlined_call_operand.vmem [shape: f32[2,32], index: 3, kind: input, shape index: {}]
  %s4 = inlined_call_operand.vmem [shape: f32[32,2], index: 4, kind: input, shape index: {}]
  %s5 = inlined_call_operand.vmem [shape: f32[7,256], index: 5, kind: input, shape index: {}]
  %s6 = inlined_call_operand.vmem [shape: f32[7,256], index: 6, kind: input, shape index: {}]
  %s7 = inlined_call_operand.vmem [shape: f32[2,49], index: 7, kind: input, shape index: {}]
  %s8 = inlined_call_operand.hbm [shape: f32[2,32,256], index: 8, kind: output, shape index: {}]
  %s9 = sld [smem:[#allocation0]]
  $region65: #{tpu_custom_call.1} parent=0
    _
  %s11 = ssub.s32 1, %s9
  %s12 = scalar_select 0, %s11, %s9
  $region1: #{tpu_custom_call.1} parent=0
    #allocation2 [shape = 'u8[65536]{0}', space=vmem, size = 0x10000, scoped, tag = 'output window, operand 0']
    #allocation3 [shape = 's32[2]{0}', space=sflag, size = 0x8, scoped, tag = 'scoped memory for tpu_custom_call.1']
    %13 = vsyncpa [#allocation3], 0
    %s14 = scalar_lea.sflag [#allocation3], 1
    %15 = vsyncpa %s14, 0
    loop: start=0, step=1, limit=4
    $region2: #{tpu_custom_call.1} parent=1 // loop_pre_header
      _
    $region3: #{tpu_custom_call.1} parent=1 // loop_header
      %s17 = sphi 0, %s21
      %p18 = scmp.ge.s32.totalorder %s17, 4
      %s27 = sphi 0, %s29
      %s30 = sphi 0, %s27
      %s31 = sphi 0, %s30
      %s47 = sphi 0, %s31
      %s51 = sphi 0, %s51
      %s53 = sphi 0, %s51
      %s54 = sphi 0, %s53
      %s68 = sphi 0, %s54
      %s72 = sphi 0, %s72
      %s74 = sphi 0, %s72
      %s75 = sphi 0, %s74
      %s89 = sphi 0, %s75
      %s93 = sphi 0, %s93
      %s95 = sphi 0, %s93
      %s96 = sphi 0, %s95
      %s110 = sphi 0, %s96
      %s114 = sphi 0, %s114
      %s116 = sphi 0, %s114
      %s117 = sphi 0, %s116
      %s131 = sphi 0, %s117
      %s135 = sphi 0, %s135
      %s137 = sphi 0, %s135
      %s138 = sphi 0, %s137
      %s152 = sphi 0, %s138
      %s156 = sphi 0, %s156
      %s158 = sphi 0, %s156
      %s159 = sphi 0, %s158
      %s173 = sphi 0, %s159
      %s177 = sphi 0, %s177
      %s179 = sphi 0, %s177
      %s180 = sphi 0, %s179
      %s194 = sphi 0, %s180
      %s200 = sphi 0, %s202
      %s203 = sphi 0, %s200
      %s204 = sphi 0, %s203
      %s220 = sphi 0, %s204
    $region4: #{tpu_custom_call.1} parent=1 // loop_header_branch
      %20 = sbr.rel (%p18) target = $region8
    $region5: #{tpu_custom_call.1} parent=1 // loop_body
      %s22 = ssub.s32 %s17, 1
      %s23 = ssub.s32 %s17, 2
      %s24 = sadd.s32 %s17, 1
      %s25 = ssub.s32 %s17, %s24
      %p26 = scmp.eq.s32.totalorder %s25, 0
      %s28 = sadd.s32 %s27, 1
      %s29 = scalar_select %p26, %s27, %s28
      %p32 = pneg %p26
      %p33 = scmp.eq.s32.totalorder %s17, 1
      %p34 = por %p32, %p33
      %p35 = scmp.ne.s32.totalorder %s27, %s30
      %p36 = scmp.eq.s32.totalorder %s17, 0
      %p37 = por %p35, %p36
      %p38 = scmp.ne.s32.totalorder %s27, %s30
      %p39 = scmp.eq.s32.totalorder %s22, 1
      %p40 = por %p38, %p39
      %p41 = scmp.ne.s32.totalorder %s30, %s31
      %p42 = scmp.eq.s32.totalorder %s22, 0
      %p43 = por %p41, %p42
      %p44 = scmp.ne.s32.totalorder %s30, %s31
      %p45 = scmp.eq.s32.totalorder %s23, 1
      %p46 = por %p44, %p45
      %p48 = scmp.ne.s32.totalorder %s31, %s47
      %p49 = scmp.eq.s32.totalorder %s23, 0
      %p50 = por %p48, %p49
      %s52 = sadd.s32 %s51, 1
      %p55 = scmp.eq.s32.totalorder %s17, 1
      %p56 = scmp.ne.s32.totalorder %s51, %s53
      %p57 = scmp.eq.s32.totalorder %s17, 0
      %p58 = por %p56, %p57
      %p59 = scmp.ne.s32.totalorder %s51, %s53
      %p60 = scmp.eq.s32.totalorder %s22, 1
      %p61 = por %p59, %p60
      %p62 = scmp.ne.s32.totalorder %s53, %s54
      %p63 = scmp.eq.s32.totalorder %s22, 0
      %p64 = por %p62, %p63
      %p65 = scmp.ne.s32.totalorder %s53, %s54
      %p66 = scmp.eq.s32.totalorder %s23, 1
      %p67 = por %p65, %p66
      %p69 = scmp.ne.s32.totalorder %s54, %s68
      %p70 = scmp.eq.s32.totalorder %s23, 0
      %p71 = por %p69, %p70
      %s73 = sadd.s32 %s72, 1
      %p76 = scmp.eq.s32.totalorder %s17, 1
      %p77 = scmp.ne.s32.totalorder %s72, %s74
      %p78 = scmp.eq.s32.totalorder %s17, 0
      %p79 = por %p77, %p78
      %p80 = scmp.ne.s32.totalorder %s72, %s74
      %p81 = scmp.eq.s32.totalorder %s22, 1
      %p82 = por %p80, %p81
      %p83 = scmp.ne.s32.totalorder %s74, %s75
      %p84 = scmp.eq.s32.totalorder %s22, 0
      %p85 = por %p83, %p84
      %p86 = scmp.ne.s32.totalorder %s74, %s75
      %p87 = scmp.eq.s32.totalorder %s23, 1
      %p88 = por %p86, %p87
      %p90 = scmp.ne.s32.totalorder %s75, %s89
      %p91 = scmp.eq.s32.totalorder %s23, 0
      %p92 = por %p90, %p91
      %s94 = sadd.s32 %s93, 1
      %p97 = scmp.eq.s32.totalorder %s17, 1
      %p98 = scmp.ne.s32.totalorder %s93, %s95
      %p99 = scmp.eq.s32.totalorder %s17, 0
      %p100 = por %p98, %p99
      %p101 = scmp.ne.s32.totalorder %s93, %s95
      %p102 = scmp.eq.s32.totalorder %s22, 1
      %p103 = por %p101, %p102
      %p104 = scmp.ne.s32.totalorder %s95, %s96
      %p105 = scmp.eq.s32.totalorder %s22, 0
      %p106 = por %p104, %p105
      %p107 = scmp.ne.s32.totalorder %s95, %s96
      %p108 = scmp.eq.s32.totalorder %s23, 1
      %p109 = por %p107, %p108
      %p111 = scmp.ne.s32.totalorder %s96, %s110
      %p112 = scmp.eq.s32.totalorder %s23, 0
      %p113 = por %p111, %p112
      %s115 = sadd.s32 %s114, 1
      %p118 = scmp.eq.s32.totalorder %s17, 1
      %p119 = scmp.ne.s32.totalorder %s114, %s116
      %p120 = scmp.eq.s32.totalorder %s17, 0
      %p121 = por %p119, %p120
      %p122 = scmp.ne.s32.totalorder %s114, %s116
      %p123 = scmp.eq.s32.totalorder %s22, 1
      %p124 = por %p122, %p123
      %p125 = scmp.ne.s32.totalorder %s116, %s117
      %p126 = scmp.eq.s32.totalorder %s22, 0
      %p127 = por %p125, %p126
      %p128 = scmp.ne.s32.totalorder %s116, %s117
      %p129 = scmp.eq.s32.totalorder %s23, 1
      %p130 = por %p128, %p129
      %p132 = scmp.ne.s32.totalorder %s117, %s131
      %p133 = scmp.eq.s32.totalorder %s23, 0
      %p134 = por %p132, %p133
      %s136 = sadd.s32 %s135, 1
      %p139 = scmp.eq.s32.totalorder %s17, 1
      %p140 = scmp.ne.s32.totalorder %s135, %s137
      %p141 = scmp.eq.s32.totalorder %s17, 0
      %p142 = por %p140, %p141
      %p143 = scmp.ne.s32.totalorder %s135, %s137
      %p144 = scmp.eq.s32.totalorder %s22, 1
      %p145 = por %p143, %p144
      %p146 = scmp.ne.s32.totalorder %s137, %s138
      %p147 = scmp.eq.s32.totalorder %s22, 0
      %p148 = por %p146, %p147
      %p149 = scmp.ne.s32.totalorder %s137, %s138
      %p150 = scmp.eq.s32.totalorder %s23, 1
      %p151 = por %p149, %p150
      %p153 = scmp.ne.s32.totalorder %s138, %s152
      %p154 = scmp.eq.s32.totalorder %s23, 0
      %p155 = por %p153, %p154
      %s157 = sadd.s32 %s156, 1
      %p160 = scmp.eq.s32.totalorder %s17, 1
      %p161 = scmp.ne.s32.totalorder %s156, %s158
      %p162 = scmp.eq.s32.totalorder %s17, 0
      %p163 = por %p161, %p162
      %p164 = scmp.ne.s32.totalorder %s156, %s158
      %p165 = scmp.eq.s32.totalorder %s22, 1
      %p166 = por %p164, %p165
      %p167 = scmp.ne.s32.totalorder %s158, %s159
      %p168 = scmp.eq.s32.totalorder %s22, 0
      %p169 = por %p167, %p168
      %p170 = scmp.ne.s32.totalorder %s158, %s159
      %p171 = scmp.eq.s32.totalorder %s23, 1
      %p172 = por %p170, %p171
      %p174 = scmp.ne.s32.totalorder %s159, %s173
      %p175 = scmp.eq.s32.totalorder %s23, 0
      %p176 = por %p174, %p175
      %s178 = sadd.s32 %s177, 1
      %p181 = scmp.eq.s32.totalorder %s17, 1
      %p182 = scmp.ne.s32.totalorder %s177, %s179
      %p183 = scmp.eq.s32.totalorder %s17, 0
      %p184 = por %p182, %p183
      %p185 = scmp.ne.s32.totalorder %s177, %s179
      %p186 = scmp.eq.s32.totalorder %s22, 1
      %p187 = por %p185, %p186
      %p188 = scmp.ne.s32.totalorder %s179, %s180
      %p189 = scmp.eq.s32.totalorder %s22, 0
      %p190 = por %p188, %p189
      %p191 = scmp.ne.s32.totalorder %s179, %s180
      %p192 = scmp.eq.s32.totalorder %s23, 1
      %p193 = por %p191, %p192
      %p195 = scmp.ne.s32.totalorder %s180, %s194
      %p196 = scmp.eq.s32.totalorder %s23, 0
      %p197 = por %p195, %p196
      %s198 = ssub.s32 %s17, %s24
      %p199 = scmp.eq.s32.totalorder %s198, 0
      %s201 = sadd.s32 %s200, 1
      %s202 = scalar_select %p199, %s200, %s201
      %p205 = pneg %p199
      %p206 = scmp.eq.s32.totalorder %s17, 1
      %p207 = por %p205, %p206
      %p208 = scmp.ne.s32.totalorder %s200, %s203
      %p209 = scmp.eq.s32.totalorder %s17, 0
      %p210 = por %p208, %p209
      %p211 = scmp.ne.s32.totalorder %s200, %s203
      %p212 = scmp.eq.s32.totalorder %s22, 1
      %p213 = por %p211, %p212
      %p214 = scmp.ne.s32.totalorder %s203, %s204
      %p215 = scmp.eq.s32.totalorder %s22, 0
      %p216 = por %p214, %p215
      %p217 = scmp.ne.s32.totalorder %s203, %s204
      %p218 = scmp.eq.s32.totalorder %s23, 1
      %p219 = por %p217, %p218
      %p221 = scmp.ne.s32.totalorder %s204, %s220
      %p222 = scmp.eq.s32.totalorder %s23, 0
      %p223 = por %p221, %p222
      %p224 = scmp.le.s32.totalorder 1, %s17
      %p225 = scmp.lt.s32.totalorder %s17, 3
      %p226 = pnand %p224, %p225
      %p227 = pneg %p226
      // Predicated region
      $region9: #{tpu_custom_call.1} parent=5 // pred_check
        _
      $region10: #{tpu_custom_call.1} parent=5 // pred_check_branch
        %229 = sbr.rel (%p226) target = $region12
      $region11: #{tpu_custom_call.1} parent=5 // pred_region
        %s230 = ssub.s32 %s17, 1
        // Predicated region
        $region13: #{tpu_custom_call.1} parent=11 // pred_check
          %p231 = pneg %p64
        $region14: #{tpu_custom_call.1} parent=11 // pred_check_branch
          %233 = sbr.rel (%p231) target = $region16
        $region15: #{tpu_custom_call.1} parent=11 // pred_region
          _
        $region16: #{tpu_custom_call.1} parent=11 // pred_fallthru
          _
        // Predicated region
        $region17: #{tpu_custom_call.1} parent=11 // pred_check
          %p234 = pneg %p85
        $region18: #{tpu_custom_call.1} parent=11 // pred_check_branch
          %236 = sbr.rel (%p234) target = $region20
        $region19: #{tpu_custom_call.1} parent=11 // pred_region
          _
        $region20: #{tpu_custom_call.1} parent=11 // pred_fallthru
          _
        // Predicated region
        $region21: #{tpu_custom_call.1} parent=11 // pred_check
          %p237 = pneg %p106
        $region22: #{tpu_custom_call.1} parent=11 // pred_check_branch
          %239 = sbr.rel (%p237) target = $region24
        $region23: #{tpu_custom_call.1} parent=11 // pred_region
          _
        $region24: #{tpu_custom_call.1} parent=11 // pred_fallthru
          _
        // Predicated region
        $region25: #{tpu_custom_call.1} parent=11 // pred_check
          %p240 = pneg %p127
        $region26: #{tpu_custom_call.1} parent=11 // pred_check_branch
          %242 = sbr.rel (%p240) target = $region28
        $region27: #{tpu_custom_call.1} parent=11 // pred_region
          _
        $region28: #{tpu_custom_call.1} parent=11 // pred_fallthru
          _
        // Predicated region
        $region29: #{tpu_custom_call.1} parent=11 // pred_check
          %p243 = pneg %p148
        $region30: #{tpu_custom_call.1} parent=11 // pred_check_branch
          %245 = sbr.rel (%p243) target = $region32
        $region31: #{tpu_custom_call.1} parent=11 // pred_region
          _
        $region32: #{tpu_custom_call.1} parent=11 // pred_fallthru
          _
        // Predicated region
        $region33: #{tpu_custom_call.1} parent=11 // pred_check
          %p246 = pneg %p169
        $region34: #{tpu_custom_call.1} parent=11 // pred_check_branch
          %248 = sbr.rel (%p246) target = $region36
        $region35: #{tpu_custom_call.1} parent=11 // pred_region
          _
        $region36: #{tpu_custom_call.1} parent=11 // pred_fallthru
          _
        // Predicated region
        $region37: #{tpu_custom_call.1} parent=11 // pred_check
          %p249 = pneg %p190
        $region38: #{tpu_custom_call.1} parent=11 // pred_check_branch
          %251 = sbr.rel (%p249) target = $region40
        $region39: #{tpu_custom_call.1} parent=11 // pred_region
          _
        $region40: #{tpu_custom_call.1} parent=11 // pred_fallthru
          _
      $region12: #{tpu_custom_call.1} parent=5 // pred_fallthru
        _
      %p252 = scmp.lt.s32.totalorder %s17, 2
      // Predicated region
      $region41: #{tpu_custom_call.1} parent=5 // pred_check
        %p253 = pneg %p252
      $region42: #{tpu_custom_call.1} parent=5 // pred_check_branch
        %255 = sbr.rel (%p253) target = $region44
      $region43: #{tpu_custom_call.1} parent=5 // pred_region
        // Predicated region
        $region45: #{tpu_custom_call.1} parent=43 // pred_check
          %p256 = pneg %p37
        $region46: #{tpu_custom_call.1} parent=43 // pred_check_branch
          %258 = sbr.rel (%p256) target = $region48
        $region47: #{tpu_custom_call.1} parent=43 // pred_region
          %p259 = scmp.lt.s32.totalorder %s17, 1
          %s260 = scalar_select %p259, %s17, 1
          %s261 = smul.addr %s260, 2
          %s262 = smul.addr %s261, 4
          %s263 = scalar_lea.vmem %s0, %s262
        $region48: #{tpu_custom_call.1} parent=43 // pred_fallthru
          _
      $region44: #{tpu_custom_call.1} parent=5 // pred_fallthru
        _
      %p264 = scmp.le.s32.totalorder 1, %s17
      %p265 = scmp.lt.s32.totalorder %s17, 3
      %p266 = pnand %p264, %p265
      %p267 = pneg %p266
      // Predicated region
      $region49: #{tpu_custom_call.1} parent=5 // pred_check
        _
      $region50: #{tpu_custom_call.1} parent=5 // pred_check_branch
        %269 = sbr.rel (%p266) target = $region52
      $region51: #{tpu_custom_call.1} parent=5 // pred_region
        %s270 = ssub.s32 %s17, 1
        %p271 = scmp.lt.s32.totalorder %s22, 1
        %s272 = scalar_select %p271, %s22, 1
        %s273 = smul.addr %s272, 2
        %s274 = smul.addr %s273, 4
        %s275 = scalar_lea.vmem %s0, %s274
        %p276 = pneg %p43
        %p277 = pneg %p40
        %p278 = pneg %p64
        %p279 = pneg %p61
        %p280 = pneg %p85
        %p281 = pneg %p82
        %p282 = pneg %p106
        %p283 = pneg %p103
        %p284 = pneg %p127
        %p285 = pneg %p124
        %p286 = pneg %p148
        %p287 = pneg %p145
        %p288 = pneg %p169
        %p289 = pneg %p166
        %p290 = pneg %p190
        %p291 = pneg %p187
        %p292 = pneg %p216
        %p293 = pneg %p213
        %s294 = sand.u32 %s203, 1
        %s295 = scalar_lea.sflag [#allocation3], %s294
        %s296 = sand.u32 %s203, 1
        %s297 = smul.addr %s296, 64
        %s298 = scalar_lea.vmem [#allocation2], %s297
        %p299 = scmp.lt.s32.totalorder %s22, 1
        %s300 = scalar_select %p299, %s22, 1
        %s301 = smul.addr %s300, 2
        %s302 = smul.addr %s301, 4
        %s303 = scalar_lea.vmem %s0, %s302
        %v304 = vld [vmem:[%s303] sm:$0xff]
        %v305 = vld [vmem:[%s1] sm:$0xff]
        %v306 = vld [vmem:[%s1 + $0x8] sm:$0xff]
        %v307 = vld [vmem:[%s1 + $0x10] sm:$0xff]
        %v308 = vld [vmem:[%s1 + $0x18] sm:$0xff]
        %310 = vset.pattern.permute.xlu0 0
        %311 = vperm.xlu0 %310, %v305
        %v312 = vpop.permute.xlu0 %311
        %315 = vset.pattern.permute.xlu0 0
        %316 = vperm.xlu0 %315, %v306
        %v317 = vpop.permute.xlu0 %316
        %320 = vset.pattern.permute.xlu0 0
        %321 = vperm.xlu0 %320, %v307
        %v322 = vpop.permute.xlu0 %321
        %325 = vset.pattern.permute.xlu0 0
        %326 = vperm.xlu0 %325, %v308
        %v327 = vpop.permute.xlu0 %326
        %v330 = vlaneseq
        %v331 = vshrl.u32 %v330, 7
        %v332 = vsub.s32 0, %v331
        %v333 = vrot.slane %v304, %v332
        %v334 = vlaneseq
        %v335 = vshrl.u32 %v334, 7
        %v336 = vsub.s32 4, %v335
        %v337 = vrot.slane %v304, %v336
        %v340 = vlaneseq
        %v341 = vshrl.u32 %v340, 7
        %v342 = vsub.s32 0, %v341
        %v343 = vrot.slane %v333, %v342
        %v344 = vlaneseq
        %v345 = vshrl.u32 %v344, 7
        %v346 = vsub.s32 0, %v345
        %v347 = vrot.slane %v337, %v346
        %v348 = vmul.f32 %v312, %v343
        %v349 = vmul.f32 %v312, %v347
        %v350 = vmul.f32 %v317, %v343
        %v351 = vmul.f32 %v317, %v347
        %v352 = vmul.f32 %v322, %v343
        %v353 = vmul.f32 %v322, %v347
        %v354 = vmul.f32 %v327, %v343
        %v355 = vmul.f32 %v327, %v347
        %356 = vset.pattern.permute.xlu0 1
        %357 = vperm.xlu0 %356, %v305
        %v358 = vpop.permute.xlu0 %357
        %360 = vset.pattern.permute.xlu0 1
        %361 = vperm.xlu0 %360, %v306
        %v362 = vpop.permute.xlu0 %361
        %364 = vset.pattern.permute.xlu0 1
        %365 = vperm.xlu0 %364, %v307
        %v366 = vpop.permute.xlu0 %365
        %368 = vset.pattern.permute.xlu0 1
        %369 = vperm.xlu0 %368, %v308
        %v370 = vpop.permute.xlu0 %369
        %v372 = vlaneseq
        %v373 = vshrl.u32 %v372, 7
        %v374 = vsub.s32 1, %v373
        %v375 = vrot.slane %v304, %v374
        %v376 = vlaneseq
        %v377 = vshrl.u32 %v376, 7
        %v378 = vsub.s32 5, %v377
        %v379 = vrot.slane %v304, %v378
        %v382 = vlaneseq
        %v383 = vshrl.u32 %v382, 7
        %v384 = vsub.s32 1, %v383
        %v385 = vrot.slane %v375, %v384
        %v386 = vlaneseq
        %v387 = vshrl.u32 %v386, 7
        %v388 = vsub.s32 1, %v387
        %v389 = vrot.slane %v379, %v388
        %v390 = vmul.f32 %v358, %v385
        %v391 = vmul.f32 %v358, %v389
        %v392 = vmul.f32 %v362, %v385
        %v393 = vmul.f32 %v362, %v389
        %v394 = vmul.f32 %v366, %v385
        %v395 = vmul.f32 %v366, %v389
        %v396 = vmul.f32 %v370, %v385
        %v397 = vmul.f32 %v370, %v389
        %v398 = vadd.f32 %v348, %v390
        %v399 = vadd.f32 %v349, %v391
        %v400 = vadd.f32 %v350, %v392
        %v401 = vadd.f32 %v351, %v393
        %v402 = vadd.f32 %v352, %v394
        %v403 = vadd.f32 %v353, %v395
        %v404 = vadd.f32 %v354, %v396
        %v405 = vadd.f32 %v355, %v397
        %406 = vset.pattern.permute.xlu0 2
        %407 = vperm.xlu0 %406, %v305
        %v408 = vpop.permute.xlu0 %407
        %410 = vset.pattern.permute.xlu0 2
        %411 = vperm.xlu0 %410, %v306
        %v412 = vpop.permute.xlu0 %411
        %414 = vset.pattern.permute.xlu0 2
        %415 = vperm.xlu0 %414, %v307
        %v416 = vpop.permute.xlu0 %415
        %418 = vset.pattern.permute.xlu0 2
        %419 = vperm.xlu0 %418, %v308
        %v420 = vpop.permute.xlu0 %419
        %v422 = vlaneseq
        %v423 = vshrl.u32 %v422, 7
        %v424 = vsub.s32 2, %v423
        %v425 = vrot.slane %v304, %v424
        %v426 = vlaneseq
        %v427 = vshrl.u32 %v426, 7
        %v428 = vsub.s32 6, %v427
        %v429 = vrot.slane %v304, %v428
        %v432 = vlaneseq
        %v433 = vshrl.u32 %v432, 7
        %v434 = vsub.s32 2, %v433
        %v435 = vrot.slane %v425, %v434
        %v436 = vlaneseq
        %v437 = vshrl.u32 %v436, 7
        %v438 = vsub.s32 2, %v437
        %v439 = vrot.slane %v429, %v438
        %v440 = vmul.f32 %v408, %v435
        %v441 = vmul.f32 %v408, %v439
        %v442 = vmul.f32 %v412, %v435
        %v443 = vmul.f32 %v412, %v439
        %v444 = vmul.f32 %v416, %v435
        %v445 = vmul.f32 %v416, %v439
        %v446 = vmul.f32 %v420, %v435
        %v447 = vmul.f32 %v420, %v439
        %v448 = vadd.f32 %v398, %v440
        %v449 = vadd.f32 %v399, %v441
        %v450 = vadd.f32 %v400, %v442
        %v451 = vadd.f32 %v401, %v443
        %v452 = vadd.f32 %v402, %v444
        %v453 = vadd.f32 %v403, %v445
        %v454 = vadd.f32 %v404, %v446
        %v455 = vadd.f32 %v405, %v447
        %456 = vset.pattern.permute.xlu0 3
        %457 = vperm.xlu0 %456, %v305
        %v458 = vpop.permute.xlu0 %457
        %460 = vset.pattern.permute.xlu0 3
        %461 = vperm.xlu0 %460, %v306
        %v462 = vpop.permute.xlu0 %461
        %464 = vset.pattern.permute.xlu0 3
        %465 = vperm.xlu0 %464, %v307
        %v466 = vpop.permute.xlu0 %465
        %468 = vset.pattern.permute.xlu0 3
        %469 = vperm.xlu0 %468, %v308
        %v470 = vpop.permute.xlu0 %469
        %v472 = vlaneseq
        %v473 = vshrl.u32 %v472, 7
        %v474 = vsub.s32 3, %v473
        %v475 = vrot.slane %v304, %v474
        %v476 = vlaneseq
        %v477 = vshrl.u32 %v476, 7
        %v478 = vsub.s32 7, %v477
        %v479 = vrot.slane %v304, %v478
        %v482 = vlaneseq
        %v483 = vshrl.u32 %v482, 7
        %v484 = vsub.s32 3, %v483
        %v485 = vrot.slane %v475, %v484
        %v486 = vlaneseq
        %v487 = vshrl.u32 %v486, 7
        %v488 = vsub.s32 3, %v487
        %v489 = vrot.slane %v479, %v488
        %v490 = vmul.f32 %v458, %v485
        %v491 = vmul.f32 %v458, %v489
        %v492 = vmul.f32 %v462, %v485
        %v493 = vmul.f32 %v462, %v489
        %v494 = vmul.f32 %v466, %v485
        %v495 = vmul.f32 %v466, %v489
        %v496 = vmul.f32 %v470, %v485
        %v497 = vmul.f32 %v470, %v489
        %v498 = vadd.f32 %v448, %v490
        %v499 = vadd.f32 %v449, %v491
        %v500 = vadd.f32 %v450, %v492
        %v501 = vadd.f32 %v451, %v493
        %v502 = vadd.f32 %v452, %v494
        %v503 = vadd.f32 %v453, %v495
        %v504 = vadd.f32 %v454, %v496
        %v505 = vadd.f32 %v455, %v497
        %v506 = vld [vmem:[%s2] sm:$0xff]
        %v507 = vld [vmem:[%s2 + $0x8] sm:$0xff]
        %v508 = vld [vmem:[%s2 + $0x10] sm:$0xff]
        %v509 = vld [vmem:[%s2 + $0x18] sm:$0xff]
        %511 = vset.pattern.permute.xlu0 0
        %512 = vperm.xlu0 %511, %v506
        %v513 = vpop.permute.xlu0 %512
        %516 = vset.pattern.permute.xlu0 0
        %517 = vperm.xlu0 %516, %v507
        %v518 = vpop.permute.xlu0 %517
        %521 = vset.pattern.permute.xlu0 0
        %522 = vperm.xlu0 %521, %v508
        %v523 = vpop.permute.xlu0 %522
        %526 = vset.pattern.permute.xlu0 0
        %527 = vperm.xlu0 %526, %v509
        %v528 = vpop.permute.xlu0 %527
        %v530 = vadd.f32 %v498, %v513
        %v531 = vadd.f32 %v499, %v513
        %v532 = vadd.f32 %v500, %v518
        %v533 = vadd.f32 %v501, %v518
        %v534 = vadd.f32 %v502, %v523
        %v535 = vadd.f32 %v503, %v523
        %v536 = vadd.f32 %v504, %v528
        %v537 = vadd.f32 %v505, %v528
        %v538 = vadd.f32 %v530, 3.0
        %v539 = vadd.f32 %v531, 3.0
        %v540 = vadd.f32 %v532, 3.0
        %v541 = vadd.f32 %v533, 3.0
        %v542 = vadd.f32 %v534, 3.0
        %v543 = vadd.f32 %v535, 3.0
        %v544 = vadd.f32 %v536, 3.0
        %v545 = vadd.f32 %v537, 3.0
        %v546 = vmax.f32 %v538, 0.0
        %v547 = vmax.f32 %v539, 0.0
        %v548 = vmax.f32 %v540, 0.0
        %v549 = vmax.f32 %v541, 0.0
        %v550 = vmax.f32 %v542, 0.0
        %v551 = vmax.f32 %v543, 0.0
        %v552 = vmax.f32 %v544, 0.0
        %v553 = vmax.f32 %v545, 0.0
        %v554 = vmin.f32 %v546, 6.0
        %v555 = vmin.f32 %v547, 6.0
        %v556 = vmin.f32 %v548, 6.0
        %v557 = vmin.f32 %v549, 6.0
        %v558 = vmin.f32 %v550, 6.0
        %v559 = vmin.f32 %v551, 6.0
        %v560 = vmin.f32 %v552, 6.0
        %v561 = vmin.f32 %v553, 6.0
        %v562 = vmul.f32 %v530, %v554
        %v563 = vmul.f32 %v531, %v555
        %v564 = vmul.f32 %v532, %v556
        %v565 = vmul.f32 %v533, %v557
        %v566 = vmul.f32 %v534, %v558
        %v567 = vmul.f32 %v535, %v559
        %v568 = vmul.f32 %v536, %v560
        %v569 = vmul.f32 %v537, %v561
        %v570 = vmul.f32 %v562, 0.16666667
        %v571 = vmul.f32 %v563, 0.16666667
        %v572 = vmul.f32 %v564, 0.16666667
        %v573 = vmul.f32 %v565, 0.16666667
        %v574 = vmul.f32 %v566, 0.16666667
        %v575 = vmul.f32 %v567, 0.16666667
        %v576 = vmul.f32 %v568, 0.16666667
        %v577 = vmul.f32 %v569, 0.16666667
        %v578 = vadd.f32 %v570, %v571
        %579 = vadd.xlane.f32.xlu0 %v578
        %v580 = vpop.xlane.xlu0 %579
        %v581 = vadd.f32 %v572, %v573
        %582 = vadd.xlane.f32.xlu0 %v581
        %v583 = vpop.xlane.xlu0 %582
        %v584 = vadd.f32 %v574, %v575
        %585 = vadd.xlane.f32.xlu0 %v584
        %v586 = vpop.xlane.xlu0 %585
        %v587 = vadd.f32 %v576, %v577
        %588 = vadd.xlane.f32.xlu0 %v587
        %v589 = vpop.xlane.xlu0 %588
        %v590 = vrcp.pop 256.0
        %v591 = vmul.f32 %v580, %v590
        %v592 = vmul.f32 %v583, %v590
        %v593 = vmul.f32 %v586, %v590
        %v594 = vmul.f32 %v589, %v590
        %v595 = vmax.f32 %v570, %v571
        %596 = vmax.xlane.f32.xlu0 %v595
        %v597 = vpop.xlane.xlu0 %596
        %v598 = vmax.f32 %v572, %v573
        %599 = vmax.xlane.f32.xlu0 %v598
        %v600 = vpop.xlane.xlu0 %599
        %v601 = vmax.f32 %v574, %v575
        %602 = vmax.xlane.f32.xlu0 %v601
        %v603 = vpop.xlane.xlu0 %602
        %v604 = vmax.f32 %v576, %v577
        %605 = vmax.xlane.f32.xlu0 %v604
        %v606 = vpop.xlane.xlu0 %605
        %vm607 = vcmask 7168
        %v608 = vsel %vm607, %v591, %v597
        %v609 = vsel %vm607, %v592, %v600
        %v610 = vsel %vm607, %v593, %v603
        %v611 = vsel %vm607, %v594, %v606
        %v612 = vld [vmem:[%s3] sm:$0x3]
        %vm613 = vcmask 261120
        %v615 = vsel %vm613, %v612, 0
        %617 = vmatprep.subr.mxu0 0.0
        %618 = vmatpush1.msra.mxu0 0.0
        %619 = vmatprep.subr.mxu0 0.0
        %620 = vmatpush1.msra.mxu0 0.0
        %621 = vmatprep.subr.mxu0 0.0
        %622 = vmatpush1.msra.mxu0 0.0
        %623 = vmatprep.subr.mxu0 0.0
        %624 = vmatpush1.msra.mxu0 0.0
        %625 = vmatprep.subr.mxu0 0.0
        %626 = vmatpush1.msra.mxu0 0.0
        %627 = vmatprep.subr.mxu0 0.0
        %628 = vmatpush1.msra.mxu0 0.0
        %629 = vmatprep.subr.mxu0 0.0
        %630 = vmatpush1.msra.mxu0 0.0
        %631 = vmatprep.subr.mxu0 0.0
        %632 = vmatpush1.msra.mxu0 0.0
        %633 = vmatprep.subr.mxu0 0.0
        %634 = vmatpush1.msra.mxu0 0.0
        %635 = vmatprep.subr.mxu0 0.0
        %636 = vmatpush1.msra.mxu0 0.0
        %637 = vmatprep.subr.mxu0 0.0
        %638 = vmatpush1.msra.mxu0 0.0
        %639 = vmatprep.subr.mxu0 0.0
        %640 = vmatpush1.msra.mxu0 0.0
        %641 = vmatprep.subr.mxu0 0.0
        %642 = vmatpush1.msra.mxu0 %v611
        %643 = vmatprep.subr.mxu0 0.0
        %644 = vmatpush1.msra.mxu0 %v610
        %645 = vmatprep.subr.mxu0 0.0
        %646 = vmatpush1.msra.mxu0 %v609
        %647 = vmatprep.subr.mxu0 0.0
        %648 = vmatpush1.msra.mxu0 %v608
        %649 = vmatprep.subr.mxu0 0.0
        %650 = vmatpush2.msra.mxu0 0.0
        %651 = vmatprep.subr.mxu0 0.0
        %652 = vmatpush2.msra.mxu0 0.0
        %653 = vmatprep.subr.mxu0 0.0
        %654 = vmatpush2.msra.mxu0 0.0
        %655 = vmatprep.subr.mxu0 0.0
        %656 = vmatpush2.msra.mxu0 0.0
        %657 = vmatprep.subr.mxu0 0.0
        %658 = vmatpush2.msra.mxu0 0.0
        %659 = vmatprep.subr.mxu0 0.0
        %660 = vmatpush2.msra.mxu0 0.0
        %661 = vmatprep.subr.mxu0 0.0
        %662 = vmatpush2.msra.mxu0 0.0
        %663 = vmatprep.subr.mxu0 0.0
        %664 = vmatpush2.msra.mxu0 0.0
        %665 = vmatprep.subr.mxu0 0.0
        %666 = vmatpush2.msra.mxu0 0.0
        %667 = vmatprep.subr.mxu0 0.0
        %668 = vmatpush2.msra.mxu0 0.0
        %669 = vmatprep.subr.mxu0 0.0
        %670 = vmatpush2.msra.mxu0 0.0
        %671 = vmatprep.subr.mxu0 0.0
        %672 = vmatpush2.msra.mxu0 0.0
        %673 = vmatprep.subr.mxu0 0.0
        %674 = vmatpush2.msra.mxu0 0.0
        %675 = vmatprep.subr.mxu0 0.0
        %676 = vmatpush2.msra.mxu0 0.0
        %677 = vmatprep.subr.mxu0 0.0
        %678 = vmatpush2.msra.mxu0 0.0
        %679 = vmatprep.subr.mxu0 0.0
        %680 = vmatpush2.msra.mxu0 0.0
        %681 = vmatprep.mubr.f32.mxu0 0.0
        %682 = vmatmul.mubr.f32.gmra.mxu0 %v615
        %v683 = vpop.f32.mrf.mxu0
        %v684 = vadd.f32 0.0, %v683
        %v685 = vpop.f32.mrf.mxu0
        %686 = vdwg.mxu0
        %v687 = vmax.f32 %v684, 0.0
        %v688 = vld [vmem:[%s4] sm:$0xff]
        %v689 = vld [vmem:[%s4 + $0x8] sm:$0xff]
        %v690 = vld [vmem:[%s4 + $0x10] sm:$0xff]
        %v691 = vld [vmem:[%s4 + $0x18] sm:$0xff]
        %vm692 = vcmask 15360
        %v694 = vsel %vm692, %v688, 0
        %v697 = vsel %vm692, %v689, 0
        %v700 = vsel %vm692, %v690, 0
        %v703 = vsel %vm692, %v691, 0
        %vm705 = vcmask 1041408
        %v707 = vsel %vm705, %v687, 0
        %709 = vmatprep.subr.mxu0 0.0
        %710 = vmatpush1.msra.mxu0 0.0
        %711 = vmatprep.subr.mxu0 0.0
        %712 = vmatpush1.msra.mxu0 0.0
        %713 = vmatprep.subr.mxu0 0.0
        %714 = vmatpush1.msra.mxu0 0.0
        %715 = vmatprep.subr.mxu0 0.0
        %716 = vmatpush1.msra.mxu0 0.0
        %717 = vmatprep.subr.mxu0 0.0
        %718 = vmatpush1.msra.mxu0 0.0
        %719 = vmatprep.subr.mxu0 0.0
        %720 = vmatpush1.msra.mxu0 0.0
        %721 = vmatprep.subr.mxu0 0.0
        %722 = vmatpush1.msra.mxu0 0.0
        %723 = vmatprep.subr.mxu0 0.0
        %724 = vmatpush1.msra.mxu0 0.0
        %725 = vmatprep.subr.mxu0 0.0
        %726 = vmatpush1.msra.mxu0 0.0
        %727 = vmatprep.subr.mxu0 0.0
        %728 = vmatpush1.msra.mxu0 0.0
        %729 = vmatprep.subr.mxu0 0.0
        %730 = vmatpush1.msra.mxu0 0.0
        %731 = vmatprep.subr.mxu0 0.0
        %732 = vmatpush1.msra.mxu0 0.0
        %733 = vmatprep.subr.mxu0 0.0
        %734 = vmatpush1.msra.mxu0 0.0
        %735 = vmatprep.subr.mxu0 0.0
        %736 = vmatpush1.msra.mxu0 0.0
        %737 = vmatprep.subr.mxu0 0.0
        %738 = vmatpush1.msra.mxu0 0.0
        %739 = vmatprep.subr.mxu0 0.0
        %740 = vmatpush1.msra.mxu0 %v707
        %741 = vmatprep.subr.mxu0 0.0
        %742 = vmatpush2.msra.mxu0 0.0
        %743 = vmatprep.subr.mxu0 0.0
        %744 = vmatpush2.msra.mxu0 0.0
        %745 = vmatprep.subr.mxu0 0.0
        %746 = vmatpush2.msra.mxu0 0.0
        %747 = vmatprep.subr.mxu0 0.0
        %748 = vmatpush2.msra.mxu0 0.0
        %749 = vmatprep.subr.mxu0 0.0
        %750 = vmatpush2.msra.mxu0 0.0
        %751 = vmatprep.subr.mxu0 0.0
        %752 = vmatpush2.msra.mxu0 0.0
        %753 = vmatprep.subr.mxu0 0.0
        %754 = vmatpush2.msra.mxu0 0.0
        %755 = vmatprep.subr.mxu0 0.0
        %756 = vmatpush2.msra.mxu0 0.0
        %757 = vmatprep.subr.mxu0 0.0
        %758 = vmatpush2.msra.mxu0 0.0
        %759 = vmatprep.subr.mxu0 0.0
        %760 = vmatpush2.msra.mxu0 0.0
        %761 = vmatprep.subr.mxu0 0.0
        %762 = vmatpush2.msra.mxu0 0.0
        %763 = vmatprep.subr.mxu0 0.0
        %764 = vmatpush2.msra.mxu0 0.0
        %765 = vmatprep.subr.mxu0 0.0
        %766 = vmatpush2.msra.mxu0 0.0
        %767 = vmatprep.subr.mxu0 0.0
        %768 = vmatpush2.msra.mxu0 0.0
        %769 = vmatprep.subr.mxu0 0.0
        %770 = vmatpush2.msra.mxu0 0.0
        %771 = vmatprep.subr.mxu0 0.0
        %772 = vmatpush2.msra.mxu0 0.0
        %773 = vmatprep.mubr.f32.mxu0 0.0
        %774 = vmatmul.mubr.f32.gmra.mxu0 %v694
        %v775 = vpop.f32.mrf.mxu0
        %v776 = vadd.f32 0.0, %v775
        %v777 = vpop.f32.mrf.mxu0
        %778 = vmatprep.mubr.f32.mxu0 0.0
        %779 = vmatmul.mubr.f32.gmra.mxu0 %v697
        %v780 = vpop.f32.mrf.mxu0
        %v781 = vadd.f32 0.0, %v780
        %v782 = vpop.f32.mrf.mxu0
        %783 = vmatprep.mubr.f32.mxu0 0.0
        %784 = vmatmul.mubr.f32.gmra.mxu0 %v700
        %v785 = vpop.f32.mrf.mxu0
        %v786 = vadd.f32 0.0, %v785
        %v787 = vpop.f32.mrf.mxu0
        %788 = vmatprep.mubr.f32.mxu0 0.0
        %789 = vmatmul.mubr.f32.gmra.mxu0 %v703
        %v790 = vpop.f32.mrf.mxu0
        %v791 = vadd.f32 0.0, %v790
        %v792 = vpop.f32.mrf.mxu0
        %793 = vdwg.mxu0
        %798 = vrot.lane.b32.xlu0 %v776, 127
        %v799 = vpop.permute.xlu0 %798
        %800 = vrot.lane.b32.xlu0 %v781, 127
        %v801 = vpop.permute.xlu0 %800
        %802 = vrot.lane.b32.xlu0 %v786, 127
        %v803 = vpop.permute.xlu0 %802
        %804 = vrot.lane.b32.xlu0 %v791, 127
        %v805 = vpop.permute.xlu0 %804
        %v810 = vadd.f32 %v776, %v799
        %v811 = vadd.f32 %v781, %v801
        %v812 = vadd.f32 %v786, %v803
        %v813 = vadd.f32 %v791, %v805
        %v814 = vand.u32 2147483647, %v810
        %v815 = vand.u32 2147483647, %v811
        %v816 = vand.u32 2147483647, %v812
        %v817 = vand.u32 2147483647, %v813
        %v818 = vsub.f32 0.0, %v814
        %v819 = vsub.f32 0.0, %v815
        %v820 = vsub.f32 0.0, %v816
        %v821 = vsub.f32 0.0, %v817
        %v822 = vmul.f32 %v818, 1.442695
        %v823 = vpow.pop %v822
        %v824 = vmul.f32 %v819, 1.442695
        %v825 = vpow.pop %v824
        %v826 = vmul.f32 %v820, 1.442695
        %v827 = vpow.pop %v826
        %v828 = vmul.f32 %v821, 1.442695
        %v829 = vpow.pop %v828
        %v830 = vadd.f32 %v823, 1.0
        %v831 = vadd.f32 %v825, 1.0
        %v832 = vadd.f32 %v827, 1.0
        %v833 = vadd.f32 %v829, 1.0
        %v834 = vrcp.pop %v830
        %v835 = vmul.f32 1.0, %v834
        %v836 = vrcp.pop %v831
        %v837 = vmul.f32 1.0, %v836
        %v838 = vrcp.pop %v832
        %v839 = vmul.f32 1.0, %v838
        %v840 = vrcp.pop %v833
        %v841 = vmul.f32 1.0, %v840
        %vm842 = vcmp.ge.f32.partialorder %v810, 0.0
        %vm843 = vcmp.ge.f32.partialorder %v811, 0.0
        %vm844 = vcmp.ge.f32.partialorder %v812, 0.0
        %vm845 = vcmp.ge.f32.partialorder %v813, 0.0
        %v846 = vmul.f32 %v823, %v835
        %v847 = vmul.f32 %v825, %v837
        %v848 = vmul.f32 %v827, %v839
        %v849 = vmul.f32 %v829, %v841
        %v850 = vsel %vm842, %v835, %v846
        %v851 = vsel %vm843, %v837, %v847
        %v852 = vsel %vm844, %v839, %v848
        %v853 = vsel %vm845, %v841, %v849
        %855 = vset.pattern.permute.xlu0 0
        %856 = vperm.xlu0 %855, %v850
        %v857 = vpop.permute.xlu0 %856
        %860 = vset.pattern.permute.xlu0 0
        %861 = vperm.xlu0 %860, %v851
        %v862 = vpop.permute.xlu0 %861
        %865 = vset.pattern.permute.xlu0 0
        %866 = vperm.xlu0 %865, %v852
        %v867 = vpop.permute.xlu0 %866
        %870 = vset.pattern.permute.xlu0 0
        %871 = vperm.xlu0 %870, %v853
        %v872 = vpop.permute.xlu0 %871
        %v874 = vmul.f32 %v570, %v857
        %v875 = vmul.f32 %v571, %v857
        %v876 = vmul.f32 %v572, %v862
        %v877 = vmul.f32 %v573, %v862
        %v878 = vmul.f32 %v574, %v867
        %v879 = vmul.f32 %v575, %v867
        %v880 = vmul.f32 %v576, %v872
        %v881 = vmul.f32 %v577, %v872
        %v882 = vadd.f32 %v874, %v876
        %v883 = vadd.f32 %v882, %v878
        %v884 = vadd.f32 %v883, %v880
        %v885 = vrot.slane %v884, 4
        %v886 = vadd.f32 %v884, %v885
        %v887 = vrot.slane %v886, 2
        %v888 = vadd.f32 %v886, %v887
        %v889 = vrot.slane %v888, 1
        %v890 = vadd.f32 %v888, %v889
        %v891 = vadd.f32 %v875, %v877
        %v892 = vadd.f32 %v891, %v879
        %v893 = vadd.f32 %v892, %v881
        %v894 = vrot.slane %v893, 4
        %v895 = vadd.f32 %v893, %v894
        %v896 = vrot.slane %v895, 2
        %v897 = vadd.f32 %v895, %v896
        %v898 = vrot.slane %v897, 1
        %v899 = vadd.f32 %v897, %v898
        %v900 = vrcp.pop 32.0
        %v901 = vmul.f32 %v890, %v900
        %v902 = vmul.f32 %v899, %v900
        %v903 = vmax.f32 %v874, %v878
        %v904 = vmax.f32 %v876, %v880
        %v905 = vmax.f32 %v903, %v904
        %v906 = vrot.slane %v905, 4
        %v907 = vmax.f32 %v905, %v906
        %v908 = vrot.slane %v907, 2
        %v909 = vmax.f32 %v907, %v908
        %v910 = vrot.slane %v909, 1
        %v911 = vmax.f32 %v909, %v910
        %v912 = vmax.f32 %v875, %v879
        %v913 = vmax.f32 %v877, %v881
        %v914 = vmax.f32 %v912, %v913
        %v915 = vrot.slane %v914, 4
        %v916 = vmax.f32 %v914, %v915
        %v917 = vrot.slane %v916, 2
        %v918 = vmax.f32 %v916, %v917
        %v919 = vrot.slane %v918, 1
        %v920 = vmax.f32 %v918, %v919
        %vm921 = vcmask 1040384
        %v922 = vsel %vm921, %v901, %v911
        %v923 = vsel %vm921, %v902, %v920
        %v924 = vld [vmem:[%s5] ss:$8 sm:$0x3]
        %925 = vrot.lane.b32.xlu0 %v922, 51
        %v926 = vpop.permute.xlu0 %925
        %927 = vrot.lane.b32.xlu0 %v923, 51
        %v928 = vpop.permute.xlu0 %927
        %v929 = vlaneseq
        %v930 = vand.u32 %v929, 127
        %vm931 = vcmp.lt.s32.totalorder %v930, 51
        %v932 = vsel %vm931, %v926, %v928
        %v933 = vsel %vm931, %v928, %v926
        %v934 = vld [vmem:[%s6] ss:$8 sm:$0x3]
        %v935 = vmul.f32 %v924, %v934
        %v936 = vld [vmem:[%s7] sm:$0x3]
        %938 = vset.pattern.permute.xlu0 0
        %939 = vperm.xlu0 %938, %v936
        %v940 = vpop.permute.xlu0 %939
        %v942 = vmul.f32 %v940, %v933
        %v943 = vmul.f32 %v940, %v932
        %v945 = vlaneseq
        %v946 = vshrl.u32 %v945, 7
        %v947 = vsub.s32 0, %v946
        %v948 = vrot.slane %v935, %v947
        %v949 = vlaneseq
        %v950 = vshrl.u32 %v949, 7
        %v951 = vsub.s32 1, %v950
        %v952 = vrot.slane %v935, %v951
        %v955 = vmul.f32 %v942, %v948
        %v956 = vmul.f32 %v943, %v952
        %957 = vrot.lane.b32.xlu0 %v922, 50
        %v958 = vpop.permute.xlu0 %957
        %959 = vrot.lane.b32.xlu0 %v923, 50
        %v960 = vpop.permute.xlu0 %959
        %vm961 = vcmp.lt.s32.totalorder %v930, 50
        %v962 = vsel %vm961, %v958, %v960
        %v963 = vsel %vm961, %v960, %v958
        %s964 = scalar_lea.vmem %s6, 1
        %v965 = vld [vmem:[%s964] ss:$8 sm:$0x3]
        %v966 = vmul.f32 %v924, %v965
        %967 = vset.pattern.permute.xlu0 1
        %968 = vperm.xlu0 %967, %v936
        %v969 = vpop.permute.xlu0 %968
        %v971 = vmul.f32 %v969, %v963
        %v972 = vmul.f32 %v969, %v962
        %v974 = vlaneseq
        %v975 = vshrl.u32 %v974, 7
        %v976 = vsub.s32 0, %v975
        %v977 = vrot.slane %v966, %v976
        %v978 = vlaneseq
        %v979 = vshrl.u32 %v978, 7
        %v980 = vsub.s32 1, %v979
        %v981 = vrot.slane %v966, %v980
        %v984 = vmul.f32 %v971, %v977
        %v985 = vmul.f32 %v972, %v981
        %v986 = vadd.f32 %v955, %v984
        %v987 = vadd.f32 %v956, %v985
        %988 = vrot.lane.b32.xlu0 %v922, 49
        %v989 = vpop.permute.xlu0 %988
        %990 = vrot.lane.b32.xlu0 %v923, 49
        %v991 = vpop.permute.xlu0 %990
        %vm992 = vcmp.lt.s32.totalorder %v930, 49
        %v993 = vsel %vm992, %v989, %v991
        %v994 = vsel %vm992, %v991, %v989
        %s995 = scalar_lea.vmem %s6, 2
        %v996 = vld [vmem:[%s995] ss:$8 sm:$0x3]
        %v997 = vmul.f32 %v924, %v996
        %998 = vset.pattern.permute.xlu0 2
        %999 = vperm.xlu0 %998, %v936
        %v1000 = vpop.permute.xlu0 %999
        %v1002 = vmul.f32 %v1000, %v994
        %v1003 = vmul.f32 %v1000, %v993
        %v1005 = vlaneseq
        %v1006 = vshrl.u32 %v1005, 7
        %v1007 = vsub.s32 0, %v1006
        %v1008 = vrot.slane %v997, %v1007
        %v1009 = vlaneseq
        %v1010 = vshrl.u32 %v1009, 7
        %v1011 = vsub.s32 1, %v1010
        %v1012 = vrot.slane %v997, %v1011
        %v1015 = vmul.f32 %v1002, %v1008
        %v1016 = vmul.f32 %v1003, %v1012
        %v1017 = vadd.f32 %v986, %v1015
        %v1018 = vadd.f32 %v987, %v1016
        %1019 = vrot.lane.b32.xlu0 %v922, 48
        %v1020 = vpop.permute.xlu0 %1019
        %1021 = vrot.lane.b32.xlu0 %v923, 48
        %v1022 = vpop.permute.xlu0 %1021
        %vm1023 = vcmp.lt.s32.totalorder %v930, 48
        %v1024 = vsel %vm1023, %v1020, %v1022
        %v1025 = vsel %vm1023, %v1022, %v1020
        %s1026 = scalar_lea.vmem %s6, 3
        %v1027 = vld [vmem:[%s1026] ss:$8 sm:$0x3]
        %v1028 = vmul.f32 %v924, %v1027
        %1029 = vset.pattern.permute.xlu0 3
        %1030 = vperm.xlu0 %1029, %v936
        %v1031 = vpop.permute.xlu0 %1030
        %v1033 = vmul.f32 %v1031, %v1025
        %v1034 = vmul.f32 %v1031, %v1024
        %v1036 = vlaneseq
        %v1037 = vshrl.u32 %v1036, 7
        %v1038 = vsub.s32 0, %v1037
        %v1039 = vrot.slane %v1028, %v1038
        %v1040 = vlaneseq
        %v1041 = vshrl.u32 %v1040, 7
        %v1042 = vsub.s32 1, %v1041
        %v1043 = vrot.slane %v1028, %v1042
        %v1046 = vmul.f32 %v1033, %v1039
        %v1047 = vmul.f32 %v1034, %v1043
        %v1048 = vadd.f32 %v1017, %v1046
        %v1049 = vadd.f32 %v1018, %v1047
        %1050 = vrot.lane.b32.xlu0 %v922, 47
        %v1051 = vpop.permute.xlu0 %1050
        %1052 = vrot.lane.b32.xlu0 %v923, 47
        %v1053 = vpop.permute.xlu0 %1052
        %vm1054 = vcmp.lt.s32.totalorder %v930, 47
        %v1055 = vsel %vm1054, %v1051, %v1053
        %v1056 = vsel %vm1054, %v1053, %v1051
        %s1057 = scalar_lea.vmem %s6, 4
        %v1058 = vld [vmem:[%s1057] ss:$8 sm:$0x3]
        %v1059 = vmul.f32 %v924, %v1058
        %1060 = vset.pattern.permute.xlu0 4
        %1061 = vperm.xlu0 %1060, %v936
        %v1062 = vpop.permute.xlu0 %1061
        %v1064 = vmul.f32 %v1062, %v1056
        %v1065 = vmul.f32 %v1062, %v1055
        %v1067 = vlaneseq
        %v1068 = vshrl.u32 %v1067, 7
        %v1069 = vsub.s32 0, %v1068
        %v1070 = vrot.slane %v1059, %v1069
        %v1071 = vlaneseq
        %v1072 = vshrl.u32 %v1071, 7
        %v1073 = vsub.s32 1, %v1072
        %v1074 = vrot.slane %v1059, %v1073
        %v1077 = vmul.f32 %v1064, %v1070
        %v1078 = vmul.f32 %v1065, %v1074
        %v1079 = vadd.f32 %v1048, %v1077
        %v1080 = vadd.f32 %v1049, %v1078
        %1081 = vrot.lane.b32.xlu0 %v922, 46
        %v1082 = vpop.permute.xlu0 %1081
        %1083 = vrot.lane.b32.xlu0 %v923, 46
        %v1084 = vpop.permute.xlu0 %1083
        %vm1085 = vcmp.lt.s32.totalorder %v930, 46
        %v1086 = vsel %vm1085, %v1082, %v1084
        %v1087 = vsel %vm1085, %v1084, %v1082
        %s1088 = scalar_lea.vmem %s6, 5
        %v1089 = vld [vmem:[%s1088] ss:$8 sm:$0x3]
        %v1090 = vmul.f32 %v924, %v1089
        %1091 = vset.pattern.permute.xlu0 5
        %1092 = vperm.xlu0 %1091, %v936
        %v1093 = vpop.permute.xlu0 %1092
        %v1095 = vmul.f32 %v1093, %v1087
        %v1096 = vmul.f32 %v1093, %v1086
        %v1098 = vlaneseq
        %v1099 = vshrl.u32 %v1098, 7
        %v1100 = vsub.s32 0, %v1099
        %v1101 = vrot.slane %v1090, %v1100
        %v1102 = vlaneseq
        %v1103 = vshrl.u32 %v1102, 7
        %v1104 = vsub.s32 1, %v1103
        %v1105 = vrot.slane %v1090, %v1104
        %v1108 = vmul.f32 %v1095, %v1101
        %v1109 = vmul.f32 %v1096, %v1105
        %v1110 = vadd.f32 %v1079, %v1108
        %v1111 = vadd.f32 %v1080, %v1109
        %1112 = vrot.lane.b32.xlu0 %v922, 45
        %v1113 = vpop.permute.xlu0 %1112
        %1114 = vrot.lane.b32.xlu0 %v923, 45
        %v1115 = vpop.permute.xlu0 %1114
        %vm1116 = vcmp.lt.s32.totalorder %v930, 45
        %v1117 = vsel %vm1116, %v1113, %v1115
        %v1118 = vsel %vm1116, %v1115, %v1113
        %s1119 = scalar_lea.vmem %s6, 6
        %v1120 = vld [vmem:[%s1119] ss:$8 sm:$0x3]
        %v1121 = vmul.f32 %v924, %v1120
        %1122 = vset.pattern.permute.xlu0 6
        %1123 = vperm.xlu0 %1122, %v936
        %v1124 = vpop.permute.xlu0 %1123
        %v1126 = vmul.f32 %v1124, %v1118
        %v1127 = vmul.f32 %v1124, %v1117
        %v1129 = vlaneseq
        %v1130 = vshrl.u32 %v1129, 7
        %v1131 = vsub.s32 0, %v1130
        %v1132 = vrot.slane %v1121, %v1131
        %v1133 = vlaneseq
        %v1134 = vshrl.u32 %v1133, 7
        %v1135 = vsub.s32 1, %v1134
        %v1136 = vrot.slane %v1121, %v1135
        %v1139 = vmul.f32 %v1126, %v1132
        %v1140 = vmul.f32 %v1127, %v1136
        %v1141 = vadd.f32 %v1110, %v1139
        %v1142 = vadd.f32 %v1111, %v1140
        %s1143 = scalar_lea.vmem %s5, 1
        %v1144 = vld [vmem:[%s1143] ss:$8 sm:$0x3]
        %1145 = vrot.lane.b32.xlu0 %v922, 35
        %v1146 = vpop.permute.xlu0 %1145
        %1147 = vrot.lane.b32.xlu0 %v923, 35
        %v1148 = vpop.permute.xlu0 %1147
        %vm1149 = vcmp.lt.s32.totalorder %v930, 35
        %v1150 = vsel %vm1149, %v1146, %v1148
        %v1151 = vsel %vm1149, %v1148, %v1146
        %v1152 = vmul.f32 %v1144, %v934
        %1153 = vset.pattern.permute.xlu0 7
        %1154 = vperm.xlu0 %1153, %v936
        %v1155 = vpop.permute.xlu0 %1154
        %v1157 = vmul.f32 %v1155, %v1151
        %v1158 = vmul.f32 %v1155, %v1150
        %v1160 = vlaneseq
        %v1161 = vshrl.u32 %v1160, 7
        %v1162 = vsub.s32 0, %v1161
        %v1163 = vrot.slane %v1152, %v1162
        %v1164 = vlaneseq
        %v1165 = vshrl.u32 %v1164, 7
        %v1166 = vsub.s32 1, %v1165
        %v1167 = vrot.slane %v1152, %v1166
        %v1170 = vmul.f32 %v1157, %v1163
        %v1171 = vmul.f32 %v1158, %v1167
        %1172 = vrot.lane.b32.xlu0 %v922, 34
        %v1173 = vpop.permute.xlu0 %1172
        %1174 = vrot.lane.b32.xlu0 %v923, 34
        %v1175 = vpop.permute.xlu0 %1174
        %vm1176 = vcmp.lt.s32.totalorder %v930, 34
        %v1177 = vsel %vm1176, %v1173, %v1175
        %v1178 = vsel %vm1176, %v1175, %v1173
        %v1179 = vmul.f32 %v1144, %v965
        %1180 = vset.pattern.permute.xlu0 8
        %1181 = vperm.xlu0 %1180, %v936
        %v1182 = vpop.permute.xlu0 %1181
        %v1184 = vmul.f32 %v1182, %v1178
        %v1185 = vmul.f32 %v1182, %v1177
        %v1187 = vlaneseq
        %v1188 = vshrl.u32 %v1187, 7
        %v1189 = vsub.s32 0, %v1188
        %v1190 = vrot.slane %v1179, %v1189
        %v1191 = vlaneseq
        %v1192 = vshrl.u32 %v1191, 7
        %v1193 = vsub.s32 1, %v1192
        %v1194 = vrot.slane %v1179, %v1193
        %v1197 = vmul.f32 %v1184, %v1190
        %v1198 = vmul.f32 %v1185, %v1194
        %v1199 = vadd.f32 %v1170, %v1197
        %v1200 = vadd.f32 %v1171, %v1198
        %1201 = vrot.lane.b32.xlu0 %v922, 33
        %v1202 = vpop.permute.xlu0 %1201
        %1203 = vrot.lane.b32.xlu0 %v923, 33
        %v1204 = vpop.permute.xlu0 %1203
        %vm1205 = vcmp.lt.s32.totalorder %v930, 33
        %v1206 = vsel %vm1205, %v1202, %v1204
        %v1207 = vsel %vm1205, %v1204, %v1202
        %v1208 = vmul.f32 %v1144, %v996
        %1209 = vset.pattern.permute.xlu0 9
        %1210 = vperm.xlu0 %1209, %v936
        %v1211 = vpop.permute.xlu0 %1210
        %v1213 = vmul.f32 %v1211, %v1207
        %v1214 = vmul.f32 %v1211, %v1206
        %v1216 = vlaneseq
        %v1217 = vshrl.u32 %v1216, 7
        %v1218 = vsub.s32 0, %v1217
        %v1219 = vrot.slane %v1208, %v1218
        %v1220 = vlaneseq
        %v1221 = vshrl.u32 %v1220, 7
        %v1222 = vsub.s32 1, %v1221
        %v1223 = vrot.slane %v1208, %v1222
        %v1226 = vmul.f32 %v1213, %v1219
        %v1227 = vmul.f32 %v1214, %v1223
        %v1228 = vadd.f32 %v1199, %v1226
        %v1229 = vadd.f32 %v1200, %v1227
        %1230 = vrot.lane.b32.xlu0 %v922, 32
        %v1231 = vpop.permute.xlu0 %1230
        %1232 = vrot.lane.b32.xlu0 %v923, 32
        %v1233 = vpop.permute.xlu0 %1232
        %vm1234 = vcmp.lt.s32.totalorder %v930, 32
        %v1235 = vsel %vm1234, %v1231, %v1233
        %v1236 = vsel %vm1234, %v1233, %v1231
        %v1237 = vmul.f32 %v1144, %v1027
        %1238 = vset.pattern.permute.xlu0 10
        %1239 = vperm.xlu0 %1238, %v936
        %v1240 = vpop.permute.xlu0 %1239
        %v1242 = vmul.f32 %v1240, %v1236
        %v1243 = vmul.f32 %v1240, %v1235
        %v1245 = vlaneseq
        %v1246 = vshrl.u32 %v1245, 7
        %v1247 = vsub.s32 0, %v1246
        %v1248 = vrot.slane %v1237, %v1247
        %v1249 = vlaneseq
        %v1250 = vshrl.u32 %v1249, 7
        %v1251 = vsub.s32 1, %v1250
        %v1252 = vrot.slane %v1237, %v1251
        %v1255 = vmul.f32 %v1242, %v1248
        %v1256 = vmul.f32 %v1243, %v1252
        %v1257 = vadd.f32 %v1228, %v1255
        %v1258 = vadd.f32 %v1229, %v1256
        %1259 = vrot.lane.b32.xlu0 %v922, 31
        %v1260 = vpop.permute.xlu0 %1259
        %1261 = vrot.lane.b32.xlu0 %v923, 31
        %v1262 = vpop.permute.xlu0 %1261
        %vm1263 = vcmp.lt.s32.totalorder %v930, 31
        %v1264 = vsel %vm1263, %v1260, %v1262
        %v1265 = vsel %vm1263, %v1262, %v1260
        %v1266 = vmul.f32 %v1144, %v1058
        %1267 = vset.pattern.permute.xlu0 11
        %1268 = vperm.xlu0 %1267, %v936
        %v1269 = vpop.permute.xlu0 %1268
        %v1271 = vmul.f32 %v1269, %v1265
        %v1272 = vmul.f32 %v1269, %v1264
        %v1274 = vlaneseq
        %v1275 = vshrl.u32 %v1274, 7
        %v1276 = vsub.s32 0, %v1275
        %v1277 = vrot.slane %v1266, %v1276
        %v1278 = vlaneseq
        %v1279 = vshrl.u32 %v1278, 7
        %v1280 = vsub.s32 1, %v1279
        %v1281 = vrot.slane %v1266, %v1280
        %v1284 = vmul.f32 %v1271, %v1277
        %v1285 = vmul.f32 %v1272, %v1281
        %v1286 = vadd.f32 %v1257, %v1284
        %v1287 = vadd.f32 %v1258, %v1285
        %1288 = vrot.lane.b32.xlu0 %v922, 30
        %v1289 = vpop.permute.xlu0 %1288
        %1290 = vrot.lane.b32.xlu0 %v923, 30
        %v1291 = vpop.permute.xlu0 %1290
        %vm1292 = vcmp.lt.s32.totalorder %v930, 30
        %v1293 = vsel %vm1292, %v1289, %v1291
        %v1294 = vsel %vm1292, %v1291, %v1289
        %v1295 = vmul.f32 %v1144, %v1089
        %1296 = vset.pattern.permute.xlu0 12
        %1297 = vperm.xlu0 %1296, %v936
        %v1298 = vpop.permute.xlu0 %1297
        %v1300 = vmul.f32 %v1298, %v1294
        %v1301 = vmul.f32 %v1298, %v1293
        %v1303 = vlaneseq
        %v1304 = vshrl.u32 %v1303, 7
        %v1305 = vsub.s32 0, %v1304
        %v1306 = vrot.slane %v1295, %v1305
        %v1307 = vlaneseq
        %v1308 = vshrl.u32 %v1307, 7
        %v1309 = vsub.s32 1, %v1308
        %v1310 = vrot.slane %v1295, %v1309
        %v1313 = vmul.f32 %v1300, %v1306
        %v1314 = vmul.f32 %v1301, %v1310
        %v1315 = vadd.f32 %v1286, %v1313
        %v1316 = vadd.f32 %v1287, %v1314
        %1317 = vrot.lane.b32.xlu0 %v922, 29
        %v1318 = vpop.permute.xlu0 %1317
        %1319 = vrot.lane.b32.xlu0 %v923, 29
        %v1320 = vpop.permute.xlu0 %1319
        %vm1321 = vcmp.lt.s32.totalorder %v930, 29
        %v1322 = vsel %vm1321, %v1318, %v1320
        %v1323 = vsel %vm1321, %v1320, %v1318
        %v1324 = vmul.f32 %v1144, %v1120
        %1325 = vset.pattern.permute.xlu0 13
        %1326 = vperm.xlu0 %1325, %v936
        %v1327 = vpop.permute.xlu0 %1326
        %v1329 = vmul.f32 %v1327, %v1323
        %v1330 = vmul.f32 %v1327, %v1322
        %v1332 = vlaneseq
        %v1333 = vshrl.u32 %v1332, 7
        %v1334 = vsub.s32 0, %v1333
        %v1335 = vrot.slane %v1324, %v1334
        %v1336 = vlaneseq
        %v1337 = vshrl.u32 %v1336, 7
        %v1338 = vsub.s32 1, %v1337
        %v1339 = vrot.slane %v1324, %v1338
        %v1342 = vmul.f32 %v1329, %v1335
        %v1343 = vmul.f32 %v1330, %v1339
        %v1344 = vadd.f32 %v1315, %v1342
        %v1345 = vadd.f32 %v1316, %v1343
        %s1346 = scalar_lea.vmem %s5, 2
        %v1347 = vld [vmem:[%s1346] ss:$8 sm:$0x3]
        %1348 = vrot.lane.b32.xlu0 %v922, 19
        %v1349 = vpop.permute.xlu0 %1348
        %1350 = vrot.lane.b32.xlu0 %v923, 19
        %v1351 = vpop.permute.xlu0 %1350
        %vm1352 = vcmp.lt.s32.totalorder %v930, 19
        %v1353 = vsel %vm1352, %v1349, %v1351
        %v1354 = vsel %vm1352, %v1351, %v1349
        %v1355 = vmul.f32 %v1347, %v934
        %1356 = vset.pattern.permute.xlu0 14
        %1357 = vperm.xlu0 %1356, %v936
        %v1358 = vpop.permute.xlu0 %1357
        %v1360 = vmul.f32 %v1358, %v1354
        %v1361 = vmul.f32 %v1358, %v1353
        %v1363 = vlaneseq
        %v1364 = vshrl.u32 %v1363, 7
        %v1365 = vsub.s32 0, %v1364
        %v1366 = vrot.slane %v1355, %v1365
        %v1367 = vlaneseq
        %v1368 = vshrl.u32 %v1367, 7
        %v1369 = vsub.s32 1, %v1368
        %v1370 = vrot.slane %v1355, %v1369
        %v1373 = vmul.f32 %v1360, %v1366
        %v1374 = vmul.f32 %v1361, %v1370
        %1375 = vrot.lane.b32.xlu0 %v922, 18
        %v1376 = vpop.permute.xlu0 %1375
        %1377 = vrot.lane.b32.xlu0 %v923, 18
        %v1378 = vpop.permute.xlu0 %1377
        %vm1379 = vcmp.lt.s32.totalorder %v930, 18
        %v1380 = vsel %vm1379, %v1376, %v1378
        %v1381 = vsel %vm1379, %v1378, %v1376
        %v1382 = vmul.f32 %v1347, %v965
        %1383 = vset.pattern.permute.xlu0 15
        %1384 = vperm.xlu0 %1383, %v936
        %v1385 = vpop.permute.xlu0 %1384
        %v1387 = vmul.f32 %v1385, %v1381
        %v1388 = vmul.f32 %v1385, %v1380
        %v1390 = vlaneseq
        %v1391 = vshrl.u32 %v1390, 7
        %v1392 = vsub.s32 0, %v1391
        %v1393 = vrot.slane %v1382, %v1392
        %v1394 = vlaneseq
        %v1395 = vshrl.u32 %v1394, 7
        %v1396 = vsub.s32 1, %v1395
        %v1397 = vrot.slane %v1382, %v1396
        %v1400 = vmul.f32 %v1387, %v1393
        %v1401 = vmul.f32 %v1388, %v1397
        %v1402 = vadd.f32 %v1373, %v1400
        %v1403 = vadd.f32 %v1374, %v1401
        %1404 = vrot.lane.b32.xlu0 %v922, 17
        %v1405 = vpop.permute.xlu0 %1404
        %1406 = vrot.lane.b32.xlu0 %v923, 17
        %v1407 = vpop.permute.xlu0 %1406
        %vm1408 = vcmp.lt.s32.totalorder %v930, 17
        %v1409 = vsel %vm1408, %v1405, %v1407
        %v1410 = vsel %vm1408, %v1407, %v1405
        %v1411 = vmul.f32 %v1347, %v996
        %1412 = vset.pattern.permute.xlu0 16
        %1413 = vperm.xlu0 %1412, %v936
        %v1414 = vpop.permute.xlu0 %1413
        %v1416 = vmul.f32 %v1414, %v1410
        %v1417 = vmul.f32 %v1414, %v1409
        %v1419 = vlaneseq
        %v1420 = vshrl.u32 %v1419, 7
        %v1421 = vsub.s32 0, %v1420
        %v1422 = vrot.slane %v1411, %v1421
        %v1423 = vlaneseq
        %v1424 = vshrl.u32 %v1423, 7
        %v1425 = vsub.s32 1, %v1424
        %v1426 = vrot.slane %v1411, %v1425
        %v1429 = vmul.f32 %v1416, %v1422
        %v1430 = vmul.f32 %v1417, %v1426
        %v1431 = vadd.f32 %v1402, %v1429
        %v1432 = vadd.f32 %v1403, %v1430
        %1433 = vrot.lane.b32.xlu0 %v922, 16
        %v1434 = vpop.permute.xlu0 %1433
        %1435 = vrot.lane.b32.xlu0 %v923, 16
        %v1436 = vpop.permute.xlu0 %1435
        %vm1437 = vcmp.lt.s32.totalorder %v930, 16
        %v1438 = vsel %vm1437, %v1434, %v1436
        %v1439 = vsel %vm1437, %v1436, %v1434
        %v1440 = vmul.f32 %v1347, %v1027
        %1441 = vset.pattern.permute.xlu0 17
        %1442 = vperm.xlu0 %1441, %v936
        %v1443 = vpop.permute.xlu0 %1442
        %v1445 = vmul.f32 %v1443, %v1439
        %v1446 = vmul.f32 %v1443, %v1438
        %v1448 = vlaneseq
        %v1449 = vshrl.u32 %v1448, 7
        %v1450 = vsub.s32 0, %v1449
        %v1451 = vrot.slane %v1440, %v1450
        %v1452 = vlaneseq
        %v1453 = vshrl.u32 %v1452, 7
        %v1454 = vsub.s32 1, %v1453
        %v1455 = vrot.slane %v1440, %v1454
        %v1458 = vmul.f32 %v1445, %v1451
        %v1459 = vmul.f32 %v1446, %v1455
        %v1460 = vadd.f32 %v1431, %v1458
        %v1461 = vadd.f32 %v1432, %v1459
        %1462 = vrot.lane.b32.xlu0 %v922, 15
        %v1463 = vpop.permute.xlu0 %1462
        %1464 = vrot.lane.b32.xlu0 %v923, 15
        %v1465 = vpop.permute.xlu0 %1464
        %vm1466 = vcmp.lt.s32.totalorder %v930, 15
        %v1467 = vsel %vm1466, %v1463, %v1465
        %v1468 = vsel %vm1466, %v1465, %v1463
        %v1469 = vmul.f32 %v1347, %v1058
        %1470 = vset.pattern.permute.xlu0 18
        %1471 = vperm.xlu0 %1470, %v936
        %v1472 = vpop.permute.xlu0 %1471
        %v1474 = vmul.f32 %v1472, %v1468
        %v1475 = vmul.f32 %v1472, %v1467
        %v1477 = vlaneseq
        %v1478 = vshrl.u32 %v1477, 7
        %v1479 = vsub.s32 0, %v1478
        %v1480 = vrot.slane %v1469, %v1479
        %v1481 = vlaneseq
        %v1482 = vshrl.u32 %v1481, 7
        %v1483 = vsub.s32 1, %v1482
        %v1484 = vrot.slane %v1469, %v1483
        %v1487 = vmul.f32 %v1474, %v1480
        %v1488 = vmul.f32 %v1475, %v1484
        %v1489 = vadd.f32 %v1460, %v1487
        %v1490 = vadd.f32 %v1461, %v1488
        %1491 = vrot.lane.b32.xlu0 %v922, 14
        %v1492 = vpop.permute.xlu0 %1491
        %1493 = vrot.lane.b32.xlu0 %v923, 14
        %v1494 = vpop.permute.xlu0 %1493
        %vm1495 = vcmp.lt.s32.totalorder %v930, 14
        %v1496 = vsel %vm1495, %v1492, %v1494
        %v1497 = vsel %vm1495, %v1494, %v1492
        %v1498 = vmul.f32 %v1347, %v1089
        %1499 = vset.pattern.permute.xlu0 19
        %1500 = vperm.xlu0 %1499, %v936
        %v1501 = vpop.permute.xlu0 %1500
        %v1503 = vmul.f32 %v1501, %v1497
        %v1504 = vmul.f32 %v1501, %v1496
        %v1506 = vlaneseq
        %v1507 = vshrl.u32 %v1506, 7
        %v1508 = vsub.s32 0, %v1507
        %v1509 = vrot.slane %v1498, %v1508
        %v1510 = vlaneseq
        %v1511 = vshrl.u32 %v1510, 7
        %v1512 = vsub.s32 1, %v1511
        %v1513 = vrot.slane %v1498, %v1512
        %v1516 = vmul.f32 %v1503, %v1509
        %v1517 = vmul.f32 %v1504, %v1513
        %v1518 = vadd.f32 %v1489, %v1516
        %v1519 = vadd.f32 %v1490, %v1517
        %1520 = vrot.lane.b32.xlu0 %v922, 13
        %v1521 = vpop.permute.xlu0 %1520
        %1522 = vrot.lane.b32.xlu0 %v923, 13
        %v1523 = vpop.permute.xlu0 %1522
        %vm1524 = vcmp.lt.s32.totalorder %v930, 13
        %v1525 = vsel %vm1524, %v1521, %v1523
        %v1526 = vsel %vm1524, %v1523, %v1521
        %v1527 = vmul.f32 %v1347, %v1120
        %1528 = vset.pattern.permute.xlu0 20
        %1529 = vperm.xlu0 %1528, %v936
        %v1530 = vpop.permute.xlu0 %1529
        %v1532 = vmul.f32 %v1530, %v1526
        %v1533 = vmul.f32 %v1530, %v1525
        %v1535 = vlaneseq
        %v1536 = vshrl.u32 %v1535, 7
        %v1537 = vsub.s32 0, %v1536
        %v1538 = vrot.slane %v1527, %v1537
        %v1539 = vlaneseq
        %v1540 = vshrl.u32 %v1539, 7
        %v1541 = vsub.s32 1, %v1540
        %v1542 = vrot.slane %v1527, %v1541
        %v1545 = vmul.f32 %v1532, %v1538
        %v1546 = vmul.f32 %v1533, %v1542
        %v1547 = vadd.f32 %v1518, %v1545
        %v1548 = vadd.f32 %v1519, %v1546
        %s1549 = scalar_lea.vmem %s5, 3
        %v1550 = vld [vmem:[%s1549] ss:$8 sm:$0x3]
        %1551 = vrot.lane.b32.xlu0 %v922, 3
        %v1552 = vpop.permute.xlu0 %1551
        %1553 = vrot.lane.b32.xlu0 %v923, 3
        %v1554 = vpop.permute.xlu0 %1553
        %vm1555 = vcmp.lt.s32.totalorder %v930, 3
        %v1556 = vsel %vm1555, %v1552, %v1554
        %v1557 = vsel %vm1555, %v1554, %v1552
        %v1558 = vmul.f32 %v1550, %v934
        %1559 = vset.pattern.permute.xlu0 21
        %1560 = vperm.xlu0 %1559, %v936
        %v1561 = vpop.permute.xlu0 %1560
        %v1563 = vmul.f32 %v1561, %v1557
        %v1564 = vmul.f32 %v1561, %v1556
        %v1566 = vlaneseq
        %v1567 = vshrl.u32 %v1566, 7
        %v1568 = vsub.s32 0, %v1567
        %v1569 = vrot.slane %v1558, %v1568
        %v1570 = vlaneseq
        %v1571 = vshrl.u32 %v1570, 7
        %v1572 = vsub.s32 1, %v1571
        %v1573 = vrot.slane %v1558, %v1572
        %v1576 = vmul.f32 %v1563, %v1569
        %v1577 = vmul.f32 %v1564, %v1573
        %1578 = vrot.lane.b32.xlu0 %v922, 2
        %v1579 = vpop.permute.xlu0 %1578
        %1580 = vrot.lane.b32.xlu0 %v923, 2
        %v1581 = vpop.permute.xlu0 %1580
        %vm1582 = vcmp.lt.s32.totalorder %v930, 2
        %v1583 = vsel %vm1582, %v1579, %v1581
        %v1584 = vsel %vm1582, %v1581, %v1579
        %v1585 = vmul.f32 %v1550, %v965
        %1586 = vset.pattern.permute.xlu0 22
        %1587 = vperm.xlu0 %1586, %v936
        %v1588 = vpop.permute.xlu0 %1587
        %v1590 = vmul.f32 %v1588, %v1584
        %v1591 = vmul.f32 %v1588, %v1583
        %v1593 = vlaneseq
        %v1594 = vshrl.u32 %v1593, 7
        %v1595 = vsub.s32 0, %v1594
        %v1596 = vrot.slane %v1585, %v1595
        %v1597 = vlaneseq
        %v1598 = vshrl.u32 %v1597, 7
        %v1599 = vsub.s32 1, %v1598
        %v1600 = vrot.slane %v1585, %v1599
        %v1603 = vmul.f32 %v1590, %v1596
        %v1604 = vmul.f32 %v1591, %v1600
        %v1605 = vadd.f32 %v1576, %v1603
        %v1606 = vadd.f32 %v1577, %v1604
        %1607 = vrot.lane.b32.xlu0 %v922, 1
        %v1608 = vpop.permute.xlu0 %1607
        %1609 = vrot.lane.b32.xlu0 %v923, 1
        %v1610 = vpop.permute.xlu0 %1609
        %vm1611 = vcmp.lt.s32.totalorder %v930, 1
        %v1612 = vsel %vm1611, %v1608, %v1610
        %v1613 = vsel %vm1611, %v1610, %v1608
        %v1614 = vmul.f32 %v1550, %v996
        %1615 = vset.pattern.permute.xlu0 23
        %1616 = vperm.xlu0 %1615, %v936
        %v1617 = vpop.permute.xlu0 %1616
        %v1619 = vmul.f32 %v1617, %v1613
        %v1620 = vmul.f32 %v1617, %v1612
        %v1622 = vlaneseq
        %v1623 = vshrl.u32 %v1622, 7
        %v1624 = vsub.s32 0, %v1623
        %v1625 = vrot.slane %v1614, %v1624
        %v1626 = vlaneseq
        %v1627 = vshrl.u32 %v1626, 7
        %v1628 = vsub.s32 1, %v1627
        %v1629 = vrot.slane %v1614, %v1628
        %v1632 = vmul.f32 %v1619, %v1625
        %v1633 = vmul.f32 %v1620, %v1629
        %v1634 = vadd.f32 %v1605, %v1632
        %v1635 = vadd.f32 %v1606, %v1633
        %v1636 = vmul.f32 %v1550, %v1027
        %1637 = vset.pattern.permute.xlu0 24
        %1638 = vperm.xlu0 %1637, %v936
        %v1639 = vpop.permute.xlu0 %1638
        %v1641 = vmul.f32 %v1639, %v922
        %v1642 = vmul.f32 %v1639, %v923
        %v1644 = vlaneseq
        %v1645 = vshrl.u32 %v1644, 7
        %v1646 = vsub.s32 0, %v1645
        %v1647 = vrot.slane %v1636, %v1646
        %v1648 = vlaneseq
        %v1649 = vshrl.u32 %v1648, 7
        %v1650 = vsub.s32 1, %v1649
        %v1651 = vrot.slane %v1636, %v1650
        %v1654 = vmul.f32 %v1641, %v1647
        %v1655 = vmul.f32 %v1642, %v1651
        %v1656 = vadd.f32 %v1634, %v1654
        %v1657 = vadd.f32 %v1635, %v1655
        %1658 = vrot.lane.b32.xlu0 %v922, 127
        %v1659 = vpop.permute.xlu0 %1658
        %1660 = vrot.lane.b32.xlu0 %v923, 127
        %v1661 = vpop.permute.xlu0 %1660
        %vm1662 = vcmp.lt.s32.totalorder %v930, 127
        %v1663 = vsel %vm1662, %v1659, %v1661
        %v1664 = vsel %vm1662, %v1661, %v1659
        %v1665 = vmul.f32 %v1550, %v1058
        %1666 = vset.pattern.permute.xlu0 25
        %1667 = vperm.xlu0 %1666, %v936
        %v1668 = vpop.permute.xlu0 %1667
        %v1670 = vmul.f32 %v1668, %v1663
        %v1671 = vmul.f32 %v1668, %v1664
        %v1673 = vlaneseq
        %v1674 = vshrl.u32 %v1673, 7
        %v1675 = vsub.s32 0, %v1674
        %v1676 = vrot.slane %v1665, %v1675
        %v1677 = vlaneseq
        %v1678 = vshrl.u32 %v1677, 7
        %v1679 = vsub.s32 1, %v1678
        %v1680 = vrot.slane %v1665, %v1679
        %v1683 = vmul.f32 %v1670, %v1676
        %v1684 = vmul.f32 %v1671, %v1680
        %v1685 = vadd.f32 %v1656, %v1683
        %v1686 = vadd.f32 %v1657, %v1684
        %1687 = vrot.lane.b32.xlu0 %v922, 126
        %v1688 = vpop.permute.xlu0 %1687
        %1689 = vrot.lane.b32.xlu0 %v923, 126
        %v1690 = vpop.permute.xlu0 %1689
        %vm1691 = vcmp.lt.s32.totalorder %v930, 126
        %v1692 = vsel %vm1691, %v1688, %v1690
        %v1693 = vsel %vm1691, %v1690, %v1688
        %v1694 = vmul.f32 %v1550, %v1089
        %1695 = vset.pattern.permute.xlu0 26
        %1696 = vperm.xlu0 %1695, %v936
        %v1697 = vpop.permute.xlu0 %1696
        %v1699 = vmul.f32 %v1697, %v1692
        %v1700 = vmul.f32 %v1697, %v1693
        %v1702 = vlaneseq
        %v1703 = vshrl.u32 %v1702, 7
        %v1704 = vsub.s32 0, %v1703
        %v1705 = vrot.slane %v1694, %v1704
        %v1706 = vlaneseq
        %v1707 = vshrl.u32 %v1706, 7
        %v1708 = vsub.s32 1, %v1707
        %v1709 = vrot.slane %v1694, %v1708
        %v1712 = vmul.f32 %v1699, %v1705
        %v1713 = vmul.f32 %v1700, %v1709
        %v1714 = vadd.f32 %v1685, %v1712
        %v1715 = vadd.f32 %v1686, %v1713
        %1716 = vrot.lane.b32.xlu0 %v922, 125
        %v1717 = vpop.permute.xlu0 %1716
        %1718 = vrot.lane.b32.xlu0 %v923, 125
        %v1719 = vpop.permute.xlu0 %1718
        %vm1720 = vcmp.lt.s32.totalorder %v930, 125
        %v1721 = vsel %vm1720, %v1717, %v1719
        %v1722 = vsel %vm1720, %v1719, %v1717
        %v1723 = vmul.f32 %v1550, %v1120
        %1724 = vset.pattern.permute.xlu0 27
        %1725 = vperm.xlu0 %1724, %v936
        %v1726 = vpop.permute.xlu0 %1725
        %v1728 = vmul.f32 %v1726, %v1721
        %v1729 = vmul.f32 %v1726, %v1722
        %v1731 = vlaneseq
        %v1732 = vshrl.u32 %v1731, 7
        %v1733 = vsub.s32 0, %v1732
        %v1734 = vrot.slane %v1723, %v1733
        %v1735 = vlaneseq
        %v1736 = vshrl.u32 %v1735, 7
        %v1737 = vsub.s32 1, %v1736
        %v1738 = vrot.slane %v1723, %v1737
        %v1741 = vmul.f32 %v1728, %v1734
        %v1742 = vmul.f32 %v1729, %v1738
        %v1743 = vadd.f32 %v1714, %v1741
        %v1744 = vadd.f32 %v1715, %v1742
        %s1745 = scalar_lea.vmem %s5, 4
        %v1746 = vld [vmem:[%s1745] ss:$8 sm:$0x3]
        %1747 = vrot.lane.b32.xlu0 %v922, 115
        %v1748 = vpop.permute.xlu0 %1747
        %1749 = vrot.lane.b32.xlu0 %v923, 115
        %v1750 = vpop.permute.xlu0 %1749
        %vm1751 = vcmp.lt.s32.totalorder %v930, 115
        %v1752 = vsel %vm1751, %v1748, %v1750
        %v1753 = vsel %vm1751, %v1750, %v1748
        %v1754 = vmul.f32 %v1746, %v934
        %1755 = vset.pattern.permute.xlu0 28
        %1756 = vperm.xlu0 %1755, %v936
        %v1757 = vpop.permute.xlu0 %1756
        %v1759 = vmul.f32 %v1757, %v1752
        %v1760 = vmul.f32 %v1757, %v1753
        %v1762 = vlaneseq
        %v1763 = vshrl.u32 %v1762, 7
        %v1764 = vsub.s32 0, %v1763
        %v1765 = vrot.slane %v1754, %v1764
        %v1766 = vlaneseq
        %v1767 = vshrl.u32 %v1766, 7
        %v1768 = vsub.s32 1, %v1767
        %v1769 = vrot.slane %v1754, %v1768
        %v1772 = vmul.f32 %v1759, %v1765
        %v1773 = vmul.f32 %v1760, %v1769
        %1774 = vrot.lane.b32.xlu0 %v922, 114
        %v1775 = vpop.permute.xlu0 %1774
        %1776 = vrot.lane.b32.xlu0 %v923, 114
        %v1777 = vpop.permute.xlu0 %1776
        %vm1778 = vcmp.lt.s32.totalorder %v930, 114
        %v1779 = vsel %vm1778, %v1775, %v1777
        %v1780 = vsel %vm1778, %v1777, %v1775
        %v1781 = vmul.f32 %v1746, %v965
        %1782 = vset.pattern.permute.xlu0 29
        %1783 = vperm.xlu0 %1782, %v936
        %v1784 = vpop.permute.xlu0 %1783
        %v1786 = vmul.f32 %v1784, %v1779
        %v1787 = vmul.f32 %v1784, %v1780
        %v1789 = vlaneseq
        %v1790 = vshrl.u32 %v1789, 7
        %v1791 = vsub.s32 0, %v1790
        %v1792 = vrot.slane %v1781, %v1791
        %v1793 = vlaneseq
        %v1794 = vshrl.u32 %v1793, 7
        %v1795 = vsub.s32 1, %v1794
        %v1796 = vrot.slane %v1781, %v1795
        %v1799 = vmul.f32 %v1786, %v1792
        %v1800 = vmul.f32 %v1787, %v1796
        %v1801 = vadd.f32 %v1772, %v1799
        %v1802 = vadd.f32 %v1773, %v1800
        %1803 = vrot.lane.b32.xlu0 %v922, 113
        %v1804 = vpop.permute.xlu0 %1803
        %1805 = vrot.lane.b32.xlu0 %v923, 113
        %v1806 = vpop.permute.xlu0 %1805
        %vm1807 = vcmp.lt.s32.totalorder %v930, 113
        %v1808 = vsel %vm1807, %v1804, %v1806
        %v1809 = vsel %vm1807, %v1806, %v1804
        %v1810 = vmul.f32 %v1746, %v996
        %1811 = vset.pattern.permute.xlu0 30
        %1812 = vperm.xlu0 %1811, %v936
        %v1813 = vpop.permute.xlu0 %1812
        %v1815 = vmul.f32 %v1813, %v1808
        %v1816 = vmul.f32 %v1813, %v1809
        %v1818 = vlaneseq
        %v1819 = vshrl.u32 %v1818, 7
        %v1820 = vsub.s32 0, %v1819
        %v1821 = vrot.slane %v1810, %v1820
        %v1822 = vlaneseq
        %v1823 = vshrl.u32 %v1822, 7
        %v1824 = vsub.s32 1, %v1823
        %v1825 = vrot.slane %v1810, %v1824
        %v1828 = vmul.f32 %v1815, %v1821
        %v1829 = vmul.f32 %v1816, %v1825
        %v1830 = vadd.f32 %v1801, %v1828
        %v1831 = vadd.f32 %v1802, %v1829
        %1832 = vrot.lane.b32.xlu0 %v922, 112
        %v1833 = vpop.permute.xlu0 %1832
        %1834 = vrot.lane.b32.xlu0 %v923, 112
        %v1835 = vpop.permute.xlu0 %1834
        %vm1836 = vcmp.lt.s32.totalorder %v930, 112
        %v1837 = vsel %vm1836, %v1833, %v1835
        %v1838 = vsel %vm1836, %v1835, %v1833
        %v1839 = vmul.f32 %v1746, %v1027
        %1840 = vset.pattern.permute.xlu0 31
        %1841 = vperm.xlu0 %1840, %v936
        %v1842 = vpop.permute.xlu0 %1841
        %v1844 = vmul.f32 %v1842, %v1837
        %v1845 = vmul.f32 %v1842, %v1838
        %v1847 = vlaneseq
        %v1848 = vshrl.u32 %v1847, 7
        %v1849 = vsub.s32 0, %v1848
        %v1850 = vrot.slane %v1839, %v1849
        %v1851 = vlaneseq
        %v1852 = vshrl.u32 %v1851, 7
        %v1853 = vsub.s32 1, %v1852
        %v1854 = vrot.slane %v1839, %v1853
        %v1857 = vmul.f32 %v1844, %v1850
        %v1858 = vmul.f32 %v1845, %v1854
        %v1859 = vadd.f32 %v1830, %v1857
        %v1860 = vadd.f32 %v1831, %v1858
        %1861 = vrot.lane.b32.xlu0 %v922, 111
        %v1862 = vpop.permute.xlu0 %1861
        %1863 = vrot.lane.b32.xlu0 %v923, 111
        %v1864 = vpop.permute.xlu0 %1863
        %vm1865 = vcmp.lt.s32.totalorder %v930, 111
        %v1866 = vsel %vm1865, %v1862, %v1864
        %v1867 = vsel %vm1865, %v1864, %v1862
        %v1868 = vmul.f32 %v1746, %v1058
        %1869 = vset.pattern.permute.xlu0 32
        %1870 = vperm.xlu0 %1869, %v936
        %v1871 = vpop.permute.xlu0 %1870
        %v1873 = vmul.f32 %v1871, %v1866
        %v1874 = vmul.f32 %v1871, %v1867
        %v1876 = vlaneseq
        %v1877 = vshrl.u32 %v1876, 7
        %v1878 = vsub.s32 0, %v1877
        %v1879 = vrot.slane %v1868, %v1878
        %v1880 = vlaneseq
        %v1881 = vshrl.u32 %v1880, 7
        %v1882 = vsub.s32 1, %v1881
        %v1883 = vrot.slane %v1868, %v1882
        %v1886 = vmul.f32 %v1873, %v1879
        %v1887 = vmul.f32 %v1874, %v1883
        %v1888 = vadd.f32 %v1859, %v1886
        %v1889 = vadd.f32 %v1860, %v1887
        %1890 = vrot.lane.b32.xlu0 %v922, 110
        %v1891 = vpop.permute.xlu0 %1890
        %1892 = vrot.lane.b32.xlu0 %v923, 110
        %v1893 = vpop.permute.xlu0 %1892
        %vm1894 = vcmp.lt.s32.totalorder %v930, 110
        %v1895 = vsel %vm1894, %v1891, %v1893
        %v1896 = vsel %vm1894, %v1893, %v1891
        %v1897 = vmul.f32 %v1746, %v1089
        %1898 = vset.pattern.permute.xlu0 33
        %1899 = vperm.xlu0 %1898, %v936
        %v1900 = vpop.permute.xlu0 %1899
        %v1902 = vmul.f32 %v1900, %v1895
        %v1903 = vmul.f32 %v1900, %v1896
        %v1905 = vlaneseq
        %v1906 = vshrl.u32 %v1905, 7
        %v1907 = vsub.s32 0, %v1906
        %v1908 = vrot.slane %v1897, %v1907
        %v1909 = vlaneseq
        %v1910 = vshrl.u32 %v1909, 7
        %v1911 = vsub.s32 1, %v1910
        %v1912 = vrot.slane %v1897, %v1911
        %v1915 = vmul.f32 %v1902, %v1908
        %v1916 = vmul.f32 %v1903, %v1912
        %v1917 = vadd.f32 %v1888, %v1915
        %v1918 = vadd.f32 %v1889, %v1916
        %1919 = vrot.lane.b32.xlu0 %v922, 109
        %v1920 = vpop.permute.xlu0 %1919
        %1921 = vrot.lane.b32.xlu0 %v923, 109
        %v1922 = vpop.permute.xlu0 %1921
        %vm1923 = vcmp.lt.s32.totalorder %v930, 109
        %v1924 = vsel %vm1923, %v1920, %v1922
        %v1925 = vsel %vm1923, %v1922, %v1920
        %v1926 = vmul.f32 %v1746, %v1120
        %1927 = vset.pattern.permute.xlu0 34
        %1928 = vperm.xlu0 %1927, %v936
        %v1929 = vpop.permute.xlu0 %1928
        %v1931 = vmul.f32 %v1929, %v1924
        %v1932 = vmul.f32 %v1929, %v1925
        %v1934 = vlaneseq
        %v1935 = vshrl.u32 %v1934, 7
        %v1936 = vsub.s32 0, %v1935
        %v1937 = vrot.slane %v1926, %v1936
        %v1938 = vlaneseq
        %v1939 = vshrl.u32 %v1938, 7
        %v1940 = vsub.s32 1, %v1939
        %v1941 = vrot.slane %v1926, %v1940
        %v1944 = vmul.f32 %v1931, %v1937
        %v1945 = vmul.f32 %v1932, %v1941
        %v1946 = vadd.f32 %v1917, %v1944
        %v1947 = vadd.f32 %v1918, %v1945
        %s1948 = scalar_lea.vmem %s5, 5
        %v1949 = vld [vmem:[%s1948] ss:$8 sm:$0x3]
        %1950 = vrot.lane.b32.xlu0 %v922, 99
        %v1951 = vpop.permute.xlu0 %1950
        %1952 = vrot.lane.b32.xlu0 %v923, 99
        %v1953 = vpop.permute.xlu0 %1952
        %vm1954 = vcmp.lt.s32.totalorder %v930, 99
        %v1955 = vsel %vm1954, %v1951, %v1953
        %v1956 = vsel %vm1954, %v1953, %v1951
        %v1957 = vmul.f32 %v1949, %v934
        %1958 = vset.pattern.permute.xlu0 35
        %1959 = vperm.xlu0 %1958, %v936
        %v1960 = vpop.permute.xlu0 %1959
        %v1962 = vmul.f32 %v1960, %v1955
        %v1963 = vmul.f32 %v1960, %v1956
        %v1965 = vlaneseq
        %v1966 = vshrl.u32 %v1965, 7
        %v1967 = vsub.s32 0, %v1966
        %v1968 = vrot.slane %v1957, %v1967
        %v1969 = vlaneseq
        %v1970 = vshrl.u32 %v1969, 7
        %v1971 = vsub.s32 1, %v1970
        %v1972 = vrot.slane %v1957, %v1971
        %v1975 = vmul.f32 %v1962, %v1968
        %v1976 = vmul.f32 %v1963, %v1972
        %1977 = vrot.lane.b32.xlu0 %v922, 98
        %v1978 = vpop.permute.xlu0 %1977
        %1979 = vrot.lane.b32.xlu0 %v923, 98
        %v1980 = vpop.permute.xlu0 %1979
        %vm1981 = vcmp.lt.s32.totalorder %v930, 98
        %v1982 = vsel %vm1981, %v1978, %v1980
        %v1983 = vsel %vm1981, %v1980, %v1978
        %v1984 = vmul.f32 %v1949, %v965
        %1985 = vset.pattern.permute.xlu0 36
        %1986 = vperm.xlu0 %1985, %v936
        %v1987 = vpop.permute.xlu0 %1986
        %v1989 = vmul.f32 %v1987, %v1982
        %v1990 = vmul.f32 %v1987, %v1983
        %v1992 = vlaneseq
        %v1993 = vshrl.u32 %v1992, 7
        %v1994 = vsub.s32 0, %v1993
        %v1995 = vrot.slane %v1984, %v1994
        %v1996 = vlaneseq
        %v1997 = vshrl.u32 %v1996, 7
        %v1998 = vsub.s32 1, %v1997
        %v1999 = vrot.slane %v1984, %v1998
        %v2002 = vmul.f32 %v1989, %v1995
        %v2003 = vmul.f32 %v1990, %v1999
        %v2004 = vadd.f32 %v1975, %v2002
        %v2005 = vadd.f32 %v1976, %v2003
        %2006 = vrot.lane.b32.xlu0 %v922, 97
        %v2007 = vpop.permute.xlu0 %2006
        %2008 = vrot.lane.b32.xlu0 %v923, 97
        %v2009 = vpop.permute.xlu0 %2008
        %vm2010 = vcmp.lt.s32.totalorder %v930, 97
        %v2011 = vsel %vm2010, %v2007, %v2009
        %v2012 = vsel %vm2010, %v2009, %v2007
        %v2013 = vmul.f32 %v1949, %v996
        %2014 = vset.pattern.permute.xlu0 37
        %2015 = vperm.xlu0 %2014, %v936
        %v2016 = vpop.permute.xlu0 %2015
        %v2018 = vmul.f32 %v2016, %v2011
        %v2019 = vmul.f32 %v2016, %v2012
        %v2021 = vlaneseq
        %v2022 = vshrl.u32 %v2021, 7
        %v2023 = vsub.s32 0, %v2022
        %v2024 = vrot.slane %v2013, %v2023
        %v2025 = vlaneseq
        %v2026 = vshrl.u32 %v2025, 7
        %v2027 = vsub.s32 1, %v2026
        %v2028 = vrot.slane %v2013, %v2027
        %v2031 = vmul.f32 %v2018, %v2024
        %v2032 = vmul.f32 %v2019, %v2028
        %v2033 = vadd.f32 %v2004, %v2031
        %v2034 = vadd.f32 %v2005, %v2032
        %2035 = vrot.lane.b32.xlu0 %v922, 96
        %v2036 = vpop.permute.xlu0 %2035
        %2037 = vrot.lane.b32.xlu0 %v923, 96
        %v2038 = vpop.permute.xlu0 %2037
        %vm2039 = vcmp.lt.s32.totalorder %v930, 96
        %v2040 = vsel %vm2039, %v2036, %v2038
        %v2041 = vsel %vm2039, %v2038, %v2036
        %v2042 = vmul.f32 %v1949, %v1027
        %2043 = vset.pattern.permute.xlu0 38
        %2044 = vperm.xlu0 %2043, %v936
        %v2045 = vpop.permute.xlu0 %2044
        %v2047 = vmul.f32 %v2045, %v2040
        %v2048 = vmul.f32 %v2045, %v2041
        %v2050 = vlaneseq
        %v2051 = vshrl.u32 %v2050, 7
        %v2052 = vsub.s32 0, %v2051
        %v2053 = vrot.slane %v2042, %v2052
        %v2054 = vlaneseq
        %v2055 = vshrl.u32 %v2054, 7
        %v2056 = vsub.s32 1, %v2055
        %v2057 = vrot.slane %v2042, %v2056
        %v2060 = vmul.f32 %v2047, %v2053
        %v2061 = vmul.f32 %v2048, %v2057
        %v2062 = vadd.f32 %v2033, %v2060
        %v2063 = vadd.f32 %v2034, %v2061
        %2064 = vrot.lane.b32.xlu0 %v922, 95
        %v2065 = vpop.permute.xlu0 %2064
        %2066 = vrot.lane.b32.xlu0 %v923, 95
        %v2067 = vpop.permute.xlu0 %2066
        %vm2068 = vcmp.lt.s32.totalorder %v930, 95
        %v2069 = vsel %vm2068, %v2065, %v2067
        %v2070 = vsel %vm2068, %v2067, %v2065
        %v2071 = vmul.f32 %v1949, %v1058
        %2072 = vset.pattern.permute.xlu0 39
        %2073 = vperm.xlu0 %2072, %v936
        %v2074 = vpop.permute.xlu0 %2073
        %v2076 = vmul.f32 %v2074, %v2069
        %v2077 = vmul.f32 %v2074, %v2070
        %v2079 = vlaneseq
        %v2080 = vshrl.u32 %v2079, 7
        %v2081 = vsub.s32 0, %v2080
        %v2082 = vrot.slane %v2071, %v2081
        %v2083 = vlaneseq
        %v2084 = vshrl.u32 %v2083, 7
        %v2085 = vsub.s32 1, %v2084
        %v2086 = vrot.slane %v2071, %v2085
        %v2089 = vmul.f32 %v2076, %v2082
        %v2090 = vmul.f32 %v2077, %v2086
        %v2091 = vadd.f32 %v2062, %v2089
        %v2092 = vadd.f32 %v2063, %v2090
        %2093 = vrot.lane.b32.xlu0 %v922, 94
        %v2094 = vpop.permute.xlu0 %2093
        %2095 = vrot.lane.b32.xlu0 %v923, 94
        %v2096 = vpop.permute.xlu0 %2095
        %vm2097 = vcmp.lt.s32.totalorder %v930, 94
        %v2098 = vsel %vm2097, %v2094, %v2096
        %v2099 = vsel %vm2097, %v2096, %v2094
        %v2100 = vmul.f32 %v1949, %v1089
        %2101 = vset.pattern.permute.xlu0 40
        %2102 = vperm.xlu0 %2101, %v936
        %v2103 = vpop.permute.xlu0 %2102
        %v2105 = vmul.f32 %v2103, %v2098
        %v2106 = vmul.f32 %v2103, %v2099
        %v2108 = vlaneseq
        %v2109 = vshrl.u32 %v2108, 7
        %v2110 = vsub.s32 0, %v2109
        %v2111 = vrot.slane %v2100, %v2110
        %v2112 = vlaneseq
        %v2113 = vshrl.u32 %v2112, 7
        %v2114 = vsub.s32 1, %v2113
        %v2115 = vrot.slane %v2100, %v2114
        %v2118 = vmul.f32 %v2105, %v2111
        %v2119 = vmul.f32 %v2106, %v2115
        %v2120 = vadd.f32 %v2091, %v2118
        %v2121 = vadd.f32 %v2092, %v2119
        %2122 = vrot.lane.b32.xlu0 %v922, 93
        %v2123 = vpop.permute.xlu0 %2122
        %2124 = vrot.lane.b32.xlu0 %v923, 93
        %v2125 = vpop.permute.xlu0 %2124
        %vm2126 = vcmp.lt.s32.totalorder %v930, 93
        %v2127 = vsel %vm2126, %v2123, %v2125
        %v2128 = vsel %vm2126, %v2125, %v2123
        %v2129 = vmul.f32 %v1949, %v1120
        %2130 = vset.pattern.permute.xlu0 41
        %2131 = vperm.xlu0 %2130, %v936
        %v2132 = vpop.permute.xlu0 %2131
        %v2134 = vmul.f32 %v2132, %v2127
        %v2135 = vmul.f32 %v2132, %v2128
        %v2137 = vlaneseq
        %v2138 = vshrl.u32 %v2137, 7
        %v2139 = vsub.s32 0, %v2138
        %v2140 = vrot.slane %v2129, %v2139
        %v2141 = vlaneseq
        %v2142 = vshrl.u32 %v2141, 7
        %v2143 = vsub.s32 1, %v2142
        %v2144 = vrot.slane %v2129, %v2143
        %v2147 = vmul.f32 %v2134, %v2140
        %v2148 = vmul.f32 %v2135, %v2144
        %v2149 = vadd.f32 %v2120, %v2147
        %v2150 = vadd.f32 %v2121, %v2148
        %s2151 = scalar_lea.vmem %s5, 6
        %v2152 = vld [vmem:[%s2151] ss:$8 sm:$0x3]
        %2153 = vrot.lane.b32.xlu0 %v922, 83
        %v2154 = vpop.permute.xlu0 %2153
        %2155 = vrot.lane.b32.xlu0 %v923, 83
        %v2156 = vpop.permute.xlu0 %2155
        %vm2157 = vcmp.lt.s32.totalorder %v930, 83
        %v2158 = vsel %vm2157, %v2154, %v2156
        %v2159 = vsel %vm2157, %v2156, %v2154
        %v2160 = vmul.f32 %v2152, %v934
        %2161 = vset.pattern.permute.xlu0 42
        %2162 = vperm.xlu0 %2161, %v936
        %v2163 = vpop.permute.xlu0 %2162
        %v2165 = vmul.f32 %v2163, %v2158
        %v2166 = vmul.f32 %v2163, %v2159
        %v2168 = vlaneseq
        %v2169 = vshrl.u32 %v2168, 7
        %v2170 = vsub.s32 0, %v2169
        %v2171 = vrot.slane %v2160, %v2170
        %v2172 = vlaneseq
        %v2173 = vshrl.u32 %v2172, 7
        %v2174 = vsub.s32 1, %v2173
        %v2175 = vrot.slane %v2160, %v2174
        %v2178 = vmul.f32 %v2165, %v2171
        %v2179 = vmul.f32 %v2166, %v2175
        %2180 = vrot.lane.b32.xlu0 %v922, 82
        %v2181 = vpop.permute.xlu0 %2180
        %2182 = vrot.lane.b32.xlu0 %v923, 82
        %v2183 = vpop.permute.xlu0 %2182
        %vm2184 = vcmp.lt.s32.totalorder %v930, 82
        %v2185 = vsel %vm2184, %v2181, %v2183
        %v2186 = vsel %vm2184, %v2183, %v2181
        %v2187 = vmul.f32 %v2152, %v965
        %2188 = vset.pattern.permute.xlu0 43
        %2189 = vperm.xlu0 %2188, %v936
        %v2190 = vpop.permute.xlu0 %2189
        %v2192 = vmul.f32 %v2190, %v2185
        %v2193 = vmul.f32 %v2190, %v2186
        %v2195 = vlaneseq
        %v2196 = vshrl.u32 %v2195, 7
        %v2197 = vsub.s32 0, %v2196
        %v2198 = vrot.slane %v2187, %v2197
        %v2199 = vlaneseq
        %v2200 = vshrl.u32 %v2199, 7
        %v2201 = vsub.s32 1, %v2200
        %v2202 = vrot.slane %v2187, %v2201
        %v2205 = vmul.f32 %v2192, %v2198
        %v2206 = vmul.f32 %v2193, %v2202
        %v2207 = vadd.f32 %v2178, %v2205
        %v2208 = vadd.f32 %v2179, %v2206
        %2209 = vrot.lane.b32.xlu0 %v922, 81
        %v2210 = vpop.permute.xlu0 %2209
        %2211 = vrot.lane.b32.xlu0 %v923, 81
        %v2212 = vpop.permute.xlu0 %2211
        %vm2213 = vcmp.lt.s32.totalorder %v930, 81
        %v2214 = vsel %vm2213, %v2210, %v2212
        %v2215 = vsel %vm2213, %v2212, %v2210
        %v2216 = vmul.f32 %v2152, %v996
        %2217 = vset.pattern.permute.xlu0 44
        %2218 = vperm.xlu0 %2217, %v936
        %v2219 = vpop.permute.xlu0 %2218
        %v2221 = vmul.f32 %v2219, %v2214
        %v2222 = vmul.f32 %v2219, %v2215
        %v2224 = vlaneseq
        %v2225 = vshrl.u32 %v2224, 7
        %v2226 = vsub.s32 0, %v2225
        %v2227 = vrot.slane %v2216, %v2226
        %v2228 = vlaneseq
        %v2229 = vshrl.u32 %v2228, 7
        %v2230 = vsub.s32 1, %v2229
        %v2231 = vrot.slane %v2216, %v2230
        %v2234 = vmul.f32 %v2221, %v2227
        %v2235 = vmul.f32 %v2222, %v2231
        %v2236 = vadd.f32 %v2207, %v2234
        %v2237 = vadd.f32 %v2208, %v2235
        %2238 = vrot.lane.b32.xlu0 %v922, 80
        %v2239 = vpop.permute.xlu0 %2238
        %2240 = vrot.lane.b32.xlu0 %v923, 80
        %v2241 = vpop.permute.xlu0 %2240
        %vm2242 = vcmp.lt.s32.totalorder %v930, 80
        %v2243 = vsel %vm2242, %v2239, %v2241
        %v2244 = vsel %vm2242, %v2241, %v2239
        %v2245 = vmul.f32 %v2152, %v1027
        %2246 = vset.pattern.permute.xlu0 45
        %2247 = vperm.xlu0 %2246, %v936
        %v2248 = vpop.permute.xlu0 %2247
        %v2250 = vmul.f32 %v2248, %v2243
        %v2251 = vmul.f32 %v2248, %v2244
        %v2253 = vlaneseq
        %v2254 = vshrl.u32 %v2253, 7
        %v2255 = vsub.s32 0, %v2254
        %v2256 = vrot.slane %v2245, %v2255
        %v2257 = vlaneseq
        %v2258 = vshrl.u32 %v2257, 7
        %v2259 = vsub.s32 1, %v2258
        %v2260 = vrot.slane %v2245, %v2259
        %v2263 = vmul.f32 %v2250, %v2256
        %v2264 = vmul.f32 %v2251, %v2260
        %v2265 = vadd.f32 %v2236, %v2263
        %v2266 = vadd.f32 %v2237, %v2264
        %2267 = vrot.lane.b32.xlu0 %v922, 79
        %v2268 = vpop.permute.xlu0 %2267
        %2269 = vrot.lane.b32.xlu0 %v923, 79
        %v2270 = vpop.permute.xlu0 %2269
        %vm2271 = vcmp.lt.s32.totalorder %v930, 79
        %v2272 = vsel %vm2271, %v2268, %v2270
        %v2273 = vsel %vm2271, %v2270, %v2268
        %v2274 = vmul.f32 %v2152, %v1058
        %2275 = vset.pattern.permute.xlu0 46
        %2276 = vperm.xlu0 %2275, %v936
        %v2277 = vpop.permute.xlu0 %2276
        %v2279 = vmul.f32 %v2277, %v2272
        %v2280 = vmul.f32 %v2277, %v2273
        %v2282 = vlaneseq
        %v2283 = vshrl.u32 %v2282, 7
        %v2284 = vsub.s32 0, %v2283
        %v2285 = vrot.slane %v2274, %v2284
        %v2286 = vlaneseq
        %v2287 = vshrl.u32 %v2286, 7
        %v2288 = vsub.s32 1, %v2287
        %v2289 = vrot.slane %v2274, %v2288
        %v2292 = vmul.f32 %v2279, %v2285
        %v2293 = vmul.f32 %v2280, %v2289
        %v2294 = vadd.f32 %v2265, %v2292
        %v2295 = vadd.f32 %v2266, %v2293
        %2296 = vrot.lane.b32.xlu0 %v922, 78
        %v2297 = vpop.permute.xlu0 %2296
        %2298 = vrot.lane.b32.xlu0 %v923, 78
        %v2299 = vpop.permute.xlu0 %2298
        %vm2300 = vcmp.lt.s32.totalorder %v930, 78
        %v2301 = vsel %vm2300, %v2297, %v2299
        %v2302 = vsel %vm2300, %v2299, %v2297
        %v2303 = vmul.f32 %v2152, %v1089
        %2304 = vset.pattern.permute.xlu0 47
        %2305 = vperm.xlu0 %2304, %v936
        %v2306 = vpop.permute.xlu0 %2305
        %v2308 = vmul.f32 %v2306, %v2301
        %v2309 = vmul.f32 %v2306, %v2302
        %v2311 = vlaneseq
        %v2312 = vshrl.u32 %v2311, 7
        %v2313 = vsub.s32 0, %v2312
        %v2314 = vrot.slane %v2303, %v2313
        %v2315 = vlaneseq
        %v2316 = vshrl.u32 %v2315, 7
        %v2317 = vsub.s32 1, %v2316
        %v2318 = vrot.slane %v2303, %v2317
        %v2321 = vmul.f32 %v2308, %v2314
        %v2322 = vmul.f32 %v2309, %v2318
        %v2323 = vadd.f32 %v2294, %v2321
        %v2324 = vadd.f32 %v2295, %v2322
        %2325 = vrot.lane.b32.xlu0 %v922, 77
        %v2326 = vpop.permute.xlu0 %2325
        %2327 = vrot.lane.b32.xlu0 %v923, 77
        %v2328 = vpop.permute.xlu0 %2327
        %vm2329 = vcmp.lt.s32.totalorder %v930, 77
        %v2330 = vsel %vm2329, %v2326, %v2328
        %v2331 = vsel %vm2329, %v2328, %v2326
        %v2332 = vmul.f32 %v2152, %v1120
        %2333 = vset.pattern.permute.xlu0 48
        %2334 = vperm.xlu0 %2333, %v936
        %v2335 = vpop.permute.xlu0 %2334
        %v2337 = vmul.f32 %v2335, %v2330
        %v2338 = vmul.f32 %v2335, %v2331
        %v2340 = vlaneseq
        %v2341 = vshrl.u32 %v2340, 7
        %v2342 = vsub.s32 0, %v2341
        %v2343 = vrot.slane %v2332, %v2342
        %v2344 = vlaneseq
        %v2345 = vshrl.u32 %v2344, 7
        %v2346 = vsub.s32 1, %v2345
        %v2347 = vrot.slane %v2332, %v2346
        %v2350 = vmul.f32 %v2337, %v2343
        %v2351 = vmul.f32 %v2338, %v2347
        %v2352 = vadd.f32 %v2323, %v2350
        %v2353 = vadd.f32 %v2324, %v2351
        %v2354 = vadd.f32 %v1141, %v1344
        %v2355 = vadd.f32 %v1142, %v1345
        %v2356 = vadd.f32 %v1547, %v1743
        %v2357 = vadd.f32 %v1548, %v1744
        %v2358 = vadd.f32 %v1946, %v2149
        %v2359 = vadd.f32 %v1947, %v2150
        %v2360 = vadd.f32 %v2354, %v2356
        %v2361 = vadd.f32 %v2355, %v2357
        %v2362 = vadd.f32 %v2358, %v2352
        %v2363 = vadd.f32 %v2359, %v2353
        %v2364 = vadd.f32 %v2360, %v2362
        %v2365 = vadd.f32 %v2361, %v2363
        %v2366 = vsel %vm705, %v2364, 0.0
        %v2367 = vrot.slane %v2366, 4
        %v2368 = vadd.f32 %v2366, %v2367
        %v2369 = vrot.slane %v2368, 2
        %v2370 = vadd.f32 %v2368, %v2369
        %v2371 = vrot.slane %v2370, 1
        %v2372 = vadd.f32 %v2370, %v2371
        %v2373 = vsel %vm705, %v2365, 0.0
        %v2374 = vrot.slane %v2373, 4
        %v2375 = vadd.f32 %v2373, %v2374
        %v2376 = vrot.slane %v2375, 2
        %v2377 = vadd.f32 %v2375, %v2376
        %v2378 = vrot.slane %v2377, 1
        %v2379 = vadd.f32 %v2377, %v2378
        %v2380 = vand.u32 2147483647, %v2372
        %v2381 = vand.u32 2147483647, %v2379
        %v2382 = vsub.f32 0.0, %v2380
        %v2383 = vsub.f32 0.0, %v2381
        %v2384 = vmul.f32 %v2382, 1.442695
        %v2385 = vpow.pop %v2384
        %v2386 = vmul.f32 %v2383, 1.442695
        %v2387 = vpow.pop %v2386
        %v2388 = vadd.f32 %v2385, 1.0
        %v2389 = vadd.f32 %v2387, 1.0
        %v2390 = vrcp.pop %v2388
        %v2391 = vmul.f32 1.0, %v2390
        %v2392 = vrcp.pop %v2389
        %v2393 = vmul.f32 1.0, %v2392
        %vm2394 = vcmp.ge.f32.partialorder %v2372, 0.0
        %vm2395 = vcmp.ge.f32.partialorder %v2379, 0.0
        %v2396 = vmul.f32 %v2385, %v2391
        %v2397 = vmul.f32 %v2387, %v2393
        %v2398 = vsel %vm2394, %v2391, %v2396
        %v2399 = vsel %vm2395, %v2393, %v2397
        %v2400 = vmul.f32 %v874, %v2398
        %v2401 = vmul.f32 %v875, %v2399
        %v2402 = vmul.f32 %v876, %v2398
        %v2403 = vmul.f32 %v877, %v2399
        %v2404 = vmul.f32 %v878, %v2398
        %v2405 = vmul.f32 %v879, %v2399
        %v2406 = vmul.f32 %v880, %v2398
        %v2407 = vmul.f32 %v881, %v2399
        %2408 = vst [vmem:[%s298] sm:$0xff] %v2400
        %2409 = vst [vmem:[%s298 + $0x8] sm:$0xff] %v2401
        %2410 = vst [vmem:[%s298 + $0x10] sm:$0xff] %v2402
        %2411 = vst [vmem:[%s298 + $0x18] sm:$0xff] %v2403
        %2412 = vst [vmem:[%s298 + $0x20] sm:$0xff] %v2404
        %2413 = vst [vmem:[%s298 + $0x28] sm:$0xff] %v2405
        %2414 = vst [vmem:[%s298 + $0x30] sm:$0xff] %v2406
        %2415 = vst [vmem:[%s298 + $0x38] sm:$0xff] %v2407
        %s2416 = sand.u32 %s203, 1
        %s2417 = scalar_lea.sflag [#allocation3], %s2416
        %s2418 = sand.u32 %s203, 1
        %s2419 = smul.addr %s2418, 64
        %s2420 = scalar_lea.vmem [#allocation2], %s2419
        // Predicated region
        $region53: #{tpu_custom_call.1} parent=51 // pred_check
          %p2421 = pneg %p213
        $region54: #{tpu_custom_call.1} parent=51 // pred_check_branch
          %2423 = sbr.rel (%p2421) target = $region56
        $region55: #{tpu_custom_call.1} parent=51 // pred_region
          %s2425 = ssub.s32 1024, 1024
          %2426 = vsyncadd %s2417, %s2425
          %s2427 = smul.addr %s22, 8
          %s2428 = smul.addr %s2427, 128
          %s2429 = scalar_lea.hbm %s8, %s2428
          %s2430 = sshll.u32 %s2420, 4
          %s2431 = int_to_ptr.vmem [resolvable:$true] %s2430
          %2436 = dma.vmem_to_hbm [thread:$0]  %s2431, 1024, %s2429, %s2417, 256, 256, 16
        $region56: #{tpu_custom_call.1} parent=51 // pred_fallthru
          _
      $region52: #{tpu_custom_call.1} parent=5 // pred_fallthru
        _
      %p2437 = scmp.le.s32.totalorder 2, %s17
      // Predicated region
      $region57: #{tpu_custom_call.1} parent=5 // pred_check
        %p2438 = pneg %p2437
      $region58: #{tpu_custom_call.1} parent=5 // pred_check_branch
        %2440 = sbr.rel (%p2438) target = $region60
      $region59: #{tpu_custom_call.1} parent=5 // pred_region
        %s2441 = ssub.s32 %s17, 2
        // Predicated region
        $region61: #{tpu_custom_call.1} parent=59 // pred_check
          %p2442 = pneg %p219
        $region62: #{tpu_custom_call.1} parent=59 // pred_check_branch
          %2444 = sbr.rel (%p2442) target = $region64
        $region63: #{tpu_custom_call.1} parent=59 // pred_region
          %s2445 = sand.u32 %s204, 1
          %s2446 = scalar_lea.sflag [#allocation3], %s2445
          %s2447 = sand.u32 %s204, 1
          %s2448 = smul.addr %s2447, 64
          %s2449 = scalar_lea.vmem [#allocation2], %s2448
          %2450 = dma.done %s2446, 1024
        $region64: #{tpu_custom_call.1} parent=59 // pred_fallthru
          _
      $region60: #{tpu_custom_call.1} parent=5 // pred_fallthru
        _
    $region6: #{tpu_custom_call.1} parent=1 // loop_footer
      %s21 = sadd.s32 1, %s17
    $region7: #{tpu_custom_call.1} parent=1 // loop_footer_branch
      %16 = sbr.rel target = $region3
    $region8: #{tpu_custom_call.1} parent=1 // loop_exit
      _
    %2451 = vsyncpa [#allocation3], 1
    %s2452 = scalar_lea.sflag [#allocation3], 1
    %2453 = vsyncpa %s2452, 1

// kernel: tpu_custom_call.1
$region0: #{tpu_custom_call.1}
  #allocation0 [shape = 'u32[]', space=smem, size = 0x4, offset = 0x4, fixed_abs, tag = 'smem constant byte address 0x4 - core index']
  #allocation1 [shape = 'u32[144,128]{1,0:T(1,128)}', space=vmem, size = 0x12000, scoped, tag = 'internal scratch']
  %s0 = inlined_call_operand.vmem [shape: f32[2,4,256], index: 0, kind: input, shape index: {}]
  %s1 = inlined_call_operand.vmem [shape: f32[32,4], index: 1, kind: input, shape index: {}]
  %s2 = inlined_call_operand.vmem [shape: f32[32,1], index: 2, kind: input, shape index: {}]
  %s3 = inlined_call_operand.vmem [shape: f32[2,32], index: 3, kind: input, shape index: {}]
  %s4 = inlined_call_operand.vmem [shape: f32[32,2], index: 4, kind: input, shape index: {}]
  %s5 = inlined_call_operand.vmem [shape: f32[7,256], index: 5, kind: input, shape index: {}]
  %s6 = inlined_call_operand.vmem [shape: f32[7,256], index: 6, kind: input, shape index: {}]
  %s7 = inlined_call_operand.vmem [shape: f32[2,49], index: 7, kind: input, shape index: {}]
  %s8 = inlined_call_operand.hbm [shape: f32[2,32,256], index: 8, kind: output, shape index: {}]
  %s9 = sld [smem:[#allocation0]]
  $region65: #{tpu_custom_call.1} parent=0
    _
  %s11 = ssub.s32 1, %s9
  %s12 = scalar_select 0, %s11, %s9
  $region1: #{tpu_custom_call.1} parent=0
    #allocation2 [shape = 'u8[65536]{0}', space=vmem, size = 0x10000, scoped, tag = 'output window, operand 0']
    #allocation3 [shape = 's32[2]{0}', space=sflag, size = 0x8, scoped, tag = 'scoped memory for tpu_custom_call.1']
    %13 = vsyncpa [#allocation3], 0
    %s14 = scalar_lea.sflag [#allocation3], 1
    %15 = vsyncpa %s14, 0
    loop: start=0, step=1, limit=4
    $region2: #{tpu_custom_call.1} parent=1 // loop_pre_header
      _
    $region3: #{tpu_custom_call.1} parent=1 // loop_header
      %s17 = sphi 0, %s21
      %p18 = scmp.ge.s32.totalorder %s17, 4
      %s27 = sphi 0, %s29
      %s30 = sphi 0, %s27
      %s31 = sphi 0, %s30
      %s47 = sphi 0, %s31
      %s51 = sphi 0, %s51
      %s53 = sphi 0, %s51
      %s54 = sphi 0, %s53
      %s68 = sphi 0, %s54
      %s72 = sphi 0, %s72
      %s74 = sphi 0, %s72
      %s75 = sphi 0, %s74
      %s89 = sphi 0, %s75
      %s93 = sphi 0, %s93
      %s95 = sphi 0, %s93
      %s96 = sphi 0, %s95
      %s110 = sphi 0, %s96
      %s114 = sphi 0, %s114
      %s116 = sphi 0, %s114
      %s117 = sphi 0, %s116
      %s131 = sphi 0, %s117
      %s135 = sphi 0, %s135
      %s137 = sphi 0, %s135
      %s138 = sphi 0, %s137
      %s152 = sphi 0, %s138
      %s156 = sphi 0, %s156
      %s158 = sphi 0, %s156
      %s159 = sphi 0, %s158
      %s173 = sphi 0, %s159
      %s177 = sphi 0, %s177
      %s179 = sphi 0, %s177
      %s180 = sphi 0, %s179
      %s194 = sphi 0, %s180
      %s200 = sphi 0, %s202
      %s203 = sphi 0, %s200
      %s204 = sphi 0, %s203
      %s220 = sphi 0, %s204
    $region4: #{tpu_custom_call.1} parent=1 // loop_header_branch
      %20 = sbr.rel (%p18) target = $region8
    $region5: #{tpu_custom_call.1} parent=1 // loop_body
      %s22 = ssub.s32 %s17, 1
      %s23 = ssub.s32 %s17, 2
      %s24 = sadd.s32 %s17, 1
      %s25 = ssub.s32 %s17, %s24
      %p26 = scmp.eq.s32.totalorder %s25, 0
      %s28 = sadd.s32 %s27, 1
      %s29 = scalar_select %p26, %s27, %s28
      %p32 = pneg %p26
      %p33 = scmp.eq.s32.totalorder %s17, 1
      %p34 = por %p32, %p33
      %p35 = scmp.ne.s32.totalorder %s27, %s30
      %p36 = scmp.eq.s32.totalorder %s17, 0
      %p37 = por %p35, %p36
      %p38 = scmp.ne.s32.totalorder %s27, %s30
      %p39 = scmp.eq.s32.totalorder %s22, 1
      %p40 = por %p38, %p39
      %p41 = scmp.ne.s32.totalorder %s30, %s31
      %p42 = scmp.eq.s32.totalorder %s22, 0
      %p43 = por %p41, %p42
      %p44 = scmp.ne.s32.totalorder %s30, %s31
      %p45 = scmp.eq.s32.totalorder %s23, 1
      %p46 = por %p44, %p45
      %p48 = scmp.ne.s32.totalorder %s31, %s47
      %p49 = scmp.eq.s32.totalorder %s23, 0
      %p50 = por %p48, %p49
      %s52 = sadd.s32 %s51, 1
      %p55 = scmp.eq.s32.totalorder %s17, 1
      %p56 = scmp.ne.s32.totalorder %s51, %s53
      %p57 = scmp.eq.s32.totalorder %s17, 0
      %p58 = por %p56, %p57
      %p59 = scmp.ne.s32.totalorder %s51, %s53
      %p60 = scmp.eq.s32.totalorder %s22, 1
      %p61 = por %p59, %p60
      %p62 = scmp.ne.s32.totalorder %s53, %s54
      %p63 = scmp.eq.s32.totalorder %s22, 0
      %p64 = por %p62, %p63
      %p65 = scmp.ne.s32.totalorder %s53, %s54
      %p66 = scmp.eq.s32.totalorder %s23, 1
      %p67 = por %p65, %p66
      %p69 = scmp.ne.s32.totalorder %s54, %s68
      %p70 = scmp.eq.s32.totalorder %s23, 0
      %p71 = por %p69, %p70
      %s73 = sadd.s32 %s72, 1
      %p76 = scmp.eq.s32.totalorder %s17, 1
      %p77 = scmp.ne.s32.totalorder %s72, %s74
      %p78 = scmp.eq.s32.totalorder %s17, 0
      %p79 = por %p77, %p78
      %p80 = scmp.ne.s32.totalorder %s72, %s74
      %p81 = scmp.eq.s32.totalorder %s22, 1
      %p82 = por %p80, %p81
      %p83 = scmp.ne.s32.totalorder %s74, %s75
      %p84 = scmp.eq.s32.totalorder %s22, 0
      %p85 = por %p83, %p84
      %p86 = scmp.ne.s32.totalorder %s74, %s75
      %p87 = scmp.eq.s32.totalorder %s23, 1
      %p88 = por %p86, %p87
      %p90 = scmp.ne.s32.totalorder %s75, %s89
      %p91 = scmp.eq.s32.totalorder %s23, 0
      %p92 = por %p90, %p91
      %s94 = sadd.s32 %s93, 1
      %p97 = scmp.eq.s32.totalorder %s17, 1
      %p98 = scmp.ne.s32.totalorder %s93, %s95
      %p99 = scmp.eq.s32.totalorder %s17, 0
      %p100 = por %p98, %p99
      %p101 = scmp.ne.s32.totalorder %s93, %s95
      %p102 = scmp.eq.s32.totalorder %s22, 1
      %p103 = por %p101, %p102
      %p104 = scmp.ne.s32.totalorder %s95, %s96
      %p105 = scmp.eq.s32.totalorder %s22, 0
      %p106 = por %p104, %p105
      %p107 = scmp.ne.s32.totalorder %s95, %s96
      %p108 = scmp.eq.s32.totalorder %s23, 1
      %p109 = por %p107, %p108
      %p111 = scmp.ne.s32.totalorder %s96, %s110
      %p112 = scmp.eq.s32.totalorder %s23, 0
      %p113 = por %p111, %p112
      %s115 = sadd.s32 %s114, 1
      %p118 = scmp.eq.s32.totalorder %s17, 1
      %p119 = scmp.ne.s32.totalorder %s114, %s116
      %p120 = scmp.eq.s32.totalorder %s17, 0
      %p121 = por %p119, %p120
      %p122 = scmp.ne.s32.totalorder %s114, %s116
      %p123 = scmp.eq.s32.totalorder %s22, 1
      %p124 = por %p122, %p123
      %p125 = scmp.ne.s32.totalorder %s116, %s117
      %p126 = scmp.eq.s32.totalorder %s22, 0
      %p127 = por %p125, %p126
      %p128 = scmp.ne.s32.totalorder %s116, %s117
      %p129 = scmp.eq.s32.totalorder %s23, 1
      %p130 = por %p128, %p129
      %p132 = scmp.ne.s32.totalorder %s117, %s131
      %p133 = scmp.eq.s32.totalorder %s23, 0
      %p134 = por %p132, %p133
      %s136 = sadd.s32 %s135, 1
      %p139 = scmp.eq.s32.totalorder %s17, 1
      %p140 = scmp.ne.s32.totalorder %s135, %s137
      %p141 = scmp.eq.s32.totalorder %s17, 0
      %p142 = por %p140, %p141
      %p143 = scmp.ne.s32.totalorder %s135, %s137
      %p144 = scmp.eq.s32.totalorder %s22, 1
      %p145 = por %p143, %p144
      %p146 = scmp.ne.s32.totalorder %s137, %s138
      %p147 = scmp.eq.s32.totalorder %s22, 0
      %p148 = por %p146, %p147
      %p149 = scmp.ne.s32.totalorder %s137, %s138
      %p150 = scmp.eq.s32.totalorder %s23, 1
      %p151 = por %p149, %p150
      %p153 = scmp.ne.s32.totalorder %s138, %s152
      %p154 = scmp.eq.s32.totalorder %s23, 0
      %p155 = por %p153, %p154
      %s157 = sadd.s32 %s156, 1
      %p160 = scmp.eq.s32.totalorder %s17, 1
      %p161 = scmp.ne.s32.totalorder %s156, %s158
      %p162 = scmp.eq.s32.totalorder %s17, 0
      %p163 = por %p161, %p162
      %p164 = scmp.ne.s32.totalorder %s156, %s158
      %p165 = scmp.eq.s32.totalorder %s22, 1
      %p166 = por %p164, %p165
      %p167 = scmp.ne.s32.totalorder %s158, %s159
      %p168 = scmp.eq.s32.totalorder %s22, 0
      %p169 = por %p167, %p168
      %p170 = scmp.ne.s32.totalorder %s158, %s159
      %p171 = scmp.eq.s32.totalorder %s23, 1
      %p172 = por %p170, %p171
      %p174 = scmp.ne.s32.totalorder %s159, %s173
      %p175 = scmp.eq.s32.totalorder %s23, 0
      %p176 = por %p174, %p175
      %s178 = sadd.s32 %s177, 1
      %p181 = scmp.eq.s32.totalorder %s17, 1
      %p182 = scmp.ne.s32.totalorder %s177, %s179
      %p183 = scmp.eq.s32.totalorder %s17, 0
      %p184 = por %p182, %p183
      %p185 = scmp.ne.s32.totalorder %s177, %s179
      %p186 = scmp.eq.s32.totalorder %s22, 1
      %p187 = por %p185, %p186
      %p188 = scmp.ne.s32.totalorder %s179, %s180
      %p189 = scmp.eq.s32.totalorder %s22, 0
      %p190 = por %p188, %p189
      %p191 = scmp.ne.s32.totalorder %s179, %s180
      %p192 = scmp.eq.s32.totalorder %s23, 1
      %p193 = por %p191, %p192
      %p195 = scmp.ne.s32.totalorder %s180, %s194
      %p196 = scmp.eq.s32.totalorder %s23, 0
      %p197 = por %p195, %p196
      %s198 = ssub.s32 %s17, %s24
      %p199 = scmp.eq.s32.totalorder %s198, 0
      %s201 = sadd.s32 %s200, 1
      %s202 = scalar_select %p199, %s200, %s201
      %p205 = pneg %p199
      %p206 = scmp.eq.s32.totalorder %s17, 1
      %p207 = por %p205, %p206
      %p208 = scmp.ne.s32.totalorder %s200, %s203
      %p209 = scmp.eq.s32.totalorder %s17, 0
      %p210 = por %p208, %p209
      %p211 = scmp.ne.s32.totalorder %s200, %s203
      %p212 = scmp.eq.s32.totalorder %s22, 1
      %p213 = por %p211, %p212
      %p214 = scmp.ne.s32.totalorder %s203, %s204
      %p215 = scmp.eq.s32.totalorder %s22, 0
      %p216 = por %p214, %p215
      %p217 = scmp.ne.s32.totalorder %s203, %s204
      %p218 = scmp.eq.s32.totalorder %s23, 1
      %p219 = por %p217, %p218
      %p221 = scmp.ne.s32.totalorder %s204, %s220
      %p222 = scmp.eq.s32.totalorder %s23, 0
      %p223 = por %p221, %p222
      %p224 = scmp.le.s32.totalorder 1, %s17
      %p225 = scmp.lt.s32.totalorder %s17, 3
      %p226 = pnand %p224, %p225
      %p227 = pneg %p226
      // Predicated region
      $region9: #{tpu_custom_call.1} parent=5 // pred_check
        _
      $region10: #{tpu_custom_call.1} parent=5 // pred_check_branch
        %229 = sbr.rel (%p226) target = $region12
      $region11: #{tpu_custom_call.1} parent=5 // pred_region
        %s230 = ssub.s32 %s17, 1
        // Predicated region
        $region13: #{tpu_custom_call.1} parent=11 // pred_check
          %p231 = pneg %p64
        $region14: #{tpu_custom_call.1} parent=11 // pred_check_branch
          %233 = sbr.rel (%p231) target = $region16
        $region15: #{tpu_custom_call.1} parent=11 // pred_region
          _
        $region16: #{tpu_custom_call.1} parent=11 // pred_fallthru
          _
        // Predicated region
        $region17: #{tpu_custom_call.1} parent=11 // pred_check
          %p234 = pneg %p85
        $region18: #{tpu_custom_call.1} parent=11 // pred_check_branch
          %236 = sbr.rel (%p234) target = $region20
        $region19: #{tpu_custom_call.1} parent=11 // pred_region
          _
        $region20: #{tpu_custom_call.1} parent=11 // pred_fallthru
          _
        // Predicated region
        $region21: #{tpu_custom_call.1} parent=11 // pred_check
          %p237 = pneg %p106
        $region22: #{tpu_custom_call.1} parent=11 // pred_check_branch
          %239 = sbr.rel (%p237) target = $region24
        $region23: #{tpu_custom_call.1} parent=11 // pred_region
          _
        $region24: #{tpu_custom_call.1} parent=11 // pred_fallthru
          _
        // Predicated region
        $region25: #{tpu_custom_call.1} parent=11 // pred_check
          %p240 = pneg %p127
        $region26: #{tpu_custom_call.1} parent=11 // pred_check_branch
          %242 = sbr.rel (%p240) target = $region28
        $region27: #{tpu_custom_call.1} parent=11 // pred_region
          _
        $region28: #{tpu_custom_call.1} parent=11 // pred_fallthru
          _
        // Predicated region
        $region29: #{tpu_custom_call.1} parent=11 // pred_check
          %p243 = pneg %p148
        $region30: #{tpu_custom_call.1} parent=11 // pred_check_branch
          %245 = sbr.rel (%p243) target = $region32
        $region31: #{tpu_custom_call.1} parent=11 // pred_region
          _
        $region32: #{tpu_custom_call.1} parent=11 // pred_fallthru
          _
        // Predicated region
        $region33: #{tpu_custom_call.1} parent=11 // pred_check
          %p246 = pneg %p169
        $region34: #{tpu_custom_call.1} parent=11 // pred_check_branch
          %248 = sbr.rel (%p246) target = $region36
        $region35: #{tpu_custom_call.1} parent=11 // pred_region
          _
        $region36: #{tpu_custom_call.1} parent=11 // pred_fallthru
          _
        // Predicated region
        $region37: #{tpu_custom_call.1} parent=11 // pred_check
          %p249 = pneg %p190
        $region38: #{tpu_custom_call.1} parent=11 // pred_check_branch
          %251 = sbr.rel (%p249) target = $region40
        $region39: #{tpu_custom_call.1} parent=11 // pred_region
          _
        $region40: #{tpu_custom_call.1} parent=11 // pred_fallthru
          _
      $region12: #{tpu_custom_call.1} parent=5 // pred_fallthru
        _
      %p252 = scmp.lt.s32.totalorder %s17, 2
      // Predicated region
      $region41: #{tpu_custom_call.1} parent=5 // pred_check
        %p253 = pneg %p252
      $region42: #{tpu_custom_call.1} parent=5 // pred_check_branch
        %255 = sbr.rel (%p253) target = $region44
      $region43: #{tpu_custom_call.1} parent=5 // pred_region
        // Predicated region
        $region45: #{tpu_custom_call.1} parent=43 // pred_check
          %p256 = pneg %p37
        $region46: #{tpu_custom_call.1} parent=43 // pred_check_branch
          %258 = sbr.rel (%p256) target = $region48
        $region47: #{tpu_custom_call.1} parent=43 // pred_region
          %p259 = scmp.lt.s32.totalorder %s17, 1
          %s260 = scalar_select %p259, %s17, 1
          %s261 = smul.addr %s260, 2
          %s262 = smul.addr %s261, 4
          %s263 = scalar_lea.vmem %s0, %s262
        $region48: #{tpu_custom_call.1} parent=43 // pred_fallthru
          _
      $region44: #{tpu_custom_call.1} parent=5 // pred_fallthru
        _
      %p264 = scmp.le.s32.totalorder 1, %s17
      %p265 = scmp.lt.s32.totalorder %s17, 3
      %p266 = pnand %p264, %p265
      %p267 = pneg %p266
      // Predicated region
      $region49: #{tpu_custom_call.1} parent=5 // pred_check
        _
      $region50: #{tpu_custom_call.1} parent=5 // pred_check_branch
        %269 = sbr.rel (%p266) target = $region52
      $region51: #{tpu_custom_call.1} parent=5 // pred_region
        %s270 = ssub.s32 %s17, 1
        %p271 = scmp.lt.s32.totalorder %s22, 1
        %s272 = scalar_select %p271, %s22, 1
        %s273 = smul.addr %s272, 2
        %s274 = smul.addr %s273, 4
        %s275 = scalar_lea.vmem %s0, %s274
        %p276 = pneg %p43
        %p277 = pneg %p40
        %p278 = pneg %p64
        %p279 = pneg %p61
        %p280 = pneg %p85
        %p281 = pneg %p82
        %p282 = pneg %p106
        %p283 = pneg %p103
        %p284 = pneg %p127
        %p285 = pneg %p124
        %p286 = pneg %p148
        %p287 = pneg %p145
        %p288 = pneg %p169
        %p289 = pneg %p166
        %p290 = pneg %p190
        %p291 = pneg %p187
        %p292 = pneg %p216
        %p293 = pneg %p213
        %s294 = sand.u32 %s203, 1
        %s295 = scalar_lea.sflag [#allocation3], %s294
        %s296 = sand.u32 %s203, 1
        %s297 = smul.addr %s296, 64
        %s298 = scalar_lea.vmem [#allocation2], %s297
        %p299 = scmp.lt.s32.totalorder %s22, 1
        %s300 = scalar_select %p299, %s22, 1
        %s301 = smul.addr %s300, 2
        %s302 = smul.addr %s301, 4
        %s303 = scalar_lea.vmem %s0, %s302
        %v304 = vld [vmem:[%s303] sm:$0xff]
        %v305 = vld [vmem:[%s1] sm:$0xff]
        %v306 = vld [vmem:[%s1 + $0x8] sm:$0xff]
        %v307 = vld [vmem:[%s1 + $0x10] sm:$0xff]
        %v308 = vld [vmem:[%s1 + $0x18] sm:$0xff]
        %310 = vset.pattern.permute.xlu0 0
        %311 = vperm.xlu0 %310, %v305
        %v312 = vpop.permute.xlu0 %311
        %315 = vset.pattern.permute.xlu0 0
        %316 = vperm.xlu0 %315, %v306
        %v317 = vpop.permute.xlu0 %316
        %320 = vset.pattern.permute.xlu0 0
        %321 = vperm.xlu0 %320, %v307
        %v322 = vpop.permute.xlu0 %321
        %325 = vset.pattern.permute.xlu0 0
        %326 = vperm.xlu0 %325, %v308
        %v327 = vpop.permute.xlu0 %326
        %v330 = vlaneseq
        %v331 = vshrl.u32 %v330, 7
        %v332 = vsub.s32 0, %v331
        %v333 = vrot.slane %v304, %v332
        %v334 = vlaneseq
        %v335 = vshrl.u32 %v334, 7
        %v336 = vsub.s32 4, %v335
        %v337 = vrot.slane %v304, %v336
        %v340 = vlaneseq
        %v341 = vshrl.u32 %v340, 7
        %v342 = vsub.s32 0, %v341
        %v343 = vrot.slane %v333, %v342
        %v344 = vlaneseq
        %v345 = vshrl.u32 %v344, 7
        %v346 = vsub.s32 0, %v345
        %v347 = vrot.slane %v337, %v346
        %v348 = vmul.f32 %v312, %v343
        %v349 = vmul.f32 %v312, %v347
        %v350 = vmul.f32 %v317, %v343
        %v351 = vmul.f32 %v317, %v347
        %v352 = vmul.f32 %v322, %v343
        %v353 = vmul.f32 %v322, %v347
        %v354 = vmul.f32 %v327, %v343
        %v355 = vmul.f32 %v327, %v347
        %356 = vset.pattern.permute.xlu0 1
        %357 = vperm.xlu0 %356, %v305
        %v358 = vpop.permute.xlu0 %357
        %360 = vset.pattern.permute.xlu0 1
        %361 = vperm.xlu0 %360, %v306
        %v362 = vpop.permute.xlu0 %361
        %364 = vset.pattern.permute.xlu0 1
        %365 = vperm.xlu0 %364, %v307
        %v366 = vpop.permute.xlu0 %365
        %368 = vset.pattern.permute.xlu0 1
        %369 = vperm.xlu0 %368, %v308
        %v370 = vpop.permute.xlu0 %369
        %v372 = vlaneseq
        %v373 = vshrl.u32 %v372, 7
        %v374 = vsub.s32 1, %v373
        %v375 = vrot.slane %v304, %v374
        %v376 = vlaneseq
        %v377 = vshrl.u32 %v376, 7
        %v378 = vsub.s32 5, %v377
        %v379 = vrot.slane %v304, %v378
        %v382 = vlaneseq
        %v383 = vshrl.u32 %v382, 7
        %v384 = vsub.s32 1, %v383
        %v385 = vrot.slane %v375, %v384
        %v386 = vlaneseq
        %v387 = vshrl.u32 %v386, 7
        %v388 = vsub.s32 1, %v387
        %v389 = vrot.slane %v379, %v388
        %v390 = vmul.f32 %v358, %v385
        %v391 = vmul.f32 %v358, %v389
        %v392 = vmul.f32 %v362, %v385
        %v393 = vmul.f32 %v362, %v389
        %v394 = vmul.f32 %v366, %v385
        %v395 = vmul.f32 %v366, %v389
        %v396 = vmul.f32 %v370, %v385
        %v397 = vmul.f32 %v370, %v389
        %v398 = vadd.f32 %v348, %v390
        %v399 = vadd.f32 %v349, %v391
        %v400 = vadd.f32 %v350, %v392
        %v401 = vadd.f32 %v351, %v393
        %v402 = vadd.f32 %v352, %v394
        %v403 = vadd.f32 %v353, %v395
        %v404 = vadd.f32 %v354, %v396
        %v405 = vadd.f32 %v355, %v397
        %406 = vset.pattern.permute.xlu0 2
        %407 = vperm.xlu0 %406, %v305
        %v408 = vpop.permute.xlu0 %407
        %410 = vset.pattern.permute.xlu0 2
        %411 = vperm.xlu0 %410, %v306
        %v412 = vpop.permute.xlu0 %411
        %414 = vset.pattern.permute.xlu0 2
        %415 = vperm.xlu0 %414, %v307
        %v416 = vpop.permute.xlu0 %415
        %418 = vset.pattern.permute.xlu0 2
        %419 = vperm.xlu0 %418, %v308
        %v420 = vpop.permute.xlu0 %419
        %v422 = vlaneseq
        %v423 = vshrl.u32 %v422, 7
        %v424 = vsub.s32 2, %v423
        %v425 = vrot.slane %v304, %v424
        %v426 = vlaneseq
        %v427 = vshrl.u32 %v426, 7
        %v428 = vsub.s32 6, %v427
        %v429 = vrot.slane %v304, %v428
        %v432 = vlaneseq
        %v433 = vshrl.u32 %v432, 7
        %v434 = vsub.s32 2, %v433
        %v435 = vrot.slane %v425, %v434
        %v436 = vlaneseq
        %v437 = vshrl.u32 %v436, 7
        %v438 = vsub.s32 2, %v437
        %v439 = vrot.slane %v429, %v438
        %v440 = vmul.f32 %v408, %v435
        %v441 = vmul.f32 %v408, %v439
        %v442 = vmul.f32 %v412, %v435
        %v443 = vmul.f32 %v412, %v439
        %v444 = vmul.f32 %v416, %v435
        %v445 = vmul.f32 %v416, %v439
        %v446 = vmul.f32 %v420, %v435
        %v447 = vmul.f32 %v420, %v439
        %v448 = vadd.f32 %v398, %v440
        %v449 = vadd.f32 %v399, %v441
        %v450 = vadd.f32 %v400, %v442
        %v451 = vadd.f32 %v401, %v443
        %v452 = vadd.f32 %v402, %v444
        %v453 = vadd.f32 %v403, %v445
        %v454 = vadd.f32 %v404, %v446
        %v455 = vadd.f32 %v405, %v447
        %456 = vset.pattern.permute.xlu0 3
        %457 = vperm.xlu0 %456, %v305
        %v458 = vpop.permute.xlu0 %457
        %460 = vset.pattern.permute.xlu0 3
        %461 = vperm.xlu0 %460, %v306
        %v462 = vpop.permute.xlu0 %461
        %464 = vset.pattern.permute.xlu0 3
        %465 = vperm.xlu0 %464, %v307
        %v466 = vpop.permute.xlu0 %465
        %468 = vset.pattern.permute.xlu0 3
        %469 = vperm.xlu0 %468, %v308
        %v470 = vpop.permute.xlu0 %469
        %v472 = vlaneseq
        %v473 = vshrl.u32 %v472, 7
        %v474 = vsub.s32 3, %v473
        %v475 = vrot.slane %v304, %v474
        %v476 = vlaneseq
        %v477 = vshrl.u32 %v476, 7
        %v478 = vsub.s32 7, %v477
        %v479 = vrot.slane %v304, %v478
        %v482 = vlaneseq
        %v483 = vshrl.u32 %v482, 7
        %v484 = vsub.s32 3, %v483
        %v485 = vrot.slane %v475, %v484
        %v486 = vlaneseq
        %v487 = vshrl.u32 %v486, 7
        %v488 = vsub.s32 3, %v487
        %v489 = vrot.slane %v479, %v488
        %v490 = vmul.f32 %v458, %v485
        %v491 = vmul.f32 %v458, %v489
        %v492 = vmul.f32 %v462, %v485
        %v493 = vmul.f32 %v462, %v489
        %v494 = vmul.f32 %v466, %v485
        %v495 = vmul.f32 %v466, %v489
        %v496 = vmul.f32 %v470, %v485
        %v497 = vmul.f32 %v470, %v489
        %v498 = vadd.f32 %v448, %v490
        %v499 = vadd.f32 %v449, %v491
        %v500 = vadd.f32 %v450, %v492
        %v501 = vadd.f32 %v451, %v493
        %v502 = vadd.f32 %v452, %v494
        %v503 = vadd.f32 %v453, %v495
        %v504 = vadd.f32 %v454, %v496
        %v505 = vadd.f32 %v455, %v497
        %v506 = vld [vmem:[%s2] sm:$0xff]
        %v507 = vld [vmem:[%s2 + $0x8] sm:$0xff]
        %v508 = vld [vmem:[%s2 + $0x10] sm:$0xff]
        %v509 = vld [vmem:[%s2 + $0x18] sm:$0xff]
        %511 = vset.pattern.permute.xlu0 0
        %512 = vperm.xlu0 %511, %v506
        %v513 = vpop.permute.xlu0 %512
        %516 = vset.pattern.permute.xlu0 0
        %517 = vperm.xlu0 %516, %v507
        %v518 = vpop.permute.xlu0 %517
        %521 = vset.pattern.permute.xlu0 0
        %522 = vperm.xlu0 %521, %v508
        %v523 = vpop.permute.xlu0 %522
        %526 = vset.pattern.permute.xlu0 0
        %527 = vperm.xlu0 %526, %v509
        %v528 = vpop.permute.xlu0 %527
        %v530 = vadd.f32 %v498, %v513
        %v531 = vadd.f32 %v499, %v513
        %v532 = vadd.f32 %v500, %v518
        %v533 = vadd.f32 %v501, %v518
        %v534 = vadd.f32 %v502, %v523
        %v535 = vadd.f32 %v503, %v523
        %v536 = vadd.f32 %v504, %v528
        %v537 = vadd.f32 %v505, %v528
        %v538 = vadd.f32 %v530, 3.0
        %v539 = vadd.f32 %v531, 3.0
        %v540 = vadd.f32 %v532, 3.0
        %v541 = vadd.f32 %v533, 3.0
        %v542 = vadd.f32 %v534, 3.0
        %v543 = vadd.f32 %v535, 3.0
        %v544 = vadd.f32 %v536, 3.0
        %v545 = vadd.f32 %v537, 3.0
        %v546 = vmax.f32 %v538, 0.0
        %v547 = vmax.f32 %v539, 0.0
        %v548 = vmax.f32 %v540, 0.0
        %v549 = vmax.f32 %v541, 0.0
        %v550 = vmax.f32 %v542, 0.0
        %v551 = vmax.f32 %v543, 0.0
        %v552 = vmax.f32 %v544, 0.0
        %v553 = vmax.f32 %v545, 0.0
        %v554 = vmin.f32 %v546, 6.0
        %v555 = vmin.f32 %v547, 6.0
        %v556 = vmin.f32 %v548, 6.0
        %v557 = vmin.f32 %v549, 6.0
        %v558 = vmin.f32 %v550, 6.0
        %v559 = vmin.f32 %v551, 6.0
        %v560 = vmin.f32 %v552, 6.0
        %v561 = vmin.f32 %v553, 6.0
        %v562 = vmul.f32 %v530, %v554
        %v563 = vmul.f32 %v531, %v555
        %v564 = vmul.f32 %v532, %v556
        %v565 = vmul.f32 %v533, %v557
        %v566 = vmul.f32 %v534, %v558
        %v567 = vmul.f32 %v535, %v559
        %v568 = vmul.f32 %v536, %v560
        %v569 = vmul.f32 %v537, %v561
        %v570 = vmul.f32 %v562, 0.16666667
        %v571 = vmul.f32 %v563, 0.16666667
        %v572 = vmul.f32 %v564, 0.16666667
        %v573 = vmul.f32 %v565, 0.16666667
        %v574 = vmul.f32 %v566, 0.16666667
        %v575 = vmul.f32 %v567, 0.16666667
        %v576 = vmul.f32 %v568, 0.16666667
        %v577 = vmul.f32 %v569, 0.16666667
        %v578 = vadd.f32 %v570, %v571
        %579 = vadd.xlane.f32.xlu0 %v578
        %v580 = vpop.xlane.xlu0 %579
        %v581 = vadd.f32 %v572, %v573
        %582 = vadd.xlane.f32.xlu0 %v581
        %v583 = vpop.xlane.xlu0 %582
        %v584 = vadd.f32 %v574, %v575
        %585 = vadd.xlane.f32.xlu0 %v584
        %v586 = vpop.xlane.xlu0 %585
        %v587 = vadd.f32 %v576, %v577
        %588 = vadd.xlane.f32.xlu0 %v587
        %v589 = vpop.xlane.xlu0 %588
        %v590 = vrcp.pop 256.0
        %v591 = vmul.f32 %v580, %v590
        %v592 = vmul.f32 %v583, %v590
        %v593 = vmul.f32 %v586, %v590
        %v594 = vmul.f32 %v589, %v590
        %v595 = vmax.f32 %v570, %v571
        %596 = vmax.xlane.f32.xlu0 %v595
        %v597 = vpop.xlane.xlu0 %596
        %v598 = vmax.f32 %v572, %v573
        %599 = vmax.xlane.f32.xlu0 %v598
        %v600 = vpop.xlane.xlu0 %599
        %v601 = vmax.f32 %v574, %v575
        %602 = vmax.xlane.f32.xlu0 %v601
        %v603 = vpop.xlane.xlu0 %602
        %v604 = vmax.f32 %v576, %v577
        %605 = vmax.xlane.f32.xlu0 %v604
        %v606 = vpop.xlane.xlu0 %605
        %vm607 = vcmask 7168
        %v608 = vsel %vm607, %v591, %v597
        %v609 = vsel %vm607, %v592, %v600
        %v610 = vsel %vm607, %v593, %v603
        %v611 = vsel %vm607, %v594, %v606
        %v612 = vld [vmem:[%s3] sm:$0x3]
        %vm613 = vcmask 261120
        %v615 = vsel %vm613, %v612, 0
        %617 = vmatprep.subr.mxu0 0.0
        %618 = vmatpush1.msra.mxu0 0.0
        %619 = vmatprep.subr.mxu0 0.0
        %620 = vmatpush1.msra.mxu0 0.0
        %621 = vmatprep.subr.mxu0 0.0
        %622 = vmatpush1.msra.mxu0 0.0
        %623 = vmatprep.subr.mxu0 0.0
        %624 = vmatpush1.msra.mxu0 0.0
        %625 = vmatprep.subr.mxu0 0.0
        %626 = vmatpush1.msra.mxu0 0.0
        %627 = vmatprep.subr.mxu0 0.0
        %628 = vmatpush1.msra.mxu0 0.0
        %629 = vmatprep.subr.mxu0 0.0
        %630 = vmatpush1.msra.mxu0 0.0
        %631 = vmatprep.subr.mxu0 0.0
        %632 = vmatpush1.msra.mxu0 0.0
        %633 = vmatprep.subr.mxu0 0.0
        %634 = vmatpush1.msra.mxu0 0.0
        %635 = vmatprep.subr.mxu0 0.0
        %636 = vmatpush1.msra.mxu0 0.0
        %637 = vmatprep.subr.mxu0 0.0
        %638 = vmatpush1.msra.mxu0 0.0
        %639 = vmatprep.subr.mxu0 0.0
        %640 = vmatpush1.msra.mxu0 0.0
        %641 = vmatprep.subr.mxu0 0.0
        %642 = vmatpush1.msra.mxu0 %v611
        %643 = vmatprep.subr.mxu0 0.0
        %644 = vmatpush1.msra.mxu0 %v610
        %645 = vmatprep.subr.mxu0 0.0
        %646 = vmatpush1.msra.mxu0 %v609
        %647 = vmatprep.subr.mxu0 0.0
        %648 = vmatpush1.msra.mxu0 %v608
        %649 = vmatprep.subr.mxu0 0.0
        %650 = vmatpush2.msra.mxu0 0.0
        %651 = vmatprep.subr.mxu0 0.0
        %652 = vmatpush2.msra.mxu0 0.0
        %653 = vmatprep.subr.mxu0 0.0
        %654 = vmatpush2.msra.mxu0 0.0
        %655 = vmatprep.subr.mxu0 0.0
        %656 = vmatpush2.msra.mxu0 0.0
        %657 = vmatprep.subr.mxu0 0.0
        %658 = vmatpush2.msra.mxu0 0.0
        %659 = vmatprep.subr.mxu0 0.0
        %660 = vmatpush2.msra.mxu0 0.0
        %661 = vmatprep.subr.mxu0 0.0
        %662 = vmatpush2.msra.mxu0 0.0
        %663 = vmatprep.subr.mxu0 0.0
        %664 = vmatpush2.msra.mxu0 0.0
        %665 = vmatprep.subr.mxu0 0.0
        %666 = vmatpush2.msra.mxu0 0.0
        %667 = vmatprep.subr.mxu0 0.0
        %668 = vmatpush2.msra.mxu0 0.0
        %669 = vmatprep.subr.mxu0 0.0
        %670 = vmatpush2.msra.mxu0 0.0
        %671 = vmatprep.subr.mxu0 0.0
        %672 = vmatpush2.msra.mxu0 0.0
        %673 = vmatprep.subr.mxu0 0.0
        %674 = vmatpush2.msra.mxu0 0.0
        %675 = vmatprep.subr.mxu0 0.0
        %676 = vmatpush2.msra.mxu0 0.0
        %677 = vmatprep.subr.mxu0 0.0
        %678 = vmatpush2.msra.mxu0 0.0
        %679 = vmatprep.subr.mxu0 0.0
        %680 = vmatpush2.msra.mxu0 0.0
        %681 = vmatprep.mubr.f32.mxu0 0.0
        %682 = vmatmul.mubr.f32.gmra.mxu0 %v615
        %v683 = vpop.f32.mrf.mxu0
        %v684 = vadd.f32 0.0, %v683
        %v685 = vpop.f32.mrf.mxu0
        %686 = vdwg.mxu0
        %v687 = vmax.f32 %v684, 0.0
        %v688 = vld [vmem:[%s4] sm:$0xff]
        %v689 = vld [vmem:[%s4 + $0x8] sm:$0xff]
        %v690 = vld [vmem:[%s4 + $0x10] sm:$0xff]
        %v691 = vld [vmem:[%s4 + $0x18] sm:$0xff]
        %vm692 = vcmask 15360
        %v694 = vsel %vm692, %v688, 0
        %v697 = vsel %vm692, %v689, 0
        %v700 = vsel %vm692, %v690, 0
        %v703 = vsel %vm692, %v691, 0
        %vm705 = vcmask 1041408
        %v707 = vsel %vm705, %v687, 0
        %709 = vmatprep.subr.mxu0 0.0
        %710 = vmatpush1.msra.mxu0 0.0
        %711 = vmatprep.subr.mxu0 0.0
        %712 = vmatpush1.msra.mxu0 0.0
        %713 = vmatprep.subr.mxu0 0.0
        %714 = vmatpush1.msra.mxu0 0.0
        %715 = vmatprep.subr.mxu0 0.0
        %716 = vmatpush1.msra.mxu0 0.0
        %717 = vmatprep.subr.mxu0 0.0
        %718 = vmatpush1.msra.mxu0 0.0
        %719 = vmatprep.subr.mxu0 0.0
        %720 = vmatpush1.msra.mxu0 0.0
        %721 = vmatprep.subr.mxu0 0.0
        %722 = vmatpush1.msra.mxu0 0.0
        %723 = vmatprep.subr.mxu0 0.0
        %724 = vmatpush1.msra.mxu0 0.0
        %725 = vmatprep.subr.mxu0 0.0
        %726 = vmatpush1.msra.mxu0 0.0
        %727 = vmatprep.subr.mxu0 0.0
        %728 = vmatpush1.msra.mxu0 0.0
        %729 = vmatprep.subr.mxu0 0.0
        %730 = vmatpush1.msra.mxu0 0.0
        %731 = vmatprep.subr.mxu0 0.0
        %732 = vmatpush1.msra.mxu0 0.0
        %733 = vmatprep.subr.mxu0 0.0
        %734 = vmatpush1.msra.mxu0 0.0
        %735 = vmatprep.subr.mxu0 0.0
        %736 = vmatpush1.msra.mxu0 0.0
        %737 = vmatprep.subr.mxu0 0.0
        %738 = vmatpush1.msra.mxu0 0.0
        %739 = vmatprep.subr.mxu0 0.0
        %740 = vmatpush1.msra.mxu0 %v707
        %741 = vmatprep.subr.mxu0 0.0
        %742 = vmatpush2.msra.mxu0 0.0
        %743 = vmatprep.subr.mxu0 0.0
        %744 = vmatpush2.msra.mxu0 0.0
        %745 = vmatprep.subr.mxu0 0.0
        %746 = vmatpush2.msra.mxu0 0.0
        %747 = vmatprep.subr.mxu0 0.0
        %748 = vmatpush2.msra.mxu0 0.0
        %749 = vmatprep.subr.mxu0 0.0
        %750 = vmatpush2.msra.mxu0 0.0
        %751 = vmatprep.subr.mxu0 0.0
        %752 = vmatpush2.msra.mxu0 0.0
        %753 = vmatprep.subr.mxu0 0.0
        %754 = vmatpush2.msra.mxu0 0.0
        %755 = vmatprep.subr.mxu0 0.0
        %756 = vmatpush2.msra.mxu0 0.0
        %757 = vmatprep.subr.mxu0 0.0
        %758 = vmatpush2.msra.mxu0 0.0
        %759 = vmatprep.subr.mxu0 0.0
        %760 = vmatpush2.msra.mxu0 0.0
        %761 = vmatprep.subr.mxu0 0.0
        %762 = vmatpush2.msra.mxu0 0.0
        %763 = vmatprep.subr.mxu0 0.0
        %764 = vmatpush2.msra.mxu0 0.0
        %765 = vmatprep.subr.mxu0 0.0
        %766 = vmatpush2.msra.mxu0 0.0
        %767 = vmatprep.subr.mxu0 0.0
        %768 = vmatpush2.msra.mxu0 0.0
        %769 = vmatprep.subr.mxu0 0.0
        %770 = vmatpush2.msra.mxu0 0.0
        %771 = vmatprep.subr.mxu0 0.0
        %772 = vmatpush2.msra.mxu0 0.0
        %773 = vmatprep.mubr.f32.mxu0 0.0
        %774 = vmatmul.mubr.f32.gmra.mxu0 %v694
        %v775 = vpop.f32.mrf.mxu0
        %v776 = vadd.f32 0.0, %v775
        %v777 = vpop.f32.mrf.mxu0
        %778 = vmatprep.mubr.f32.mxu0 0.0
        %779 = vmatmul.mubr.f32.gmra.mxu0 %v697
        %v780 = vpop.f32.mrf.mxu0
        %v781 = vadd.f32 0.0, %v780
        %v782 = vpop.f32.mrf.mxu0
        %783 = vmatprep.mubr.f32.mxu0 0.0
        %784 = vmatmul.mubr.f32.gmra.mxu0 %v700
        %v785 = vpop.f32.mrf.mxu0
        %v786 = vadd.f32 0.0, %v785
        %v787 = vpop.f32.mrf.mxu0
        %788 = vmatprep.mubr.f32.mxu0 0.0
        %789 = vmatmul.mubr.f32.gmra.mxu0 %v703
        %v790 = vpop.f32.mrf.mxu0
        %v791 = vadd.f32 0.0, %v790
        %v792 = vpop.f32.mrf.mxu0
        %793 = vdwg.mxu0
        %798 = vrot.lane.b32.xlu0 %v776, 127
        %v799 = vpop.permute.xlu0 %798
        %800 = vrot.lane.b32.xlu0 %v781, 127
        %v801 = vpop.permute.xlu0 %800
        %802 = vrot.lane.b32.xlu0 %v786, 127
        %v803 = vpop.permute.xlu0 %802
        %804 = vrot.lane.b32.xlu0 %v791, 127
        %v805 = vpop.permute.xlu0 %804
        %v810 = vadd.f32 %v776, %v799
        %v811 = vadd.f32 %v781, %v801
        %v812 = vadd.f32 %v786, %v803
        %v813 = vadd.f32 %v791, %v805
        %v814 = vand.u32 2147483647, %v810
        %v815 = vand.u32 2147483647, %v811
        %v816 = vand.u32 2147483647, %v812
        %v817 = vand.u32 2147483647, %v813
        %v818 = vsub.f32 0.0, %v814
        %v819 = vsub.f32 0.0, %v815
        %v820 = vsub.f32 0.0, %v816
        %v821 = vsub.f32 0.0, %v817
        %v822 = vmul.f32 %v818, 1.442695
        %v823 = vpow.pop %v822
        %v824 = vmul.f32 %v819, 1.442695
        %v825 = vpow.pop %v824
        %v826 = vmul.f32 %v820, 1.442695
        %v827 = vpow.pop %v826
        %v828 = vmul.f32 %v821, 1.442695
        %v829 = vpow.pop %v828
        %v830 = vadd.f32 %v823, 1.0
        %v831 = vadd.f32 %v825, 1.0
        %v832 = vadd.f32 %v827, 1.0
        %v833 = vadd.f32 %v829, 1.0
        %v834 = vrcp.pop %v830
        %v835 = vmul.f32 1.0, %v834
        %v836 = vrcp.pop %v831
        %v837 = vmul.f32 1.0, %v836
        %v838 = vrcp.pop %v832
        %v839 = vmul.f32 1.0, %v838
        %v840 = vrcp.pop %v833
        %v841 = vmul.f32 1.0, %v840
        %vm842 = vcmp.ge.f32.partialorder %v810, 0.0
        %vm843 = vcmp.ge.f32.partialorder %v811, 0.0
        %vm844 = vcmp.ge.f32.partialorder %v812, 0.0
        %vm845 = vcmp.ge.f32.partialorder %v813, 0.0
        %v846 = vmul.f32 %v823, %v835
        %v847 = vmul.f32 %v825, %v837
        %v848 = vmul.f32 %v827, %v839
        %v849 = vmul.f32 %v829, %v841
        %v850 = vsel %vm842, %v835, %v846
        %v851 = vsel %vm843, %v837, %v847
        %v852 = vsel %vm844, %v839, %v848
        %v853 = vsel %vm845, %v841, %v849
        %855 = vset.pattern.permute.xlu0 0
        %856 = vperm.xlu0 %855, %v850
        %v857 = vpop.permute.xlu0 %856
        %860 = vset.pattern.permute.xlu0 0
        %861 = vperm.xlu0 %860, %v851
        %v862 = vpop.permute.xlu0 %861
        %865 = vset.pattern.permute.xlu0 0
        %866 = vperm.xlu0 %865, %v852
        %v867 = vpop.permute.xlu0 %866
        %870 = vset.pattern.permute.xlu0 0
        %871 = vperm.xlu0 %870, %v853
        %v872 = vpop.permute.xlu0 %871
        %v874 = vmul.f32 %v570, %v857
        %v875 = vmul.f32 %v571, %v857
        %v876 = vmul.f32 %v572, %v862
        %v877 = vmul.f32 %v573, %v862
        %v878 = vmul.f32 %v574, %v867
        %v879 = vmul.f32 %v575, %v867
        %v880 = vmul.f32 %v576, %v872
        %v881 = vmul.f32 %v577, %v872
        %v882 = vadd.f32 %v874, %v876
        %v883 = vadd.f32 %v882, %v878
        %v884 = vadd.f32 %v883, %v880
        %v885 = vrot.slane %v884, 4
        %v886 = vadd.f32 %v884, %v885
        %v887 = vrot.slane %v886, 2
        %v888 = vadd.f32 %v886, %v887
        %v889 = vrot.slane %v888, 1
        %v890 = vadd.f32 %v888, %v889
        %v891 = vadd.f32 %v875, %v877
        %v892 = vadd.f32 %v891, %v879
        %v893 = vadd.f32 %v892, %v881
        %v894 = vrot.slane %v893, 4
        %v895 = vadd.f32 %v893, %v894
        %v896 = vrot.slane %v895, 2
        %v897 = vadd.f32 %v895, %v896
        %v898 = vrot.slane %v897, 1
        %v899 = vadd.f32 %v897, %v898
        %v900 = vrcp.pop 32.0
        %v901 = vmul.f32 %v890, %v900
        %v902 = vmul.f32 %v899, %v900
        %v903 = vmax.f32 %v874, %v878
        %v904 = vmax.f32 %v876, %v880
        %v905 = vmax.f32 %v903, %v904
        %v906 = vrot.slane %v905, 4
        %v907 = vmax.f32 %v905, %v906
        %v908 = vrot.slane %v907, 2
        %v909 = vmax.f32 %v907, %v908
        %v910 = vrot.slane %v909, 1
        %v911 = vmax.f32 %v909, %v910
        %v912 = vmax.f32 %v875, %v879
        %v913 = vmax.f32 %v877, %v881
        %v914 = vmax.f32 %v912, %v913
        %v915 = vrot.slane %v914, 4
        %v916 = vmax.f32 %v914, %v915
        %v917 = vrot.slane %v916, 2
        %v918 = vmax.f32 %v916, %v917
        %v919 = vrot.slane %v918, 1
        %v920 = vmax.f32 %v918, %v919
        %vm921 = vcmask 1040384
        %v922 = vsel %vm921, %v901, %v911
        %v923 = vsel %vm921, %v902, %v920
        %v924 = vld [vmem:[%s5] ss:$8 sm:$0x3]
        %925 = vrot.lane.b32.xlu0 %v922, 51
        %v926 = vpop.permute.xlu0 %925
        %927 = vrot.lane.b32.xlu0 %v923, 51
        %v928 = vpop.permute.xlu0 %927
        %v929 = vlaneseq
        %v930 = vand.u32 %v929, 127
        %vm931 = vcmp.lt.s32.totalorder %v930, 51
        %v932 = vsel %vm931, %v926, %v928
        %v933 = vsel %vm931, %v928, %v926
        %v934 = vld [vmem:[%s6] ss:$8 sm:$0x3]
        %v935 = vmul.f32 %v924, %v934
        %v936 = vld [vmem:[%s7] sm:$0x3]
        %938 = vset.pattern.permute.xlu0 0
        %939 = vperm.xlu0 %938, %v936
        %v940 = vpop.permute.xlu0 %939
        %v942 = vmul.f32 %v940, %v933
        %v943 = vmul.f32 %v940, %v932
        %v945 = vlaneseq
        %v946 = vshrl.u32 %v945, 7
        %v947 = vsub.s32 0, %v946
        %v948 = vrot.slane %v935, %v947
        %v949 = vlaneseq
        %v950 = vshrl.u32 %v949, 7
        %v951 = vsub.s32 1, %v950
        %v952 = vrot.slane %v935, %v951
        %v955 = vmul.f32 %v942, %v948
        %v956 = vmul.f32 %v943, %v952
        %957 = vrot.lane.b32.xlu0 %v922, 50
        %v958 = vpop.permute.xlu0 %957
        %959 = vrot.lane.b32.xlu0 %v923, 50
        %v960 = vpop.permute.xlu0 %959
        %vm961 = vcmp.lt.s32.totalorder %v930, 50
        %v962 = vsel %vm961, %v958, %v960
        %v963 = vsel %vm961, %v960, %v958
        %s964 = scalar_lea.vmem %s6, 1
        %v965 = vld [vmem:[%s964] ss:$8 sm:$0x3]
        %v966 = vmul.f32 %v924, %v965
        %967 = vset.pattern.permute.xlu0 1
        %968 = vperm.xlu0 %967, %v936
        %v969 = vpop.permute.xlu0 %968
        %v971 = vmul.f32 %v969, %v963
        %v972 = vmul.f32 %v969, %v962
        %v974 = vlaneseq
        %v975 = vshrl.u32 %v974, 7
        %v976 = vsub.s32 0, %v975
        %v977 = vrot.slane %v966, %v976
        %v978 = vlaneseq
        %v979 = vshrl.u32 %v978, 7
        %v980 = vsub.s32 1, %v979
        %v981 = vrot.slane %v966, %v980
        %v984 = vmul.f32 %v971, %v977
        %v985 = vmul.f32 %v972, %v981
        %v986 = vadd.f32 %v955, %v984
        %v987 = vadd.f32 %v956, %v985
        %988 = vrot.lane.b32.xlu0 %v922, 49
        %v989 = vpop.permute.xlu0 %988
        %990 = vrot.lane.b32.xlu0 %v923, 49
        %v991 = vpop.permute.xlu0 %990
        %vm992 = vcmp.lt.s32.totalorder %v930, 49
        %v993 = vsel %vm992, %v989, %v991
        %v994 = vsel %vm992, %v991, %v989
        %s995 = scalar_lea.vmem %s6, 2
        %v996 = vld [vmem:[%s995] ss:$8 sm:$0x3]
        %v997 = vmul.f32 %v924, %v996
        %998 = vset.pattern.permute.xlu0 2
        %999 = vperm.xlu0 %998, %v936
        %v1000 = vpop.permute.xlu0 %999
        %v1002 = vmul.f32 %v1000, %v994
        %v1003 = vmul.f32 %v1000, %v993
        %v1005 = vlaneseq
        %v1006 = vshrl.u32 %v1005, 7
        %v1007 = vsub.s32 0, %v1006
        %v1008 = vrot.slane %v997, %v1007
        %v1009 = vlaneseq
        %v1010 = vshrl.u32 %v1009, 7
        %v1011 = vsub.s32 1, %v1010
        %v1012 = vrot.slane %v997, %v1011
        %v1015 = vmul.f32 %v1002, %v1008
        %v1016 = vmul.f32 %v1003, %v1012
        %v1017 = vadd.f32 %v986, %v1015
        %v1018 = vadd.f32 %v987, %v1016
        %1019 = vrot.lane.b32.xlu0 %v922, 48
        %v1020 = vpop.permute.xlu0 %1019
        %1021 = vrot.lane.b32.xlu0 %v923, 48
        %v1022 = vpop.permute.xlu0 %1021
        %vm1023 = vcmp.lt.s32.totalorder %v930, 48
        %v1024 = vsel %vm1023, %v1020, %v1022
        %v1025 = vsel %vm1023, %v1022, %v1020
        %s1026 = scalar_lea.vmem %s6, 3
        %v1027 = vld [vmem:[%s1026] ss:$8 sm:$0x3]
        %v1028 = vmul.f32 %v924, %v1027
        %1029 = vset.pattern.permute.xlu0 3
        %1030 = vperm.xlu0 %1029, %v936
        %v1031 = vpop.permute.xlu0 %1030
        %v1033 = vmul.f32 %v1031, %v1025
        %v1034 = vmul.f32 %v1031, %v1024
        %v1036 = vlaneseq
        %v1037 = vshrl.u32 %v1036, 7
        %v1038 = vsub.s32 0, %v1037
        %v1039 = vrot.slane %v1028, %v1038
        %v1040 = vlaneseq
        %v1041 = vshrl.u32 %v1040, 7
        %v1042 = vsub.s32 1, %v1041
        %v1043 = vrot.slane %v1028, %v1042
        %v1046 = vmul.f32 %v1033, %v1039
        %v1047 = vmul.f32 %v1034, %v1043
        %v1048 = vadd.f32 %v1017, %v1046
        %v1049 = vadd.f32 %v1018, %v1047
        %1050 = vrot.lane.b32.xlu0 %v922, 47
        %v1051 = vpop.permute.xlu0 %1050
        %1052 = vrot.lane.b32.xlu0 %v923, 47
        %v1053 = vpop.permute.xlu0 %1052
        %vm1054 = vcmp.lt.s32.totalorder %v930, 47
        %v1055 = vsel %vm1054, %v1051, %v1053
        %v1056 = vsel %vm1054, %v1053, %v1051
        %s1057 = scalar_lea.vmem %s6, 4
        %v1058 = vld [vmem:[%s1057] ss:$8 sm:$0x3]
        %v1059 = vmul.f32 %v924, %v1058
        %1060 = vset.pattern.permute.xlu0 4
        %1061 = vperm.xlu0 %1060, %v936
        %v1062 = vpop.permute.xlu0 %1061
        %v1064 = vmul.f32 %v1062, %v1056
        %v1065 = vmul.f32 %v1062, %v1055
        %v1067 = vlaneseq
        %v1068 = vshrl.u32 %v1067, 7
        %v1069 = vsub.s32 0, %v1068
        %v1070 = vrot.slane %v1059, %v1069
        %v1071 = vlaneseq
        %v1072 = vshrl.u32 %v1071, 7
        %v1073 = vsub.s32 1, %v1072
        %v1074 = vrot.slane %v1059, %v1073
        %v1077 = vmul.f32 %v1064, %v1070
        %v1078 = vmul.f32 %v1065, %v1074
        %v1079 = vadd.f32 %v1048, %v1077
        %v1080 = vadd.f32 %v1049, %v1078
        %1081 = vrot.lane.b32.xlu0 %v922, 46
        %v1082 = vpop.permute.xlu0 %1081
        %1083 = vrot.lane.b32.xlu0 %v923, 46
        %v1084 = vpop.permute.xlu0 %1083
        %vm1085 = vcmp.lt.s32.totalorder %v930, 46
        %v1086 = vsel %vm1085, %v1082, %v1084
        %v1087 = vsel %vm1085, %v1084, %v1082
        %s1088 = scalar_lea.vmem %s6, 5
        %v1089 = vld [vmem:[%s1088] ss:$8 sm:$0x3]
        %v1090 = vmul.f32 %v924, %v1089
        %1091 = vset.pattern.permute.xlu0 5
        %1092 = vperm.xlu0 %1091, %v936
        %v1093 = vpop.permute.xlu0 %1092
        %v1095 = vmul.f32 %v1093, %v1087
        %v1096 = vmul.f32 %v1093, %v1086
        %v1098 = vlaneseq
        %v1099 = vshrl.u32 %v1098, 7
        %v1100 = vsub.s32 0, %v1099
        %v1101 = vrot.slane %v1090, %v1100
        %v1102 = vlaneseq
        %v1103 = vshrl.u32 %v1102, 7
        %v1104 = vsub.s32 1, %v1103
        %v1105 = vrot.slane %v1090, %v1104
        %v1108 = vmul.f32 %v1095, %v1101
        %v1109 = vmul.f32 %v1096, %v1105
        %v1110 = vadd.f32 %v1079, %v1108
        %v1111 = vadd.f32 %v1080, %v1109
        %1112 = vrot.lane.b32.xlu0 %v922, 45
        %v1113 = vpop.permute.xlu0 %1112
        %1114 = vrot.lane.b32.xlu0 %v923, 45
        %v1115 = vpop.permute.xlu0 %1114
        %vm1116 = vcmp.lt.s32.totalorder %v930, 45
        %v1117 = vsel %vm1116, %v1113, %v1115
        %v1118 = vsel %vm1116, %v1115, %v1113
        %s1119 = scalar_lea.vmem %s6, 6
        %v1120 = vld [vmem:[%s1119] ss:$8 sm:$0x3]
        %v1121 = vmul.f32 %v924, %v1120
        %1122 = vset.pattern.permute.xlu0 6
        %1123 = vperm.xlu0 %1122, %v936
        %v1124 = vpop.permute.xlu0 %1123
        %v1126 = vmul.f32 %v1124, %v1118
        %v1127 = vmul.f32 %v1124, %v1117
        %v1129 = vlaneseq
        %v1130 = vshrl.u32 %v1129, 7
        %v1131 = vsub.s32 0, %v1130
        %v1132 = vrot.slane %v1121, %v1131
        %v1133 = vlaneseq
        %v1134 = vshrl.u32 %v1133, 7
        %v1135 = vsub.s32 1, %v1134
        %v1136 = vrot.slane %v1121, %v1135
        %v1139 = vmul.f32 %v1126, %v1132
        %v1140 = vmul.f32 %v1127, %v1136
        %v1141 = vadd.f32 %v1110, %v1139
        %v1142 = vadd.f32 %v1111, %v1140
        %s1143 = scalar_lea.vmem %s5, 1
        %v1144 = vld [vmem:[%s1143] ss:$8 sm:$0x3]
        %1145 = vrot.lane.b32.xlu0 %v922, 35
        %v1146 = vpop.permute.xlu0 %1145
        %1147 = vrot.lane.b32.xlu0 %v923, 35
        %v1148 = vpop.permute.xlu0 %1147
        %vm1149 = vcmp.lt.s32.totalorder %v930, 35
        %v1150 = vsel %vm1149, %v1146, %v1148
        %v1151 = vsel %vm1149, %v1148, %v1146
        %v1152 = vmul.f32 %v1144, %v934
        %1153 = vset.pattern.permute.xlu0 7
        %1154 = vperm.xlu0 %1153, %v936
        %v1155 = vpop.permute.xlu0 %1154
        %v1157 = vmul.f32 %v1155, %v1151
        %v1158 = vmul.f32 %v1155, %v1150
        %v1160 = vlaneseq
        %v1161 = vshrl.u32 %v1160, 7
        %v1162 = vsub.s32 0, %v1161
        %v1163 = vrot.slane %v1152, %v1162
        %v1164 = vlaneseq
        %v1165 = vshrl.u32 %v1164, 7
        %v1166 = vsub.s32 1, %v1165
        %v1167 = vrot.slane %v1152, %v1166
        %v1170 = vmul.f32 %v1157, %v1163
        %v1171 = vmul.f32 %v1158, %v1167
        %1172 = vrot.lane.b32.xlu0 %v922, 34
        %v1173 = vpop.permute.xlu0 %1172
        %1174 = vrot.lane.b32.xlu0 %v923, 34
        %v1175 = vpop.permute.xlu0 %1174
        %vm1176 = vcmp.lt.s32.totalorder %v930, 34
        %v1177 = vsel %vm1176, %v1173, %v1175
        %v1178 = vsel %vm1176, %v1175, %v1173
        %v1179 = vmul.f32 %v1144, %v965
        %1180 = vset.pattern.permute.xlu0 8
        %1181 = vperm.xlu0 %1180, %v936
        %v1182 = vpop.permute.xlu0 %1181
        %v1184 = vmul.f32 %v1182, %v1178
        %v1185 = vmul.f32 %v1182, %v1177
        %v1187 = vlaneseq
        %v1188 = vshrl.u32 %v1187, 7
        %v1189 = vsub.s32 0, %v1188
        %v1190 = vrot.slane %v1179, %v1189
        %v1191 = vlaneseq
        %v1192 = vshrl.u32 %v1191, 7
        %v1193 = vsub.s32 1, %v1192
        %v1194 = vrot.slane %v1179, %v1193
        %v1197 = vmul.f32 %v1184, %v1190
        %v1198 = vmul.f32 %v1185, %v1194
        %v1199 = vadd.f32 %v1170, %v1197
        %v1200 = vadd.f32 %v1171, %v1198
        %1201 = vrot.lane.b32.xlu0 %v922, 33
        %v1202 = vpop.permute.xlu0 %1201
        %1203 = vrot.lane.b32.xlu0 %v923, 33
        %v1204 = vpop.permute.xlu0 %1203
        %vm1205 = vcmp.lt.s32.totalorder %v930, 33
        %v1206 = vsel %vm1205, %v1202, %v1204
        %v1207 = vsel %vm1205, %v1204, %v1202
        %v1208 = vmul.f32 %v1144, %v996
        %1209 = vset.pattern.permute.xlu0 9
        %1210 = vperm.xlu0 %1209, %v936
        %v1211 = vpop.permute.xlu0 %1210
        %v1213 = vmul.f32 %v1211, %v1207
        %v1214 = vmul.f32 %v1211, %v1206
        %v1216 = vlaneseq
        %v1217 = vshrl.u32 %v1216, 7
        %v1218 = vsub.s32 0, %v1217
        %v1219 = vrot.slane %v1208, %v1218
        %v1220 = vlaneseq
        %v1221 = vshrl.u32 %v1220, 7
        %v1222 = vsub.s32 1, %v1221
        %v1223 = vrot.slane %v1208, %v1222
        %v1226 = vmul.f32 %v1213, %v1219
        %v1227 = vmul.f32 %v1214, %v1223
        %v1228 = vadd.f32 %v1199, %v1226
        %v1229 = vadd.f32 %v1200, %v1227
        %1230 = vrot.lane.b32.xlu0 %v922, 32
        %v1231 = vpop.permute.xlu0 %1230
        %1232 = vrot.lane.b32.xlu0 %v923, 32
        %v1233 = vpop.permute.xlu0 %1232
        %vm1234 = vcmp.lt.s32.totalorder %v930, 32
        %v1235 = vsel %vm1234, %v1231, %v1233
        %v1236 = vsel %vm1234, %v1233, %v1231
        %v1237 = vmul.f32 %v1144, %v1027
        %1238 = vset.pattern.permute.xlu0 10
        %1239 = vperm.xlu0 %1238, %v936
        %v1240 = vpop.permute.xlu0 %1239
        %v1242 = vmul.f32 %v1240, %v1236
        %v1243 = vmul.f32 %v1240, %v1235
        %v1245 = vlaneseq
        %v1246 = vshrl.u32 %v1245, 7
        %v1247 = vsub.s32 0, %v1246
        %v1248 = vrot.slane %v1237, %v1247
        %v1249 = vlaneseq
        %v1250 = vshrl.u32 %v1249, 7
        %v1251 = vsub.s32 1, %v1250
        %v1252 = vrot.slane %v1237, %v1251
        %v1255 = vmul.f32 %v1242, %v1248
        %v1256 = vmul.f32 %v1243, %v1252
        %v1257 = vadd.f32 %v1228, %v1255
        %v1258 = vadd.f32 %v1229, %v1256
        %1259 = vrot.lane.b32.xlu0 %v922, 31
        %v1260 = vpop.permute.xlu0 %1259
        %1261 = vrot.lane.b32.xlu0 %v923, 31
        %v1262 = vpop.permute.xlu0 %1261
        %vm1263 = vcmp.lt.s32.totalorder %v930, 31
        %v1264 = vsel %vm1263, %v1260, %v1262
        %v1265 = vsel %vm1263, %v1262, %v1260
        %v1266 = vmul.f32 %v1144, %v1058
        %1267 = vset.pattern.permute.xlu0 11
        %1268 = vperm.xlu0 %1267, %v936
        %v1269 = vpop.permute.xlu0 %1268
        %v1271 = vmul.f32 %v1269, %v1265
        %v1272 = vmul.f32 %v1269, %v1264
        %v1274 = vlaneseq
        %v1275 = vshrl.u32 %v1274, 7
        %v1276 = vsub.s32 0, %v1275
        %v1277 = vrot.slane %v1266, %v1276
        %v1278 = vlaneseq
        %v1279 = vshrl.u32 %v1278, 7
        %v1280 = vsub.s32 1, %v1279
        %v1281 = vrot.slane %v1266, %v1280
        %v1284 = vmul.f32 %v1271, %v1277
        %v1285 = vmul.f32 %v1272, %v1281
        %v1286 = vadd.f32 %v1257, %v1284
        %v1287 = vadd.f32 %v1258, %v1285
        %1288 = vrot.lane.b32.xlu0 %v922, 30
        %v1289 = vpop.permute.xlu0 %1288
        %1290 = vrot.lane.b32.xlu0 %v923, 30
        %v1291 = vpop.permute.xlu0 %1290
        %vm1292 = vcmp.lt.s32.totalorder %v930, 30
        %v1293 = vsel %vm1292, %v1289, %v1291
        %v1294 = vsel %vm1292, %v1291, %v1289
        %v1295 = vmul.f32 %v1144, %v1089
        %1296 = vset.pattern.permute.xlu0 12
        %1297 = vperm.xlu0 %1296, %v936
        %v1298 = vpop.permute.xlu0 %1297
        %v1300 = vmul.f32 %v1298, %v1294
        %v1301 = vmul.f32 %v1298, %v1293
        %v1303 = vlaneseq
        %v1304 = vshrl.u32 %v1303, 7
        %v1305 = vsub.s32 0, %v1304
        %v1306 = vrot.slane %v1295, %v1305
        %v1307 = vlaneseq
        %v1308 = vshrl.u32 %v1307, 7
        %v1309 = vsub.s32 1, %v1308
        %v1310 = vrot.slane %v1295, %v1309
        %v1313 = vmul.f32 %v1300, %v1306
        %v1314 = vmul.f32 %v1301, %v1310
        %v1315 = vadd.f32 %v1286, %v1313
        %v1316 = vadd.f32 %v1287, %v1314
        %1317 = vrot.lane.b32.xlu0 %v922, 29
        %v1318 = vpop.permute.xlu0 %1317
        %1319 = vrot.lane.b32.xlu0 %v923, 29
        %v1320 = vpop.permute.xlu0 %1319
        %vm1321 = vcmp.lt.s32.totalorder %v930, 29
        %v1322 = vsel %vm1321, %v1318, %v1320
        %v1323 = vsel %vm1321, %v1320, %v1318
        %v1324 = vmul.f32 %v1144, %v1120
        %1325 = vset.pattern.permute.xlu0 13
        %1326 = vperm.xlu0 %1325, %v936
        %v1327 = vpop.permute.xlu0 %1326
        %v1329 = vmul.f32 %v1327, %v1323
        %v1330 = vmul.f32 %v1327, %v1322
        %v1332 = vlaneseq
        %v1333 = vshrl.u32 %v1332, 7
        %v1334 = vsub.s32 0, %v1333
        %v1335 = vrot.slane %v1324, %v1334
        %v1336 = vlaneseq
        %v1337 = vshrl.u32 %v1336, 7
        %v1338 = vsub.s32 1, %v1337
        %v1339 = vrot.slane %v1324, %v1338
        %v1342 = vmul.f32 %v1329, %v1335
        %v1343 = vmul.f32 %v1330, %v1339
        %v1344 = vadd.f32 %v1315, %v1342
        %v1345 = vadd.f32 %v1316, %v1343
        %s1346 = scalar_lea.vmem %s5, 2
        %v1347 = vld [vmem:[%s1346] ss:$8 sm:$0x3]
        %1348 = vrot.lane.b32.xlu0 %v922, 19
        %v1349 = vpop.permute.xlu0 %1348
        %1350 = vrot.lane.b32.xlu0 %v923, 19
        %v1351 = vpop.permute.xlu0 %1350
        %vm1352 = vcmp.lt.s32.totalorder %v930, 19
        %v1353 = vsel %vm1352, %v1349, %v1351
        %v1354 = vsel %vm1352, %v1351, %v1349
        %v1355 = vmul.f32 %v1347, %v934
        %1356 = vset.pattern.permute.xlu0 14
        %1357 = vperm.xlu0 %1356, %v936
        %v1358 = vpop.permute.xlu0 %1357
        %v1360 = vmul.f32 %v1358, %v1354
        %v1361 = vmul.f32 %v1358, %v1353
        %v1363 = vlaneseq
        %v1364 = vshrl.u32 %v1363, 7
        %v1365 = vsub.s32 0, %v1364
        %v1366 = vrot.slane %v1355, %v1365
        %v1367 = vlaneseq
        %v1368 = vshrl.u32 %v1367, 7
        %v1369 = vsub.s32 1, %v1368
        %v1370 = vrot.slane %v1355, %v1369
        %v1373 = vmul.f32 %v1360, %v1366
        %v1374 = vmul.f32 %v1361, %v1370
        %1375 = vrot.lane.b32.xlu0 %v922, 18
        %v1376 = vpop.permute.xlu0 %1375
        %1377 = vrot.lane.b32.xlu0 %v923, 18
        %v1378 = vpop.permute.xlu0 %1377
        %vm1379 = vcmp.lt.s32.totalorder %v930, 18
        %v1380 = vsel %vm1379, %v1376, %v1378
        %v1381 = vsel %vm1379, %v1378, %v1376
        %v1382 = vmul.f32 %v1347, %v965
        %1383 = vset.pattern.permute.xlu0 15
        %1384 = vperm.xlu0 %1383, %v936
        %v1385 = vpop.permute.xlu0 %1384
        %v1387 = vmul.f32 %v1385, %v1381
        %v1388 = vmul.f32 %v1385, %v1380
        %v1390 = vlaneseq
        %v1391 = vshrl.u32 %v1390, 7
        %v1392 = vsub.s32 0, %v1391
        %v1393 = vrot.slane %v1382, %v1392
        %v1394 = vlaneseq
        %v1395 = vshrl.u32 %v1394, 7
        %v1396 = vsub.s32 1, %v1395
        %v1397 = vrot.slane %v1382, %v1396
        %v1400 = vmul.f32 %v1387, %v1393
        %v1401 = vmul.f32 %v1388, %v1397
        %v1402 = vadd.f32 %v1373, %v1400
        %v1403 = vadd.f32 %v1374, %v1401
        %1404 = vrot.lane.b32.xlu0 %v922, 17
        %v1405 = vpop.permute.xlu0 %1404
        %1406 = vrot.lane.b32.xlu0 %v923, 17
        %v1407 = vpop.permute.xlu0 %1406
        %vm1408 = vcmp.lt.s32.totalorder %v930, 17
        %v1409 = vsel %vm1408, %v1405, %v1407
        %v1410 = vsel %vm1408, %v1407, %v1405
        %v1411 = vmul.f32 %v1347, %v996
        %1412 = vset.pattern.permute.xlu0 16
        %1413 = vperm.xlu0 %1412, %v936
        %v1414 = vpop.permute.xlu0 %1413
        %v1416 = vmul.f32 %v1414, %v1410
        %v1417 = vmul.f32 %v1414, %v1409
        %v1419 = vlaneseq
        %v1420 = vshrl.u32 %v1419, 7
        %v1421 = vsub.s32 0, %v1420
        %v1422 = vrot.slane %v1411, %v1421
        %v1423 = vlaneseq
        %v1424 = vshrl.u32 %v1423, 7
        %v1425 = vsub.s32 1, %v1424
        %v1426 = vrot.slane %v1411, %v1425
        %v1429 = vmul.f32 %v1416, %v1422
        %v1430 = vmul.f32 %v1417, %v1426
        %v1431 = vadd.f32 %v1402, %v1429
        %v1432 = vadd.f32 %v1403, %v1430
        %1433 = vrot.lane.b32.xlu0 %v922, 16
        %v1434 = vpop.permute.xlu0 %1433
        %1435 = vrot.lane.b32.xlu0 %v923, 16
        %v1436 = vpop.permute.xlu0 %1435
        %vm1437 = vcmp.lt.s32.totalorder %v930, 16
        %v1438 = vsel %vm1437, %v1434, %v1436
        %v1439 = vsel %vm1437, %v1436, %v1434
        %v1440 = vmul.f32 %v1347, %v1027
        %1441 = vset.pattern.permute.xlu0 17
        %1442 = vperm.xlu0 %1441, %v936
        %v1443 = vpop.permute.xlu0 %1442
        %v1445 = vmul.f32 %v1443, %v1439
        %v1446 = vmul.f32 %v1443, %v1438
        %v1448 = vlaneseq
        %v1449 = vshrl.u32 %v1448, 7
        %v1450 = vsub.s32 0, %v1449
        %v1451 = vrot.slane %v1440, %v1450
        %v1452 = vlaneseq
        %v1453 = vshrl.u32 %v1452, 7
        %v1454 = vsub.s32 1, %v1453
        %v1455 = vrot.slane %v1440, %v1454
        %v1458 = vmul.f32 %v1445, %v1451
        %v1459 = vmul.f32 %v1446, %v1455
        %v1460 = vadd.f32 %v1431, %v1458
        %v1461 = vadd.f32 %v1432, %v1459
        %1462 = vrot.lane.b32.xlu0 %v922, 15
        %v1463 = vpop.permute.xlu0 %1462
        %1464 = vrot.lane.b32.xlu0 %v923, 15
        %v1465 = vpop.permute.xlu0 %1464
        %vm1466 = vcmp.lt.s32.totalorder %v930, 15
        %v1467 = vsel %vm1466, %v1463, %v1465
        %v1468 = vsel %vm1466, %v1465, %v1463
        %v1469 = vmul.f32 %v1347, %v1058
        %1470 = vset.pattern.permute.xlu0 18
        %1471 = vperm.xlu0 %1470, %v936
        %v1472 = vpop.permute.xlu0 %1471
        %v1474 = vmul.f32 %v1472, %v1468
        %v1475 = vmul.f32 %v1472, %v1467
        %v1477 = vlaneseq
        %v1478 = vshrl.u32 %v1477, 7
        %v1479 = vsub.s32 0, %v1478
        %v1480 = vrot.slane %v1469, %v1479
        %v1481 = vlaneseq
        %v1482 = vshrl.u32 %v1481, 7
        %v1483 = vsub.s32 1, %v1482
        %v1484 = vrot.slane %v1469, %v1483
        %v1487 = vmul.f32 %v1474, %v1480
        %v1488 = vmul.f32 %v1475, %v1484
        %v1489 = vadd.f32 %v1460, %v1487
        %v1490 = vadd.f32 %v1461, %v1488
        %1491 = vrot.lane.b32.xlu0 %v922, 14
        %v1492 = vpop.permute.xlu0 %1491
        %1493 = vrot.lane.b32.xlu0 %v923, 14
        %v1494 = vpop.permute.xlu0 %1493
        %vm1495 = vcmp.lt.s32.totalorder %v930, 14
        %v1496 = vsel %vm1495, %v1492, %v1494
        %v1497 = vsel %vm1495, %v1494, %v1492
        %v1498 = vmul.f32 %v1347, %v1089
        %1499 = vset.pattern.permute.xlu0 19
        %1500 = vperm.xlu0 %1499, %v936
        %v1501 = vpop.permute.xlu0 %1500
        %v1503 = vmul.f32 %v1501, %v1497
        %v1504 = vmul.f32 %v1501, %v1496
        %v1506 = vlaneseq
        %v1507 = vshrl.u32 %v1506, 7
        %v1508 = vsub.s32 0, %v1507
        %v1509 = vrot.slane %v1498, %v1508
        %v1510 = vlaneseq
        %v1511 = vshrl.u32 %v1510, 7
        %v1512 = vsub.s32 1, %v1511
        %v1513 = vrot.slane %v1498, %v1512
        %v1516 = vmul.f32 %v1503, %v1509
        %v1517 = vmul.f32 %v1504, %v1513
        %v1518 = vadd.f32 %v1489, %v1516
        %v1519 = vadd.f32 %v1490, %v1517
        %1520 = vrot.lane.b32.xlu0 %v922, 13
        %v1521 = vpop.permute.xlu0 %1520
        %1522 = vrot.lane.b32.xlu0 %v923, 13
        %v1523 = vpop.permute.xlu0 %1522
        %vm1524 = vcmp.lt.s32.totalorder %v930, 13
        %v1525 = vsel %vm1524, %v1521, %v1523
        %v1526 = vsel %vm1524, %v1523, %v1521
        %v1527 = vmul.f32 %v1347, %v1120
        %1528 = vset.pattern.permute.xlu0 20
        %1529 = vperm.xlu0 %1528, %v936
        %v1530 = vpop.permute.xlu0 %1529
        %v1532 = vmul.f32 %v1530, %v1526
        %v1533 = vmul.f32 %v1530, %v1525
        %v1535 = vlaneseq
        %v1536 = vshrl.u32 %v1535, 7
        %v1537 = vsub.s32 0, %v1536
        %v1538 = vrot.slane %v1527, %v1537
        %v1539 = vlaneseq
        %v1540 = vshrl.u32 %v1539, 7
        %v1541 = vsub.s32 1, %v1540
        %v1542 = vrot.slane %v1527, %v1541
        %v1545 = vmul.f32 %v1532, %v1538
        %v1546 = vmul.f32 %v1533, %v1542
        %v1547 = vadd.f32 %v1518, %v1545
        %v1548 = vadd.f32 %v1519, %v1546
        %s1549 = scalar_lea.vmem %s5, 3
        %v1550 = vld [vmem:[%s1549] ss:$8 sm:$0x3]
        %1551 = vrot.lane.b32.xlu0 %v922, 3
        %v1552 = vpop.permute.xlu0 %1551
        %1553 = vrot.lane.b32.xlu0 %v923, 3
        %v1554 = vpop.permute.xlu0 %1553
        %vm1555 = vcmp.lt.s32.totalorder %v930, 3
        %v1556 = vsel %vm1555, %v1552, %v1554
        %v1557 = vsel %vm1555, %v1554, %v1552
        %v1558 = vmul.f32 %v1550, %v934
        %1559 = vset.pattern.permute.xlu0 21
        %1560 = vperm.xlu0 %1559, %v936
        %v1561 = vpop.permute.xlu0 %1560
        %v1563 = vmul.f32 %v1561, %v1557
        %v1564 = vmul.f32 %v1561, %v1556
        %v1566 = vlaneseq
        %v1567 = vshrl.u32 %v1566, 7
        %v1568 = vsub.s32 0, %v1567
        %v1569 = vrot.slane %v1558, %v1568
        %v1570 = vlaneseq
        %v1571 = vshrl.u32 %v1570, 7
        %v1572 = vsub.s32 1, %v1571
        %v1573 = vrot.slane %v1558, %v1572
        %v1576 = vmul.f32 %v1563, %v1569
        %v1577 = vmul.f32 %v1564, %v1573
        %1578 = vrot.lane.b32.xlu0 %v922, 2
        %v1579 = vpop.permute.xlu0 %1578
        %1580 = vrot.lane.b32.xlu0 %v923, 2
        %v1581 = vpop.permute.xlu0 %1580
        %vm1582 = vcmp.lt.s32.totalorder %v930, 2
        %v1583 = vsel %vm1582, %v1579, %v1581
        %v1584 = vsel %vm1582, %v1581, %v1579
        %v1585 = vmul.f32 %v1550, %v965
        %1586 = vset.pattern.permute.xlu0 22
        %1587 = vperm.xlu0 %1586, %v936
        %v1588 = vpop.permute.xlu0 %1587
        %v1590 = vmul.f32 %v1588, %v1584
        %v1591 = vmul.f32 %v1588, %v1583
        %v1593 = vlaneseq
        %v1594 = vshrl.u32 %v1593, 7
        %v1595 = vsub.s32 0, %v1594
        %v1596 = vrot.slane %v1585, %v1595
        %v1597 = vlaneseq
        %v1598 = vshrl.u32 %v1597, 7
        %v1599 = vsub.s32 1, %v1598
        %v1600 = vrot.slane %v1585, %v1599
        %v1603 = vmul.f32 %v1590, %v1596
        %v1604 = vmul.f32 %v1591, %v1600
        %v1605 = vadd.f32 %v1576, %v1603
        %v1606 = vadd.f32 %v1577, %v1604
        %1607 = vrot.lane.b32.xlu0 %v922, 1
        %v1608 = vpop.permute.xlu0 %1607
        %1609 = vrot.lane.b32.xlu0 %v923, 1
        %v1610 = vpop.permute.xlu0 %1609
        %vm1611 = vcmp.lt.s32.totalorder %v930, 1
        %v1612 = vsel %vm1611, %v1608, %v1610
        %v1613 = vsel %vm1611, %v1610, %v1608
        %v1614 = vmul.f32 %v1550, %v996
        %1615 = vset.pattern.permute.xlu0 23
        %1616 = vperm.xlu0 %1615, %v936
        %v1617 = vpop.permute.xlu0 %1616
        %v1619 = vmul.f32 %v1617, %v1613
        %v1620 = vmul.f32 %v1617, %v1612
        %v1622 = vlaneseq
        %v1623 = vshrl.u32 %v1622, 7
        %v1624 = vsub.s32 0, %v1623
        %v1625 = vrot.slane %v1614, %v1624
        %v1626 = vlaneseq
        %v1627 = vshrl.u32 %v1626, 7
        %v1628 = vsub.s32 1, %v1627
        %v1629 = vrot.slane %v1614, %v1628
        %v1632 = vmul.f32 %v1619, %v1625
        %v1633 = vmul.f32 %v1620, %v1629
        %v1634 = vadd.f32 %v1605, %v1632
        %v1635 = vadd.f32 %v1606, %v1633
        %v1636 = vmul.f32 %v1550, %v1027
        %1637 = vset.pattern.permute.xlu0 24
        %1638 = vperm.xlu0 %1637, %v936
        %v1639 = vpop.permute.xlu0 %1638
        %v1641 = vmul.f32 %v1639, %v922
        %v1642 = vmul.f32 %v1639, %v923
        %v1644 = vlaneseq
        %v1645 = vshrl.u32 %v1644, 7
        %v1646 = vsub.s32 0, %v1645
        %v1647 = vrot.slane %v1636, %v1646
        %v1648 = vlaneseq
        %v1649 = vshrl.u32 %v1648, 7
        %v1650 = vsub.s32 1, %v1649
        %v1651 = vrot.slane %v1636, %v1650
        %v1654 = vmul.f32 %v1641, %v1647
        %v1655 = vmul.f32 %v1642, %v1651
        %v1656 = vadd.f32 %v1634, %v1654
        %v1657 = vadd.f32 %v1635, %v1655
        %1658 = vrot.lane.b32.xlu0 %v922, 127
        %v1659 = vpop.permute.xlu0 %1658
        %1660 = vrot.lane.b32.xlu0 %v923, 127
        %v1661 = vpop.permute.xlu0 %1660
        %vm1662 = vcmp.lt.s32.totalorder %v930, 127
        %v1663 = vsel %vm1662, %v1659, %v1661
        %v1664 = vsel %vm1662, %v1661, %v1659
        %v1665 = vmul.f32 %v1550, %v1058
        %1666 = vset.pattern.permute.xlu0 25
        %1667 = vperm.xlu0 %1666, %v936
        %v1668 = vpop.permute.xlu0 %1667
        %v1670 = vmul.f32 %v1668, %v1663
        %v1671 = vmul.f32 %v1668, %v1664
        %v1673 = vlaneseq
        %v1674 = vshrl.u32 %v1673, 7
        %v1675 = vsub.s32 0, %v1674
        %v1676 = vrot.slane %v1665, %v1675
        %v1677 = vlaneseq
        %v1678 = vshrl.u32 %v1677, 7
        %v1679 = vsub.s32 1, %v1678
        %v1680 = vrot.slane %v1665, %v1679
        %v1683 = vmul.f32 %v1670, %v1676
        %v1684 = vmul.f32 %v1671, %v1680
        %v1685 = vadd.f32 %v1656, %v1683
        %v1686 = vadd.f32 %v1657, %v1684
        %1687 = vrot.lane.b32.xlu0 %v922, 126
        %v1688 = vpop.permute.xlu0 %1687
        %1689 = vrot.lane.b32.xlu0 %v923, 126
        %v1690 = vpop.permute.xlu0 %1689
        %vm1691 = vcmp.lt.s32.totalorder %v930, 126
        %v1692 = vsel %vm1691, %v1688, %v1690
        %v1693 = vsel %vm1691, %v1690, %v1688
        %v1694 = vmul.f32 %v1550, %v1089
        %1695 = vset.pattern.permute.xlu0 26
        %1696 = vperm.xlu0 %1695, %v936
        %v1697 = vpop.permute.xlu0 %1696
        %v1699 = vmul.f32 %v1697, %v1692
        %v1700 = vmul.f32 %v1697, %v1693
        %v1702 = vlaneseq
        %v1703 = vshrl.u32 %v1702, 7
        %v1704 = vsub.s32 0, %v1703
        %v1705 = vrot.slane %v1694, %v1704
        %v1706 = vlaneseq
        %v1707 = vshrl.u32 %v1706, 7
        %v1708 = vsub.s32 1, %v1707
        %v1709 = vrot.slane %v1694, %v1708
        %v1712 = vmul.f32 %v1699, %v1705
        %v1713 = vmul.f32 %v1700, %v1709
        %v1714 = vadd.f32 %v1685, %v1712
        %v1715 = vadd.f32 %v1686, %v1713
        %1716 = vrot.lane.b32.xlu0 %v922, 125
        %v1717 = vpop.permute.xlu0 %1716
        %1718 = vrot.lane.b32.xlu0 %v923, 125
        %v1719 = vpop.permute.xlu0 %1718
        %vm1720 = vcmp.lt.s32.totalorder %v930, 125
        %v1721 = vsel %vm1720, %v1717, %v1719
        %v1722 = vsel %vm1720, %v1719, %v1717
        %v1723 = vmul.f32 %v1550, %v1120
        %1724 = vset.pattern.permute.xlu0 27
        %1725 = vperm.xlu0 %1724, %v936
        %v1726 = vpop.permute.xlu0 %1725
        %v1728 = vmul.f32 %v1726, %v1721
        %v1729 = vmul.f32 %v1726, %v1722
        %v1731 = vlaneseq
        %v1732 = vshrl.u32 %v1731, 7
        %v1733 = vsub.s32 0, %v1732
        %v1734 = vrot.slane %v1723, %v1733
        %v1735 = vlaneseq
        %v1736 = vshrl.u32 %v1735, 7
        %v1737 = vsub.s32 1, %v1736
        %v1738 = vrot.slane %v1723, %v1737
        %v1741 = vmul.f32 %v1728, %v1734
        %v1742 = vmul.f32 %v1729, %v1738
        %v1743 = vadd.f32 %v1714, %v1741
        %v1744 = vadd.f32 %v1715, %v1742
        %s1745 = scalar_lea.vmem %s5, 4
        %v1746 = vld [vmem:[%s1745] ss:$8 sm:$0x3]
        %1747 = vrot.lane.b32.xlu0 %v922, 115
        %v1748 = vpop.permute.xlu0 %1747
        %1749 = vrot.lane.b32.xlu0 %v923, 115
        %v1750 = vpop.permute.xlu0 %1749
        %vm1751 = vcmp.lt.s32.totalorder %v930, 115
        %v1752 = vsel %vm1751, %v1748, %v1750
        %v1753 = vsel %vm1751, %v1750, %v1748
        %v1754 = vmul.f32 %v1746, %v934
        %1755 = vset.pattern.permute.xlu0 28
        %1756 = vperm.xlu0 %1755, %v936
        %v1757 = vpop.permute.xlu0 %1756
        %v1759 = vmul.f32 %v1757, %v1752
        %v1760 = vmul.f32 %v1757, %v1753
        %v1762 = vlaneseq
        %v1763 = vshrl.u32 %v1762, 7
        %v1764 = vsub.s32 0, %v1763
        %v1765 = vrot.slane %v1754, %v1764
        %v1766 = vlaneseq
        %v1767 = vshrl.u32 %v1766, 7
        %v1768 = vsub.s32 1, %v1767
        %v1769 = vrot.slane %v1754, %v1768
        %v1772 = vmul.f32 %v1759, %v1765
        %v1773 = vmul.f32 %v1760, %v1769
        %1774 = vrot.lane.b32.xlu0 %v922, 114
        %v1775 = vpop.permute.xlu0 %1774
        %1776 = vrot.lane.b32.xlu0 %v923, 114
        %v1777 = vpop.permute.xlu0 %1776
        %vm1778 = vcmp.lt.s32.totalorder %v930, 114
        %v1779 = vsel %vm1778, %v1775, %v1777
        %v1780 = vsel %vm1778, %v1777, %v1775
        %v1781 = vmul.f32 %v1746, %v965
        %1782 = vset.pattern.permute.xlu0 29
        %1783 = vperm.xlu0 %1782, %v936
        %v1784 = vpop.permute.xlu0 %1783
        %v1786 = vmul.f32 %v1784, %v1779
        %v1787 = vmul.f32 %v1784, %v1780
        %v1789 = vlaneseq
        %v1790 = vshrl.u32 %v1789, 7
        %v1791 = vsub.s32 0, %v1790
        %v1792 = vrot.slane %v1781, %v1791
        %v1793 = vlaneseq
        %v1794 = vshrl.u32 %v1793, 7
        %v1795 = vsub.s32 1, %v1794
        %v1796 = vrot.slane %v1781, %v1795
        %v1799 = vmul.f32 %v1786, %v1792
        %v1800 = vmul.f32 %v1787, %v1796
        %v1801 = vadd.f32 %v1772, %v1799
        %v1802 = vadd.f32 %v1773, %v1800
        %1803 = vrot.lane.b32.xlu0 %v922, 113
        %v1804 = vpop.permute.xlu0 %1803
        %1805 = vrot.lane.b32.xlu0 %v923, 113
        %v1806 = vpop.permute.xlu0 %1805
        %vm1807 = vcmp.lt.s32.totalorder %v930, 113
        %v1808 = vsel %vm1807, %v1804, %v1806
        %v1809 = vsel %vm1807, %v1806, %v1804
        %v1810 = vmul.f32 %v1746, %v996
        %1811 = vset.pattern.permute.xlu0 30
        %1812 = vperm.xlu0 %1811, %v936
        %v1813 = vpop.permute.xlu0 %1812
        %v1815 = vmul.f32 %v1813, %v1808
        %v1816 = vmul.f32 %v1813, %v1809
        %v1818 = vlaneseq
        %v1819 = vshrl.u32 %v1818, 7
        %v1820 = vsub.s32 0, %v1819
        %v1821 = vrot.slane %v1810, %v1820
        %v1822 = vlaneseq
        %v1823 = vshrl.u32 %v1822, 7
        %v1824 = vsub.s32 1, %v1823
        %v1825 = vrot.slane %v1810, %v1824
        %v1828 = vmul.f32 %v1815, %v1821
        %v1829 = vmul.f32 %v1816, %v1825
        %v1830 = vadd.f32 %v1801, %v1828
        %v1831 = vadd.f32 %v1802, %v1829
        %1832 = vrot.lane.b32.xlu0 %v922, 112
        %v1833 = vpop.permute.xlu0 %1832
        %1834 = vrot.lane.b32.xlu0 %v923, 112
        %v1835 = vpop.permute.xlu0 %1834
        %vm1836 = vcmp.lt.s32.totalorder %v930, 112
        %v1837 = vsel %vm1836, %v1833, %v1835
        %v1838 = vsel %vm1836, %v1835, %v1833
        %v1839 = vmul.f32 %v1746, %v1027
        %1840 = vset.pattern.permute.xlu0 31
        %1841 = vperm.xlu0 %1840, %v936
        %v1842 = vpop.permute.xlu0 %1841
        %v1844 = vmul.f32 %v1842, %v1837
        %v1845 = vmul.f32 %v1842, %v1838
        %v1847 = vlaneseq
        %v1848 = vshrl.u32 %v1847, 7
        %v1849 = vsub.s32 0, %v1848
        %v1850 = vrot.slane %v1839, %v1849
        %v1851 = vlaneseq
        %v1852 = vshrl.u32 %v1851, 7
        %v1853 = vsub.s32 1, %v1852
        %v1854 = vrot.slane %v1839, %v1853
        %v1857 = vmul.f32 %v1844, %v1850
        %v1858 = vmul.f32 %v1845, %v1854
        %v1859 = vadd.f32 %v1830, %v1857
        %v1860 = vadd.f32 %v1831, %v1858
        %1861 = vrot.lane.b32.xlu0 %v922, 111
        %v1862 = vpop.permute.xlu0 %1861
        %1863 = vrot.lane.b32.xlu0 %v923, 111
        %v1864 = vpop.permute.xlu0 %1863
        %vm1865 = vcmp.lt.s32.totalorder %v930, 111
        %v1866 = vsel %vm1865, %v1862, %v1864
        %v1867 = vsel %vm1865, %v1864, %v1862
        %v1868 = vmul.f32 %v1746, %v1058
        %1869 = vset.pattern.permute.xlu0 32
        %1870 = vperm.xlu0 %1869, %v936
        %v1871 = vpop.permute.xlu0 %1870
        %v1873 = vmul.f32 %v1871, %v1866
        %v1874 = vmul.f32 %v1871, %v1867
        %v1876 = vlaneseq
        %v1877 = vshrl.u32 %v1876, 7
        %v1878 = vsub.s32 0, %v1877
        %v1879 = vrot.slane %v1868, %v1878
        %v1880 = vlaneseq
        %v1881 = vshrl.u32 %v1880, 7
        %v1882 = vsub.s32 1, %v1881
        %v1883 = vrot.slane %v1868, %v1882
        %v1886 = vmul.f32 %v1873, %v1879
        %v1887 = vmul.f32 %v1874, %v1883
        %v1888 = vadd.f32 %v1859, %v1886
        %v1889 = vadd.f32 %v1860, %v1887
        %1890 = vrot.lane.b32.xlu0 %v922, 110
        %v1891 = vpop.permute.xlu0 %1890
        %1892 = vrot.lane.b32.xlu0 %v923, 110
        %v1893 = vpop.permute.xlu0 %1892
        %vm1894 = vcmp.lt.s32.totalorder %v930, 110
        %v1895 = vsel %vm1894, %v1891, %v1893
        %v1896 = vsel %vm1894, %v1893, %v1891
        %v1897 = vmul.f32 %v1746, %v1089
        %1898 = vset.pattern.permute.xlu0 33
        %1899 = vperm.xlu0 %1898, %v936
        %v1900 = vpop.permute.xlu0 %1899
        %v1902 = vmul.f32 %v1900, %v1895
        %v1903 = vmul.f32 %v1900, %v1896
        %v1905 = vlaneseq
        %v1906 = vshrl.u32 %v1905, 7
        %v1907 = vsub.s32 0, %v1906
        %v1908 = vrot.slane %v1897, %v1907
        %v1909 = vlaneseq
        %v1910 = vshrl.u32 %v1909, 7
        %v1911 = vsub.s32 1, %v1910
        %v1912 = vrot.slane %v1897, %v1911
        %v1915 = vmul.f32 %v1902, %v1908
        %v1916 = vmul.f32 %v1903, %v1912
        %v1917 = vadd.f32 %v1888, %v1915
        %v1918 = vadd.f32 %v1889, %v1916
        %1919 = vrot.lane.b32.xlu0 %v922, 109
        %v1920 = vpop.permute.xlu0 %1919
        %1921 = vrot.lane.b32.xlu0 %v923, 109
        %v1922 = vpop.permute.xlu0 %1921
        %vm1923 = vcmp.lt.s32.totalorder %v930, 109
        %v1924 = vsel %vm1923, %v1920, %v1922
        %v1925 = vsel %vm1923, %v1922, %v1920
        %v1926 = vmul.f32 %v1746, %v1120
        %1927 = vset.pattern.permute.xlu0 34
        %1928 = vperm.xlu0 %1927, %v936
        %v1929 = vpop.permute.xlu0 %1928
        %v1931 = vmul.f32 %v1929, %v1924
        %v1932 = vmul.f32 %v1929, %v1925
        %v1934 = vlaneseq
        %v1935 = vshrl.u32 %v1934, 7
        %v1936 = vsub.s32 0, %v1935
        %v1937 = vrot.slane %v1926, %v1936
        %v1938 = vlaneseq
        %v1939 = vshrl.u32 %v1938, 7
        %v1940 = vsub.s32 1, %v1939
        %v1941 = vrot.slane %v1926, %v1940
        %v1944 = vmul.f32 %v1931, %v1937
        %v1945 = vmul.f32 %v1932, %v1941
        %v1946 = vadd.f32 %v1917, %v1944
        %v1947 = vadd.f32 %v1918, %v1945
        %s1948 = scalar_lea.vmem %s5, 5
        %v1949 = vld [vmem:[%s1948] ss:$8 sm:$0x3]
        %1950 = vrot.lane.b32.xlu0 %v922, 99
        %v1951 = vpop.permute.xlu0 %1950
        %1952 = vrot.lane.b32.xlu0 %v923, 99
        %v1953 = vpop.permute.xlu0 %1952
        %vm1954 = vcmp.lt.s32.totalorder %v930, 99
        %v1955 = vsel %vm1954, %v1951, %v1953
        %v1956 = vsel %vm1954, %v1953, %v1951
        %v1957 = vmul.f32 %v1949, %v934
        %1958 = vset.pattern.permute.xlu0 35
        %1959 = vperm.xlu0 %1958, %v936
        %v1960 = vpop.permute.xlu0 %1959
        %v1962 = vmul.f32 %v1960, %v1955
        %v1963 = vmul.f32 %v1960, %v1956
        %v1965 = vlaneseq
        %v1966 = vshrl.u32 %v1965, 7
        %v1967 = vsub.s32 0, %v1966
        %v1968 = vrot.slane %v1957, %v1967
        %v1969 = vlaneseq
        %v1970 = vshrl.u32 %v1969, 7
        %v1971 = vsub.s32 1, %v1970
        %v1972 = vrot.slane %v1957, %v1971
        %v1975 = vmul.f32 %v1962, %v1968
        %v1976 = vmul.f32 %v1963, %v1972
        %1977 = vrot.lane.b32.xlu0 %v922, 98
        %v1978 = vpop.permute.xlu0 %1977
        %1979 = vrot.lane.b32.xlu0 %v923, 98
        %v1980 = vpop.permute.xlu0 %1979
        %vm1981 = vcmp.lt.s32.totalorder %v930, 98
        %v1982 = vsel %vm1981, %v1978, %v1980
        %v1983 = vsel %vm1981, %v1980, %v1978
        %v1984 = vmul.f32 %v1949, %v965
        %1985 = vset.pattern.permute.xlu0 36
        %1986 = vperm.xlu0 %1985, %v936
        %v1987 = vpop.permute.xlu0 %1986
        %v1989 = vmul.f32 %v1987, %v1982
        %v1990 = vmul.f32 %v1987, %v1983
        %v1992 = vlaneseq
        %v1993 = vshrl.u32 %v1992, 7
        %v1994 = vsub.s32 0, %v1993
        %v1995 = vrot.slane %v1984, %v1994
        %v1996 = vlaneseq
        %v1997 = vshrl.u32 %v1996, 7
        %v1998 = vsub.s32 1, %v1997
        %v1999 = vrot.slane %v1984, %v1998
        %v2002 = vmul.f32 %v1989, %v1995
        %v2003 = vmul.f32 %v1990, %v1999
        %v2004 = vadd.f32 %v1975, %v2002
        %v2005 = vadd.f32 %v1976, %v2003
        %2006 = vrot.lane.b32.xlu0 %v922, 97
        %v2007 = vpop.permute.xlu0 %2006
        %2008 = vrot.lane.b32.xlu0 %v923, 97
        %v2009 = vpop.permute.xlu0 %2008
        %vm2010 = vcmp.lt.s32.totalorder %v930, 97
        %v2011 = vsel %vm2010, %v2007, %v2009
        %v2012 = vsel %vm2010, %v2009, %v2007
        %v2013 = vmul.f32 %v1949, %v996
        %2014 = vset.pattern.permute.xlu0 37
        %2015 = vperm.xlu0 %2014, %v936
        %v2016 = vpop.permute.xlu0 %2015
        %v2018 = vmul.f32 %v2016, %v2011
        %v2019 = vmul.f32 %v2016, %v2012
        %v2021 = vlaneseq
        %v2022 = vshrl.u32 %v2021, 7
        %v2023 = vsub.s32 0, %v2022
        %v2024 = vrot.slane %v2013, %v2023
        %v2025 = vlaneseq
        %v2026 = vshrl.u32 %v2025, 7
        %v2027 = vsub.s32 1, %v2026
        %v2028 = vrot.slane %v2013, %v2027
        %v2031 = vmul.f32 %v2018, %v2024
        %v2032 = vmul.f32 %v2019, %v2028
        %v2033 = vadd.f32 %v2004, %v2031
        %v2034 = vadd.f32 %v2005, %v2032
        %2035 = vrot.lane.b32.xlu0 %v922, 96
        %v2036 = vpop.permute.xlu0 %2035
        %2037 = vrot.lane.b32.xlu0 %v923, 96
        %v2038 = vpop.permute.xlu0 %2037
        %vm2039 = vcmp.lt.s32.totalorder %v930, 96
        %v2040 = vsel %vm2039, %v2036, %v2038
        %v2041 = vsel %vm2039, %v2038, %v2036
        %v2042 = vmul.f32 %v1949, %v1027
        %2043 = vset.pattern.permute.xlu0 38
        %2044 = vperm.xlu0 %2043, %v936
        %v2045 = vpop.permute.xlu0 %2044
        %v2047 = vmul.f32 %v2045, %v2040
        %v2048 = vmul.f32 %v2045, %v2041
        %v2050 = vlaneseq
        %v2051 = vshrl.u32 %v2050, 7
        %v2052 = vsub.s32 0, %v2051
        %v2053 = vrot.slane %v2042, %v2052
        %v2054 = vlaneseq
        %v2055 = vshrl.u32 %v2054, 7
        %v2056 = vsub.s32 1, %v2055
        %v2057 = vrot.slane %v2042, %v2056
        %v2060 = vmul.f32 %v2047, %v2053
        %v2061 = vmul.f32 %v2048, %v2057
        %v2062 = vadd.f32 %v2033, %v2060
        %v2063 = vadd.f32 %v2034, %v2061
        %2064 = vrot.lane.b32.xlu0 %v922, 95
        %v2065 = vpop.permute.xlu0 %2064
        %2066 = vrot.lane.b32.xlu0 %v923, 95
        %v2067 = vpop.permute.xlu0 %2066
        %vm2068 = vcmp.lt.s32.totalorder %v930, 95
        %v2069 = vsel %vm2068, %v2065, %v2067
        %v2070 = vsel %vm2068, %v2067, %v2065
        %v2071 = vmul.f32 %v1949, %v1058
        %2072 = vset.pattern.permute.xlu0 39
        %2073 = vperm.xlu0 %2072, %v936
        %v2074 = vpop.permute.xlu0 %2073
        %v2076 = vmul.f32 %v2074, %v2069
        %v2077 = vmul.f32 %v2074, %v2070
        %v2079 = vlaneseq
        %v2080 = vshrl.u32 %v2079, 7
        %v2081 = vsub.s32 0, %v2080
        %v2082 = vrot.slane %v2071, %v2081
        %v2083 = vlaneseq
        %v2084 = vshrl.u32 %v2083, 7
        %v2085 = vsub.s32 1, %v2084
        %v2086 = vrot.slane %v2071, %v2085
        %v2089 = vmul.f32 %v2076, %v2082
        %v2090 = vmul.f32 %v2077, %v2086
        %v2091 = vadd.f32 %v2062, %v2089
        %v2092 = vadd.f32 %v2063, %v2090
        %2093 = vrot.lane.b32.xlu0 %v922, 94
        %v2094 = vpop.permute.xlu0 %2093
        %2095 = vrot.lane.b32.xlu0 %v923, 94
        %v2096 = vpop.permute.xlu0 %2095
        %vm2097 = vcmp.lt.s32.totalorder %v930, 94
        %v2098 = vsel %vm2097, %v2094, %v2096
        %v2099 = vsel %vm2097, %v2096, %v2094
        %v2100 = vmul.f32 %v1949, %v1089
        %2101 = vset.pattern.permute.xlu0 40
        %2102 = vperm.xlu0 %2101, %v936
        %v2103 = vpop.permute.xlu0 %2102
        %v2105 = vmul.f32 %v2103, %v2098
        %v2106 = vmul.f32 %v2103, %v2099
        %v2108 = vlaneseq
        %v2109 = vshrl.u32 %v2108, 7
        %v2110 = vsub.s32 0, %v2109
        %v2111 = vrot.slane %v2100, %v2110
        %v2112 = vlaneseq
        %v2113 = vshrl.u32 %v2112, 7
        %v2114 = vsub.s32 1, %v2113
        %v2115 = vrot.slane %v2100, %v2114
        %v2118 = vmul.f32 %v2105, %v2111
        %v2119 = vmul.f32 %v2106, %v2115
        %v2120 = vadd.f32 %v2091, %v2118
        %v2121 = vadd.f32 %v2092, %v2119
        %2122 = vrot.lane.b32.xlu0 %v922, 93
        %v2123 = vpop.permute.xlu0 %2122
        %2124 = vrot.lane.b32.xlu0 %v923, 93
        %v2125 = vpop.permute.xlu0 %2124
        %vm2126 = vcmp.lt.s32.totalorder %v930, 93
        %v2127 = vsel %vm2126, %v2123, %v2125
        %v2128 = vsel %vm2126, %v2125, %v2123
        %v2129 = vmul.f32 %v1949, %v1120
        %2130 = vset.pattern.permute.xlu0 41
        %2131 = vperm.xlu0 %2130, %v936
        %v2132 = vpop.permute.xlu0 %2131
        %v2134 = vmul.f32 %v2132, %v2127
        %v2135 = vmul.f32 %v2132, %v2128
        %v2137 = vlaneseq
        %v2138 = vshrl.u32 %v2137, 7
        %v2139 = vsub.s32 0, %v2138
        %v2140 = vrot.slane %v2129, %v2139
        %v2141 = vlaneseq
        %v2142 = vshrl.u32 %v2141, 7
        %v2143 = vsub.s32 1, %v2142
        %v2144 = vrot.slane %v2129, %v2143
        %v2147 = vmul.f32 %v2134, %v2140
        %v2148 = vmul.f32 %v2135, %v2144
        %v2149 = vadd.f32 %v2120, %v2147
        %v2150 = vadd.f32 %v2121, %v2148
        %s2151 = scalar_lea.vmem %s5, 6
        %v2152 = vld [vmem:[%s2151] ss:$8 sm:$0x3]
        %2153 = vrot.lane.b32.xlu0 %v922, 83
        %v2154 = vpop.permute.xlu0 %2153
        %2155 = vrot.lane.b32.xlu0 %v923, 83
        %v2156 = vpop.permute.xlu0 %2155
        %vm2157 = vcmp.lt.s32.totalorder %v930, 83
        %v2158 = vsel %vm2157, %v2154, %v2156
        %v2159 = vsel %vm2157, %v2156, %v2154
        %v2160 = vmul.f32 %v2152, %v934
        %2161 = vset.pattern.permute.xlu0 42
        %2162 = vperm.xlu0 %2161, %v936
        %v2163 = vpop.permute.xlu0 %2162
        %v2165 = vmul.f32 %v2163, %v2158
        %v2166 = vmul.f32 %v2163, %v2159
        %v2168 = vlaneseq
        %v2169 = vshrl.u32 %v2168, 7
        %v2170 = vsub.s32 0, %v2169
        %v2171 = vrot.slane %v2160, %v2170
        %v2172 = vlaneseq
        %v2173 = vshrl.u32 %v2172, 7
        %v2174 = vsub.s32 1, %v2173
        %v2175 = vrot.slane %v2160, %v2174
        %v2178 = vmul.f32 %v2165, %v2171
        %v2179 = vmul.f32 %v2166, %v2175
        %2180 = vrot.lane.b32.xlu0 %v922, 82
        %v2181 = vpop.permute.xlu0 %2180
        %2182 = vrot.lane.b32.xlu0 %v923, 82
        %v2183 = vpop.permute.xlu0 %2182
        %vm2184 = vcmp.lt.s32.totalorder %v930, 82
        %v2185 = vsel %vm2184, %v2181, %v2183
        %v2186 = vsel %vm2184, %v2183, %v2181
        %v2187 = vmul.f32 %v2152, %v965
        %2188 = vset.pattern.permute.xlu0 43
        %2189 = vperm.xlu0 %2188, %v936
        %v2190 = vpop.permute.xlu0 %2189
        %v2192 = vmul.f32 %v2190, %v2185
        %v2193 = vmul.f32 %v2190, %v2186
        %v2195 = vlaneseq
        %v2196 = vshrl.u32 %v2195, 7
        %v2197 = vsub.s32 0, %v2196
        %v2198 = vrot.slane %v2187, %v2197
        %v2199 = vlaneseq
        %v2200 = vshrl.u32 %v2199, 7
        %v2201 = vsub.s32 1, %v2200
        %v2202 = vrot.slane %v2187, %v2201
        %v2205 = vmul.f32 %v2192, %v2198
        %v2206 = vmul.f32 %v2193, %v2202
        %v2207 = vadd.f32 %v2178, %v2205
        %v2208 = vadd.f32 %v2179, %v2206
        %2209 = vrot.lane.b32.xlu0 %v922, 81
        %v2210 = vpop.permute.xlu0 %2209
        %2211 = vrot.lane.b32.xlu0 %v923, 81
        %v2212 = vpop.permute.xlu0 %2211
        %vm2213 = vcmp.lt.s32.totalorder %v930, 81
        %v2214 = vsel %vm2213, %v2210, %v2212
        %v2215 = vsel %vm2213, %v2212, %v2210
        %v2216 = vmul.f32 %v2152, %v996
        %2217 = vset.pattern.permute.xlu0 44
        %2218 = vperm.xlu0 %2217, %v936
        %v2219 = vpop.permute.xlu0 %2218
        %v2221 = vmul.f32 %v2219, %v2214
        %v2222 = vmul.f32 %v2219, %v2215
        %v2224 = vlaneseq
        %v2225 = vshrl.u32 %v2224, 7
        %v2226 = vsub.s32 0, %v2225
        %v2227 = vrot.slane %v2216, %v2226
        %v2228 = vlaneseq
        %v2229 = vshrl.u32 %v2228, 7
        %v2230 = vsub.s32 1, %v2229
        %v2231 = vrot.slane %v2216, %v2230
        %v2234 = vmul.f32 %v2221, %v2227
        %v2235 = vmul.f32 %v2222, %v2231
        %v2236 = vadd.f32 %v2207, %v2234
        %v2237 = vadd.f32 %v2208, %v2235
        %2238 = vrot.lane.b32.xlu0 %v922, 80
        %v2239 = vpop.permute.xlu0 %2238
        %2240 = vrot.lane.b32.xlu0 %v923, 80
        %v2241 = vpop.permute.xlu0 %2240
        %vm2242 = vcmp.lt.s32.totalorder %v930, 80
        %v2243 = vsel %vm2242, %v2239, %v2241
        %v2244 = vsel %vm2242, %v2241, %v2239
        %v2245 = vmul.f32 %v2152, %v1027
        %2246 = vset.pattern.permute.xlu0 45
        %2247 = vperm.xlu0 %2246, %v936
        %v2248 = vpop.permute.xlu0 %2247
        %v2250 = vmul.f32 %v2248, %v2243
        %v2251 = vmul.f32 %v2248, %v2244
        %v2253 = vlaneseq
        %v2254 = vshrl.u32 %v2253, 7
        %v2255 = vsub.s32 0, %v2254
        %v2256 = vrot.slane %v2245, %v2255
        %v2257 = vlaneseq
        %v2258 = vshrl.u32 %v2257, 7
        %v2259 = vsub.s32 1, %v2258
        %v2260 = vrot.slane %v2245, %v2259
        %v2263 = vmul.f32 %v2250, %v2256
        %v2264 = vmul.f32 %v2251, %v2260
        %v2265 = vadd.f32 %v2236, %v2263
        %v2266 = vadd.f32 %v2237, %v2264
        %2267 = vrot.lane.b32.xlu0 %v922, 79
        %v2268 = vpop.permute.xlu0 %2267
        %2269 = vrot.lane.b32.xlu0 %v923, 79
        %v2270 = vpop.permute.xlu0 %2269
        %vm2271 = vcmp.lt.s32.totalorder %v930, 79
        %v2272 = vsel %vm2271, %v2268, %v2270
        %v2273 = vsel %vm2271, %v2270, %v2268
        %v2274 = vmul.f32 %v2152, %v1058
        %2275 = vset.pattern.permute.xlu0 46
        %2276 = vperm.xlu0 %2275, %v936
        %v2277 = vpop.permute.xlu0 %2276
        %v2279 = vmul.f32 %v2277, %v2272
        %v2280 = vmul.f32 %v2277, %v2273
        %v2282 = vlaneseq
        %v2283 = vshrl.u32 %v2282, 7
        %v2284 = vsub.s32 0, %v2283
        %v2285 = vrot.slane %v2274, %v2284
        %v2286 = vlaneseq
        %v2287 = vshrl.u32 %v2286, 7
        %v2288 = vsub.s32 1, %v2287
        %v2289 = vrot.slane %v2274, %v2288
        %v2292 = vmul.f32 %v2279, %v2285
        %v2293 = vmul.f32 %v2280, %v2289
        %v2294 = vadd.f32 %v2265, %v2292
        %v2295 = vadd.f32 %v2266, %v2293
        %2296 = vrot.lane.b32.xlu0 %v922, 78
        %v2297 = vpop.permute.xlu0 %2296
        %2298 = vrot.lane.b32.xlu0 %v923, 78
        %v2299 = vpop.permute.xlu0 %2298
        %vm2300 = vcmp.lt.s32.totalorder %v930, 78
        %v2301 = vsel %vm2300, %v2297, %v2299
        %v2302 = vsel %vm2300, %v2299, %v2297
        %v2303 = vmul.f32 %v2152, %v1089
        %2304 = vset.pattern.permute.xlu0 47
        %2305 = vperm.xlu0 %2304, %v936
        %v2306 = vpop.permute.xlu0 %2305
        %v2308 = vmul.f32 %v2306, %v2301
        %v2309 = vmul.f32 %v2306, %v2302
        %v2311 = vlaneseq
        %v2312 = vshrl.u32 %v2311, 7
        %v2313 = vsub.s32 0, %v2312
        %v2314 = vrot.slane %v2303, %v2313
        %v2315 = vlaneseq
        %v2316 = vshrl.u32 %v2315, 7
        %v2317 = vsub.s32 1, %v2316
        %v2318 = vrot.slane %v2303, %v2317
        %v2321 = vmul.f32 %v2308, %v2314
        %v2322 = vmul.f32 %v2309, %v2318
        %v2323 = vadd.f32 %v2294, %v2321
        %v2324 = vadd.f32 %v2295, %v2322
        %2325 = vrot.lane.b32.xlu0 %v922, 77
        %v2326 = vpop.permute.xlu0 %2325
        %2327 = vrot.lane.b32.xlu0 %v923, 77
        %v2328 = vpop.permute.xlu0 %2327
        %vm2329 = vcmp.lt.s32.totalorder %v930, 77
        %v2330 = vsel %vm2329, %v2326, %v2328
        %v2331 = vsel %vm2329, %v2328, %v2326
        %v2332 = vmul.f32 %v2152, %v1120
        %2333 = vset.pattern.permute.xlu0 48
        %2334 = vperm.xlu0 %2333, %v936
        %v2335 = vpop.permute.xlu0 %2334
        %v2337 = vmul.f32 %v2335, %v2330
        %v2338 = vmul.f32 %v2335, %v2331
        %v2340 = vlaneseq
        %v2341 = vshrl.u32 %v2340, 7
        %v2342 = vsub.s32 0, %v2341
        %v2343 = vrot.slane %v2332, %v2342
        %v2344 = vlaneseq
        %v2345 = vshrl.u32 %v2344, 7
        %v2346 = vsub.s32 1, %v2345
        %v2347 = vrot.slane %v2332, %v2346
        %v2350 = vmul.f32 %v2337, %v2343
        %v2351 = vmul.f32 %v2338, %v2347
        %v2352 = vadd.f32 %v2323, %v2350
        %v2353 = vadd.f32 %v2324, %v2351
        %v2354 = vadd.f32 %v1141, %v1344
        %v2355 = vadd.f32 %v1142, %v1345
        %v2356 = vadd.f32 %v1547, %v1743
        %v2357 = vadd.f32 %v1548, %v1744
        %v2358 = vadd.f32 %v1946, %v2149
        %v2359 = vadd.f32 %v1947, %v2150
        %v2360 = vadd.f32 %v2354, %v2356
        %v2361 = vadd.f32 %v2355, %v2357
        %v2362 = vadd.f32 %v2358, %v2352
        %v2363 = vadd.f32 %v2359, %v2353
        %v2364 = vadd.f32 %v2360, %v2362
        %v2365 = vadd.f32 %v2361, %v2363
        %v2366 = vsel %vm705, %v2364, 0.0
        %v2367 = vrot.slane %v2366, 4
        %v2368 = vadd.f32 %v2366, %v2367
        %v2369 = vrot.slane %v2368, 2
        %v2370 = vadd.f32 %v2368, %v2369
        %v2371 = vrot.slane %v2370, 1
        %v2372 = vadd.f32 %v2370, %v2371
        %v2373 = vsel %vm705, %v2365, 0.0
        %v2374 = vrot.slane %v2373, 4
        %v2375 = vadd.f32 %v2373, %v2374
        %v2376 = vrot.slane %v2375, 2
        %v2377 = vadd.f32 %v2375, %v2376
        %v2378 = vrot.slane %v2377, 1
        %v2379 = vadd.f32 %v2377, %v2378
        %v2380 = vand.u32 2147483647, %v2372
        %v2381 = vand.u32 2147483647, %v2379
        %v2382 = vsub.f32 0.0, %v2380
        %v2383 = vsub.f32 0.0, %v2381
        %v2384 = vmul.f32 %v2382, 1.442695
        %v2385 = vpow.pop %v2384
        %v2386 = vmul.f32 %v2383, 1.442695
        %v2387 = vpow.pop %v2386
        %v2388 = vadd.f32 %v2385, 1.0
        %v2389 = vadd.f32 %v2387, 1.0
        %v2390 = vrcp.pop %v2388
        %v2391 = vmul.f32 1.0, %v2390
        %v2392 = vrcp.pop %v2389
        %v2393 = vmul.f32 1.0, %v2392
        %vm2394 = vcmp.ge.f32.partialorder %v2372, 0.0
        %vm2395 = vcmp.ge.f32.partialorder %v2379, 0.0
        %v2396 = vmul.f32 %v2385, %v2391
        %v2397 = vmul.f32 %v2387, %v2393
        %v2398 = vsel %vm2394, %v2391, %v2396
        %v2399 = vsel %vm2395, %v2393, %v2397
        %v2400 = vmul.f32 %v874, %v2398
        %v2401 = vmul.f32 %v875, %v2399
        %v2402 = vmul.f32 %v876, %v2398
        %v2403 = vmul.f32 %v877, %v2399
        %v2404 = vmul.f32 %v878, %v2398
        %v2405 = vmul.f32 %v879, %v2399
        %v2406 = vmul.f32 %v880, %v2398
        %v2407 = vmul.f32 %v881, %v2399
        %2408 = vst [vmem:[%s298] sm:$0xff] %v2400
        %2409 = vst [vmem:[%s298 + $0x8] sm:$0xff] %v2401
        %2410 = vst [vmem:[%s298 + $0x10] sm:$0xff] %v2402
        %2411 = vst [vmem:[%s298 + $0x18] sm:$0xff] %v2403
        %2412 = vst [vmem:[%s298 + $0x20] sm:$0xff] %v2404
        %2413 = vst [vmem:[%s298 + $0x28] sm:$0xff] %v2405
        %2414 = vst [vmem:[%s298 + $0x30] sm:$0xff] %v2406
        %2415 = vst [vmem:[%s298 + $0x38] sm:$0xff] %v2407
        %s2416 = sand.u32 %s203, 1
        %s2417 = scalar_lea.sflag [#allocation3], %s2416
        %s2418 = sand.u32 %s203, 1
        %s2419 = smul.addr %s2418, 64
        %s2420 = scalar_lea.vmem [#allocation2], %s2419
        // Predicated region
        $region53: #{tpu_custom_call.1} parent=51 // pred_check
          %p2421 = pneg %p213
        $region54: #{tpu_custom_call.1} parent=51 // pred_check_branch
          %2423 = sbr.rel (%p2421) target = $region56
        $region55: #{tpu_custom_call.1} parent=51 // pred_region
          %s2425 = ssub.s32 1024, 1024
          %2426 = vsyncadd %s2417, %s2425
          %s2427 = smul.addr %s22, 8
          %s2428 = smul.addr %s2427, 128
          %s2429 = scalar_lea.hbm %s8, %s2428
          %s2430 = sshll.u32 %s2420, 4
          %s2431 = int_to_ptr.vmem [resolvable:$true] %s2430
          %2436 = dma.vmem_to_hbm [thread:$0]  %s2431, 1024, %s2429, %s2417, 256, 256, 16
        $region56: #{tpu_custom_call.1} parent=51 // pred_fallthru
          _
      $region52: #{tpu_custom_call.1} parent=5 // pred_fallthru
        _
      %p2437 = scmp.le.s32.totalorder 2, %s17
      // Predicated region
      $region57: #{tpu_custom_call.1} parent=5 // pred_check
        %p2438 = pneg %p2437
      $region58: #{tpu_custom_call.1} parent=5 // pred_check_branch
        %2440 = sbr.rel (%p2438) target = $region60
      $region59: #{tpu_custom_call.1} parent=5 // pred_region
        %s2441 = ssub.s32 %s17, 2
        // Predicated region
        $region61: #{tpu_custom_call.1} parent=59 // pred_check
          %p2442 = pneg %p219
        $region62: #{tpu_custom_call.1} parent=59 // pred_check_branch
          %2444 = sbr.rel (%p2442) target = $region64
        $region63: #{tpu_custom_call.1} parent=59 // pred_region
          %s2445 = sand.u32 %s204, 1
          %s2446 = scalar_lea.sflag [#allocation3], %s2445
          %s2447 = sand.u32 %s204, 1
          %s2448 = smul.addr %s2447, 64
          %s2449 = scalar_lea.vmem [#allocation2], %s2448
          %2450 = dma.done %s2446, 1024
        $region64: #{tpu_custom_call.1} parent=59 // pred_fallthru
          _
      $region60: #{tpu_custom_call.1} parent=5 // pred_fallthru
        _
    $region6: #{tpu_custom_call.1} parent=1 // loop_footer
      %s21 = sadd.s32 1, %s17
    $region7: #{tpu_custom_call.1} parent=1 // loop_footer_branch
      %16 = sbr.rel target = $region3
    $region8: #{tpu_custom_call.1} parent=1 // loop_exit
      _
    %2451 = vsyncpa [#allocation3], 1
    %s2452 = scalar_lea.sflag [#allocation3], 1
    %2453 = vsyncpa %s2452, 1

</llo_original>
